<compile_context>
chip_gen: v6e
topology: v6e:2x2x1
jax: 0.10.0
libtpu: 0.0.40
codegen_flags: <defaults>
</compile_context>

<pallas_src>
from functools import partial

import numpy as np
import jax
import jax.numpy as jnp
from jax.experimental import pallas as pl
from jax.experimental.pallas import tpu as pltpu


_IN_EPS = 1e-5  # nn.InstanceNorm2d default eps


# ----------------------------------------------------------------------------
# Fused SPADE kernel: direct 3x3 convs (tap roll + mask + MXU dot) +
# InstanceNorm2d(affine=False) + modulation, one image per grid step.
# ----------------------------------------------------------------------------

def _spade_kernel(y_ref, w1_ref, b1_ref, w2_ref, b2_ref, m_ref, x_ref, o_ref,
                  acc1_ref, acc2_ref, *, ks, H, W, cx, eps):
    HW = H * W
    half = ks // 2

    def conv_taps(load_src, w_ref_, acc_ref_):
        """acc += sum_t W_t @ shift_t(src); src is (Cin, HW) f32, W_t (Cout, Cin) bf16."""
        acc_ref_[...] = jnp.zeros_like(acc_ref_)
        t = 0
        for i in range(ks):
            for j in range(ks):
                dy, dx = i - half, j - half
                s = dy * W + dx                     # flat-index shift of tap (dy, dx)
                src = load_src()                    # (Cin, HW) f32, VMEM resident
                if s == 0:
                    a = src                         # centre tap: mask is all-ones
                else:
                    # a[:, p] = src[:, (p + s) mod HW], zeroed where (h+dy, w+dx)
                    # falls outside the image (precomputed 0/1 mask per tap).
                    a = pltpu.roll(src, shift=(-s) % HW, axis=1) * m_ref[t]
                acc_ref_[...] += jnp.dot(w_ref_[t], a.astype(jnp.bfloat16),
                                         preferred_element_type=jnp.float32)
                t += 1

    # ---- shared = Conv2d(y_mod_dim, nhidden, ks, pad) + ReLU (VMEM only) ----
    conv_taps(lambda: y_ref[0].astype(jnp.float32), w1_ref, acc1_ref)
    acc1_ref[...] = jnp.maximum(acc1_ref[...] + b1_ref[...], 0.0)   # actv, f32

    # ---- gamma & beta convs fused (weights stacked along Cout) ----
    conv_taps(lambda: acc1_ref[...], w2_ref, acc2_ref)
    gb = acc2_ref[...] + b2_ref[...]                # (2*cx, HW) f32
    gamma = gb[:cx, :]
    beta = gb[cx:2 * cx, :]

    # ---- InstanceNorm2d(affine=False) + SPADE modulation (two-pass stats) ----
    x = x_ref[0]                                    # (cx, HW) f32
    mean = jnp.sum(x, axis=-1, keepdims=True) * (1.0 / HW)
    xc = x - mean
    var = jnp.sum(xc * xc, axis=-1, keepdims=True) * (1.0 / HW)
    inv = jax.lax.rsqrt(var + eps)
    o_ref[0] = (xc * inv * (1.0 + gamma) + beta).astype(o_ref.dtype)


# ----------------------------------------------------------------------------
# Trace-time helpers (pure numpy / XLA glue)
# ----------------------------------------------------------------------------

def _bilinear_matrix(out_size, in_size):
    """Exact PyTorch bilinear (align_corners=False) interpolation matrix."""
    m = np.zeros((out_size, in_size), np.float32)
    if in_size == 1:
        m[:, 0] = 1.0
        return m
    scale = in_size / out_size
    for o in range(out_size):
        src = (o + 0.5) * scale - 0.5
        if src < 0.0:
            src = 0.0
        i0 = min(int(np.floor(src)), in_size - 1)
        i1 = min(i0 + 1, in_size - 1)
        lam = src - i0
        m[o, i0] += 1.0 - lam
        m[o, i1] += lam
    return m


def _tap_masks(H, W, ks):
    """(ks*ks, 1, H*W) 0/1 masks: mask[t, 0, h*W+w] = 1 iff (h+dy, w+dx) in-image."""
    half = ks // 2
    hh, ww = np.meshgrid(np.arange(H), np.arange(W), indexing="ij")
    hh, ww = hh.reshape(-1), ww.reshape(-1)
    masks = []
    for i in range(ks):
        for j in range(ks):
            dy, dx = i - half, j - half
            valid = ((hh + dy >= 0) & (hh + dy < H) &
                     (ww + dx >= 0) & (ww + dx < W))
            masks.append(valid.astype(np.float32))
    return np.stack(masks, 0).reshape(ks * ks, 1, H * W)


def _conv_w_to_taps(w):
    """(Cout, Cin, kh, kw) -> (kh*kw, Cout, Cin), tap-major (t = i*kw + j)."""
    cout, cin, kh, kw = w.shape
    return jnp.transpose(w, (2, 3, 0, 1)).reshape(kh * kw, cout, cin)


# ----------------------------------------------------------------------------
# Parameters (deterministic synthetic init) and jitted forward
# ----------------------------------------------------------------------------

def make_spade_params(key, x_dim, y_mod_dim=128, nhidden=128, ks=3):
    k_sh, k_g, k_b = jax.random.split(key, 3)

    def conv(k, cout, cin):
        kw_, kb_ = jax.random.split(k)
        fan_in = cin * ks * ks
        w = jax.random.normal(kw_, (cout, cin, ks, ks), jnp.float32) * np.sqrt(2.0 / fan_in)
        b = jax.random.normal(kb_, (cout,), jnp.float32) * 0.01
        return w, b

    w_sh, b_sh = conv(k_sh, nhidden, y_mod_dim)
    w_g, b_g = conv(k_g, x_dim, nhidden)
    w_b, b_b = conv(k_b, x_dim, nhidden)
    return dict(w_shared=w_sh, b_shared=b_sh,
                w_gamma=w_g, b_gamma=b_g,
                w_beta=w_b, b_beta=b_b)


@jax.jit
def spade_forward(params, x, y):
    """SPADE.forward: x (N, x_dim, H, W), y (N, y_mod_dim, Hy, Wy) -> (N, x_dim, H, W)."""
    N, Cx, H, W = x.shape
    _, Cy, Hy, Wy = y.shape
    ks = params["w_shared"].shape[-1]
    nh = params["w_shared"].shape[0]
    HW = H * W
    c2 = 2 * Cx

    # 1) y = F.interpolate(y, size=(H, W), mode='bilinear', align_corners=False)
    #    as an exact einsum, kept channels-first, flattened HW, cast to bf16.
    Mh = jnp.asarray(_bilinear_matrix(H, Hy))
    Mw = jnp.asarray(_bilinear_matrix(W, Wy))
    y_up = jnp.einsum("nchw,Hh,Ww->ncHW", y, Mh, Mw)
    y_up = y_up.reshape(N, Cy, HW).astype(jnp.bfloat16)

    # 2) weights: tap-major stacks, bf16 for the MXU; biases as (Cout, 1) f32.
    w1 = _conv_w_to_taps(params["w_shared"]).astype(jnp.bfloat16)      # (ks*ks, nh, Cy)
    b1 = params["b_shared"].reshape(nh, 1).astype(jnp.float32)
    w_gb = jnp.concatenate([params["w_gamma"], params["w_beta"]], axis=0)
    w2 = _conv_w_to_taps(w_gb).astype(jnp.bfloat16)                    # (ks*ks, 2Cx, nh)
    b2 = jnp.concatenate([params["b_gamma"], params["b_beta"]]).reshape(c2, 1).astype(jnp.float32)

    masks = jnp.asarray(_tap_masks(H, W, ks))                          # (ks*ks, 1, HW) f32
    x3 = x.reshape(N, Cx, HW)

    flops = int(N * ks * ks * 2 * HW * (nh * Cy + c2 * nh) + N * 8 * Cx * HW)
    bytes_accessed = int(y_up.size * 2 + w1.size * 2 + w2.size * 2 + masks.size * 4
                         + b1.size * 4 + b2.size * 4 + x3.size * 4 + N * Cx * HW * 4)

    out3 = pl.pallas_call(
        partial(_spade_kernel, ks=ks, H=H, W=W, cx=Cx, eps=_IN_EPS),
        out_shape=jax.ShapeDtypeStruct((N, Cx, HW), jnp.float32),
        grid_spec=pltpu.PrefetchScalarGridSpec(
            num_scalar_prefetch=0,
            grid=(N,),
            in_specs=[
                pl.BlockSpec((1, Cy, HW), lambda n: (n, 0, 0)),        # y_up (per image)
                pl.BlockSpec((ks * ks, nh, Cy), lambda n: (0, 0, 0)),  # w1
                pl.BlockSpec((nh, 1), lambda n: (0, 0)),               # b1
                pl.BlockSpec((ks * ks, c2, nh), lambda n: (0, 0, 0)),  # w2 (gamma|beta)
                pl.BlockSpec((c2, 1), lambda n: (0, 0)),               # b2
                pl.BlockSpec((ks * ks, 1, HW), lambda n: (0, 0, 0)),   # tap masks
                pl.BlockSpec((1, Cx, HW), lambda n: (n, 0, 0)),        # x (per image)
            ],
            out_specs=pl.BlockSpec((1, Cx, HW), lambda n: (n, 0, 0)),
            scratch_shapes=[
                pltpu.VMEM((nh, HW), jnp.float32),   # conv1 acc, then ReLU'd activation
                pltpu.VMEM((c2, HW), jnp.float32),   # conv2 acc (gamma|beta)
            ],
        ),
        compiler_params=pltpu.CompilerParams(
            dimension_semantics=("parallel",)),
        cost_estimate=pl.CostEstimate(
            flops=flops,
            transcendentals=int(N * Cx),
            bytes_accessed=bytes_accessed),
    )(y_up, w1, b1, w2, b2, masks, x3)

    return out3.reshape(N, Cx, H, W)


# ----------------------------------------------------------------------------
# Demo
# ----------------------------------------------------------------------------

if __name__ == "__main__":
    key = jax.random.PRNGKey(0)
    k_x, k_y, k_p = jax.random.split(key, 3)

    # Small deterministic shapes consistent with SPADE's forward:
    #   x: feature map to normalize/modulate, y: low-res modulation map.
    N, x_dim, H, W = 2, 32, 16, 16
    y_mod_dim, Hy, Wy = 128, 8, 8

    x = jax.random.normal(k_x, (N, x_dim, H, W), jnp.float32)
    y = jax.random.normal(k_y, (N, y_mod_dim, Hy, Wy), jnp.float32)

    params = make_spade_params(k_p, x_dim=x_dim, y_mod_dim=y_mod_dim,
                               nhidden=128, ks=3)

    out = spade_forward(params, x, y)
    out = jax.block_until_ready(out)

    assert out.shape == (N, x_dim, H, W)
    assert bool(jnp.all(jnp.isfinite(out)))

    print("KERNEL_OK")
</pallas_src>

<mosaic_0001>
module attributes {stable_mosaic.version = 11 : i64} {
  func.func @_spade_kernel(%arg0: i32, %arg1: memref<1x128x256xbf16, #tpu.memory_space<vmem>>, %arg2: memref<9x128x128xbf16, #tpu.memory_space<vmem>>, %arg3: memref<128x1xf32, #tpu.memory_space<vmem>>, %arg4: memref<9x64x128xbf16, #tpu.memory_space<vmem>>, %arg5: memref<64x1xf32, #tpu.memory_space<vmem>>, %arg6: memref<9x1x256xf32, #tpu.memory_space<vmem>>, %arg7: memref<1x32x256xf32, #tpu.memory_space<vmem>>, %arg8: memref<1x32x256xf32, #tpu.memory_space<vmem>>, %arg9: memref<128x256xf32, #tpu.memory_space<vmem>>, %arg10: memref<64x256xf32, #tpu.memory_space<vmem>>) attributes {dimension_semantics = [#tpu.dimension_semantics<parallel>], iteration_bounds = array<i64: 2>, scalar_prefetch = 0 : i64, scratch_operands = 2 : i64, tpu.core_type = #tpu.core_type<tc>, window_params = [{transform_indices = @transform_0, window_bounds = array<i64: 1, 128, 256>}, {pipeline_mode = #tpu.pipeline_mode<synchronous>, transform_indices = @transform_1, window_bounds = array<i64: 9, 128, 128>}, {pipeline_mode = #tpu.pipeline_mode<synchronous>, transform_indices = @transform_2, window_bounds = array<i64: 128, 1>}, {pipeline_mode = #tpu.pipeline_mode<synchronous>, transform_indices = @transform_3, window_bounds = array<i64: 9, 64, 128>}, {pipeline_mode = #tpu.pipeline_mode<synchronous>, transform_indices = @transform_4, window_bounds = array<i64: 64, 1>}, {pipeline_mode = #tpu.pipeline_mode<synchronous>, transform_indices = @transform_5, window_bounds = array<i64: 9, 1, 256>}, {transform_indices = @transform_6, window_bounds = array<i64: 1, 32, 256>}, {transform_indices = @transform_7, window_bounds = array<i64: 1, 32, 256>}]} {
    %cst = arith.constant 0.000000e+00 : f32
    %0 = vector.broadcast %cst : f32 to vector<128x256xf32>
    %c0 = arith.constant 0 : index
    %c0_0 = arith.constant 0 : index
    %1 = vector.load %arg9[%c0, %c0_0] : memref<128x256xf32, #tpu.memory_space<vmem>>, vector<128x256xf32>
    tpu.vector_store %arg9[%c0, %c0_0], %0 {strides = array<i32>} : memref<128x256xf32, #tpu.memory_space<vmem>>, vector<128x256xf32>,
    %c0_1 = arith.constant 0 : index
    %c0_2 = arith.constant 0 : index
    %c0_3 = arith.constant 0 : index
    %2 = vector.load %arg1[%c0_1, %c0_2, %c0_3] : memref<1x128x256xbf16, #tpu.memory_space<vmem>>, vector<1x128x256xbf16>
    %3 = vector.shape_cast %2 : vector<1x128x256xbf16> to vector<128x256xbf16>
    %4 = arith.extf %3 : vector<128x256xbf16> to vector<128x256xf32>
    %c17_i32 = arith.constant 17 : i32
    %5 = tpu.dynamic_rotate %4 by %c17_i32 dim 1 : vector<128x256xf32>, i32 -> vector<128x256xf32>
    %c0_4 = arith.constant 0 : index
    %c0_5 = arith.constant 0 : index
    %c0_6 = arith.constant 0 : index
    %6 = vector.load %arg6[%c0_4, %c0_5, %c0_6] : memref<9x1x256xf32, #tpu.memory_space<vmem>>, vector<1x1x256xf32>
    %7 = vector.shape_cast %6 : vector<1x1x256xf32> to vector<1x256xf32>
    %8 = vector.broadcast %7 : vector<1x256xf32> to vector<128x256xf32>
    %9 = arith.mulf %5, %8 : vector<128x256xf32>
    %c0_7 = arith.constant 0 : index
    %c0_8 = arith.constant 0 : index
    %10 = vector.load %arg9[%c0_7, %c0_8] : memref<128x256xf32, #tpu.memory_space<vmem>>, vector<128x256xf32>
    %c0_9 = arith.constant 0 : index
    %c0_10 = arith.constant 0 : index
    %c0_11 = arith.constant 0 : index
    %11 = vector.load %arg2[%c0_9, %c0_10, %c0_11] : memref<9x128x128xbf16, #tpu.memory_space<vmem>>, vector<1x128x128xbf16>
    %12 = vector.shape_cast %11 : vector<1x128x128xbf16> to vector<128x128xbf16>
    %13 = arith.truncf %9 : vector<128x256xf32> to vector<128x256xbf16>
    %cst_12 = arith.constant dense<0.000000e+00> : vector<128x256xf32>
    %14 = tpu.matmul %12, %13, %cst_12 {dimension_numbers = #tpu.dot_dimension_numbers<[1], [0], [0], [1], [0, 0, 1, 1], [], []>} : vector<128x128xbf16>, vector<128x256xbf16>, vector<128x256xf32> -> vector<128x256xf32>
    %15 = arith.addf %10, %14 : vector<128x256xf32>
    %c0_13 = arith.constant 0 : index
    %c0_14 = arith.constant 0 : index
    %16 = vector.load %arg9[%c0_13, %c0_14] : memref<128x256xf32, #tpu.memory_space<vmem>>, vector<128x256xf32>
    tpu.vector_store %arg9[%c0_13, %c0_14], %15 {strides = array<i32>} : memref<128x256xf32, #tpu.memory_space<vmem>>, vector<128x256xf32>,
    %c0_15 = arith.constant 0 : index
    %c0_16 = arith.constant 0 : index
    %c0_17 = arith.constant 0 : index
    %17 = vector.load %arg1[%c0_15, %c0_16, %c0_17] : memref<1x128x256xbf16, #tpu.memory_space<vmem>>, vector<1x128x256xbf16>
    %18 = vector.shape_cast %17 : vector<1x128x256xbf16> to vector<128x256xbf16>
    %19 = arith.extf %18 : vector<128x256xbf16> to vector<128x256xf32>
    %c16_i32 = arith.constant 16 : i32
    %20 = tpu.dynamic_rotate %19 by %c16_i32 dim 1 : vector<128x256xf32>, i32 -> vector<128x256xf32>
    %c1 = arith.constant 1 : index
    %c0_18 = arith.constant 0 : index
    %c0_19 = arith.constant 0 : index
    %21 = vector.load %arg6[%c1, %c0_18, %c0_19] : memref<9x1x256xf32, #tpu.memory_space<vmem>>, vector<1x1x256xf32>
    %22 = vector.shape_cast %21 : vector<1x1x256xf32> to vector<1x256xf32>
    %23 = vector.broadcast %22 : vector<1x256xf32> to vector<128x256xf32>
    %24 = arith.mulf %20, %23 : vector<128x256xf32>
    %c0_20 = arith.constant 0 : index
    %c0_21 = arith.constant 0 : index
    %25 = vector.load %arg9[%c0_20, %c0_21] : memref<128x256xf32, #tpu.memory_space<vmem>>, vector<128x256xf32>
    %c1_22 = arith.constant 1 : index
    %c0_23 = arith.constant 0 : index
    %c0_24 = arith.constant 0 : index
    %26 = vector.load %arg2[%c1_22, %c0_23, %c0_24] : memref<9x128x128xbf16, #tpu.memory_space<vmem>>, vector<1x128x128xbf16>
    %27 = vector.shape_cast %26 : vector<1x128x128xbf16> to vector<128x128xbf16>
    %28 = arith.truncf %24 : vector<128x256xf32> to vector<128x256xbf16>
    %cst_25 = arith.constant dense<0.000000e+00> : vector<128x256xf32>
    %29 = tpu.matmul %27, %28, %cst_25 {dimension_numbers = #tpu.dot_dimension_numbers<[1], [0], [0], [1], [0, 0, 1, 1], [], []>} : vector<128x128xbf16>, vector<128x256xbf16>, vector<128x256xf32> -> vector<128x256xf32>
    %30 = arith.addf %25, %29 : vector<128x256xf32>
    %c0_26 = arith.constant 0 : index
    %c0_27 = arith.constant 0 : index
    %31 = vector.load %arg9[%c0_26, %c0_27] : memref<128x256xf32, #tpu.memory_space<vmem>>, vector<128x256xf32>
    tpu.vector_store %arg9[%c0_26, %c0_27], %30 {strides = array<i32>} : memref<128x256xf32, #tpu.memory_space<vmem>>, vector<128x256xf32>,
    %c0_28 = arith.constant 0 : index
    %c0_29 = arith.constant 0 : index
    %c0_30 = arith.constant 0 : index
    %32 = vector.load %arg1[%c0_28, %c0_29, %c0_30] : memref<1x128x256xbf16, #tpu.memory_space<vmem>>, vector<1x128x256xbf16>
    %33 = vector.shape_cast %32 : vector<1x128x256xbf16> to vector<128x256xbf16>
    %34 = arith.extf %33 : vector<128x256xbf16> to vector<128x256xf32>
    %c15_i32 = arith.constant 15 : i32
    %35 = tpu.dynamic_rotate %34 by %c15_i32 dim 1 : vector<128x256xf32>, i32 -> vector<128x256xf32>
    %c2 = arith.constant 2 : index
    %c0_31 = arith.constant 0 : index
    %c0_32 = arith.constant 0 : index
    %36 = vector.load %arg6[%c2, %c0_31, %c0_32] : memref<9x1x256xf32, #tpu.memory_space<vmem>>, vector<1x1x256xf32>
    %37 = vector.shape_cast %36 : vector<1x1x256xf32> to vector<1x256xf32>
    %38 = vector.broadcast %37 : vector<1x256xf32> to vector<128x256xf32>
    %39 = arith.mulf %35, %38 : vector<128x256xf32>
    %c0_33 = arith.constant 0 : index
    %c0_34 = arith.constant 0 : index
    %40 = vector.load %arg9[%c0_33, %c0_34] : memref<128x256xf32, #tpu.memory_space<vmem>>, vector<128x256xf32>
    %c2_35 = arith.constant 2 : index
    %c0_36 = arith.constant 0 : index
    %c0_37 = arith.constant 0 : index
    %41 = vector.load %arg2[%c2_35, %c0_36, %c0_37] : memref<9x128x128xbf16, #tpu.memory_space<vmem>>, vector<1x128x128xbf16>
    %42 = vector.shape_cast %41 : vector<1x128x128xbf16> to vector<128x128xbf16>
    %43 = arith.truncf %39 : vector<128x256xf32> to vector<128x256xbf16>
    %cst_38 = arith.constant dense<0.000000e+00> : vector<128x256xf32>
    %44 = tpu.matmul %42, %43, %cst_38 {dimension_numbers = #tpu.dot_dimension_numbers<[1], [0], [0], [1], [0, 0, 1, 1], [], []>} : vector<128x128xbf16>, vector<128x256xbf16>, vector<128x256xf32> -> vector<128x256xf32>
    %45 = arith.addf %40, %44 : vector<128x256xf32>
    %c0_39 = arith.constant 0 : index
    %c0_40 = arith.constant 0 : index
    %46 = vector.load %arg9[%c0_39, %c0_40] : memref<128x256xf32, #tpu.memory_space<vmem>>, vector<128x256xf32>
    tpu.vector_store %arg9[%c0_39, %c0_40], %45 {strides = array<i32>} : memref<128x256xf32, #tpu.memory_space<vmem>>, vector<128x256xf32>,
    %c0_41 = arith.constant 0 : index
    %c0_42 = arith.constant 0 : index
    %c0_43 = arith.constant 0 : index
    %47 = vector.load %arg1[%c0_41, %c0_42, %c0_43] : memref<1x128x256xbf16, #tpu.memory_space<vmem>>, vector<1x128x256xbf16>
    %48 = vector.shape_cast %47 : vector<1x128x256xbf16> to vector<128x256xbf16>
    %49 = arith.extf %48 : vector<128x256xbf16> to vector<128x256xf32>
    %c1_i32 = arith.constant 1 : i32
    %50 = tpu.dynamic_rotate %49 by %c1_i32 dim 1 : vector<128x256xf32>, i32 -> vector<128x256xf32>
    %c3 = arith.constant 3 : index
    %c0_44 = arith.constant 0 : index
    %c0_45 = arith.constant 0 : index
    %51 = vector.load %arg6[%c3, %c0_44, %c0_45] : memref<9x1x256xf32, #tpu.memory_space<vmem>>, vector<1x1x256xf32>
    %52 = vector.shape_cast %51 : vector<1x1x256xf32> to vector<1x256xf32>
    %53 = vector.broadcast %52 : vector<1x256xf32> to vector<128x256xf32>
    %54 = arith.mulf %50, %53 : vector<128x256xf32>
    %c0_46 = arith.constant 0 : index
    %c0_47 = arith.constant 0 : index
    %55 = vector.load %arg9[%c0_46, %c0_47] : memref<128x256xf32, #tpu.memory_space<vmem>>, vector<128x256xf32>
    %c3_48 = arith.constant 3 : index
    %c0_49 = arith.constant 0 : index
    %c0_50 = arith.constant 0 : index
    %56 = vector.load %arg2[%c3_48, %c0_49, %c0_50] : memref<9x128x128xbf16, #tpu.memory_space<vmem>>, vector<1x128x128xbf16>
    %57 = vector.shape_cast %56 : vector<1x128x128xbf16> to vector<128x128xbf16>
    %58 = arith.truncf %54 : vector<128x256xf32> to vector<128x256xbf16>
    %cst_51 = arith.constant dense<0.000000e+00> : vector<128x256xf32>
    %59 = tpu.matmul %57, %58, %cst_51 {dimension_numbers = #tpu.dot_dimension_numbers<[1], [0], [0], [1], [0, 0, 1, 1], [], []>} : vector<128x128xbf16>, vector<128x256xbf16>, vector<128x256xf32> -> vector<128x256xf32>
    %60 = arith.addf %55, %59 : vector<128x256xf32>
    %c0_52 = arith.constant 0 : index
    %c0_53 = arith.constant 0 : index
    %61 = vector.load %arg9[%c0_52, %c0_53] : memref<128x256xf32, #tpu.memory_space<vmem>>, vector<128x256xf32>
    tpu.vector_store %arg9[%c0_52, %c0_53], %60 {strides = array<i32>} : memref<128x256xf32, #tpu.memory_space<vmem>>, vector<128x256xf32>,
    %c0_54 = arith.constant 0 : index
    %c0_55 = arith.constant 0 : index
    %c0_56 = arith.constant 0 : index
    %62 = vector.load %arg1[%c0_54, %c0_55, %c0_56] : memref<1x128x256xbf16, #tpu.memory_space<vmem>>, vector<1x128x256xbf16>
    %63 = vector.shape_cast %62 : vector<1x128x256xbf16> to vector<128x256xbf16>
    %64 = arith.extf %63 : vector<128x256xbf16> to vector<128x256xf32>
    %c0_57 = arith.constant 0 : index
    %c0_58 = arith.constant 0 : index
    %65 = vector.load %arg9[%c0_57, %c0_58] : memref<128x256xf32, #tpu.memory_space<vmem>>, vector<128x256xf32>
    %c4 = arith.constant 4 : index
    %c0_59 = arith.constant 0 : index
    %c0_60 = arith.constant 0 : index
    %66 = vector.load %arg2[%c4, %c0_59, %c0_60] : memref<9x128x128xbf16, #tpu.memory_space<vmem>>, vector<1x128x128xbf16>
    %67 = vector.shape_cast %66 : vector<1x128x128xbf16> to vector<128x128xbf16>
    %68 = arith.truncf %64 : vector<128x256xf32> to vector<128x256xbf16>
    %cst_61 = arith.constant dense<0.000000e+00> : vector<128x256xf32>
    %69 = tpu.matmul %67, %68, %cst_61 {dimension_numbers = #tpu.dot_dimension_numbers<[1], [0], [0], [1], [0, 0, 1, 1], [], []>} : vector<128x128xbf16>, vector<128x256xbf16>, vector<128x256xf32> -> vector<128x256xf32>
    %70 = arith.addf %65, %69 : vector<128x256xf32>
    %c0_62 = arith.constant 0 : index
    %c0_63 = arith.constant 0 : index
    %71 = vector.load %arg9[%c0_62, %c0_63] : memref<128x256xf32, #tpu.memory_space<vmem>>, vector<128x256xf32>
    tpu.vector_store %arg9[%c0_62, %c0_63], %70 {strides = array<i32>} : memref<128x256xf32, #tpu.memory_space<vmem>>, vector<128x256xf32>,
    %c0_64 = arith.constant 0 : index
    %c0_65 = arith.constant 0 : index
    %c0_66 = arith.constant 0 : index
    %72 = vector.load %arg1[%c0_64, %c0_65, %c0_66] : memref<1x128x256xbf16, #tpu.memory_space<vmem>>, vector<1x128x256xbf16>
    %73 = vector.shape_cast %72 : vector<1x128x256xbf16> to vector<128x256xbf16>
    %74 = arith.extf %73 : vector<128x256xbf16> to vector<128x256xf32>
    %c255_i32 = arith.constant 255 : i32
    %75 = tpu.dynamic_rotate %74 by %c255_i32 dim 1 : vector<128x256xf32>, i32 -> vector<128x256xf32>
    %c5 = arith.constant 5 : index
    %c0_67 = arith.constant 0 : index
    %c0_68 = arith.constant 0 : index
    %76 = vector.load %arg6[%c5, %c0_67, %c0_68] : memref<9x1x256xf32, #tpu.memory_space<vmem>>, vector<1x1x256xf32>
    %77 = vector.shape_cast %76 : vector<1x1x256xf32> to vector<1x256xf32>
    %78 = vector.broadcast %77 : vector<1x256xf32> to vector<128x256xf32>
    %79 = arith.mulf %75, %78 : vector<128x256xf32>
    %c0_69 = arith.constant 0 : index
    %c0_70 = arith.constant 0 : index
    %80 = vector.load %arg9[%c0_69, %c0_70] : memref<128x256xf32, #tpu.memory_space<vmem>>, vector<128x256xf32>
    %c5_71 = arith.constant 5 : index
    %c0_72 = arith.constant 0 : index
    %c0_73 = arith.constant 0 : index
    %81 = vector.load %arg2[%c5_71, %c0_72, %c0_73] : memref<9x128x128xbf16, #tpu.memory_space<vmem>>, vector<1x128x128xbf16>
    %82 = vector.shape_cast %81 : vector<1x128x128xbf16> to vector<128x128xbf16>
    %83 = arith.truncf %79 : vector<128x256xf32> to vector<128x256xbf16>
    %cst_74 = arith.constant dense<0.000000e+00> : vector<128x256xf32>
    %84 = tpu.matmul %82, %83, %cst_74 {dimension_numbers = #tpu.dot_dimension_numbers<[1], [0], [0], [1], [0, 0, 1, 1], [], []>} : vector<128x128xbf16>, vector<128x256xbf16>, vector<128x256xf32> -> vector<128x256xf32>
    %85 = arith.addf %80, %84 : vector<128x256xf32>
    %c0_75 = arith.constant 0 : index
    %c0_76 = arith.constant 0 : index
    %86 = vector.load %arg9[%c0_75, %c0_76] : memref<128x256xf32, #tpu.memory_space<vmem>>, vector<128x256xf32>
    tpu.vector_store %arg9[%c0_75, %c0_76], %85 {strides = array<i32>} : memref<128x256xf32, #tpu.memory_space<vmem>>, vector<128x256xf32>,
    %c0_77 = arith.constant 0 : index
    %c0_78 = arith.constant 0 : index
    %c0_79 = arith.constant 0 : index
    %87 = vector.load %arg1[%c0_77, %c0_78, %c0_79] : memref<1x128x256xbf16, #tpu.memory_space<vmem>>, vector<1x128x256xbf16>
    %88 = vector.shape_cast %87 : vector<1x128x256xbf16> to vector<128x256xbf16>
    %89 = arith.extf %88 : vector<128x256xbf16> to vector<128x256xf32>
    %c241_i32 = arith.constant 241 : i32
    %90 = tpu.dynamic_rotate %89 by %c241_i32 dim 1 : vector<128x256xf32>, i32 -> vector<128x256xf32>
    %c6 = arith.constant 6 : index
    %c0_80 = arith.constant 0 : index
    %c0_81 = arith.constant 0 : index
    %91 = vector.load %arg6[%c6, %c0_80, %c0_81] : memref<9x1x256xf32, #tpu.memory_space<vmem>>, vector<1x1x256xf32>
    %92 = vector.shape_cast %91 : vector<1x1x256xf32> to vector<1x256xf32>
    %93 = vector.broadcast %92 : vector<1x256xf32> to vector<128x256xf32>
    %94 = arith.mulf %90, %93 : vector<128x256xf32>
    %c0_82 = arith.constant 0 : index
    %c0_83 = arith.constant 0 : index
    %95 = vector.load %arg9[%c0_82, %c0_83] : memref<128x256xf32, #tpu.memory_space<vmem>>, vector<128x256xf32>
    %c6_84 = arith.constant 6 : index
    %c0_85 = arith.constant 0 : index
    %c0_86 = arith.constant 0 : index
    %96 = vector.load %arg2[%c6_84, %c0_85, %c0_86] : memref<9x128x128xbf16, #tpu.memory_space<vmem>>, vector<1x128x128xbf16>
    %97 = vector.shape_cast %96 : vector<1x128x128xbf16> to vector<128x128xbf16>
    %98 = arith.truncf %94 : vector<128x256xf32> to vector<128x256xbf16>
    %cst_87 = arith.constant dense<0.000000e+00> : vector<128x256xf32>
    %99 = tpu.matmul %97, %98, %cst_87 {dimension_numbers = #tpu.dot_dimension_numbers<[1], [0], [0], [1], [0, 0, 1, 1], [], []>} : vector<128x128xbf16>, vector<128x256xbf16>, vector<128x256xf32> -> vector<128x256xf32>
    %100 = arith.addf %95, %99 : vector<128x256xf32>
    %c0_88 = arith.constant 0 : index
    %c0_89 = arith.constant 0 : index
    %101 = vector.load %arg9[%c0_88, %c0_89] : memref<128x256xf32, #tpu.memory_space<vmem>>, vector<128x256xf32>
    tpu.vector_store %arg9[%c0_88, %c0_89], %100 {strides = array<i32>} : memref<128x256xf32, #tpu.memory_space<vmem>>, vector<128x256xf32>,
    %c0_90 = arith.constant 0 : index
    %c0_91 = arith.constant 0 : index
    %c0_92 = arith.constant 0 : index
    %102 = vector.load %arg1[%c0_90, %c0_91, %c0_92] : memref<1x128x256xbf16, #tpu.memory_space<vmem>>, vector<1x128x256xbf16>
    %103 = vector.shape_cast %102 : vector<1x128x256xbf16> to vector<128x256xbf16>
    %104 = arith.extf %103 : vector<128x256xbf16> to vector<128x256xf32>
    %c240_i32 = arith.constant 240 : i32
    %105 = tpu.dynamic_rotate %104 by %c240_i32 dim 1 : vector<128x256xf32>, i32 -> vector<128x256xf32>
    %c7 = arith.constant 7 : index
    %c0_93 = arith.constant 0 : index
    %c0_94 = arith.constant 0 : index
    %106 = vector.load %arg6[%c7, %c0_93, %c0_94] : memref<9x1x256xf32, #tpu.memory_space<vmem>>, vector<1x1x256xf32>
    %107 = vector.shape_cast %106 : vector<1x1x256xf32> to vector<1x256xf32>
    %108 = vector.broadcast %107 : vector<1x256xf32> to vector<128x256xf32>
    %109 = arith.mulf %105, %108 : vector<128x256xf32>
    %c0_95 = arith.constant 0 : index
    %c0_96 = arith.constant 0 : index
    %110 = vector.load %arg9[%c0_95, %c0_96] : memref<128x256xf32, #tpu.memory_space<vmem>>, vector<128x256xf32>
    %c7_97 = arith.constant 7 : index
    %c0_98 = arith.constant 0 : index
    %c0_99 = arith.constant 0 : index
    %111 = vector.load %arg2[%c7_97, %c0_98, %c0_99] : memref<9x128x128xbf16, #tpu.memory_space<vmem>>, vector<1x128x128xbf16>
    %112 = vector.shape_cast %111 : vector<1x128x128xbf16> to vector<128x128xbf16>
    %113 = arith.truncf %109 : vector<128x256xf32> to vector<128x256xbf16>
    %cst_100 = arith.constant dense<0.000000e+00> : vector<128x256xf32>
    %114 = tpu.matmul %112, %113, %cst_100 {dimension_numbers = #tpu.dot_dimension_numbers<[1], [0], [0], [1], [0, 0, 1, 1], [], []>} : vector<128x128xbf16>, vector<128x256xbf16>, vector<128x256xf32> -> vector<128x256xf32>
    %115 = arith.addf %110, %114 : vector<128x256xf32>
    %c0_101 = arith.constant 0 : index
    %c0_102 = arith.constant 0 : index
    %116 = vector.load %arg9[%c0_101, %c0_102] : memref<128x256xf32, #tpu.memory_space<vmem>>, vector<128x256xf32>
    tpu.vector_store %arg9[%c0_101, %c0_102], %115 {strides = array<i32>} : memref<128x256xf32, #tpu.memory_space<vmem>>, vector<128x256xf32>,
    %c0_103 = arith.constant 0 : index
    %c0_104 = arith.constant 0 : index
    %c0_105 = arith.constant 0 : index
    %117 = vector.load %arg1[%c0_103, %c0_104, %c0_105] : memref<1x128x256xbf16, #tpu.memory_space<vmem>>, vector<1x128x256xbf16>
    %118 = vector.shape_cast %117 : vector<1x128x256xbf16> to vector<128x256xbf16>
    %119 = arith.extf %118 : vector<128x256xbf16> to vector<128x256xf32>
    %c239_i32 = arith.constant 239 : i32
    %120 = tpu.dynamic_rotate %119 by %c239_i32 dim 1 : vector<128x256xf32>, i32 -> vector<128x256xf32>
    %c8 = arith.constant 8 : index
    %c0_106 = arith.constant 0 : index
    %c0_107 = arith.constant 0 : index
    %121 = vector.load %arg6[%c8, %c0_106, %c0_107] : memref<9x1x256xf32, #tpu.memory_space<vmem>>, vector<1x1x256xf32>
    %122 = vector.shape_cast %121 : vector<1x1x256xf32> to vector<1x256xf32>
    %123 = vector.broadcast %122 : vector<1x256xf32> to vector<128x256xf32>
    %124 = arith.mulf %120, %123 : vector<128x256xf32>
    %c0_108 = arith.constant 0 : index
    %c0_109 = arith.constant 0 : index
    %125 = vector.load %arg9[%c0_108, %c0_109] : memref<128x256xf32, #tpu.memory_space<vmem>>, vector<128x256xf32>
    %c8_110 = arith.constant 8 : index
    %c0_111 = arith.constant 0 : index
    %c0_112 = arith.constant 0 : index
    %126 = vector.load %arg2[%c8_110, %c0_111, %c0_112] : memref<9x128x128xbf16, #tpu.memory_space<vmem>>, vector<1x128x128xbf16>
    %127 = vector.shape_cast %126 : vector<1x128x128xbf16> to vector<128x128xbf16>
    %128 = arith.truncf %124 : vector<128x256xf32> to vector<128x256xbf16>
    %cst_113 = arith.constant dense<0.000000e+00> : vector<128x256xf32>
    %129 = tpu.matmul %127, %128, %cst_113 {dimension_numbers = #tpu.dot_dimension_numbers<[1], [0], [0], [1], [0, 0, 1, 1], [], []>} : vector<128x128xbf16>, vector<128x256xbf16>, vector<128x256xf32> -> vector<128x256xf32>
    %130 = arith.addf %125, %129 : vector<128x256xf32>
    %c0_114 = arith.constant 0 : index
    %c0_115 = arith.constant 0 : index
    %131 = vector.load %arg9[%c0_114, %c0_115] : memref<128x256xf32, #tpu.memory_space<vmem>>, vector<128x256xf32>
    tpu.vector_store %arg9[%c0_114, %c0_115], %130 {strides = array<i32>} : memref<128x256xf32, #tpu.memory_space<vmem>>, vector<128x256xf32>,
    %c0_116 = arith.constant 0 : index
    %c0_117 = arith.constant 0 : index
    %132 = vector.load %arg9[%c0_116, %c0_117] : memref<128x256xf32, #tpu.memory_space<vmem>>, vector<128x256xf32>
    %c0_118 = arith.constant 0 : index
    %c0_119 = arith.constant 0 : index
    %133 = vector.load %arg3[%c0_118, %c0_119] : memref<128x1xf32, #tpu.memory_space<vmem>>, vector<128x1xf32>
    %134 = vector.broadcast %133 : vector<128x1xf32> to vector<128x256xf32>
    %135 = arith.addf %132, %134 : vector<128x256xf32>
    %cst_120 = arith.constant 0.000000e+00 : f32
    %136 = vector.broadcast %cst_120 : f32 to vector<128x256xf32>
    %137 = arith.maximumf %135, %136 : vector<128x256xf32>
    %c0_121 = arith.constant 0 : index
    %c0_122 = arith.constant 0 : index
    %138 = vector.load %arg9[%c0_121, %c0_122] : memref<128x256xf32, #tpu.memory_space<vmem>>, vector<128x256xf32>
    tpu.vector_store %arg9[%c0_121, %c0_122], %137 {strides = array<i32>} : memref<128x256xf32, #tpu.memory_space<vmem>>, vector<128x256xf32>,
    %cst_123 = arith.constant 0.000000e+00 : f32
    %139 = vector.broadcast %cst_123 : f32 to vector<64x256xf32>
    %c0_124 = arith.constant 0 : index
    %c0_125 = arith.constant 0 : index
    %140 = vector.load %arg10[%c0_124, %c0_125] : memref<64x256xf32, #tpu.memory_space<vmem>>, vector<64x256xf32>
    tpu.vector_store %arg10[%c0_124, %c0_125], %139 {strides = array<i32>} : memref<64x256xf32, #tpu.memory_space<vmem>>, vector<64x256xf32>,
    %c0_126 = arith.constant 0 : index
    %c0_127 = arith.constant 0 : index
    %141 = vector.load %arg9[%c0_126, %c0_127] : memref<128x256xf32, #tpu.memory_space<vmem>>, vector<128x256xf32>
    %c17_i32_128 = arith.constant 17 : i32
    %142 = tpu.dynamic_rotate %141 by %c17_i32_128 dim 1 : vector<128x256xf32>, i32 -> vector<128x256xf32>
    %c0_129 = arith.constant 0 : index
    %c0_130 = arith.constant 0 : index
    %c0_131 = arith.constant 0 : index
    %143 = vector.load %arg6[%c0_129, %c0_130, %c0_131] : memref<9x1x256xf32, #tpu.memory_space<vmem>>, vector<1x1x256xf32>
    %144 = vector.shape_cast %143 : vector<1x1x256xf32> to vector<1x256xf32>
    %145 = vector.broadcast %144 : vector<1x256xf32> to vector<128x256xf32>
    %146 = arith.mulf %142, %145 : vector<128x256xf32>
    %c0_132 = arith.constant 0 : index
    %c0_133 = arith.constant 0 : index
    %147 = vector.load %arg10[%c0_132, %c0_133] : memref<64x256xf32, #tpu.memory_space<vmem>>, vector<64x256xf32>
    %c0_134 = arith.constant 0 : index
    %c0_135 = arith.constant 0 : index
    %c0_136 = arith.constant 0 : index
    %148 = vector.load %arg4[%c0_134, %c0_135, %c0_136] : memref<9x64x128xbf16, #tpu.memory_space<vmem>>, vector<1x64x128xbf16>
    %149 = vector.shape_cast %148 : vector<1x64x128xbf16> to vector<64x128xbf16>
    %150 = arith.truncf %146 : vector<128x256xf32> to vector<128x256xbf16>
    %cst_137 = arith.constant dense<0.000000e+00> : vector<64x256xf32>
    %151 = tpu.matmul %149, %150, %cst_137 {dimension_numbers = #tpu.dot_dimension_numbers<[1], [0], [0], [1], [0, 0, 1, 1], [], []>} : vector<64x128xbf16>, vector<128x256xbf16>, vector<64x256xf32> -> vector<64x256xf32>
    %152 = arith.addf %147, %151 : vector<64x256xf32>
    %c0_138 = arith.constant 0 : index
    %c0_139 = arith.constant 0 : index
    %153 = vector.load %arg10[%c0_138, %c0_139] : memref<64x256xf32, #tpu.memory_space<vmem>>, vector<64x256xf32>
    tpu.vector_store %arg10[%c0_138, %c0_139], %152 {strides = array<i32>} : memref<64x256xf32, #tpu.memory_space<vmem>>, vector<64x256xf32>,
    %c0_140 = arith.constant 0 : index
    %c0_141 = arith.constant 0 : index
    %154 = vector.load %arg9[%c0_140, %c0_141] : memref<128x256xf32, #tpu.memory_space<vmem>>, vector<128x256xf32>
    %c16_i32_142 = arith.constant 16 : i32
    %155 = tpu.dynamic_rotate %154 by %c16_i32_142 dim 1 : vector<128x256xf32>, i32 -> vector<128x256xf32>
    %c1_143 = arith.constant 1 : index
    %c0_144 = arith.constant 0 : index
    %c0_145 = arith.constant 0 : index
    %156 = vector.load %arg6[%c1_143, %c0_144, %c0_145] : memref<9x1x256xf32, #tpu.memory_space<vmem>>, vector<1x1x256xf32>
    %157 = vector.shape_cast %156 : vector<1x1x256xf32> to vector<1x256xf32>
    %158 = vector.broadcast %157 : vector<1x256xf32> to vector<128x256xf32>
    %159 = arith.mulf %155, %158 : vector<128x256xf32>
    %c0_146 = arith.constant 0 : index
    %c0_147 = arith.constant 0 : index
    %160 = vector.load %arg10[%c0_146, %c0_147] : memref<64x256xf32, #tpu.memory_space<vmem>>, vector<64x256xf32>
    %c1_148 = arith.constant 1 : index
    %c0_149 = arith.constant 0 : index
    %c0_150 = arith.constant 0 : index
    %161 = vector.load %arg4[%c1_148, %c0_149, %c0_150] : memref<9x64x128xbf16, #tpu.memory_space<vmem>>, vector<1x64x128xbf16>
    %162 = vector.shape_cast %161 : vector<1x64x128xbf16> to vector<64x128xbf16>
    %163 = arith.truncf %159 : vector<128x256xf32> to vector<128x256xbf16>
    %cst_151 = arith.constant dense<0.000000e+00> : vector<64x256xf32>
    %164 = tpu.matmul %162, %163, %cst_151 {dimension_numbers = #tpu.dot_dimension_numbers<[1], [0], [0], [1], [0, 0, 1, 1], [], []>} : vector<64x128xbf16>, vector<128x256xbf16>, vector<64x256xf32> -> vector<64x256xf32>
    %165 = arith.addf %160, %164 : vector<64x256xf32>
    %c0_152 = arith.constant 0 : index
    %c0_153 = arith.constant 0 : index
    %166 = vector.load %arg10[%c0_152, %c0_153] : memref<64x256xf32, #tpu.memory_space<vmem>>, vector<64x256xf32>
    tpu.vector_store %arg10[%c0_152, %c0_153], %165 {strides = array<i32>} : memref<64x256xf32, #tpu.memory_space<vmem>>, vector<64x256xf32>,
    %c0_154 = arith.constant 0 : index
    %c0_155 = arith.constant 0 : index
    %167 = vector.load %arg9[%c0_154, %c0_155] : memref<128x256xf32, #tpu.memory_space<vmem>>, vector<128x256xf32>
    %c15_i32_156 = arith.constant 15 : i32
    %168 = tpu.dynamic_rotate %167 by %c15_i32_156 dim 1 : vector<128x256xf32>, i32 -> vector<128x256xf32>
    %c2_157 = arith.constant 2 : index
    %c0_158 = arith.constant 0 : index
    %c0_159 = arith.constant 0 : index
    %169 = vector.load %arg6[%c2_157, %c0_158, %c0_159] : memref<9x1x256xf32, #tpu.memory_space<vmem>>, vector<1x1x256xf32>
    %170 = vector.shape_cast %169 : vector<1x1x256xf32> to vector<1x256xf32>
    %171 = vector.broadcast %170 : vector<1x256xf32> to vector<128x256xf32>
    %172 = arith.mulf %168, %171 : vector<128x256xf32>
    %c0_160 = arith.constant 0 : index
    %c0_161 = arith.constant 0 : index
    %173 = vector.load %arg10[%c0_160, %c0_161] : memref<64x256xf32, #tpu.memory_space<vmem>>, vector<64x256xf32>
    %c2_162 = arith.constant 2 : index
    %c0_163 = arith.constant 0 : index
    %c0_164 = arith.constant 0 : index
    %174 = vector.load %arg4[%c2_162, %c0_163, %c0_164] : memref<9x64x128xbf16, #tpu.memory_space<vmem>>, vector<1x64x128xbf16>
    %175 = vector.shape_cast %174 : vector<1x64x128xbf16> to vector<64x128xbf16>
    %176 = arith.truncf %172 : vector<128x256xf32> to vector<128x256xbf16>
    %cst_165 = arith.constant dense<0.000000e+00> : vector<64x256xf32>
    %177 = tpu.matmul %175, %176, %cst_165 {dimension_numbers = #tpu.dot_dimension_numbers<[1], [0], [0], [1], [0, 0, 1, 1], [], []>} : vector<64x128xbf16>, vector<128x256xbf16>, vector<64x256xf32> -> vector<64x256xf32>
    %178 = arith.addf %173, %177 : vector<64x256xf32>
    %c0_166 = arith.constant 0 : index
    %c0_167 = arith.constant 0 : index
    %179 = vector.load %arg10[%c0_166, %c0_167] : memref<64x256xf32, #tpu.memory_space<vmem>>, vector<64x256xf32>
    tpu.vector_store %arg10[%c0_166, %c0_167], %178 {strides = array<i32>} : memref<64x256xf32, #tpu.memory_space<vmem>>, vector<64x256xf32>,
    %c0_168 = arith.constant 0 : index
    %c0_169 = arith.constant 0 : index
    %180 = vector.load %arg9[%c0_168, %c0_169] : memref<128x256xf32, #tpu.memory_space<vmem>>, vector<128x256xf32>
    %c1_i32_170 = arith.constant 1 : i32
    %181 = tpu.dynamic_rotate %180 by %c1_i32_170 dim 1 : vector<128x256xf32>, i32 -> vector<128x256xf32>
    %c3_171 = arith.constant 3 : index
    %c0_172 = arith.constant 0 : index
    %c0_173 = arith.constant 0 : index
    %182 = vector.load %arg6[%c3_171, %c0_172, %c0_173] : memref<9x1x256xf32, #tpu.memory_space<vmem>>, vector<1x1x256xf32>
    %183 = vector.shape_cast %182 : vector<1x1x256xf32> to vector<1x256xf32>
    %184 = vector.broadcast %183 : vector<1x256xf32> to vector<128x256xf32>
    %185 = arith.mulf %181, %184 : vector<128x256xf32>
    %c0_174 = arith.constant 0 : index
    %c0_175 = arith.constant 0 : index
    %186 = vector.load %arg10[%c0_174, %c0_175] : memref<64x256xf32, #tpu.memory_space<vmem>>, vector<64x256xf32>
    %c3_176 = arith.constant 3 : index
    %c0_177 = arith.constant 0 : index
    %c0_178 = arith.constant 0 : index
    %187 = vector.load %arg4[%c3_176, %c0_177, %c0_178] : memref<9x64x128xbf16, #tpu.memory_space<vmem>>, vector<1x64x128xbf16>
    %188 = vector.shape_cast %187 : vector<1x64x128xbf16> to vector<64x128xbf16>
    %189 = arith.truncf %185 : vector<128x256xf32> to vector<128x256xbf16>
    %cst_179 = arith.constant dense<0.000000e+00> : vector<64x256xf32>
    %190 = tpu.matmul %188, %189, %cst_179 {dimension_numbers = #tpu.dot_dimension_numbers<[1], [0], [0], [1], [0, 0, 1, 1], [], []>} : vector<64x128xbf16>, vector<128x256xbf16>, vector<64x256xf32> -> vector<64x256xf32>
    %191 = arith.addf %186, %190 : vector<64x256xf32>
    %c0_180 = arith.constant 0 : index
    %c0_181 = arith.constant 0 : index
    %192 = vector.load %arg10[%c0_180, %c0_181] : memref<64x256xf32, #tpu.memory_space<vmem>>, vector<64x256xf32>
    tpu.vector_store %arg10[%c0_180, %c0_181], %191 {strides = array<i32>} : memref<64x256xf32, #tpu.memory_space<vmem>>, vector<64x256xf32>,
    %c0_182 = arith.constant 0 : index
    %c0_183 = arith.constant 0 : index
    %193 = vector.load %arg9[%c0_182, %c0_183] : memref<128x256xf32, #tpu.memory_space<vmem>>, vector<128x256xf32>
    %c0_184 = arith.constant 0 : index
    %c0_185 = arith.constant 0 : index
    %194 = vector.load %arg10[%c0_184, %c0_185] : memref<64x256xf32, #tpu.memory_space<vmem>>, vector<64x256xf32>
    %c4_186 = arith.constant 4 : index
    %c0_187 = arith.constant 0 : index
    %c0_188 = arith.constant 0 : index
    %195 = vector.load %arg4[%c4_186, %c0_187, %c0_188] : memref<9x64x128xbf16, #tpu.memory_space<vmem>>, vector<1x64x128xbf16>
    %196 = vector.shape_cast %195 : vector<1x64x128xbf16> to vector<64x128xbf16>
    %197 = arith.truncf %193 : vector<128x256xf32> to vector<128x256xbf16>
    %cst_189 = arith.constant dense<0.000000e+00> : vector<64x256xf32>
    %198 = tpu.matmul %196, %197, %cst_189 {dimension_numbers = #tpu.dot_dimension_numbers<[1], [0], [0], [1], [0, 0, 1, 1], [], []>} : vector<64x128xbf16>, vector<128x256xbf16>, vector<64x256xf32> -> vector<64x256xf32>
    %199 = arith.addf %194, %198 : vector<64x256xf32>
    %c0_190 = arith.constant 0 : index
    %c0_191 = arith.constant 0 : index
    %200 = vector.load %arg10[%c0_190, %c0_191] : memref<64x256xf32, #tpu.memory_space<vmem>>, vector<64x256xf32>
    tpu.vector_store %arg10[%c0_190, %c0_191], %199 {strides = array<i32>} : memref<64x256xf32, #tpu.memory_space<vmem>>, vector<64x256xf32>,
    %c0_192 = arith.constant 0 : index
    %c0_193 = arith.constant 0 : index
    %201 = vector.load %arg9[%c0_192, %c0_193] : memref<128x256xf32, #tpu.memory_space<vmem>>, vector<128x256xf32>
    %c255_i32_194 = arith.constant 255 : i32
    %202 = tpu.dynamic_rotate %201 by %c255_i32_194 dim 1 : vector<128x256xf32>, i32 -> vector<128x256xf32>
    %c5_195 = arith.constant 5 : index
    %c0_196 = arith.constant 0 : index
    %c0_197 = arith.constant 0 : index
    %203 = vector.load %arg6[%c5_195, %c0_196, %c0_197] : memref<9x1x256xf32, #tpu.memory_space<vmem>>, vector<1x1x256xf32>
    %204 = vector.shape_cast %203 : vector<1x1x256xf32> to vector<1x256xf32>
    %205 = vector.broadcast %204 : vector<1x256xf32> to vector<128x256xf32>
    %206 = arith.mulf %202, %205 : vector<128x256xf32>
    %c0_198 = arith.constant 0 : index
    %c0_199 = arith.constant 0 : index
    %207 = vector.load %arg10[%c0_198, %c0_199] : memref<64x256xf32, #tpu.memory_space<vmem>>, vector<64x256xf32>
    %c5_200 = arith.constant 5 : index
    %c0_201 = arith.constant 0 : index
    %c0_202 = arith.constant 0 : index
    %208 = vector.load %arg4[%c5_200, %c0_201, %c0_202] : memref<9x64x128xbf16, #tpu.memory_space<vmem>>, vector<1x64x128xbf16>
    %209 = vector.shape_cast %208 : vector<1x64x128xbf16> to vector<64x128xbf16>
    %210 = arith.truncf %206 : vector<128x256xf32> to vector<128x256xbf16>
    %cst_203 = arith.constant dense<0.000000e+00> : vector<64x256xf32>
    %211 = tpu.matmul %209, %210, %cst_203 {dimension_numbers = #tpu.dot_dimension_numbers<[1], [0], [0], [1], [0, 0, 1, 1], [], []>} : vector<64x128xbf16>, vector<128x256xbf16>, vector<64x256xf32> -> vector<64x256xf32>
    %212 = arith.addf %207, %211 : vector<64x256xf32>
    %c0_204 = arith.constant 0 : index
    %c0_205 = arith.constant 0 : index
    %213 = vector.load %arg10[%c0_204, %c0_205] : memref<64x256xf32, #tpu.memory_space<vmem>>, vector<64x256xf32>
    tpu.vector_store %arg10[%c0_204, %c0_205], %212 {strides = array<i32>} : memref<64x256xf32, #tpu.memory_space<vmem>>, vector<64x256xf32>,
    %c0_206 = arith.constant 0 : index
    %c0_207 = arith.constant 0 : index
    %214 = vector.load %arg9[%c0_206, %c0_207] : memref<128x256xf32, #tpu.memory_space<vmem>>, vector<128x256xf32>
    %c241_i32_208 = arith.constant 241 : i32
    %215 = tpu.dynamic_rotate %214 by %c241_i32_208 dim 1 : vector<128x256xf32>, i32 -> vector<128x256xf32>
    %c6_209 = arith.constant 6 : index
    %c0_210 = arith.constant 0 : index
    %c0_211 = arith.constant 0 : index
    %216 = vector.load %arg6[%c6_209, %c0_210, %c0_211] : memref<9x1x256xf32, #tpu.memory_space<vmem>>, vector<1x1x256xf32>
    %217 = vector.shape_cast %216 : vector<1x1x256xf32> to vector<1x256xf32>
    %218 = vector.broadcast %217 : vector<1x256xf32> to vector<128x256xf32>
    %219 = arith.mulf %215, %218 : vector<128x256xf32>
    %c0_212 = arith.constant 0 : index
    %c0_213 = arith.constant 0 : index
    %220 = vector.load %arg10[%c0_212, %c0_213] : memref<64x256xf32, #tpu.memory_space<vmem>>, vector<64x256xf32>
    %c6_214 = arith.constant 6 : index
    %c0_215 = arith.constant 0 : index
    %c0_216 = arith.constant 0 : index
    %221 = vector.load %arg4[%c6_214, %c0_215, %c0_216] : memref<9x64x128xbf16, #tpu.memory_space<vmem>>, vector<1x64x128xbf16>
    %222 = vector.shape_cast %221 : vector<1x64x128xbf16> to vector<64x128xbf16>
    %223 = arith.truncf %219 : vector<128x256xf32> to vector<128x256xbf16>
    %cst_217 = arith.constant dense<0.000000e+00> : vector<64x256xf32>
    %224 = tpu.matmul %222, %223, %cst_217 {dimension_numbers = #tpu.dot_dimension_numbers<[1], [0], [0], [1], [0, 0, 1, 1], [], []>} : vector<64x128xbf16>, vector<128x256xbf16>, vector<64x256xf32> -> vector<64x256xf32>
    %225 = arith.addf %220, %224 : vector<64x256xf32>
    %c0_218 = arith.constant 0 : index
    %c0_219 = arith.constant 0 : index
    %226 = vector.load %arg10[%c0_218, %c0_219] : memref<64x256xf32, #tpu.memory_space<vmem>>, vector<64x256xf32>
    tpu.vector_store %arg10[%c0_218, %c0_219], %225 {strides = array<i32>} : memref<64x256xf32, #tpu.memory_space<vmem>>, vector<64x256xf32>,
    %c0_220 = arith.constant 0 : index
    %c0_221 = arith.constant 0 : index
    %227 = vector.load %arg9[%c0_220, %c0_221] : memref<128x256xf32, #tpu.memory_space<vmem>>, vector<128x256xf32>
    %c240_i32_222 = arith.constant 240 : i32
    %228 = tpu.dynamic_rotate %227 by %c240_i32_222 dim 1 : vector<128x256xf32>, i32 -> vector<128x256xf32>
    %c7_223 = arith.constant 7 : index
    %c0_224 = arith.constant 0 : index
    %c0_225 = arith.constant 0 : index
    %229 = vector.load %arg6[%c7_223, %c0_224, %c0_225] : memref<9x1x256xf32, #tpu.memory_space<vmem>>, vector<1x1x256xf32>
    %230 = vector.shape_cast %229 : vector<1x1x256xf32> to vector<1x256xf32>
    %231 = vector.broadcast %230 : vector<1x256xf32> to vector<128x256xf32>
    %232 = arith.mulf %228, %231 : vector<128x256xf32>
    %c0_226 = arith.constant 0 : index
    %c0_227 = arith.constant 0 : index
    %233 = vector.load %arg10[%c0_226, %c0_227] : memref<64x256xf32, #tpu.memory_space<vmem>>, vector<64x256xf32>
    %c7_228 = arith.constant 7 : index
    %c0_229 = arith.constant 0 : index
    %c0_230 = arith.constant 0 : index
    %234 = vector.load %arg4[%c7_228, %c0_229, %c0_230] : memref<9x64x128xbf16, #tpu.memory_space<vmem>>, vector<1x64x128xbf16>
    %235 = vector.shape_cast %234 : vector<1x64x128xbf16> to vector<64x128xbf16>
    %236 = arith.truncf %232 : vector<128x256xf32> to vector<128x256xbf16>
    %cst_231 = arith.constant dense<0.000000e+00> : vector<64x256xf32>
    %237 = tpu.matmul %235, %236, %cst_231 {dimension_numbers = #tpu.dot_dimension_numbers<[1], [0], [0], [1], [0, 0, 1, 1], [], []>} : vector<64x128xbf16>, vector<128x256xbf16>, vector<64x256xf32> -> vector<64x256xf32>
    %238 = arith.addf %233, %237 : vector<64x256xf32>
    %c0_232 = arith.constant 0 : index
    %c0_233 = arith.constant 0 : index
    %239 = vector.load %arg10[%c0_232, %c0_233] : memref<64x256xf32, #tpu.memory_space<vmem>>, vector<64x256xf32>
    tpu.vector_store %arg10[%c0_232, %c0_233], %238 {strides = array<i32>} : memref<64x256xf32, #tpu.memory_space<vmem>>, vector<64x256xf32>,
    %c0_234 = arith.constant 0 : index
    %c0_235 = arith.constant 0 : index
    %240 = vector.load %arg9[%c0_234, %c0_235] : memref<128x256xf32, #tpu.memory_space<vmem>>, vector<128x256xf32>
    %c239_i32_236 = arith.constant 239 : i32
    %241 = tpu.dynamic_rotate %240 by %c239_i32_236 dim 1 : vector<128x256xf32>, i32 -> vector<128x256xf32>
    %c8_237 = arith.constant 8 : index
    %c0_238 = arith.constant 0 : index
    %c0_239 = arith.constant 0 : index
    %242 = vector.load %arg6[%c8_237, %c0_238, %c0_239] : memref<9x1x256xf32, #tpu.memory_space<vmem>>, vector<1x1x256xf32>
    %243 = vector.shape_cast %242 : vector<1x1x256xf32> to vector<1x256xf32>
    %244 = vector.broadcast %243 : vector<1x256xf32> to vector<128x256xf32>
    %245 = arith.mulf %241, %244 : vector<128x256xf32>
    %c0_240 = arith.constant 0 : index
    %c0_241 = arith.constant 0 : index
    %246 = vector.load %arg10[%c0_240, %c0_241] : memref<64x256xf32, #tpu.memory_space<vmem>>, vector<64x256xf32>
    %c8_242 = arith.constant 8 : index
    %c0_243 = arith.constant 0 : index
    %c0_244 = arith.constant 0 : index
    %247 = vector.load %arg4[%c8_242, %c0_243, %c0_244] : memref<9x64x128xbf16, #tpu.memory_space<vmem>>, vector<1x64x128xbf16>
    %248 = vector.shape_cast %247 : vector<1x64x128xbf16> to vector<64x128xbf16>
    %249 = arith.truncf %245 : vector<128x256xf32> to vector<128x256xbf16>
    %cst_245 = arith.constant dense<0.000000e+00> : vector<64x256xf32>
    %250 = tpu.matmul %248, %249, %cst_245 {dimension_numbers = #tpu.dot_dimension_numbers<[1], [0], [0], [1], [0, 0, 1, 1], [], []>} : vector<64x128xbf16>, vector<128x256xbf16>, vector<64x256xf32> -> vector<64x256xf32>
    %251 = arith.addf %246, %250 : vector<64x256xf32>
    %c0_246 = arith.constant 0 : index
    %c0_247 = arith.constant 0 : index
    %252 = vector.load %arg10[%c0_246, %c0_247] : memref<64x256xf32, #tpu.memory_space<vmem>>, vector<64x256xf32>
    tpu.vector_store %arg10[%c0_246, %c0_247], %251 {strides = array<i32>} : memref<64x256xf32, #tpu.memory_space<vmem>>, vector<64x256xf32>,
    %c0_248 = arith.constant 0 : index
    %c0_249 = arith.constant 0 : index
    %253 = vector.load %arg10[%c0_248, %c0_249] : memref<64x256xf32, #tpu.memory_space<vmem>>, vector<64x256xf32>
    %c0_250 = arith.constant 0 : index
    %c0_251 = arith.constant 0 : index
    %254 = vector.load %arg5[%c0_250, %c0_251] : memref<64x1xf32, #tpu.memory_space<vmem>>, vector<64x1xf32>
    %255 = vector.broadcast %254 : vector<64x1xf32> to vector<64x256xf32>
    %256 = arith.addf %253, %255 : vector<64x256xf32>
    %257 = vector.extract_strided_slice %256 {offsets = [0, 0], sizes = [32, 256], strides = [1, 1]} : vector<64x256xf32> to vector<32x256xf32>
    %258 = vector.extract_strided_slice %256 {offsets = [32, 0], sizes = [32, 256], strides = [1, 1]} : vector<64x256xf32> to vector<32x256xf32>
    %c0_252 = arith.constant 0 : index
    %c0_253 = arith.constant 0 : index
    %c0_254 = arith.constant 0 : index
    %259 = vector.load %arg7[%c0_252, %c0_253, %c0_254] : memref<1x32x256xf32, #tpu.memory_space<vmem>>, vector<1x32x256xf32>
    %260 = vector.shape_cast %259 : vector<1x32x256xf32> to vector<32x256xf32>
    %cst_255 = arith.constant dense<0.000000e+00> : vector<32xf32>
    %261 = vector.multi_reduction <add>, %260, %cst_255 [1] : vector<32x256xf32> to vector<32xf32>
    %262 = vector.shape_cast %261 : vector<32xf32> to vector<32x1xf32>
    %cst_256 = arith.constant 3.906250e-03 : f32
    %263 = vector.broadcast %cst_256 : f32 to vector<32x1xf32>
    %264 = arith.mulf %262, %263 : vector<32x1xf32>
    %265 = vector.broadcast %264 : vector<32x1xf32> to vector<32x256xf32>
    %266 = arith.subf %260, %265 : vector<32x256xf32>
    %267 = arith.mulf %266, %266 : vector<32x256xf32>
    %cst_257 = arith.constant dense<0.000000e+00> : vector<32xf32>
    %268 = vector.multi_reduction <add>, %267, %cst_257 [1] : vector<32x256xf32> to vector<32xf32>
    %269 = vector.shape_cast %268 : vector<32xf32> to vector<32x1xf32>
    %cst_258 = arith.constant 3.906250e-03 : f32
    %270 = vector.broadcast %cst_258 : f32 to vector<32x1xf32>
    %271 = arith.mulf %269, %270 : vector<32x1xf32>
    %cst_259 = arith.constant 9.99999974E-6 : f32
    %272 = vector.broadcast %cst_259 : f32 to vector<32x1xf32>
    %273 = arith.addf %271, %272 : vector<32x1xf32>
    %274 = math.rsqrt %273 : vector<32x1xf32>
    %275 = vector.broadcast %274 : vector<32x1xf32> to vector<32x256xf32>
    %276 = arith.mulf %266, %275 : vector<32x256xf32>
    %cst_260 = arith.constant 1.000000e+00 : f32
    %277 = vector.broadcast %cst_260 : f32 to vector<32x256xf32>
    %278 = arith.addf %277, %257 : vector<32x256xf32>
    %279 = arith.mulf %276, %278 : vector<32x256xf32>
    %280 = arith.addf %279, %258 : vector<32x256xf32>
    %c0_261 = arith.constant 0 : index
    %c0_262 = arith.constant 0 : index
    %c0_263 = arith.constant 0 : index
    %281 = vector.load %arg8[%c0_261, %c0_262, %c0_263] : memref<1x32x256xf32, #tpu.memory_space<vmem>>, vector<1x32x256xf32>
    %282 = vector.shape_cast %281 : vector<1x32x256xf32> to vector<32x256xf32>
    %283 = vector.shape_cast %280 : vector<32x256xf32> to vector<1x32x256xf32>
    tpu.vector_store %arg8[%c0_261, %c0_262, %c0_263], %283 {strides = array<i32>} : memref<1x32x256xf32, #tpu.memory_space<vmem>>, vector<1x32x256xf32>,
    return
  }
  func.func @transform_0(%arg0: i32) -> (i32, i32, i32) {
    %c0_i32 = arith.constant 0 : i32
    %c0_i32_0 = arith.constant 0 : i32
    %c0_i32_1 = arith.constant 0 : i32
    return %arg0, %c0_i32, %c0_i32_0 : i32, i32, i32
  }
  func.func @transform_1(%arg0: i32) -> (i32, i32, i32) {
    %c0_i32 = arith.constant 0 : i32
    %c0_i32_0 = arith.constant 0 : i32
    %c0_i32_1 = arith.constant 0 : i32
    %c0_i32_2 = arith.constant 0 : i32
    return %c0_i32, %c0_i32_0, %c0_i32_1 : i32, i32, i32
  }
  func.func @transform_2(%arg0: i32) -> (i32, i32) {
    %c0_i32 = arith.constant 0 : i32
    %c0_i32_0 = arith.constant 0 : i32
    %c0_i32_1 = arith.constant 0 : i32
    return %c0_i32, %c0_i32_0 : i32, i32
  }
  func.func @transform_3(%arg0: i32) -> (i32, i32, i32) {
    %c0_i32 = arith.constant 0 : i32
    %c0_i32_0 = arith.constant 0 : i32
    %c0_i32_1 = arith.constant 0 : i32
    %c0_i32_2 = arith.constant 0 : i32
    return %c0_i32, %c0_i32_0, %c0_i32_1 : i32, i32, i32
  }
  func.func @transform_4(%arg0: i32) -> (i32, i32) {
    %c0_i32 = arith.constant 0 : i32
    %c0_i32_0 = arith.constant 0 : i32
    %c0_i32_1 = arith.constant 0 : i32
    return %c0_i32, %c0_i32_0 : i32, i32
  }
  func.func @transform_5(%arg0: i32) -> (i32, i32, i32) {
    %c0_i32 = arith.constant 0 : i32
    %c0_i32_0 = arith.constant 0 : i32
    %c0_i32_1 = arith.constant 0 : i32
    %c0_i32_2 = arith.constant 0 : i32
    return %c0_i32, %c0_i32_0, %c0_i32_1 : i32, i32, i32
  }
  func.func @transform_6(%arg0: i32) -> (i32, i32, i32) {
    %c0_i32 = arith.constant 0 : i32
    %c0_i32_0 = arith.constant 0 : i32
    %c0_i32_1 = arith.constant 0 : i32
    return %arg0, %c0_i32, %c0_i32_0 : i32, i32, i32
  }
  func.func @transform_7(%arg0: i32) -> (i32, i32, i32) {
    %c0_i32 = arith.constant 0 : i32
    %c0_i32_0 = arith.constant 0 : i32
    %c0_i32_1 = arith.constant 0 : i32
    return %arg0, %c0_i32, %c0_i32_0 : i32, i32, i32
  }
}

</mosaic_0001>

<llo_original>
// kernel: spade_forward.1
$region0: #{spade_forward.1}
  #allocation0 [shape = 'u32[]', space=smem, size = 0x4, offset = 0x4, fixed_abs, tag = 'smem constant byte address 0x4 - core index']
  #allocation1 [shape = 'u32[144,128]{1,0:T(1,128)}', space=vmem, size = 0x12000, scoped, tag = 'internal scratch']
  #allocation2 [shape = 'f32[128,256]{1,0:T(8,128)}', space=vmem, size = 0x20000, scoped, tag = 'scratch operand']
  #allocation3 [shape = 'f32[64,256]{1,0:T(8,128)}', space=vmem, size = 0x10000, scoped, tag = 'scratch operand']
  %s0 = inlined_call_operand.vmem [shape: bf16[2,128,256], index: 0, kind: input, shape index: {}]
  %s1 = inlined_call_operand.vmem [shape: bf16[9,128,128], index: 1, kind: input, shape index: {}]
  %s2 = inlined_call_operand.vmem [shape: f32[128,1], index: 2, kind: input, shape index: {}]
  %s3 = inlined_call_operand.vmem [shape: bf16[9,64,128], index: 3, kind: input, shape index: {}]
  %s4 = inlined_call_operand.vmem [shape: f32[64,1], index: 4, kind: input, shape index: {}]
  %s5 = inlined_call_operand.vmem [shape: f32[9,1,256], index: 5, kind: input, shape index: {}]
  %s6 = inlined_call_operand.vmem [shape: f32[2,32,256], index: 6, kind: input, shape index: {}]
  %s7 = inlined_call_operand.vmem [shape: f32[2,32,256], index: 7, kind: output, shape index: {}]
  %s8 = sld [smem:[#allocation0]]
  $region61: #{spade_forward.1} parent=0
    _
  %s10 = ssub.s32 1, %s8
  %s11 = scalar_select 0, %s10, %s8
  loop: start=0, step=1, limit=4
  $region2: #{spade_forward.1} parent=0 // loop_pre_header
    _
  $region3: #{spade_forward.1} parent=0 // loop_header
    %s13 = sphi 0, %s17
    %p14 = scmp.ge.s32.totalorder %s13, 4
    %s23 = sphi 0, %s25
    %s26 = sphi 0, %s23
    %s27 = sphi 0, %s26
    %s43 = sphi 0, %s27
    %s47 = sphi 0, %s47
    %s49 = sphi 0, %s47
    %s50 = sphi 0, %s49
    %s64 = sphi 0, %s50
    %s68 = sphi 0, %s68
    %s70 = sphi 0, %s68
    %s71 = sphi 0, %s70
    %s85 = sphi 0, %s71
    %s89 = sphi 0, %s89
    %s91 = sphi 0, %s89
    %s92 = sphi 0, %s91
    %s106 = sphi 0, %s92
    %s110 = sphi 0, %s110
    %s112 = sphi 0, %s110
    %s113 = sphi 0, %s112
    %s127 = sphi 0, %s113
    %s131 = sphi 0, %s131
    %s133 = sphi 0, %s131
    %s134 = sphi 0, %s133
    %s148 = sphi 0, %s134
    %s154 = sphi 0, %s156
    %s157 = sphi 0, %s154
    %s158 = sphi 0, %s157
    %s174 = sphi 0, %s158
    %s180 = sphi 0, %s182
    %s183 = sphi 0, %s180
    %s184 = sphi 0, %s183
    %s200 = sphi 0, %s184
  $region4: #{spade_forward.1} parent=0 // loop_header_branch
    %16 = sbr.rel (%p14) target = $region8
  $region5: #{spade_forward.1} parent=0 // loop_body
    %s18 = ssub.s32 %s13, 1
    %s19 = ssub.s32 %s13, 2
    %s20 = sadd.s32 %s13, 1
    %s21 = ssub.s32 %s13, %s20
    %p22 = scmp.eq.s32.totalorder %s21, 0
    %s24 = sadd.s32 %s23, 1
    %s25 = scalar_select %p22, %s23, %s24
    %p28 = pneg %p22
    %p29 = scmp.eq.s32.totalorder %s13, 1
    %p30 = por %p28, %p29
    %p31 = scmp.ne.s32.totalorder %s23, %s26
    %p32 = scmp.eq.s32.totalorder %s13, 0
    %p33 = por %p31, %p32
    %p34 = scmp.ne.s32.totalorder %s23, %s26
    %p35 = scmp.eq.s32.totalorder %s18, 1
    %p36 = por %p34, %p35
    %p37 = scmp.ne.s32.totalorder %s26, %s27
    %p38 = scmp.eq.s32.totalorder %s18, 0
    %p39 = por %p37, %p38
    %p40 = scmp.ne.s32.totalorder %s26, %s27
    %p41 = scmp.eq.s32.totalorder %s19, 1
    %p42 = por %p40, %p41
    %p44 = scmp.ne.s32.totalorder %s27, %s43
    %p45 = scmp.eq.s32.totalorder %s19, 0
    %p46 = por %p44, %p45
    %s48 = sadd.s32 %s47, 1
    %p51 = scmp.eq.s32.totalorder %s13, 1
    %p52 = scmp.ne.s32.totalorder %s47, %s49
    %p53 = scmp.eq.s32.totalorder %s13, 0
    %p54 = por %p52, %p53
    %p55 = scmp.ne.s32.totalorder %s47, %s49
    %p56 = scmp.eq.s32.totalorder %s18, 1
    %p57 = por %p55, %p56
    %p58 = scmp.ne.s32.totalorder %s49, %s50
    %p59 = scmp.eq.s32.totalorder %s18, 0
    %p60 = por %p58, %p59
    %p61 = scmp.ne.s32.totalorder %s49, %s50
    %p62 = scmp.eq.s32.totalorder %s19, 1
    %p63 = por %p61, %p62
    %p65 = scmp.ne.s32.totalorder %s50, %s64
    %p66 = scmp.eq.s32.totalorder %s19, 0
    %p67 = por %p65, %p66
    %s69 = sadd.s32 %s68, 1
    %p72 = scmp.eq.s32.totalorder %s13, 1
    %p73 = scmp.ne.s32.totalorder %s68, %s70
    %p74 = scmp.eq.s32.totalorder %s13, 0
    %p75 = por %p73, %p74
    %p76 = scmp.ne.s32.totalorder %s68, %s70
    %p77 = scmp.eq.s32.totalorder %s18, 1
    %p78 = por %p76, %p77
    %p79 = scmp.ne.s32.totalorder %s70, %s71
    %p80 = scmp.eq.s32.totalorder %s18, 0
    %p81 = por %p79, %p80
    %p82 = scmp.ne.s32.totalorder %s70, %s71
    %p83 = scmp.eq.s32.totalorder %s19, 1
    %p84 = por %p82, %p83
    %p86 = scmp.ne.s32.totalorder %s71, %s85
    %p87 = scmp.eq.s32.totalorder %s19, 0
    %p88 = por %p86, %p87
    %s90 = sadd.s32 %s89, 1
    %p93 = scmp.eq.s32.totalorder %s13, 1
    %p94 = scmp.ne.s32.totalorder %s89, %s91
    %p95 = scmp.eq.s32.totalorder %s13, 0
    %p96 = por %p94, %p95
    %p97 = scmp.ne.s32.totalorder %s89, %s91
    %p98 = scmp.eq.s32.totalorder %s18, 1
    %p99 = por %p97, %p98
    %p100 = scmp.ne.s32.totalorder %s91, %s92
    %p101 = scmp.eq.s32.totalorder %s18, 0
    %p102 = por %p100, %p101
    %p103 = scmp.ne.s32.totalorder %s91, %s92
    %p104 = scmp.eq.s32.totalorder %s19, 1
    %p105 = por %p103, %p104
    %p107 = scmp.ne.s32.totalorder %s92, %s106
    %p108 = scmp.eq.s32.totalorder %s19, 0
    %p109 = por %p107, %p108
    %s111 = sadd.s32 %s110, 1
    %p114 = scmp.eq.s32.totalorder %s13, 1
    %p115 = scmp.ne.s32.totalorder %s110, %s112
    %p116 = scmp.eq.s32.totalorder %s13, 0
    %p117 = por %p115, %p116
    %p118 = scmp.ne.s32.totalorder %s110, %s112
    %p119 = scmp.eq.s32.totalorder %s18, 1
    %p120 = por %p118, %p119
    %p121 = scmp.ne.s32.totalorder %s112, %s113
    %p122 = scmp.eq.s32.totalorder %s18, 0
    %p123 = por %p121, %p122
    %p124 = scmp.ne.s32.totalorder %s112, %s113
    %p125 = scmp.eq.s32.totalorder %s19, 1
    %p126 = por %p124, %p125
    %p128 = scmp.ne.s32.totalorder %s113, %s127
    %p129 = scmp.eq.s32.totalorder %s19, 0
    %p130 = por %p128, %p129
    %s132 = sadd.s32 %s131, 1
    %p135 = scmp.eq.s32.totalorder %s13, 1
    %p136 = scmp.ne.s32.totalorder %s131, %s133
    %p137 = scmp.eq.s32.totalorder %s13, 0
    %p138 = por %p136, %p137
    %p139 = scmp.ne.s32.totalorder %s131, %s133
    %p140 = scmp.eq.s32.totalorder %s18, 1
    %p141 = por %p139, %p140
    %p142 = scmp.ne.s32.totalorder %s133, %s134
    %p143 = scmp.eq.s32.totalorder %s18, 0
    %p144 = por %p142, %p143
    %p145 = scmp.ne.s32.totalorder %s133, %s134
    %p146 = scmp.eq.s32.totalorder %s19, 1
    %p147 = por %p145, %p146
    %p149 = scmp.ne.s32.totalorder %s134, %s148
    %p150 = scmp.eq.s32.totalorder %s19, 0
    %p151 = por %p149, %p150
    %s152 = ssub.s32 %s13, %s20
    %p153 = scmp.eq.s32.totalorder %s152, 0
    %s155 = sadd.s32 %s154, 1
    %s156 = scalar_select %p153, %s154, %s155
    %p159 = pneg %p153
    %p160 = scmp.eq.s32.totalorder %s13, 1
    %p161 = por %p159, %p160
    %p162 = scmp.ne.s32.totalorder %s154, %s157
    %p163 = scmp.eq.s32.totalorder %s13, 0
    %p164 = por %p162, %p163
    %p165 = scmp.ne.s32.totalorder %s154, %s157
    %p166 = scmp.eq.s32.totalorder %s18, 1
    %p167 = por %p165, %p166
    %p168 = scmp.ne.s32.totalorder %s157, %s158
    %p169 = scmp.eq.s32.totalorder %s18, 0
    %p170 = por %p168, %p169
    %p171 = scmp.ne.s32.totalorder %s157, %s158
    %p172 = scmp.eq.s32.totalorder %s19, 1
    %p173 = por %p171, %p172
    %p175 = scmp.ne.s32.totalorder %s158, %s174
    %p176 = scmp.eq.s32.totalorder %s19, 0
    %p177 = por %p175, %p176
    %s178 = ssub.s32 %s13, %s20
    %p179 = scmp.eq.s32.totalorder %s178, 0
    %s181 = sadd.s32 %s180, 1
    %s182 = scalar_select %p179, %s180, %s181
    %p185 = pneg %p179
    %p186 = scmp.eq.s32.totalorder %s13, 1
    %p187 = por %p185, %p186
    %p188 = scmp.ne.s32.totalorder %s180, %s183
    %p189 = scmp.eq.s32.totalorder %s13, 0
    %p190 = por %p188, %p189
    %p191 = scmp.ne.s32.totalorder %s180, %s183
    %p192 = scmp.eq.s32.totalorder %s18, 1
    %p193 = por %p191, %p192
    %p194 = scmp.ne.s32.totalorder %s183, %s184
    %p195 = scmp.eq.s32.totalorder %s18, 0
    %p196 = por %p194, %p195
    %p197 = scmp.ne.s32.totalorder %s183, %s184
    %p198 = scmp.eq.s32.totalorder %s19, 1
    %p199 = por %p197, %p198
    %p201 = scmp.ne.s32.totalorder %s184, %s200
    %p202 = scmp.eq.s32.totalorder %s19, 0
    %p203 = por %p201, %p202
    %p204 = scmp.le.s32.totalorder 1, %s13
    %p205 = scmp.lt.s32.totalorder %s13, 3
    %p206 = pnand %p204, %p205
    %p207 = pneg %p206
    // Predicated region
    $region9: #{spade_forward.1} parent=5 // pred_check
      _
    $region10: #{spade_forward.1} parent=5 // pred_check_branch
      %209 = sbr.rel (%p206) target = $region12
    $region11: #{spade_forward.1} parent=5 // pred_region
      %s210 = ssub.s32 %s13, 1
      // Predicated region
      $region13: #{spade_forward.1} parent=11 // pred_check
        %p211 = pneg %p60
      $region14: #{spade_forward.1} parent=11 // pred_check_branch
        %213 = sbr.rel (%p211) target = $region16
      $region15: #{spade_forward.1} parent=11 // pred_region
        _
      $region16: #{spade_forward.1} parent=11 // pred_fallthru
        _
      // Predicated region
      $region17: #{spade_forward.1} parent=11 // pred_check
        %p214 = pneg %p81
      $region18: #{spade_forward.1} parent=11 // pred_check_branch
        %216 = sbr.rel (%p214) target = $region20
      $region19: #{spade_forward.1} parent=11 // pred_region
        _
      $region20: #{spade_forward.1} parent=11 // pred_fallthru
        _
      // Predicated region
      $region21: #{spade_forward.1} parent=11 // pred_check
        %p217 = pneg %p102
      $region22: #{spade_forward.1} parent=11 // pred_check_branch
        %219 = sbr.rel (%p217) target = $region24
      $region23: #{spade_forward.1} parent=11 // pred_region
        _
      $region24: #{spade_forward.1} parent=11 // pred_fallthru
        _
      // Predicated region
      $region25: #{spade_forward.1} parent=11 // pred_check
        %p220 = pneg %p123
      $region26: #{spade_forward.1} parent=11 // pred_check_branch
        %222 = sbr.rel (%p220) target = $region28
      $region27: #{spade_forward.1} parent=11 // pred_region
        _
      $region28: #{spade_forward.1} parent=11 // pred_fallthru
        _
      // Predicated region
      $region29: #{spade_forward.1} parent=11 // pred_check
        %p223 = pneg %p144
      $region30: #{spade_forward.1} parent=11 // pred_check_branch
        %225 = sbr.rel (%p223) target = $region32
      $region31: #{spade_forward.1} parent=11 // pred_region
        _
      $region32: #{spade_forward.1} parent=11 // pred_fallthru
        _
    $region12: #{spade_forward.1} parent=5 // pred_fallthru
      _
    %p226 = scmp.lt.s32.totalorder %s13, 2
    // Predicated region
    $region33: #{spade_forward.1} parent=5 // pred_check
      %p227 = pneg %p226
    $region34: #{spade_forward.1} parent=5 // pred_check_branch
      %229 = sbr.rel (%p227) target = $region36
    $region35: #{spade_forward.1} parent=5 // pred_region
      // Predicated region
      $region37: #{spade_forward.1} parent=35 // pred_check
        %p230 = pneg %p33
      $region38: #{spade_forward.1} parent=35 // pred_check_branch
        %232 = sbr.rel (%p230) target = $region40
      $region39: #{spade_forward.1} parent=35 // pred_region
        %p233 = scmp.lt.s32.totalorder %s13, 1
        %s234 = scalar_select %p233, %s13, 1
        %s235 = smul.addr %s234, 32
        %s236 = smul.addr %s235, 4
        %s237 = scalar_lea.vmem %s0, %s236
      $region40: #{spade_forward.1} parent=35 // pred_fallthru
        _
      // Predicated region
      $region41: #{spade_forward.1} parent=35 // pred_check
        %p238 = pneg %p164
      $region42: #{spade_forward.1} parent=35 // pred_check_branch
        %240 = sbr.rel (%p238) target = $region44
      $region43: #{spade_forward.1} parent=35 // pred_region
        %p241 = scmp.lt.s32.totalorder %s13, 1
        %s242 = scalar_select %p241, %s13, 1
        %s243 = smul.addr %s242, 8
        %s244 = smul.addr %s243, 8
        %s245 = scalar_lea.vmem %s6, %s244
      $region44: #{spade_forward.1} parent=35 // pred_fallthru
        _
    $region36: #{spade_forward.1} parent=5 // pred_fallthru
      _
    %p246 = scmp.le.s32.totalorder 1, %s13
    %p247 = scmp.lt.s32.totalorder %s13, 3
    %p248 = pnand %p246, %p247
    %p249 = pneg %p248
    // Predicated region
    $region45: #{spade_forward.1} parent=5 // pred_check
      _
    $region46: #{spade_forward.1} parent=5 // pred_check_branch
      %251 = sbr.rel (%p248) target = $region48
    $region47: #{spade_forward.1} parent=5 // pred_region
      %s252 = ssub.s32 %s13, 1
      %p253 = scmp.lt.s32.totalorder %s18, 1
      %s254 = scalar_select %p253, %s18, 1
      %s255 = smul.addr %s254, 32
      %s256 = smul.addr %s255, 4
      %s257 = scalar_lea.vmem %s0, %s256
      %p258 = pneg %p39
      %p259 = pneg %p36
      %p260 = pneg %p60
      %p261 = pneg %p57
      %p262 = pneg %p81
      %p263 = pneg %p78
      %p264 = pneg %p102
      %p265 = pneg %p99
      %p266 = pneg %p123
      %p267 = pneg %p120
      %p268 = pneg %p144
      %p269 = pneg %p141
      %p270 = scmp.lt.s32.totalorder %s18, 1
      %s271 = scalar_select %p270, %s18, 1
      %s272 = smul.addr %s271, 8
      %s273 = smul.addr %s272, 8
      %s274 = scalar_lea.vmem %s6, %s273
      %p275 = pneg %p170
      %p276 = pneg %p167
      %p277 = pneg %p196
      %p278 = pneg %p193
      %p279 = scmp.lt.s32.totalorder %s18, 1
      %s280 = scalar_select %p279, %s18, 1
      %s281 = smul.addr %s280, 8
      %s282 = smul.addr %s281, 8
      %s283 = scalar_lea.vmem %s7, %s282
      %p284 = scmp.lt.s32.totalorder %s18, 1
      %s285 = scalar_select %p284, %s18, 1
      %s286 = smul.addr %s285, 32
      %s287 = smul.addr %s286, 4
      %s288 = scalar_lea.vmem %s0, %s287
      %p289 = scmp.lt.s32.totalorder %s18, 1
      %s290 = scalar_select %p289, %s18, 1
      %s291 = smul.addr %s290, 8
      %s292 = smul.addr %s291, 8
      %s293 = scalar_lea.vmem %s6, %s292
      %p294 = scmp.lt.s32.totalorder %s18, 1
      %s295 = scalar_select %p294, %s18, 1
      %s296 = smul.addr %s295, 8
      %s297 = smul.addr %s296, 8
      %s298 = scalar_lea.vmem %s7, %s297
      %300 = vst [vmem:[#allocation2] sm:$0xff] 0.0
      %301 = vst [vmem:[#allocation2 + $0x8] sm:$0xff] 0.0
      %302 = vst [vmem:[#allocation2 + $0x10] sm:$0xff] 0.0
      %303 = vst [vmem:[#allocation2 + $0x18] sm:$0xff] 0.0
      %304 = vst [vmem:[#allocation2 + $0x20] sm:$0xff] 0.0
      %305 = vst [vmem:[#allocation2 + $0x28] sm:$0xff] 0.0
      %306 = vst [vmem:[#allocation2 + $0x30] sm:$0xff] 0.0
      %307 = vst [vmem:[#allocation2 + $0x38] sm:$0xff] 0.0
      %308 = vst [vmem:[#allocation2 + $0x40] sm:$0xff] 0.0
      %309 = vst [vmem:[#allocation2 + $0x48] sm:$0xff] 0.0
      %310 = vst [vmem:[#allocation2 + $0x50] sm:$0xff] 0.0
      %311 = vst [vmem:[#allocation2 + $0x58] sm:$0xff] 0.0
      %312 = vst [vmem:[#allocation2 + $0x60] sm:$0xff] 0.0
      %313 = vst [vmem:[#allocation2 + $0x68] sm:$0xff] 0.0
      %314 = vst [vmem:[#allocation2 + $0x70] sm:$0xff] 0.0
      %315 = vst [vmem:[#allocation2 + $0x78] sm:$0xff] 0.0
      %316 = vst [vmem:[#allocation2 + $0x80] sm:$0xff] 0.0
      %317 = vst [vmem:[#allocation2 + $0x88] sm:$0xff] 0.0
      %318 = vst [vmem:[#allocation2 + $0x90] sm:$0xff] 0.0
      %319 = vst [vmem:[#allocation2 + $0x98] sm:$0xff] 0.0
      %320 = vst [vmem:[#allocation2 + $0xa0] sm:$0xff] 0.0
      %321 = vst [vmem:[#allocation2 + $0xa8] sm:$0xff] 0.0
      %322 = vst [vmem:[#allocation2 + $0xb0] sm:$0xff] 0.0
      %323 = vst [vmem:[#allocation2 + $0xb8] sm:$0xff] 0.0
      %324 = vst [vmem:[#allocation2 + $0xc0] sm:$0xff] 0.0
      %325 = vst [vmem:[#allocation2 + $0xc8] sm:$0xff] 0.0
      %326 = vst [vmem:[#allocation2 + $0xd0] sm:$0xff] 0.0
      %327 = vst [vmem:[#allocation2 + $0xd8] sm:$0xff] 0.0
      %328 = vst [vmem:[#allocation2 + $0xe0] sm:$0xff] 0.0
      %329 = vst [vmem:[#allocation2 + $0xe8] sm:$0xff] 0.0
      %330 = vst [vmem:[#allocation2 + $0xf0] sm:$0xff] 0.0
      %331 = vst [vmem:[#allocation2 + $0xf8] sm:$0xff] 0.0
      %v332 = vld [vmem:[%s288] sm:$0xff]
      %v333 = vld [vmem:[%s288 + $0x8] sm:$0xff]
      %v334 = vld [vmem:[%s288 + $0x10] sm:$0xff]
      %v335 = vld [vmem:[%s288 + $0x18] sm:$0xff]
      %v336 = vld [vmem:[%s288 + $0x20] sm:$0xff]
      %v337 = vld [vmem:[%s288 + $0x28] sm:$0xff]
      %v338 = vld [vmem:[%s288 + $0x30] sm:$0xff]
      %v339 = vld [vmem:[%s288 + $0x38] sm:$0xff]
      %v340 = vld [vmem:[%s288 + $0x40] sm:$0xff]
      %v341 = vld [vmem:[%s288 + $0x48] sm:$0xff]
      %v342 = vld [vmem:[%s288 + $0x50] sm:$0xff]
      %v343 = vld [vmem:[%s288 + $0x58] sm:$0xff]
      %v344 = vld [vmem:[%s288 + $0x60] sm:$0xff]
      %v345 = vld [vmem:[%s288 + $0x68] sm:$0xff]
      %v346 = vld [vmem:[%s288 + $0x70] sm:$0xff]
      %v347 = vld [vmem:[%s288 + $0x78] sm:$0xff]
      %v348 = vunpack.c.l.bf16 %v332
      %v349 = vunpack.c.h.bf16 %v332
      %v350 = vunpack.c.l.bf16 %v333
      %v351 = vunpack.c.h.bf16 %v333
      %v352 = vunpack.c.l.bf16 %v334
      %v353 = vunpack.c.h.bf16 %v334
      %v354 = vunpack.c.l.bf16 %v335
      %v355 = vunpack.c.h.bf16 %v335
      %v356 = vunpack.c.l.bf16 %v336
      %v357 = vunpack.c.h.bf16 %v336
      %v358 = vunpack.c.l.bf16 %v337
      %v359 = vunpack.c.h.bf16 %v337
      %v360 = vunpack.c.l.bf16 %v338
      %v361 = vunpack.c.h.bf16 %v338
      %v362 = vunpack.c.l.bf16 %v339
      %v363 = vunpack.c.h.bf16 %v339
      %v364 = vunpack.c.l.bf16 %v340
      %v365 = vunpack.c.h.bf16 %v340
      %v366 = vunpack.c.l.bf16 %v341
      %v367 = vunpack.c.h.bf16 %v341
      %v368 = vunpack.c.l.bf16 %v342
      %v369 = vunpack.c.h.bf16 %v342
      %v370 = vunpack.c.l.bf16 %v343
      %v371 = vunpack.c.h.bf16 %v343
      %v372 = vunpack.c.l.bf16 %v344
      %v373 = vunpack.c.h.bf16 %v344
      %v374 = vunpack.c.l.bf16 %v345
      %v375 = vunpack.c.h.bf16 %v345
      %v376 = vunpack.c.l.bf16 %v346
      %v377 = vunpack.c.h.bf16 %v346
      %v378 = vunpack.c.l.bf16 %v347
      %v379 = vunpack.c.h.bf16 %v347
      %380 = vrot.lane.b32.xlu0 %v348, 17
      %v381 = vpop.permute.xlu0 %380
      %382 = vrot.lane.b32.xlu0 %v350, 17
      %v383 = vpop.permute.xlu0 %382
      %384 = vrot.lane.b32.xlu0 %v352, 17
      %v385 = vpop.permute.xlu0 %384
      %386 = vrot.lane.b32.xlu0 %v354, 17
      %v387 = vpop.permute.xlu0 %386
      %388 = vrot.lane.b32.xlu0 %v356, 17
      %v389 = vpop.permute.xlu0 %388
      %390 = vrot.lane.b32.xlu0 %v358, 17
      %v391 = vpop.permute.xlu0 %390
      %392 = vrot.lane.b32.xlu0 %v360, 17
      %v393 = vpop.permute.xlu0 %392
      %394 = vrot.lane.b32.xlu0 %v362, 17
      %v395 = vpop.permute.xlu0 %394
      %396 = vrot.lane.b32.xlu0 %v364, 17
      %v397 = vpop.permute.xlu0 %396
      %398 = vrot.lane.b32.xlu0 %v366, 17
      %v399 = vpop.permute.xlu0 %398
      %400 = vrot.lane.b32.xlu0 %v368, 17
      %v401 = vpop.permute.xlu0 %400
      %402 = vrot.lane.b32.xlu0 %v370, 17
      %v403 = vpop.permute.xlu0 %402
      %404 = vrot.lane.b32.xlu0 %v372, 17
      %v405 = vpop.permute.xlu0 %404
      %406 = vrot.lane.b32.xlu0 %v374, 17
      %v407 = vpop.permute.xlu0 %406
      %408 = vrot.lane.b32.xlu0 %v376, 17
      %v409 = vpop.permute.xlu0 %408
      %410 = vrot.lane.b32.xlu0 %v378, 17
      %v411 = vpop.permute.xlu0 %410
      %412 = vrot.lane.b32.xlu0 %v349, 17
      %v413 = vpop.permute.xlu0 %412
      %414 = vrot.lane.b32.xlu0 %v351, 17
      %v415 = vpop.permute.xlu0 %414
      %416 = vrot.lane.b32.xlu0 %v353, 17
      %v417 = vpop.permute.xlu0 %416
      %418 = vrot.lane.b32.xlu0 %v355, 17
      %v419 = vpop.permute.xlu0 %418
      %420 = vrot.lane.b32.xlu0 %v357, 17
      %v421 = vpop.permute.xlu0 %420
      %422 = vrot.lane.b32.xlu0 %v359, 17
      %v423 = vpop.permute.xlu0 %422
      %424 = vrot.lane.b32.xlu0 %v361, 17
      %v425 = vpop.permute.xlu0 %424
      %426 = vrot.lane.b32.xlu0 %v363, 17
      %v427 = vpop.permute.xlu0 %426
      %428 = vrot.lane.b32.xlu0 %v365, 17
      %v429 = vpop.permute.xlu0 %428
      %430 = vrot.lane.b32.xlu0 %v367, 17
      %v431 = vpop.permute.xlu0 %430
      %432 = vrot.lane.b32.xlu0 %v369, 17
      %v433 = vpop.permute.xlu0 %432
      %434 = vrot.lane.b32.xlu0 %v371, 17
      %v435 = vpop.permute.xlu0 %434
      %436 = vrot.lane.b32.xlu0 %v373, 17
      %v437 = vpop.permute.xlu0 %436
      %438 = vrot.lane.b32.xlu0 %v375, 17
      %v439 = vpop.permute.xlu0 %438
      %440 = vrot.lane.b32.xlu0 %v377, 17
      %v441 = vpop.permute.xlu0 %440
      %442 = vrot.lane.b32.xlu0 %v379, 17
      %v443 = vpop.permute.xlu0 %442
      %v444 = vlaneseq
      %v445 = vand.u32 %v444, 127
      %vm446 = vcmp.lt.s32.totalorder %v445, 17
      %v447 = vsel %vm446, %v381, %v413
      %v448 = vsel %vm446, %v383, %v415
      %v449 = vsel %vm446, %v385, %v417
      %v450 = vsel %vm446, %v387, %v419
      %v451 = vsel %vm446, %v389, %v421
      %v452 = vsel %vm446, %v391, %v423
      %v453 = vsel %vm446, %v393, %v425
      %v454 = vsel %vm446, %v395, %v427
      %v455 = vsel %vm446, %v397, %v429
      %v456 = vsel %vm446, %v399, %v431
      %v457 = vsel %vm446, %v401, %v433
      %v458 = vsel %vm446, %v403, %v435
      %v459 = vsel %vm446, %v405, %v437
      %v460 = vsel %vm446, %v407, %v439
      %v461 = vsel %vm446, %v409, %v441
      %v462 = vsel %vm446, %v411, %v443
      %v463 = vsel %vm446, %v413, %v381
      %v464 = vsel %vm446, %v415, %v383
      %v465 = vsel %vm446, %v417, %v385
      %v466 = vsel %vm446, %v419, %v387
      %v467 = vsel %vm446, %v421, %v389
      %v468 = vsel %vm446, %v423, %v391
      %v469 = vsel %vm446, %v425, %v393
      %v470 = vsel %vm446, %v427, %v395
      %v471 = vsel %vm446, %v429, %v397
      %v472 = vsel %vm446, %v431, %v399
      %v473 = vsel %vm446, %v433, %v401
      %v474 = vsel %vm446, %v435, %v403
      %v475 = vsel %vm446, %v437, %v405
      %v476 = vsel %vm446, %v439, %v407
      %v477 = vsel %vm446, %v441, %v409
      %v478 = vsel %vm446, %v443, %v411
      %v479 = vld [vmem:[%s5] sm:$0x3]
      %v481 = vlaneseq
      %v482 = vshrl.u32 %v481, 7
      %v483 = vsub.s32 0, %v482
      %v484 = vrot.slane %v479, %v483
      %v485 = vlaneseq
      %v486 = vshrl.u32 %v485, 7
      %v487 = vsub.s32 1, %v486
      %v488 = vrot.slane %v479, %v487
      %v491 = vmul.f32 %v463, %v484
      %v492 = vmul.f32 %v447, %v488
      %v493 = vmul.f32 %v464, %v484
      %v494 = vmul.f32 %v448, %v488
      %v495 = vmul.f32 %v465, %v484
      %v496 = vmul.f32 %v449, %v488
      %v497 = vmul.f32 %v466, %v484
      %v498 = vmul.f32 %v450, %v488
      %v499 = vmul.f32 %v467, %v484
      %v500 = vmul.f32 %v451, %v488
      %v501 = vmul.f32 %v468, %v484
      %v502 = vmul.f32 %v452, %v488
      %v503 = vmul.f32 %v469, %v484
      %v504 = vmul.f32 %v453, %v488
      %v505 = vmul.f32 %v470, %v484
      %v506 = vmul.f32 %v454, %v488
      %v507 = vmul.f32 %v471, %v484
      %v508 = vmul.f32 %v455, %v488
      %v509 = vmul.f32 %v472, %v484
      %v510 = vmul.f32 %v456, %v488
      %v511 = vmul.f32 %v473, %v484
      %v512 = vmul.f32 %v457, %v488
      %v513 = vmul.f32 %v474, %v484
      %v514 = vmul.f32 %v458, %v488
      %v515 = vmul.f32 %v475, %v484
      %v516 = vmul.f32 %v459, %v488
      %v517 = vmul.f32 %v476, %v484
      %v518 = vmul.f32 %v460, %v488
      %v519 = vmul.f32 %v477, %v484
      %v520 = vmul.f32 %v461, %v488
      %v521 = vmul.f32 %v478, %v484
      %v522 = vmul.f32 %v462, %v488
      %v523 = vld [vmem:[#allocation2] sm:$0xff]
      %v524 = vld [vmem:[#allocation2 + $0x8] sm:$0xff]
      %v525 = vld [vmem:[#allocation2 + $0x10] sm:$0xff]
      %v526 = vld [vmem:[#allocation2 + $0x18] sm:$0xff]
      %v527 = vld [vmem:[#allocation2 + $0x20] sm:$0xff]
      %v528 = vld [vmem:[#allocation2 + $0x28] sm:$0xff]
      %v529 = vld [vmem:[#allocation2 + $0x30] sm:$0xff]
      %v530 = vld [vmem:[#allocation2 + $0x38] sm:$0xff]
      %v531 = vld [vmem:[#allocation2 + $0x40] sm:$0xff]
      %v532 = vld [vmem:[#allocation2 + $0x48] sm:$0xff]
      %v533 = vld [vmem:[#allocation2 + $0x50] sm:$0xff]
      %v534 = vld [vmem:[#allocation2 + $0x58] sm:$0xff]
      %v535 = vld [vmem:[#allocation2 + $0x60] sm:$0xff]
      %v536 = vld [vmem:[#allocation2 + $0x68] sm:$0xff]
      %v537 = vld [vmem:[#allocation2 + $0x70] sm:$0xff]
      %v538 = vld [vmem:[#allocation2 + $0x78] sm:$0xff]
      %v539 = vld [vmem:[#allocation2 + $0x80] sm:$0xff]
      %v540 = vld [vmem:[#allocation2 + $0x88] sm:$0xff]
      %v541 = vld [vmem:[#allocation2 + $0x90] sm:$0xff]
      %v542 = vld [vmem:[#allocation2 + $0x98] sm:$0xff]
      %v543 = vld [vmem:[#allocation2 + $0xa0] sm:$0xff]
      %v544 = vld [vmem:[#allocation2 + $0xa8] sm:$0xff]
      %v545 = vld [vmem:[#allocation2 + $0xb0] sm:$0xff]
      %v546 = vld [vmem:[#allocation2 + $0xb8] sm:$0xff]
      %v547 = vld [vmem:[#allocation2 + $0xc0] sm:$0xff]
      %v548 = vld [vmem:[#allocation2 + $0xc8] sm:$0xff]
      %v549 = vld [vmem:[#allocation2 + $0xd0] sm:$0xff]
      %v550 = vld [vmem:[#allocation2 + $0xd8] sm:$0xff]
      %v551 = vld [vmem:[#allocation2 + $0xe0] sm:$0xff]
      %v552 = vld [vmem:[#allocation2 + $0xe8] sm:$0xff]
      %v553 = vld [vmem:[#allocation2 + $0xf0] sm:$0xff]
      %v554 = vld [vmem:[#allocation2 + $0xf8] sm:$0xff]
      %v555 = vld [vmem:[%s1] sm:$0xf]
      %v556 = vld [vmem:[%s1 + $0x4] sm:$0xf]
      %v557 = vld [vmem:[%s1 + $0x8] sm:$0xf]
      %v558 = vld [vmem:[%s1 + $0xc] sm:$0xf]
      %v559 = vld [vmem:[%s1 + $0x10] sm:$0xf]
      %v560 = vld [vmem:[%s1 + $0x14] sm:$0xf]
      %v561 = vld [vmem:[%s1 + $0x18] sm:$0xf]
      %v562 = vld [vmem:[%s1 + $0x1c] sm:$0xf]
      %v563 = vld [vmem:[%s1 + $0x20] sm:$0xf]
      %v564 = vld [vmem:[%s1 + $0x24] sm:$0xf]
      %v565 = vld [vmem:[%s1 + $0x28] sm:$0xf]
      %v566 = vld [vmem:[%s1 + $0x2c] sm:$0xf]
      %v567 = vld [vmem:[%s1 + $0x30] sm:$0xf]
      %v568 = vld [vmem:[%s1 + $0x34] sm:$0xf]
      %v569 = vld [vmem:[%s1 + $0x38] sm:$0xf]
      %v570 = vld [vmem:[%s1 + $0x3c] sm:$0xf]
      %v571 = vpack.c.bf16 %v493, %v491
      %v572 = vpack.c.bf16 %v494, %v492
      %v573 = vpack.c.bf16 %v497, %v495
      %v574 = vpack.c.bf16 %v498, %v496
      %v575 = vpack.c.bf16 %v501, %v499
      %v576 = vpack.c.bf16 %v502, %v500
      %v577 = vpack.c.bf16 %v505, %v503
      %v578 = vpack.c.bf16 %v506, %v504
      %v579 = vpack.c.bf16 %v509, %v507
      %v580 = vpack.c.bf16 %v510, %v508
      %v581 = vpack.c.bf16 %v513, %v511
      %v582 = vpack.c.bf16 %v514, %v512
      %v583 = vpack.c.bf16 %v517, %v515
      %v584 = vpack.c.bf16 %v518, %v516
      %v585 = vpack.c.bf16 %v521, %v519
      %v586 = vpack.c.bf16 %v522, %v520
      %v603 = vunpack.c.l.b16 %v555
      %v604 = vunpack.c.l.b16 %v556
      %v605 = vunpack.c.l.b16 %v557
      %v606 = vunpack.c.l.b16 %v558
      %v607 = vunpack.c.l.b16 %v559
      %v608 = vunpack.c.l.b16 %v560
      %v609 = vunpack.c.l.b16 %v561
      %v610 = vunpack.c.l.b16 %v562
      %v611 = vunpack.c.l.b16 %v563
      %v612 = vunpack.c.l.b16 %v564
      %v613 = vunpack.c.l.b16 %v565
      %v614 = vunpack.c.l.b16 %v566
      %v615 = vunpack.c.l.b16 %v567
      %v616 = vunpack.c.l.b16 %v568
      %v617 = vunpack.c.l.b16 %v569
      %v618 = vunpack.c.l.b16 %v570
      %v619 = vpack.c.b16 %v604, %v603
      %v620 = vpack.c.b16 %v606, %v605
      %v621 = vpack.c.b16 %v608, %v607
      %v622 = vpack.c.b16 %v610, %v609
      %v623 = vpack.c.b16 %v612, %v611
      %v624 = vpack.c.b16 %v614, %v613
      %v625 = vpack.c.b16 %v616, %v615
      %v626 = vpack.c.b16 %v618, %v617
      %635 = vmatprep.subr.bf16.mxu0 %v586
      %636 = vmatpush1.bf16.msra.mxu0 %v585
      %637 = vmatprep.subr.bf16.mxu0 %v584
      %638 = vmatpush1.bf16.msra.mxu0 %v583
      %639 = vmatprep.subr.bf16.mxu0 %v582
      %640 = vmatpush1.bf16.msra.mxu0 %v581
      %641 = vmatprep.subr.bf16.mxu0 %v580
      %642 = vmatpush1.bf16.msra.mxu0 %v579
      %643 = vmatprep.subr.bf16.mxu0 %v578
      %644 = vmatpush1.bf16.msra.mxu0 %v577
      %645 = vmatprep.subr.bf16.mxu0 %v576
      %646 = vmatpush1.bf16.msra.mxu0 %v575
      %647 = vmatprep.subr.bf16.mxu0 %v574
      %648 = vmatpush1.bf16.msra.mxu0 %v573
      %649 = vmatprep.subr.bf16.mxu0 %v572
      %650 = vmatpush1.bf16.msra.mxu0 %v571
      %651 = vmatprep.subr.bf16.mxu0 0
      %652 = vmatpush2.bf16.msra.mxu0 0
      %653 = vmatprep.subr.bf16.mxu0 0
      %654 = vmatpush2.bf16.msra.mxu0 0
      %655 = vmatprep.subr.bf16.mxu0 0
      %656 = vmatpush2.bf16.msra.mxu0 0
      %657 = vmatprep.subr.bf16.mxu0 0
      %658 = vmatpush2.bf16.msra.mxu0 0
      %659 = vmatprep.subr.bf16.mxu0 0
      %660 = vmatpush2.bf16.msra.mxu0 0
      %661 = vmatprep.subr.bf16.mxu0 0
      %662 = vmatpush2.bf16.msra.mxu0 0
      %663 = vmatprep.subr.bf16.mxu0 0
      %664 = vmatpush2.bf16.msra.mxu0 0
      %665 = vmatprep.subr.bf16.mxu0 0
      %666 = vmatpush2.bf16.msra.mxu0 0
      %667 = vmatprep.mubr.bf16.mxu0 0
      %668 = vmatmul.mubr.bf16.gmra.mxu0 %v619
      %v669 = vpop.f32.mrf.mxu0
      %v670 = vadd.f32 0.0, %v669
      %v671 = vpop.f32.mrf.mxu0
      %v672 = vadd.f32 0.0, %v671
      %v673 = vpop.f32.mrf.mxu0
      %v674 = vadd.f32 0.0, %v673
      %v675 = vpop.f32.mrf.mxu0
      %v676 = vadd.f32 0.0, %v675
      %677 = vmatprep.mubr.bf16.mxu0 0
      %678 = vmatmul.mubr.bf16.gmra.mxu0 %v620
      %v679 = vpop.f32.mrf.mxu0
      %v680 = vadd.f32 0.0, %v679
      %v681 = vpop.f32.mrf.mxu0
      %v682 = vadd.f32 0.0, %v681
      %v683 = vpop.f32.mrf.mxu0
      %v684 = vadd.f32 0.0, %v683
      %v685 = vpop.f32.mrf.mxu0
      %v686 = vadd.f32 0.0, %v685
      %687 = vmatprep.mubr.bf16.mxu0 0
      %688 = vmatmul.mubr.bf16.gmra.mxu0 %v621
      %v689 = vpop.f32.mrf.mxu0
      %v690 = vadd.f32 0.0, %v689
      %v691 = vpop.f32.mrf.mxu0
      %v692 = vadd.f32 0.0, %v691
      %v693 = vpop.f32.mrf.mxu0
      %v694 = vadd.f32 0.0, %v693
      %v695 = vpop.f32.mrf.mxu0
      %v696 = vadd.f32 0.0, %v695
      %697 = vmatprep.mubr.bf16.mxu0 0
      %698 = vmatmul.mubr.bf16.gmra.mxu0 %v622
      %v699 = vpop.f32.mrf.mxu0
      %v700 = vadd.f32 0.0, %v699
      %v701 = vpop.f32.mrf.mxu0
      %v702 = vadd.f32 0.0, %v701
      %v703 = vpop.f32.mrf.mxu0
      %v704 = vadd.f32 0.0, %v703
      %v705 = vpop.f32.mrf.mxu0
      %v706 = vadd.f32 0.0, %v705
      %707 = vmatprep.mubr.bf16.mxu0 0
      %708 = vmatmul.mubr.bf16.gmra.mxu0 %v623
      %v709 = vpop.f32.mrf.mxu0
      %v710 = vadd.f32 0.0, %v709
      %v711 = vpop.f32.mrf.mxu0
      %v712 = vadd.f32 0.0, %v711
      %v713 = vpop.f32.mrf.mxu0
      %v714 = vadd.f32 0.0, %v713
      %v715 = vpop.f32.mrf.mxu0
      %v716 = vadd.f32 0.0, %v715
      %717 = vmatprep.mubr.bf16.mxu0 0
      %718 = vmatmul.mubr.bf16.gmra.mxu0 %v624
      %v719 = vpop.f32.mrf.mxu0
      %v720 = vadd.f32 0.0, %v719
      %v721 = vpop.f32.mrf.mxu0
      %v722 = vadd.f32 0.0, %v721
      %v723 = vpop.f32.mrf.mxu0
      %v724 = vadd.f32 0.0, %v723
      %v725 = vpop.f32.mrf.mxu0
      %v726 = vadd.f32 0.0, %v725
      %727 = vmatprep.mubr.bf16.mxu0 0
      %728 = vmatmul.mubr.bf16.gmra.mxu0 %v625
      %v729 = vpop.f32.mrf.mxu0
      %v730 = vadd.f32 0.0, %v729
      %v731 = vpop.f32.mrf.mxu0
      %v732 = vadd.f32 0.0, %v731
      %v733 = vpop.f32.mrf.mxu0
      %v734 = vadd.f32 0.0, %v733
      %v735 = vpop.f32.mrf.mxu0
      %v736 = vadd.f32 0.0, %v735
      %737 = vmatprep.mubr.bf16.mxu0 0
      %738 = vmatmul.mubr.bf16.gmra.mxu0 %v626
      %v739 = vpop.f32.mrf.mxu0
      %v740 = vadd.f32 0.0, %v739
      %v741 = vpop.f32.mrf.mxu0
      %v742 = vadd.f32 0.0, %v741
      %v743 = vpop.f32.mrf.mxu0
      %v744 = vadd.f32 0.0, %v743
      %v745 = vpop.f32.mrf.mxu0
      %v746 = vadd.f32 0.0, %v745
      %747 = vdwg.mxu0
      %v748 = vadd.f32 %v523, %v670
      %v749 = vadd.f32 %v524, %v672
      %v750 = vadd.f32 %v525, %v674
      %v751 = vadd.f32 %v526, %v676
      %v752 = vadd.f32 %v527, %v680
      %v753 = vadd.f32 %v528, %v682
      %v754 = vadd.f32 %v529, %v684
      %v755 = vadd.f32 %v530, %v686
      %v756 = vadd.f32 %v531, %v690
      %v757 = vadd.f32 %v532, %v692
      %v758 = vadd.f32 %v533, %v694
      %v759 = vadd.f32 %v534, %v696
      %v760 = vadd.f32 %v535, %v700
      %v761 = vadd.f32 %v536, %v702
      %v762 = vadd.f32 %v537, %v704
      %v763 = vadd.f32 %v538, %v706
      %v764 = vadd.f32 %v539, %v710
      %v765 = vadd.f32 %v540, %v712
      %v766 = vadd.f32 %v541, %v714
      %v767 = vadd.f32 %v542, %v716
      %v768 = vadd.f32 %v543, %v720
      %v769 = vadd.f32 %v544, %v722
      %v770 = vadd.f32 %v545, %v724
      %v771 = vadd.f32 %v546, %v726
      %v772 = vadd.f32 %v547, %v730
      %v773 = vadd.f32 %v548, %v732
      %v774 = vadd.f32 %v549, %v734
      %v775 = vadd.f32 %v550, %v736
      %v776 = vadd.f32 %v551, %v740
      %v777 = vadd.f32 %v552, %v742
      %v778 = vadd.f32 %v553, %v744
      %v779 = vadd.f32 %v554, %v746
      %780 = vst [vmem:[#allocation2] sm:$0xff] %v748
      %781 = vst [vmem:[#allocation2 + $0x8] sm:$0xff] %v749
      %782 = vst [vmem:[#allocation2 + $0x10] sm:$0xff] %v750
      %783 = vst [vmem:[#allocation2 + $0x18] sm:$0xff] %v751
      %784 = vst [vmem:[#allocation2 + $0x20] sm:$0xff] %v752
      %785 = vst [vmem:[#allocation2 + $0x28] sm:$0xff] %v753
      %786 = vst [vmem:[#allocation2 + $0x30] sm:$0xff] %v754
      %787 = vst [vmem:[#allocation2 + $0x38] sm:$0xff] %v755
      %788 = vst [vmem:[#allocation2 + $0x40] sm:$0xff] %v756
      %789 = vst [vmem:[#allocation2 + $0x48] sm:$0xff] %v757
      %790 = vst [vmem:[#allocation2 + $0x50] sm:$0xff] %v758
      %791 = vst [vmem:[#allocation2 + $0x58] sm:$0xff] %v759
      %792 = vst [vmem:[#allocation2 + $0x60] sm:$0xff] %v760
      %793 = vst [vmem:[#allocation2 + $0x68] sm:$0xff] %v761
      %794 = vst [vmem:[#allocation2 + $0x70] sm:$0xff] %v762
      %795 = vst [vmem:[#allocation2 + $0x78] sm:$0xff] %v763
      %796 = vst [vmem:[#allocation2 + $0x80] sm:$0xff] %v764
      %797 = vst [vmem:[#allocation2 + $0x88] sm:$0xff] %v765
      %798 = vst [vmem:[#allocation2 + $0x90] sm:$0xff] %v766
      %799 = vst [vmem:[#allocation2 + $0x98] sm:$0xff] %v767
      %800 = vst [vmem:[#allocation2 + $0xa0] sm:$0xff] %v768
      %801 = vst [vmem:[#allocation2 + $0xa8] sm:$0xff] %v769
      %802 = vst [vmem:[#allocation2 + $0xb0] sm:$0xff] %v770
      %803 = vst [vmem:[#allocation2 + $0xb8] sm:$0xff] %v771
      %804 = vst [vmem:[#allocation2 + $0xc0] sm:$0xff] %v772
      %805 = vst [vmem:[#allocation2 + $0xc8] sm:$0xff] %v773
      %806 = vst [vmem:[#allocation2 + $0xd0] sm:$0xff] %v774
      %807 = vst [vmem:[#allocation2 + $0xd8] sm:$0xff] %v775
      %808 = vst [vmem:[#allocation2 + $0xe0] sm:$0xff] %v776
      %809 = vst [vmem:[#allocation2 + $0xe8] sm:$0xff] %v777
      %810 = vst [vmem:[#allocation2 + $0xf0] sm:$0xff] %v778
      %811 = vst [vmem:[#allocation2 + $0xf8] sm:$0xff] %v779
      %v812 = vld [vmem:[%s288] sm:$0xff]
      %v813 = vld [vmem:[%s288 + $0x8] sm:$0xff]
      %v814 = vld [vmem:[%s288 + $0x10] sm:$0xff]
      %v815 = vld [vmem:[%s288 + $0x18] sm:$0xff]
      %v816 = vld [vmem:[%s288 + $0x20] sm:$0xff]
      %v817 = vld [vmem:[%s288 + $0x28] sm:$0xff]
      %v818 = vld [vmem:[%s288 + $0x30] sm:$0xff]
      %v819 = vld [vmem:[%s288 + $0x38] sm:$0xff]
      %v820 = vld [vmem:[%s288 + $0x40] sm:$0xff]
      %v821 = vld [vmem:[%s288 + $0x48] sm:$0xff]
      %v822 = vld [vmem:[%s288 + $0x50] sm:$0xff]
      %v823 = vld [vmem:[%s288 + $0x58] sm:$0xff]
      %v824 = vld [vmem:[%s288 + $0x60] sm:$0xff]
      %v825 = vld [vmem:[%s288 + $0x68] sm:$0xff]
      %v826 = vld [vmem:[%s288 + $0x70] sm:$0xff]
      %v827 = vld [vmem:[%s288 + $0x78] sm:$0xff]
      %v828 = vunpack.c.l.bf16 %v812
      %v829 = vunpack.c.h.bf16 %v812
      %v830 = vunpack.c.l.bf16 %v813
      %v831 = vunpack.c.h.bf16 %v813
      %v832 = vunpack.c.l.bf16 %v814
      %v833 = vunpack.c.h.bf16 %v814
      %v834 = vunpack.c.l.bf16 %v815
      %v835 = vunpack.c.h.bf16 %v815
      %v836 = vunpack.c.l.bf16 %v816
      %v837 = vunpack.c.h.bf16 %v816
      %v838 = vunpack.c.l.bf16 %v817
      %v839 = vunpack.c.h.bf16 %v817
      %v840 = vunpack.c.l.bf16 %v818
      %v841 = vunpack.c.h.bf16 %v818
      %v842 = vunpack.c.l.bf16 %v819
      %v843 = vunpack.c.h.bf16 %v819
      %v844 = vunpack.c.l.bf16 %v820
      %v845 = vunpack.c.h.bf16 %v820
      %v846 = vunpack.c.l.bf16 %v821
      %v847 = vunpack.c.h.bf16 %v821
      %v848 = vunpack.c.l.bf16 %v822
      %v849 = vunpack.c.h.bf16 %v822
      %v850 = vunpack.c.l.bf16 %v823
      %v851 = vunpack.c.h.bf16 %v823
      %v852 = vunpack.c.l.bf16 %v824
      %v853 = vunpack.c.h.bf16 %v824
      %v854 = vunpack.c.l.bf16 %v825
      %v855 = vunpack.c.h.bf16 %v825
      %v856 = vunpack.c.l.bf16 %v826
      %v857 = vunpack.c.h.bf16 %v826
      %v858 = vunpack.c.l.bf16 %v827
      %v859 = vunpack.c.h.bf16 %v827
      %860 = vrot.lane.b32.xlu0 %v828, 16
      %v861 = vpop.permute.xlu0 %860
      %862 = vrot.lane.b32.xlu0 %v830, 16
      %v863 = vpop.permute.xlu0 %862
      %864 = vrot.lane.b32.xlu0 %v832, 16
      %v865 = vpop.permute.xlu0 %864
      %866 = vrot.lane.b32.xlu0 %v834, 16
      %v867 = vpop.permute.xlu0 %866
      %868 = vrot.lane.b32.xlu0 %v836, 16
      %v869 = vpop.permute.xlu0 %868
      %870 = vrot.lane.b32.xlu0 %v838, 16
      %v871 = vpop.permute.xlu0 %870
      %872 = vrot.lane.b32.xlu0 %v840, 16
      %v873 = vpop.permute.xlu0 %872
      %874 = vrot.lane.b32.xlu0 %v842, 16
      %v875 = vpop.permute.xlu0 %874
      %876 = vrot.lane.b32.xlu0 %v844, 16
      %v877 = vpop.permute.xlu0 %876
      %878 = vrot.lane.b32.xlu0 %v846, 16
      %v879 = vpop.permute.xlu0 %878
      %880 = vrot.lane.b32.xlu0 %v848, 16
      %v881 = vpop.permute.xlu0 %880
      %882 = vrot.lane.b32.xlu0 %v850, 16
      %v883 = vpop.permute.xlu0 %882
      %884 = vrot.lane.b32.xlu0 %v852, 16
      %v885 = vpop.permute.xlu0 %884
      %886 = vrot.lane.b32.xlu0 %v854, 16
      %v887 = vpop.permute.xlu0 %886
      %888 = vrot.lane.b32.xlu0 %v856, 16
      %v889 = vpop.permute.xlu0 %888
      %890 = vrot.lane.b32.xlu0 %v858, 16
      %v891 = vpop.permute.xlu0 %890
      %892 = vrot.lane.b32.xlu0 %v829, 16
      %v893 = vpop.permute.xlu0 %892
      %894 = vrot.lane.b32.xlu0 %v831, 16
      %v895 = vpop.permute.xlu0 %894
      %896 = vrot.lane.b32.xlu0 %v833, 16
      %v897 = vpop.permute.xlu0 %896
      %898 = vrot.lane.b32.xlu0 %v835, 16
      %v899 = vpop.permute.xlu0 %898
      %900 = vrot.lane.b32.xlu0 %v837, 16
      %v901 = vpop.permute.xlu0 %900
      %902 = vrot.lane.b32.xlu0 %v839, 16
      %v903 = vpop.permute.xlu0 %902
      %904 = vrot.lane.b32.xlu0 %v841, 16
      %v905 = vpop.permute.xlu0 %904
      %906 = vrot.lane.b32.xlu0 %v843, 16
      %v907 = vpop.permute.xlu0 %906
      %908 = vrot.lane.b32.xlu0 %v845, 16
      %v909 = vpop.permute.xlu0 %908
      %910 = vrot.lane.b32.xlu0 %v847, 16
      %v911 = vpop.permute.xlu0 %910
      %912 = vrot.lane.b32.xlu0 %v849, 16
      %v913 = vpop.permute.xlu0 %912
      %914 = vrot.lane.b32.xlu0 %v851, 16
      %v915 = vpop.permute.xlu0 %914
      %916 = vrot.lane.b32.xlu0 %v853, 16
      %v917 = vpop.permute.xlu0 %916
      %918 = vrot.lane.b32.xlu0 %v855, 16
      %v919 = vpop.permute.xlu0 %918
      %920 = vrot.lane.b32.xlu0 %v857, 16
      %v921 = vpop.permute.xlu0 %920
      %922 = vrot.lane.b32.xlu0 %v859, 16
      %v923 = vpop.permute.xlu0 %922
      %vm924 = vcmp.lt.s32.totalorder %v445, 16
      %v925 = vsel %vm924, %v861, %v893
      %v926 = vsel %vm924, %v863, %v895
      %v927 = vsel %vm924, %v865, %v897
      %v928 = vsel %vm924, %v867, %v899
      %v929 = vsel %vm924, %v869, %v901
      %v930 = vsel %vm924, %v871, %v903
      %v931 = vsel %vm924, %v873, %v905
      %v932 = vsel %vm924, %v875, %v907
      %v933 = vsel %vm924, %v877, %v909
      %v934 = vsel %vm924, %v879, %v911
      %v935 = vsel %vm924, %v881, %v913
      %v936 = vsel %vm924, %v883, %v915
      %v937 = vsel %vm924, %v885, %v917
      %v938 = vsel %vm924, %v887, %v919
      %v939 = vsel %vm924, %v889, %v921
      %v940 = vsel %vm924, %v891, %v923
      %v941 = vsel %vm924, %v893, %v861
      %v942 = vsel %vm924, %v895, %v863
      %v943 = vsel %vm924, %v897, %v865
      %v944 = vsel %vm924, %v899, %v867
      %v945 = vsel %vm924, %v901, %v869
      %v946 = vsel %vm924, %v903, %v871
      %v947 = vsel %vm924, %v905, %v873
      %v948 = vsel %vm924, %v907, %v875
      %v949 = vsel %vm924, %v909, %v877
      %v950 = vsel %vm924, %v911, %v879
      %v951 = vsel %vm924, %v913, %v881
      %v952 = vsel %vm924, %v915, %v883
      %v953 = vsel %vm924, %v917, %v885
      %v954 = vsel %vm924, %v919, %v887
      %v955 = vsel %vm924, %v921, %v889
      %v956 = vsel %vm924, %v923, %v891
      %s957 = scalar_lea.vmem %s5, 2
      %v958 = vld [vmem:[%s957] sm:$0x3]
      %v960 = vlaneseq
      %v961 = vshrl.u32 %v960, 7
      %v962 = vsub.s32 0, %v961
      %v963 = vrot.slane %v958, %v962
      %v964 = vlaneseq
      %v965 = vshrl.u32 %v964, 7
      %v966 = vsub.s32 1, %v965
      %v967 = vrot.slane %v958, %v966
      %v970 = vmul.f32 %v941, %v963
      %v971 = vmul.f32 %v925, %v967
      %v972 = vmul.f32 %v942, %v963
      %v973 = vmul.f32 %v926, %v967
      %v974 = vmul.f32 %v943, %v963
      %v975 = vmul.f32 %v927, %v967
      %v976 = vmul.f32 %v944, %v963
      %v977 = vmul.f32 %v928, %v967
      %v978 = vmul.f32 %v945, %v963
      %v979 = vmul.f32 %v929, %v967
      %v980 = vmul.f32 %v946, %v963
      %v981 = vmul.f32 %v930, %v967
      %v982 = vmul.f32 %v947, %v963
      %v983 = vmul.f32 %v931, %v967
      %v984 = vmul.f32 %v948, %v963
      %v985 = vmul.f32 %v932, %v967
      %v986 = vmul.f32 %v949, %v963
      %v987 = vmul.f32 %v933, %v967
      %v988 = vmul.f32 %v950, %v963
      %v989 = vmul.f32 %v934, %v967
      %v990 = vmul.f32 %v951, %v963
      %v991 = vmul.f32 %v935, %v967
      %v992 = vmul.f32 %v952, %v963
      %v993 = vmul.f32 %v936, %v967
      %v994 = vmul.f32 %v953, %v963
      %v995 = vmul.f32 %v937, %v967
      %v996 = vmul.f32 %v954, %v963
      %v997 = vmul.f32 %v938, %v967
      %v998 = vmul.f32 %v955, %v963
      %v999 = vmul.f32 %v939, %v967
      %v1000 = vmul.f32 %v956, %v963
      %v1001 = vmul.f32 %v940, %v967
      %v1002 = vld [vmem:[#allocation2] sm:$0xff]
      %v1003 = vld [vmem:[#allocation2 + $0x8] sm:$0xff]
      %v1004 = vld [vmem:[#allocation2 + $0x10] sm:$0xff]
      %v1005 = vld [vmem:[#allocation2 + $0x18] sm:$0xff]
      %v1006 = vld [vmem:[#allocation2 + $0x20] sm:$0xff]
      %v1007 = vld [vmem:[#allocation2 + $0x28] sm:$0xff]
      %v1008 = vld [vmem:[#allocation2 + $0x30] sm:$0xff]
      %v1009 = vld [vmem:[#allocation2 + $0x38] sm:$0xff]
      %v1010 = vld [vmem:[#allocation2 + $0x40] sm:$0xff]
      %v1011 = vld [vmem:[#allocation2 + $0x48] sm:$0xff]
      %v1012 = vld [vmem:[#allocation2 + $0x50] sm:$0xff]
      %v1013 = vld [vmem:[#allocation2 + $0x58] sm:$0xff]
      %v1014 = vld [vmem:[#allocation2 + $0x60] sm:$0xff]
      %v1015 = vld [vmem:[#allocation2 + $0x68] sm:$0xff]
      %v1016 = vld [vmem:[#allocation2 + $0x70] sm:$0xff]
      %v1017 = vld [vmem:[#allocation2 + $0x78] sm:$0xff]
      %v1018 = vld [vmem:[#allocation2 + $0x80] sm:$0xff]
      %v1019 = vld [vmem:[#allocation2 + $0x88] sm:$0xff]
      %v1020 = vld [vmem:[#allocation2 + $0x90] sm:$0xff]
      %v1021 = vld [vmem:[#allocation2 + $0x98] sm:$0xff]
      %v1022 = vld [vmem:[#allocation2 + $0xa0] sm:$0xff]
      %v1023 = vld [vmem:[#allocation2 + $0xa8] sm:$0xff]
      %v1024 = vld [vmem:[#allocation2 + $0xb0] sm:$0xff]
      %v1025 = vld [vmem:[#allocation2 + $0xb8] sm:$0xff]
      %v1026 = vld [vmem:[#allocation2 + $0xc0] sm:$0xff]
      %v1027 = vld [vmem:[#allocation2 + $0xc8] sm:$0xff]
      %v1028 = vld [vmem:[#allocation2 + $0xd0] sm:$0xff]
      %v1029 = vld [vmem:[#allocation2 + $0xd8] sm:$0xff]
      %v1030 = vld [vmem:[#allocation2 + $0xe0] sm:$0xff]
      %v1031 = vld [vmem:[#allocation2 + $0xe8] sm:$0xff]
      %v1032 = vld [vmem:[#allocation2 + $0xf0] sm:$0xff]
      %v1033 = vld [vmem:[#allocation2 + $0xf8] sm:$0xff]
      %s1034 = scalar_lea.vmem %s1, 64
      %v1035 = vld [vmem:[%s1034] sm:$0xf]
      %v1036 = vld [vmem:[%s1034 + $0x4] sm:$0xf]
      %v1037 = vld [vmem:[%s1034 + $0x8] sm:$0xf]
      %v1038 = vld [vmem:[%s1034 + $0xc] sm:$0xf]
      %v1039 = vld [vmem:[%s1034 + $0x10] sm:$0xf]
      %v1040 = vld [vmem:[%s1034 + $0x14] sm:$0xf]
      %v1041 = vld [vmem:[%s1034 + $0x18] sm:$0xf]
      %v1042 = vld [vmem:[%s1034 + $0x1c] sm:$0xf]
      %v1043 = vld [vmem:[%s1034 + $0x20] sm:$0xf]
      %v1044 = vld [vmem:[%s1034 + $0x24] sm:$0xf]
      %v1045 = vld [vmem:[%s1034 + $0x28] sm:$0xf]
      %v1046 = vld [vmem:[%s1034 + $0x2c] sm:$0xf]
      %v1047 = vld [vmem:[%s1034 + $0x30] sm:$0xf]
      %v1048 = vld [vmem:[%s1034 + $0x34] sm:$0xf]
      %v1049 = vld [vmem:[%s1034 + $0x38] sm:$0xf]
      %v1050 = vld [vmem:[%s1034 + $0x3c] sm:$0xf]
      %v1051 = vpack.c.bf16 %v972, %v970
      %v1052 = vpack.c.bf16 %v973, %v971
      %v1053 = vpack.c.bf16 %v976, %v974
      %v1054 = vpack.c.bf16 %v977, %v975
      %v1055 = vpack.c.bf16 %v980, %v978
      %v1056 = vpack.c.bf16 %v981, %v979
      %v1057 = vpack.c.bf16 %v984, %v982
      %v1058 = vpack.c.bf16 %v985, %v983
      %v1059 = vpack.c.bf16 %v988, %v986
      %v1060 = vpack.c.bf16 %v989, %v987
      %v1061 = vpack.c.bf16 %v992, %v990
      %v1062 = vpack.c.bf16 %v993, %v991
      %v1063 = vpack.c.bf16 %v996, %v994
      %v1064 = vpack.c.bf16 %v997, %v995
      %v1065 = vpack.c.bf16 %v1000, %v998
      %v1066 = vpack.c.bf16 %v1001, %v999
      %v1083 = vunpack.c.l.b16 %v1035
      %v1084 = vunpack.c.l.b16 %v1036
      %v1085 = vunpack.c.l.b16 %v1037
      %v1086 = vunpack.c.l.b16 %v1038
      %v1087 = vunpack.c.l.b16 %v1039
      %v1088 = vunpack.c.l.b16 %v1040
      %v1089 = vunpack.c.l.b16 %v1041
      %v1090 = vunpack.c.l.b16 %v1042
      %v1091 = vunpack.c.l.b16 %v1043
      %v1092 = vunpack.c.l.b16 %v1044
      %v1093 = vunpack.c.l.b16 %v1045
      %v1094 = vunpack.c.l.b16 %v1046
      %v1095 = vunpack.c.l.b16 %v1047
      %v1096 = vunpack.c.l.b16 %v1048
      %v1097 = vunpack.c.l.b16 %v1049
      %v1098 = vunpack.c.l.b16 %v1050
      %v1099 = vpack.c.b16 %v1084, %v1083
      %v1100 = vpack.c.b16 %v1086, %v1085
      %v1101 = vpack.c.b16 %v1088, %v1087
      %v1102 = vpack.c.b16 %v1090, %v1089
      %v1103 = vpack.c.b16 %v1092, %v1091
      %v1104 = vpack.c.b16 %v1094, %v1093
      %v1105 = vpack.c.b16 %v1096, %v1095
      %v1106 = vpack.c.b16 %v1098, %v1097
      %1115 = vmatprep.subr.bf16.mxu0 %v1066
      %1116 = vmatpush1.bf16.msra.mxu0 %v1065
      %1117 = vmatprep.subr.bf16.mxu0 %v1064
      %1118 = vmatpush1.bf16.msra.mxu0 %v1063
      %1119 = vmatprep.subr.bf16.mxu0 %v1062
      %1120 = vmatpush1.bf16.msra.mxu0 %v1061
      %1121 = vmatprep.subr.bf16.mxu0 %v1060
      %1122 = vmatpush1.bf16.msra.mxu0 %v1059
      %1123 = vmatprep.subr.bf16.mxu0 %v1058
      %1124 = vmatpush1.bf16.msra.mxu0 %v1057
      %1125 = vmatprep.subr.bf16.mxu0 %v1056
      %1126 = vmatpush1.bf16.msra.mxu0 %v1055
      %1127 = vmatprep.subr.bf16.mxu0 %v1054
      %1128 = vmatpush1.bf16.msra.mxu0 %v1053
      %1129 = vmatprep.subr.bf16.mxu0 %v1052
      %1130 = vmatpush1.bf16.msra.mxu0 %v1051
      %1131 = vmatprep.subr.bf16.mxu0 0
      %1132 = vmatpush2.bf16.msra.mxu0 0
      %1133 = vmatprep.subr.bf16.mxu0 0
      %1134 = vmatpush2.bf16.msra.mxu0 0
      %1135 = vmatprep.subr.bf16.mxu0 0
      %1136 = vmatpush2.bf16.msra.mxu0 0
      %1137 = vmatprep.subr.bf16.mxu0 0
      %1138 = vmatpush2.bf16.msra.mxu0 0
      %1139 = vmatprep.subr.bf16.mxu0 0
      %1140 = vmatpush2.bf16.msra.mxu0 0
      %1141 = vmatprep.subr.bf16.mxu0 0
      %1142 = vmatpush2.bf16.msra.mxu0 0
      %1143 = vmatprep.subr.bf16.mxu0 0
      %1144 = vmatpush2.bf16.msra.mxu0 0
      %1145 = vmatprep.subr.bf16.mxu0 0
      %1146 = vmatpush2.bf16.msra.mxu0 0
      %1147 = vmatprep.mubr.bf16.mxu0 0
      %1148 = vmatmul.mubr.bf16.gmra.mxu0 %v1099
      %v1149 = vpop.f32.mrf.mxu0
      %v1150 = vadd.f32 0.0, %v1149
      %v1151 = vpop.f32.mrf.mxu0
      %v1152 = vadd.f32 0.0, %v1151
      %v1153 = vpop.f32.mrf.mxu0
      %v1154 = vadd.f32 0.0, %v1153
      %v1155 = vpop.f32.mrf.mxu0
      %v1156 = vadd.f32 0.0, %v1155
      %1157 = vmatprep.mubr.bf16.mxu0 0
      %1158 = vmatmul.mubr.bf16.gmra.mxu0 %v1100
      %v1159 = vpop.f32.mrf.mxu0
      %v1160 = vadd.f32 0.0, %v1159
      %v1161 = vpop.f32.mrf.mxu0
      %v1162 = vadd.f32 0.0, %v1161
      %v1163 = vpop.f32.mrf.mxu0
      %v1164 = vadd.f32 0.0, %v1163
      %v1165 = vpop.f32.mrf.mxu0
      %v1166 = vadd.f32 0.0, %v1165
      %1167 = vmatprep.mubr.bf16.mxu0 0
      %1168 = vmatmul.mubr.bf16.gmra.mxu0 %v1101
      %v1169 = vpop.f32.mrf.mxu0
      %v1170 = vadd.f32 0.0, %v1169
      %v1171 = vpop.f32.mrf.mxu0
      %v1172 = vadd.f32 0.0, %v1171
      %v1173 = vpop.f32.mrf.mxu0
      %v1174 = vadd.f32 0.0, %v1173
      %v1175 = vpop.f32.mrf.mxu0
      %v1176 = vadd.f32 0.0, %v1175
      %1177 = vmatprep.mubr.bf16.mxu0 0
      %1178 = vmatmul.mubr.bf16.gmra.mxu0 %v1102
      %v1179 = vpop.f32.mrf.mxu0
      %v1180 = vadd.f32 0.0, %v1179
      %v1181 = vpop.f32.mrf.mxu0
      %v1182 = vadd.f32 0.0, %v1181
      %v1183 = vpop.f32.mrf.mxu0
      %v1184 = vadd.f32 0.0, %v1183
      %v1185 = vpop.f32.mrf.mxu0
      %v1186 = vadd.f32 0.0, %v1185
      %1187 = vmatprep.mubr.bf16.mxu0 0
      %1188 = vmatmul.mubr.bf16.gmra.mxu0 %v1103
      %v1189 = vpop.f32.mrf.mxu0
      %v1190 = vadd.f32 0.0, %v1189
      %v1191 = vpop.f32.mrf.mxu0
      %v1192 = vadd.f32 0.0, %v1191
      %v1193 = vpop.f32.mrf.mxu0
      %v1194 = vadd.f32 0.0, %v1193
      %v1195 = vpop.f32.mrf.mxu0
      %v1196 = vadd.f32 0.0, %v1195
      %1197 = vmatprep.mubr.bf16.mxu0 0
      %1198 = vmatmul.mubr.bf16.gmra.mxu0 %v1104
      %v1199 = vpop.f32.mrf.mxu0
      %v1200 = vadd.f32 0.0, %v1199
      %v1201 = vpop.f32.mrf.mxu0
      %v1202 = vadd.f32 0.0, %v1201
      %v1203 = vpop.f32.mrf.mxu0
      %v1204 = vadd.f32 0.0, %v1203
      %v1205 = vpop.f32.mrf.mxu0
      %v1206 = vadd.f32 0.0, %v1205
      %1207 = vmatprep.mubr.bf16.mxu0 0
      %1208 = vmatmul.mubr.bf16.gmra.mxu0 %v1105
      %v1209 = vpop.f32.mrf.mxu0
      %v1210 = vadd.f32 0.0, %v1209
      %v1211 = vpop.f32.mrf.mxu0
      %v1212 = vadd.f32 0.0, %v1211
      %v1213 = vpop.f32.mrf.mxu0
      %v1214 = vadd.f32 0.0, %v1213
      %v1215 = vpop.f32.mrf.mxu0
      %v1216 = vadd.f32 0.0, %v1215
      %1217 = vmatprep.mubr.bf16.mxu0 0
      %1218 = vmatmul.mubr.bf16.gmra.mxu0 %v1106
      %v1219 = vpop.f32.mrf.mxu0
      %v1220 = vadd.f32 0.0, %v1219
      %v1221 = vpop.f32.mrf.mxu0
      %v1222 = vadd.f32 0.0, %v1221
      %v1223 = vpop.f32.mrf.mxu0
      %v1224 = vadd.f32 0.0, %v1223
      %v1225 = vpop.f32.mrf.mxu0
      %v1226 = vadd.f32 0.0, %v1225
      %1227 = vdwg.mxu0
      %v1228 = vadd.f32 %v1002, %v1150
      %v1229 = vadd.f32 %v1003, %v1152
      %v1230 = vadd.f32 %v1004, %v1154
      %v1231 = vadd.f32 %v1005, %v1156
      %v1232 = vadd.f32 %v1006, %v1160
      %v1233 = vadd.f32 %v1007, %v1162
      %v1234 = vadd.f32 %v1008, %v1164
      %v1235 = vadd.f32 %v1009, %v1166
      %v1236 = vadd.f32 %v1010, %v1170
      %v1237 = vadd.f32 %v1011, %v1172
      %v1238 = vadd.f32 %v1012, %v1174
      %v1239 = vadd.f32 %v1013, %v1176
      %v1240 = vadd.f32 %v1014, %v1180
      %v1241 = vadd.f32 %v1015, %v1182
      %v1242 = vadd.f32 %v1016, %v1184
      %v1243 = vadd.f32 %v1017, %v1186
      %v1244 = vadd.f32 %v1018, %v1190
      %v1245 = vadd.f32 %v1019, %v1192
      %v1246 = vadd.f32 %v1020, %v1194
      %v1247 = vadd.f32 %v1021, %v1196
      %v1248 = vadd.f32 %v1022, %v1200
      %v1249 = vadd.f32 %v1023, %v1202
      %v1250 = vadd.f32 %v1024, %v1204
      %v1251 = vadd.f32 %v1025, %v1206
      %v1252 = vadd.f32 %v1026, %v1210
      %v1253 = vadd.f32 %v1027, %v1212
      %v1254 = vadd.f32 %v1028, %v1214
      %v1255 = vadd.f32 %v1029, %v1216
      %v1256 = vadd.f32 %v1030, %v1220
      %v1257 = vadd.f32 %v1031, %v1222
      %v1258 = vadd.f32 %v1032, %v1224
      %v1259 = vadd.f32 %v1033, %v1226
      %1260 = vst [vmem:[#allocation2] sm:$0xff] %v1228
      %1261 = vst [vmem:[#allocation2 + $0x8] sm:$0xff] %v1229
      %1262 = vst [vmem:[#allocation2 + $0x10] sm:$0xff] %v1230
      %1263 = vst [vmem:[#allocation2 + $0x18] sm:$0xff] %v1231
      %1264 = vst [vmem:[#allocation2 + $0x20] sm:$0xff] %v1232
      %1265 = vst [vmem:[#allocation2 + $0x28] sm:$0xff] %v1233
      %1266 = vst [vmem:[#allocation2 + $0x30] sm:$0xff] %v1234
      %1267 = vst [vmem:[#allocation2 + $0x38] sm:$0xff] %v1235
      %1268 = vst [vmem:[#allocation2 + $0x40] sm:$0xff] %v1236
      %1269 = vst [vmem:[#allocation2 + $0x48] sm:$0xff] %v1237
      %1270 = vst [vmem:[#allocation2 + $0x50] sm:$0xff] %v1238
      %1271 = vst [vmem:[#allocation2 + $0x58] sm:$0xff] %v1239
      %1272 = vst [vmem:[#allocation2 + $0x60] sm:$0xff] %v1240
      %1273 = vst [vmem:[#allocation2 + $0x68] sm:$0xff] %v1241
      %1274 = vst [vmem:[#allocation2 + $0x70] sm:$0xff] %v1242
      %1275 = vst [vmem:[#allocation2 + $0x78] sm:$0xff] %v1243
      %1276 = vst [vmem:[#allocation2 + $0x80] sm:$0xff] %v1244
      %1277 = vst [vmem:[#allocation2 + $0x88] sm:$0xff] %v1245
      %1278 = vst [vmem:[#allocation2 + $0x90] sm:$0xff] %v1246
      %1279 = vst [vmem:[#allocation2 + $0x98] sm:$0xff] %v1247
      %1280 = vst [vmem:[#allocation2 + $0xa0] sm:$0xff] %v1248
      %1281 = vst [vmem:[#allocation2 + $0xa8] sm:$0xff] %v1249
      %1282 = vst [vmem:[#allocation2 + $0xb0] sm:$0xff] %v1250
      %1283 = vst [vmem:[#allocation2 + $0xb8] sm:$0xff] %v1251
      %1284 = vst [vmem:[#allocation2 + $0xc0] sm:$0xff] %v1252
      %1285 = vst [vmem:[#allocation2 + $0xc8] sm:$0xff] %v1253
      %1286 = vst [vmem:[#allocation2 + $0xd0] sm:$0xff] %v1254
      %1287 = vst [vmem:[#allocation2 + $0xd8] sm:$0xff] %v1255
      %1288 = vst [vmem:[#allocation2 + $0xe0] sm:$0xff] %v1256
      %1289 = vst [vmem:[#allocation2 + $0xe8] sm:$0xff] %v1257
      %1290 = vst [vmem:[#allocation2 + $0xf0] sm:$0xff] %v1258
      %1291 = vst [vmem:[#allocation2 + $0xf8] sm:$0xff] %v1259
      %v1292 = vld [vmem:[%s288] sm:$0xff]
      %v1293 = vld [vmem:[%s288 + $0x8] sm:$0xff]
      %v1294 = vld [vmem:[%s288 + $0x10] sm:$0xff]
      %v1295 = vld [vmem:[%s288 + $0x18] sm:$0xff]
      %v1296 = vld [vmem:[%s288 + $0x20] sm:$0xff]
      %v1297 = vld [vmem:[%s288 + $0x28] sm:$0xff]
      %v1298 = vld [vmem:[%s288 + $0x30] sm:$0xff]
      %v1299 = vld [vmem:[%s288 + $0x38] sm:$0xff]
      %v1300 = vld [vmem:[%s288 + $0x40] sm:$0xff]
      %v1301 = vld [vmem:[%s288 + $0x48] sm:$0xff]
      %v1302 = vld [vmem:[%s288 + $0x50] sm:$0xff]
      %v1303 = vld [vmem:[%s288 + $0x58] sm:$0xff]
      %v1304 = vld [vmem:[%s288 + $0x60] sm:$0xff]
      %v1305 = vld [vmem:[%s288 + $0x68] sm:$0xff]
      %v1306 = vld [vmem:[%s288 + $0x70] sm:$0xff]
      %v1307 = vld [vmem:[%s288 + $0x78] sm:$0xff]
      %v1308 = vunpack.c.l.bf16 %v1292
      %v1309 = vunpack.c.h.bf16 %v1292
      %v1310 = vunpack.c.l.bf16 %v1293
      %v1311 = vunpack.c.h.bf16 %v1293
      %v1312 = vunpack.c.l.bf16 %v1294
      %v1313 = vunpack.c.h.bf16 %v1294
      %v1314 = vunpack.c.l.bf16 %v1295
      %v1315 = vunpack.c.h.bf16 %v1295
      %v1316 = vunpack.c.l.bf16 %v1296
      %v1317 = vunpack.c.h.bf16 %v1296
      %v1318 = vunpack.c.l.bf16 %v1297
      %v1319 = vunpack.c.h.bf16 %v1297
      %v1320 = vunpack.c.l.bf16 %v1298
      %v1321 = vunpack.c.h.bf16 %v1298
      %v1322 = vunpack.c.l.bf16 %v1299
      %v1323 = vunpack.c.h.bf16 %v1299
      %v1324 = vunpack.c.l.bf16 %v1300
      %v1325 = vunpack.c.h.bf16 %v1300
      %v1326 = vunpack.c.l.bf16 %v1301
      %v1327 = vunpack.c.h.bf16 %v1301
      %v1328 = vunpack.c.l.bf16 %v1302
      %v1329 = vunpack.c.h.bf16 %v1302
      %v1330 = vunpack.c.l.bf16 %v1303
      %v1331 = vunpack.c.h.bf16 %v1303
      %v1332 = vunpack.c.l.bf16 %v1304
      %v1333 = vunpack.c.h.bf16 %v1304
      %v1334 = vunpack.c.l.bf16 %v1305
      %v1335 = vunpack.c.h.bf16 %v1305
      %v1336 = vunpack.c.l.bf16 %v1306
      %v1337 = vunpack.c.h.bf16 %v1306
      %v1338 = vunpack.c.l.bf16 %v1307
      %v1339 = vunpack.c.h.bf16 %v1307
      %1340 = vrot.lane.b32.xlu0 %v1308, 15
      %v1341 = vpop.permute.xlu0 %1340
      %1342 = vrot.lane.b32.xlu0 %v1310, 15
      %v1343 = vpop.permute.xlu0 %1342
      %1344 = vrot.lane.b32.xlu0 %v1312, 15
      %v1345 = vpop.permute.xlu0 %1344
      %1346 = vrot.lane.b32.xlu0 %v1314, 15
      %v1347 = vpop.permute.xlu0 %1346
      %1348 = vrot.lane.b32.xlu0 %v1316, 15
      %v1349 = vpop.permute.xlu0 %1348
      %1350 = vrot.lane.b32.xlu0 %v1318, 15
      %v1351 = vpop.permute.xlu0 %1350
      %1352 = vrot.lane.b32.xlu0 %v1320, 15
      %v1353 = vpop.permute.xlu0 %1352
      %1354 = vrot.lane.b32.xlu0 %v1322, 15
      %v1355 = vpop.permute.xlu0 %1354
      %1356 = vrot.lane.b32.xlu0 %v1324, 15
      %v1357 = vpop.permute.xlu0 %1356
      %1358 = vrot.lane.b32.xlu0 %v1326, 15
      %v1359 = vpop.permute.xlu0 %1358
      %1360 = vrot.lane.b32.xlu0 %v1328, 15
      %v1361 = vpop.permute.xlu0 %1360
      %1362 = vrot.lane.b32.xlu0 %v1330, 15
      %v1363 = vpop.permute.xlu0 %1362
      %1364 = vrot.lane.b32.xlu0 %v1332, 15
      %v1365 = vpop.permute.xlu0 %1364
      %1366 = vrot.lane.b32.xlu0 %v1334, 15
      %v1367 = vpop.permute.xlu0 %1366
      %1368 = vrot.lane.b32.xlu0 %v1336, 15
      %v1369 = vpop.permute.xlu0 %1368
      %1370 = vrot.lane.b32.xlu0 %v1338, 15
      %v1371 = vpop.permute.xlu0 %1370
      %1372 = vrot.lane.b32.xlu0 %v1309, 15
      %v1373 = vpop.permute.xlu0 %1372
      %1374 = vrot.lane.b32.xlu0 %v1311, 15
      %v1375 = vpop.permute.xlu0 %1374
      %1376 = vrot.lane.b32.xlu0 %v1313, 15
      %v1377 = vpop.permute.xlu0 %1376
      %1378 = vrot.lane.b32.xlu0 %v1315, 15
      %v1379 = vpop.permute.xlu0 %1378
      %1380 = vrot.lane.b32.xlu0 %v1317, 15
      %v1381 = vpop.permute.xlu0 %1380
      %1382 = vrot.lane.b32.xlu0 %v1319, 15
      %v1383 = vpop.permute.xlu0 %1382
      %1384 = vrot.lane.b32.xlu0 %v1321, 15
      %v1385 = vpop.permute.xlu0 %1384
      %1386 = vrot.lane.b32.xlu0 %v1323, 15
      %v1387 = vpop.permute.xlu0 %1386
      %1388 = vrot.lane.b32.xlu0 %v1325, 15
      %v1389 = vpop.permute.xlu0 %1388
      %1390 = vrot.lane.b32.xlu0 %v1327, 15
      %v1391 = vpop.permute.xlu0 %1390
      %1392 = vrot.lane.b32.xlu0 %v1329, 15
      %v1393 = vpop.permute.xlu0 %1392
      %1394 = vrot.lane.b32.xlu0 %v1331, 15
      %v1395 = vpop.permute.xlu0 %1394
      %1396 = vrot.lane.b32.xlu0 %v1333, 15
      %v1397 = vpop.permute.xlu0 %1396
      %1398 = vrot.lane.b32.xlu0 %v1335, 15
      %v1399 = vpop.permute.xlu0 %1398
      %1400 = vrot.lane.b32.xlu0 %v1337, 15
      %v1401 = vpop.permute.xlu0 %1400
      %1402 = vrot.lane.b32.xlu0 %v1339, 15
      %v1403 = vpop.permute.xlu0 %1402
      %vm1404 = vcmp.lt.s32.totalorder %v445, 15
      %v1405 = vsel %vm1404, %v1341, %v1373
      %v1406 = vsel %vm1404, %v1343, %v1375
      %v1407 = vsel %vm1404, %v1345, %v1377
      %v1408 = vsel %vm1404, %v1347, %v1379
      %v1409 = vsel %vm1404, %v1349, %v1381
      %v1410 = vsel %vm1404, %v1351, %v1383
      %v1411 = vsel %vm1404, %v1353, %v1385
      %v1412 = vsel %vm1404, %v1355, %v1387
      %v1413 = vsel %vm1404, %v1357, %v1389
      %v1414 = vsel %vm1404, %v1359, %v1391
      %v1415 = vsel %vm1404, %v1361, %v1393
      %v1416 = vsel %vm1404, %v1363, %v1395
      %v1417 = vsel %vm1404, %v1365, %v1397
      %v1418 = vsel %vm1404, %v1367, %v1399
      %v1419 = vsel %vm1404, %v1369, %v1401
      %v1420 = vsel %vm1404, %v1371, %v1403
      %v1421 = vsel %vm1404, %v1373, %v1341
      %v1422 = vsel %vm1404, %v1375, %v1343
      %v1423 = vsel %vm1404, %v1377, %v1345
      %v1424 = vsel %vm1404, %v1379, %v1347
      %v1425 = vsel %vm1404, %v1381, %v1349
      %v1426 = vsel %vm1404, %v1383, %v1351
      %v1427 = vsel %vm1404, %v1385, %v1353
      %v1428 = vsel %vm1404, %v1387, %v1355
      %v1429 = vsel %vm1404, %v1389, %v1357
      %v1430 = vsel %vm1404, %v1391, %v1359
      %v1431 = vsel %vm1404, %v1393, %v1361
      %v1432 = vsel %vm1404, %v1395, %v1363
      %v1433 = vsel %vm1404, %v1397, %v1365
      %v1434 = vsel %vm1404, %v1399, %v1367
      %v1435 = vsel %vm1404, %v1401, %v1369
      %v1436 = vsel %vm1404, %v1403, %v1371
      %s1437 = scalar_lea.vmem %s5, 4
      %v1438 = vld [vmem:[%s1437] sm:$0x3]
      %v1440 = vlaneseq
      %v1441 = vshrl.u32 %v1440, 7
      %v1442 = vsub.s32 0, %v1441
      %v1443 = vrot.slane %v1438, %v1442
      %v1444 = vlaneseq
      %v1445 = vshrl.u32 %v1444, 7
      %v1446 = vsub.s32 1, %v1445
      %v1447 = vrot.slane %v1438, %v1446
      %v1450 = vmul.f32 %v1421, %v1443
      %v1451 = vmul.f32 %v1405, %v1447
      %v1452 = vmul.f32 %v1422, %v1443
      %v1453 = vmul.f32 %v1406, %v1447
      %v1454 = vmul.f32 %v1423, %v1443
      %v1455 = vmul.f32 %v1407, %v1447
      %v1456 = vmul.f32 %v1424, %v1443
      %v1457 = vmul.f32 %v1408, %v1447
      %v1458 = vmul.f32 %v1425, %v1443
      %v1459 = vmul.f32 %v1409, %v1447
      %v1460 = vmul.f32 %v1426, %v1443
      %v1461 = vmul.f32 %v1410, %v1447
      %v1462 = vmul.f32 %v1427, %v1443
      %v1463 = vmul.f32 %v1411, %v1447
      %v1464 = vmul.f32 %v1428, %v1443
      %v1465 = vmul.f32 %v1412, %v1447
      %v1466 = vmul.f32 %v1429, %v1443
      %v1467 = vmul.f32 %v1413, %v1447
      %v1468 = vmul.f32 %v1430, %v1443
      %v1469 = vmul.f32 %v1414, %v1447
      %v1470 = vmul.f32 %v1431, %v1443
      %v1471 = vmul.f32 %v1415, %v1447
      %v1472 = vmul.f32 %v1432, %v1443
      %v1473 = vmul.f32 %v1416, %v1447
      %v1474 = vmul.f32 %v1433, %v1443
      %v1475 = vmul.f32 %v1417, %v1447
      %v1476 = vmul.f32 %v1434, %v1443
      %v1477 = vmul.f32 %v1418, %v1447
      %v1478 = vmul.f32 %v1435, %v1443
      %v1479 = vmul.f32 %v1419, %v1447
      %v1480 = vmul.f32 %v1436, %v1443
      %v1481 = vmul.f32 %v1420, %v1447
      %v1482 = vld [vmem:[#allocation2] sm:$0xff]
      %v1483 = vld [vmem:[#allocation2 + $0x8] sm:$0xff]
      %v1484 = vld [vmem:[#allocation2 + $0x10] sm:$0xff]
      %v1485 = vld [vmem:[#allocation2 + $0x18] sm:$0xff]
      %v1486 = vld [vmem:[#allocation2 + $0x20] sm:$0xff]
      %v1487 = vld [vmem:[#allocation2 + $0x28] sm:$0xff]
      %v1488 = vld [vmem:[#allocation2 + $0x30] sm:$0xff]
      %v1489 = vld [vmem:[#allocation2 + $0x38] sm:$0xff]
      %v1490 = vld [vmem:[#allocation2 + $0x40] sm:$0xff]
      %v1491 = vld [vmem:[#allocation2 + $0x48] sm:$0xff]
      %v1492 = vld [vmem:[#allocation2 + $0x50] sm:$0xff]
      %v1493 = vld [vmem:[#allocation2 + $0x58] sm:$0xff]
      %v1494 = vld [vmem:[#allocation2 + $0x60] sm:$0xff]
      %v1495 = vld [vmem:[#allocation2 + $0x68] sm:$0xff]
      %v1496 = vld [vmem:[#allocation2 + $0x70] sm:$0xff]
      %v1497 = vld [vmem:[#allocation2 + $0x78] sm:$0xff]
      %v1498 = vld [vmem:[#allocation2 + $0x80] sm:$0xff]
      %v1499 = vld [vmem:[#allocation2 + $0x88] sm:$0xff]
      %v1500 = vld [vmem:[#allocation2 + $0x90] sm:$0xff]
      %v1501 = vld [vmem:[#allocation2 + $0x98] sm:$0xff]
      %v1502 = vld [vmem:[#allocation2 + $0xa0] sm:$0xff]
      %v1503 = vld [vmem:[#allocation2 + $0xa8] sm:$0xff]
      %v1504 = vld [vmem:[#allocation2 + $0xb0] sm:$0xff]
      %v1505 = vld [vmem:[#allocation2 + $0xb8] sm:$0xff]
      %v1506 = vld [vmem:[#allocation2 + $0xc0] sm:$0xff]
      %v1507 = vld [vmem:[#allocation2 + $0xc8] sm:$0xff]
      %v1508 = vld [vmem:[#allocation2 + $0xd0] sm:$0xff]
      %v1509 = vld [vmem:[#allocation2 + $0xd8] sm:$0xff]
      %v1510 = vld [vmem:[#allocation2 + $0xe0] sm:$0xff]
      %v1511 = vld [vmem:[#allocation2 + $0xe8] sm:$0xff]
      %v1512 = vld [vmem:[#allocation2 + $0xf0] sm:$0xff]
      %v1513 = vld [vmem:[#allocation2 + $0xf8] sm:$0xff]
      %s1514 = scalar_lea.vmem %s1, 128
      %v1515 = vld [vmem:[%s1514] sm:$0xf]
      %v1516 = vld [vmem:[%s1514 + $0x4] sm:$0xf]
      %v1517 = vld [vmem:[%s1514 + $0x8] sm:$0xf]
      %v1518 = vld [vmem:[%s1514 + $0xc] sm:$0xf]
      %v1519 = vld [vmem:[%s1514 + $0x10] sm:$0xf]
      %v1520 = vld [vmem:[%s1514 + $0x14] sm:$0xf]
      %v1521 = vld [vmem:[%s1514 + $0x18] sm:$0xf]
      %v1522 = vld [vmem:[%s1514 + $0x1c] sm:$0xf]
      %v1523 = vld [vmem:[%s1514 + $0x20] sm:$0xf]
      %v1524 = vld [vmem:[%s1514 + $0x24] sm:$0xf]
      %v1525 = vld [vmem:[%s1514 + $0x28] sm:$0xf]
      %v1526 = vld [vmem:[%s1514 + $0x2c] sm:$0xf]
      %v1527 = vld [vmem:[%s1514 + $0x30] sm:$0xf]
      %v1528 = vld [vmem:[%s1514 + $0x34] sm:$0xf]
      %v1529 = vld [vmem:[%s1514 + $0x38] sm:$0xf]
      %v1530 = vld [vmem:[%s1514 + $0x3c] sm:$0xf]
      %v1531 = vpack.c.bf16 %v1452, %v1450
      %v1532 = vpack.c.bf16 %v1453, %v1451
      %v1533 = vpack.c.bf16 %v1456, %v1454
      %v1534 = vpack.c.bf16 %v1457, %v1455
      %v1535 = vpack.c.bf16 %v1460, %v1458
      %v1536 = vpack.c.bf16 %v1461, %v1459
      %v1537 = vpack.c.bf16 %v1464, %v1462
      %v1538 = vpack.c.bf16 %v1465, %v1463
      %v1539 = vpack.c.bf16 %v1468, %v1466
      %v1540 = vpack.c.bf16 %v1469, %v1467
      %v1541 = vpack.c.bf16 %v1472, %v1470
      %v1542 = vpack.c.bf16 %v1473, %v1471
      %v1543 = vpack.c.bf16 %v1476, %v1474
      %v1544 = vpack.c.bf16 %v1477, %v1475
      %v1545 = vpack.c.bf16 %v1480, %v1478
      %v1546 = vpack.c.bf16 %v1481, %v1479
      %v1563 = vunpack.c.l.b16 %v1515
      %v1564 = vunpack.c.l.b16 %v1516
      %v1565 = vunpack.c.l.b16 %v1517
      %v1566 = vunpack.c.l.b16 %v1518
      %v1567 = vunpack.c.l.b16 %v1519
      %v1568 = vunpack.c.l.b16 %v1520
      %v1569 = vunpack.c.l.b16 %v1521
      %v1570 = vunpack.c.l.b16 %v1522
      %v1571 = vunpack.c.l.b16 %v1523
      %v1572 = vunpack.c.l.b16 %v1524
      %v1573 = vunpack.c.l.b16 %v1525
      %v1574 = vunpack.c.l.b16 %v1526
      %v1575 = vunpack.c.l.b16 %v1527
      %v1576 = vunpack.c.l.b16 %v1528
      %v1577 = vunpack.c.l.b16 %v1529
      %v1578 = vunpack.c.l.b16 %v1530
      %v1579 = vpack.c.b16 %v1564, %v1563
      %v1580 = vpack.c.b16 %v1566, %v1565
      %v1581 = vpack.c.b16 %v1568, %v1567
      %v1582 = vpack.c.b16 %v1570, %v1569
      %v1583 = vpack.c.b16 %v1572, %v1571
      %v1584 = vpack.c.b16 %v1574, %v1573
      %v1585 = vpack.c.b16 %v1576, %v1575
      %v1586 = vpack.c.b16 %v1578, %v1577
      %1595 = vmatprep.subr.bf16.mxu0 %v1546
      %1596 = vmatpush1.bf16.msra.mxu0 %v1545
      %1597 = vmatprep.subr.bf16.mxu0 %v1544
      %1598 = vmatpush1.bf16.msra.mxu0 %v1543
      %1599 = vmatprep.subr.bf16.mxu0 %v1542
      %1600 = vmatpush1.bf16.msra.mxu0 %v1541
      %1601 = vmatprep.subr.bf16.mxu0 %v1540
      %1602 = vmatpush1.bf16.msra.mxu0 %v1539
      %1603 = vmatprep.subr.bf16.mxu0 %v1538
      %1604 = vmatpush1.bf16.msra.mxu0 %v1537
      %1605 = vmatprep.subr.bf16.mxu0 %v1536
      %1606 = vmatpush1.bf16.msra.mxu0 %v1535
      %1607 = vmatprep.subr.bf16.mxu0 %v1534
      %1608 = vmatpush1.bf16.msra.mxu0 %v1533
      %1609 = vmatprep.subr.bf16.mxu0 %v1532
      %1610 = vmatpush1.bf16.msra.mxu0 %v1531
      %1611 = vmatprep.subr.bf16.mxu0 0
      %1612 = vmatpush2.bf16.msra.mxu0 0
      %1613 = vmatprep.subr.bf16.mxu0 0
      %1614 = vmatpush2.bf16.msra.mxu0 0
      %1615 = vmatprep.subr.bf16.mxu0 0
      %1616 = vmatpush2.bf16.msra.mxu0 0
      %1617 = vmatprep.subr.bf16.mxu0 0
      %1618 = vmatpush2.bf16.msra.mxu0 0
      %1619 = vmatprep.subr.bf16.mxu0 0
      %1620 = vmatpush2.bf16.msra.mxu0 0
      %1621 = vmatprep.subr.bf16.mxu0 0
      %1622 = vmatpush2.bf16.msra.mxu0 0
      %1623 = vmatprep.subr.bf16.mxu0 0
      %1624 = vmatpush2.bf16.msra.mxu0 0
      %1625 = vmatprep.subr.bf16.mxu0 0
      %1626 = vmatpush2.bf16.msra.mxu0 0
      %1627 = vmatprep.mubr.bf16.mxu0 0
      %1628 = vmatmul.mubr.bf16.gmra.mxu0 %v1579
      %v1629 = vpop.f32.mrf.mxu0
      %v1630 = vadd.f32 0.0, %v1629
      %v1631 = vpop.f32.mrf.mxu0
      %v1632 = vadd.f32 0.0, %v1631
      %v1633 = vpop.f32.mrf.mxu0
      %v1634 = vadd.f32 0.0, %v1633
      %v1635 = vpop.f32.mrf.mxu0
      %v1636 = vadd.f32 0.0, %v1635
      %1637 = vmatprep.mubr.bf16.mxu0 0
      %1638 = vmatmul.mubr.bf16.gmra.mxu0 %v1580
      %v1639 = vpop.f32.mrf.mxu0
      %v1640 = vadd.f32 0.0, %v1639
      %v1641 = vpop.f32.mrf.mxu0
      %v1642 = vadd.f32 0.0, %v1641
      %v1643 = vpop.f32.mrf.mxu0
      %v1644 = vadd.f32 0.0, %v1643
      %v1645 = vpop.f32.mrf.mxu0
      %v1646 = vadd.f32 0.0, %v1645
      %1647 = vmatprep.mubr.bf16.mxu0 0
      %1648 = vmatmul.mubr.bf16.gmra.mxu0 %v1581
      %v1649 = vpop.f32.mrf.mxu0
      %v1650 = vadd.f32 0.0, %v1649
      %v1651 = vpop.f32.mrf.mxu0
      %v1652 = vadd.f32 0.0, %v1651
      %v1653 = vpop.f32.mrf.mxu0
      %v1654 = vadd.f32 0.0, %v1653
      %v1655 = vpop.f32.mrf.mxu0
      %v1656 = vadd.f32 0.0, %v1655
      %1657 = vmatprep.mubr.bf16.mxu0 0
      %1658 = vmatmul.mubr.bf16.gmra.mxu0 %v1582
      %v1659 = vpop.f32.mrf.mxu0
      %v1660 = vadd.f32 0.0, %v1659
      %v1661 = vpop.f32.mrf.mxu0
      %v1662 = vadd.f32 0.0, %v1661
      %v1663 = vpop.f32.mrf.mxu0
      %v1664 = vadd.f32 0.0, %v1663
      %v1665 = vpop.f32.mrf.mxu0
      %v1666 = vadd.f32 0.0, %v1665
      %1667 = vmatprep.mubr.bf16.mxu0 0
      %1668 = vmatmul.mubr.bf16.gmra.mxu0 %v1583
      %v1669 = vpop.f32.mrf.mxu0
      %v1670 = vadd.f32 0.0, %v1669
      %v1671 = vpop.f32.mrf.mxu0
      %v1672 = vadd.f32 0.0, %v1671
      %v1673 = vpop.f32.mrf.mxu0
      %v1674 = vadd.f32 0.0, %v1673
      %v1675 = vpop.f32.mrf.mxu0
      %v1676 = vadd.f32 0.0, %v1675
      %1677 = vmatprep.mubr.bf16.mxu0 0
      %1678 = vmatmul.mubr.bf16.gmra.mxu0 %v1584
      %v1679 = vpop.f32.mrf.mxu0
      %v1680 = vadd.f32 0.0, %v1679
      %v1681 = vpop.f32.mrf.mxu0
      %v1682 = vadd.f32 0.0, %v1681
      %v1683 = vpop.f32.mrf.mxu0
      %v1684 = vadd.f32 0.0, %v1683
      %v1685 = vpop.f32.mrf.mxu0
      %v1686 = vadd.f32 0.0, %v1685
      %1687 = vmatprep.mubr.bf16.mxu0 0
      %1688 = vmatmul.mubr.bf16.gmra.mxu0 %v1585
      %v1689 = vpop.f32.mrf.mxu0
      %v1690 = vadd.f32 0.0, %v1689
      %v1691 = vpop.f32.mrf.mxu0
      %v1692 = vadd.f32 0.0, %v1691
      %v1693 = vpop.f32.mrf.mxu0
      %v1694 = vadd.f32 0.0, %v1693
      %v1695 = vpop.f32.mrf.mxu0
      %v1696 = vadd.f32 0.0, %v1695
      %1697 = vmatprep.mubr.bf16.mxu0 0
      %1698 = vmatmul.mubr.bf16.gmra.mxu0 %v1586
      %v1699 = vpop.f32.mrf.mxu0
      %v1700 = vadd.f32 0.0, %v1699
      %v1701 = vpop.f32.mrf.mxu0
      %v1702 = vadd.f32 0.0, %v1701
      %v1703 = vpop.f32.mrf.mxu0
      %v1704 = vadd.f32 0.0, %v1703
      %v1705 = vpop.f32.mrf.mxu0
      %v1706 = vadd.f32 0.0, %v1705
      %1707 = vdwg.mxu0
      %v1708 = vadd.f32 %v1482, %v1630
      %v1709 = vadd.f32 %v1483, %v1632
      %v1710 = vadd.f32 %v1484, %v1634
      %v1711 = vadd.f32 %v1485, %v1636
      %v1712 = vadd.f32 %v1486, %v1640
      %v1713 = vadd.f32 %v1487, %v1642
      %v1714 = vadd.f32 %v1488, %v1644
      %v1715 = vadd.f32 %v1489, %v1646
      %v1716 = vadd.f32 %v1490, %v1650
      %v1717 = vadd.f32 %v1491, %v1652
      %v1718 = vadd.f32 %v1492, %v1654
      %v1719 = vadd.f32 %v1493, %v1656
      %v1720 = vadd.f32 %v1494, %v1660
      %v1721 = vadd.f32 %v1495, %v1662
      %v1722 = vadd.f32 %v1496, %v1664
      %v1723 = vadd.f32 %v1497, %v1666
      %v1724 = vadd.f32 %v1498, %v1670
      %v1725 = vadd.f32 %v1499, %v1672
      %v1726 = vadd.f32 %v1500, %v1674
      %v1727 = vadd.f32 %v1501, %v1676
      %v1728 = vadd.f32 %v1502, %v1680
      %v1729 = vadd.f32 %v1503, %v1682
      %v1730 = vadd.f32 %v1504, %v1684
      %v1731 = vadd.f32 %v1505, %v1686
      %v1732 = vadd.f32 %v1506, %v1690
      %v1733 = vadd.f32 %v1507, %v1692
      %v1734 = vadd.f32 %v1508, %v1694
      %v1735 = vadd.f32 %v1509, %v1696
      %v1736 = vadd.f32 %v1510, %v1700
      %v1737 = vadd.f32 %v1511, %v1702
      %v1738 = vadd.f32 %v1512, %v1704
      %v1739 = vadd.f32 %v1513, %v1706
      %1740 = vst [vmem:[#allocation2] sm:$0xff] %v1708
      %1741 = vst [vmem:[#allocation2 + $0x8] sm:$0xff] %v1709
      %1742 = vst [vmem:[#allocation2 + $0x10] sm:$0xff] %v1710
      %1743 = vst [vmem:[#allocation2 + $0x18] sm:$0xff] %v1711
      %1744 = vst [vmem:[#allocation2 + $0x20] sm:$0xff] %v1712
      %1745 = vst [vmem:[#allocation2 + $0x28] sm:$0xff] %v1713
      %1746 = vst [vmem:[#allocation2 + $0x30] sm:$0xff] %v1714
      %1747 = vst [vmem:[#allocation2 + $0x38] sm:$0xff] %v1715
      %1748 = vst [vmem:[#allocation2 + $0x40] sm:$0xff] %v1716
      %1749 = vst [vmem:[#allocation2 + $0x48] sm:$0xff] %v1717
      %1750 = vst [vmem:[#allocation2 + $0x50] sm:$0xff] %v1718
      %1751 = vst [vmem:[#allocation2 + $0x58] sm:$0xff] %v1719
      %1752 = vst [vmem:[#allocation2 + $0x60] sm:$0xff] %v1720
      %1753 = vst [vmem:[#allocation2 + $0x68] sm:$0xff] %v1721
      %1754 = vst [vmem:[#allocation2 + $0x70] sm:$0xff] %v1722
      %1755 = vst [vmem:[#allocation2 + $0x78] sm:$0xff] %v1723
      %1756 = vst [vmem:[#allocation2 + $0x80] sm:$0xff] %v1724
      %1757 = vst [vmem:[#allocation2 + $0x88] sm:$0xff] %v1725
      %1758 = vst [vmem:[#allocation2 + $0x90] sm:$0xff] %v1726
      %1759 = vst [vmem:[#allocation2 + $0x98] sm:$0xff] %v1727
      %1760 = vst [vmem:[#allocation2 + $0xa0] sm:$0xff] %v1728
      %1761 = vst [vmem:[#allocation2 + $0xa8] sm:$0xff] %v1729
      %1762 = vst [vmem:[#allocation2 + $0xb0] sm:$0xff] %v1730
      %1763 = vst [vmem:[#allocation2 + $0xb8] sm:$0xff] %v1731
      %1764 = vst [vmem:[#allocation2 + $0xc0] sm:$0xff] %v1732
      %1765 = vst [vmem:[#allocation2 + $0xc8] sm:$0xff] %v1733
      %1766 = vst [vmem:[#allocation2 + $0xd0] sm:$0xff] %v1734
      %1767 = vst [vmem:[#allocation2 + $0xd8] sm:$0xff] %v1735
      %1768 = vst [vmem:[#allocation2 + $0xe0] sm:$0xff] %v1736
      %1769 = vst [vmem:[#allocation2 + $0xe8] sm:$0xff] %v1737
      %1770 = vst [vmem:[#allocation2 + $0xf0] sm:$0xff] %v1738
      %1771 = vst [vmem:[#allocation2 + $0xf8] sm:$0xff] %v1739
      %v1772 = vld [vmem:[%s288] sm:$0xff]
      %v1773 = vld [vmem:[%s288 + $0x8] sm:$0xff]
      %v1774 = vld [vmem:[%s288 + $0x10] sm:$0xff]
      %v1775 = vld [vmem:[%s288 + $0x18] sm:$0xff]
      %v1776 = vld [vmem:[%s288 + $0x20] sm:$0xff]
      %v1777 = vld [vmem:[%s288 + $0x28] sm:$0xff]
      %v1778 = vld [vmem:[%s288 + $0x30] sm:$0xff]
      %v1779 = vld [vmem:[%s288 + $0x38] sm:$0xff]
      %v1780 = vld [vmem:[%s288 + $0x40] sm:$0xff]
      %v1781 = vld [vmem:[%s288 + $0x48] sm:$0xff]
      %v1782 = vld [vmem:[%s288 + $0x50] sm:$0xff]
      %v1783 = vld [vmem:[%s288 + $0x58] sm:$0xff]
      %v1784 = vld [vmem:[%s288 + $0x60] sm:$0xff]
      %v1785 = vld [vmem:[%s288 + $0x68] sm:$0xff]
      %v1786 = vld [vmem:[%s288 + $0x70] sm:$0xff]
      %v1787 = vld [vmem:[%s288 + $0x78] sm:$0xff]
      %v1788 = vunpack.c.l.bf16 %v1772
      %v1789 = vunpack.c.h.bf16 %v1772
      %v1790 = vunpack.c.l.bf16 %v1773
      %v1791 = vunpack.c.h.bf16 %v1773
      %v1792 = vunpack.c.l.bf16 %v1774
      %v1793 = vunpack.c.h.bf16 %v1774
      %v1794 = vunpack.c.l.bf16 %v1775
      %v1795 = vunpack.c.h.bf16 %v1775
      %v1796 = vunpack.c.l.bf16 %v1776
      %v1797 = vunpack.c.h.bf16 %v1776
      %v1798 = vunpack.c.l.bf16 %v1777
      %v1799 = vunpack.c.h.bf16 %v1777
      %v1800 = vunpack.c.l.bf16 %v1778
      %v1801 = vunpack.c.h.bf16 %v1778
      %v1802 = vunpack.c.l.bf16 %v1779
      %v1803 = vunpack.c.h.bf16 %v1779
      %v1804 = vunpack.c.l.bf16 %v1780
      %v1805 = vunpack.c.h.bf16 %v1780
      %v1806 = vunpack.c.l.bf16 %v1781
      %v1807 = vunpack.c.h.bf16 %v1781
      %v1808 = vunpack.c.l.bf16 %v1782
      %v1809 = vunpack.c.h.bf16 %v1782
      %v1810 = vunpack.c.l.bf16 %v1783
      %v1811 = vunpack.c.h.bf16 %v1783
      %v1812 = vunpack.c.l.bf16 %v1784
      %v1813 = vunpack.c.h.bf16 %v1784
      %v1814 = vunpack.c.l.bf16 %v1785
      %v1815 = vunpack.c.h.bf16 %v1785
      %v1816 = vunpack.c.l.bf16 %v1786
      %v1817 = vunpack.c.h.bf16 %v1786
      %v1818 = vunpack.c.l.bf16 %v1787
      %v1819 = vunpack.c.h.bf16 %v1787
      %1820 = vrot.lane.b32.xlu0 %v1788, 1
      %v1821 = vpop.permute.xlu0 %1820
      %1822 = vrot.lane.b32.xlu0 %v1790, 1
      %v1823 = vpop.permute.xlu0 %1822
      %1824 = vrot.lane.b32.xlu0 %v1792, 1
      %v1825 = vpop.permute.xlu0 %1824
      %1826 = vrot.lane.b32.xlu0 %v1794, 1
      %v1827 = vpop.permute.xlu0 %1826
      %1828 = vrot.lane.b32.xlu0 %v1796, 1
      %v1829 = vpop.permute.xlu0 %1828
      %1830 = vrot.lane.b32.xlu0 %v1798, 1
      %v1831 = vpop.permute.xlu0 %1830
      %1832 = vrot.lane.b32.xlu0 %v1800, 1
      %v1833 = vpop.permute.xlu0 %1832
      %1834 = vrot.lane.b32.xlu0 %v1802, 1
      %v1835 = vpop.permute.xlu0 %1834
      %1836 = vrot.lane.b32.xlu0 %v1804, 1
      %v1837 = vpop.permute.xlu0 %1836
      %1838 = vrot.lane.b32.xlu0 %v1806, 1
      %v1839 = vpop.permute.xlu0 %1838
      %1840 = vrot.lane.b32.xlu0 %v1808, 1
      %v1841 = vpop.permute.xlu0 %1840
      %1842 = vrot.lane.b32.xlu0 %v1810, 1
      %v1843 = vpop.permute.xlu0 %1842
      %1844 = vrot.lane.b32.xlu0 %v1812, 1
      %v1845 = vpop.permute.xlu0 %1844
      %1846 = vrot.lane.b32.xlu0 %v1814, 1
      %v1847 = vpop.permute.xlu0 %1846
      %1848 = vrot.lane.b32.xlu0 %v1816, 1
      %v1849 = vpop.permute.xlu0 %1848
      %1850 = vrot.lane.b32.xlu0 %v1818, 1
      %v1851 = vpop.permute.xlu0 %1850
      %1852 = vrot.lane.b32.xlu0 %v1789, 1
      %v1853 = vpop.permute.xlu0 %1852
      %1854 = vrot.lane.b32.xlu0 %v1791, 1
      %v1855 = vpop.permute.xlu0 %1854
      %1856 = vrot.lane.b32.xlu0 %v1793, 1
      %v1857 = vpop.permute.xlu0 %1856
      %1858 = vrot.lane.b32.xlu0 %v1795, 1
      %v1859 = vpop.permute.xlu0 %1858
      %1860 = vrot.lane.b32.xlu0 %v1797, 1
      %v1861 = vpop.permute.xlu0 %1860
      %1862 = vrot.lane.b32.xlu0 %v1799, 1
      %v1863 = vpop.permute.xlu0 %1862
      %1864 = vrot.lane.b32.xlu0 %v1801, 1
      %v1865 = vpop.permute.xlu0 %1864
      %1866 = vrot.lane.b32.xlu0 %v1803, 1
      %v1867 = vpop.permute.xlu0 %1866
      %1868 = vrot.lane.b32.xlu0 %v1805, 1
      %v1869 = vpop.permute.xlu0 %1868
      %1870 = vrot.lane.b32.xlu0 %v1807, 1
      %v1871 = vpop.permute.xlu0 %1870
      %1872 = vrot.lane.b32.xlu0 %v1809, 1
      %v1873 = vpop.permute.xlu0 %1872
      %1874 = vrot.lane.b32.xlu0 %v1811, 1
      %v1875 = vpop.permute.xlu0 %1874
      %1876 = vrot.lane.b32.xlu0 %v1813, 1
      %v1877 = vpop.permute.xlu0 %1876
      %1878 = vrot.lane.b32.xlu0 %v1815, 1
      %v1879 = vpop.permute.xlu0 %1878
      %1880 = vrot.lane.b32.xlu0 %v1817, 1
      %v1881 = vpop.permute.xlu0 %1880
      %1882 = vrot.lane.b32.xlu0 %v1819, 1
      %v1883 = vpop.permute.xlu0 %1882
      %vm1884 = vcmp.lt.s32.totalorder %v445, 1
      %v1885 = vsel %vm1884, %v1821, %v1853
      %v1886 = vsel %vm1884, %v1823, %v1855
      %v1887 = vsel %vm1884, %v1825, %v1857
      %v1888 = vsel %vm1884, %v1827, %v1859
      %v1889 = vsel %vm1884, %v1829, %v1861
      %v1890 = vsel %vm1884, %v1831, %v1863
      %v1891 = vsel %vm1884, %v1833, %v1865
      %v1892 = vsel %vm1884, %v1835, %v1867
      %v1893 = vsel %vm1884, %v1837, %v1869
      %v1894 = vsel %vm1884, %v1839, %v1871
      %v1895 = vsel %vm1884, %v1841, %v1873
      %v1896 = vsel %vm1884, %v1843, %v1875
      %v1897 = vsel %vm1884, %v1845, %v1877
      %v1898 = vsel %vm1884, %v1847, %v1879
      %v1899 = vsel %vm1884, %v1849, %v1881
      %v1900 = vsel %vm1884, %v1851, %v1883
      %v1901 = vsel %vm1884, %v1853, %v1821
      %v1902 = vsel %vm1884, %v1855, %v1823
      %v1903 = vsel %vm1884, %v1857, %v1825
      %v1904 = vsel %vm1884, %v1859, %v1827
      %v1905 = vsel %vm1884, %v1861, %v1829
      %v1906 = vsel %vm1884, %v1863, %v1831
      %v1907 = vsel %vm1884, %v1865, %v1833
      %v1908 = vsel %vm1884, %v1867, %v1835
      %v1909 = vsel %vm1884, %v1869, %v1837
      %v1910 = vsel %vm1884, %v1871, %v1839
      %v1911 = vsel %vm1884, %v1873, %v1841
      %v1912 = vsel %vm1884, %v1875, %v1843
      %v1913 = vsel %vm1884, %v1877, %v1845
      %v1914 = vsel %vm1884, %v1879, %v1847
      %v1915 = vsel %vm1884, %v1881, %v1849
      %v1916 = vsel %vm1884, %v1883, %v1851
      %s1917 = scalar_lea.vmem %s5, 6
      %v1918 = vld [vmem:[%s1917] sm:$0x3]
      %v1920 = vlaneseq
      %v1921 = vshrl.u32 %v1920, 7
      %v1922 = vsub.s32 0, %v1921
      %v1923 = vrot.slane %v1918, %v1922
      %v1924 = vlaneseq
      %v1925 = vshrl.u32 %v1924, 7
      %v1926 = vsub.s32 1, %v1925
      %v1927 = vrot.slane %v1918, %v1926
      %v1930 = vmul.f32 %v1901, %v1923
      %v1931 = vmul.f32 %v1885, %v1927
      %v1932 = vmul.f32 %v1902, %v1923
      %v1933 = vmul.f32 %v1886, %v1927
      %v1934 = vmul.f32 %v1903, %v1923
      %v1935 = vmul.f32 %v1887, %v1927
      %v1936 = vmul.f32 %v1904, %v1923
      %v1937 = vmul.f32 %v1888, %v1927
      %v1938 = vmul.f32 %v1905, %v1923
      %v1939 = vmul.f32 %v1889, %v1927
      %v1940 = vmul.f32 %v1906, %v1923
      %v1941 = vmul.f32 %v1890, %v1927
      %v1942 = vmul.f32 %v1907, %v1923
      %v1943 = vmul.f32 %v1891, %v1927
      %v1944 = vmul.f32 %v1908, %v1923
      %v1945 = vmul.f32 %v1892, %v1927
      %v1946 = vmul.f32 %v1909, %v1923
      %v1947 = vmul.f32 %v1893, %v1927
      %v1948 = vmul.f32 %v1910, %v1923
      %v1949 = vmul.f32 %v1894, %v1927
      %v1950 = vmul.f32 %v1911, %v1923
      %v1951 = vmul.f32 %v1895, %v1927
      %v1952 = vmul.f32 %v1912, %v1923
      %v1953 = vmul.f32 %v1896, %v1927
      %v1954 = vmul.f32 %v1913, %v1923
      %v1955 = vmul.f32 %v1897, %v1927
      %v1956 = vmul.f32 %v1914, %v1923
      %v1957 = vmul.f32 %v1898, %v1927
      %v1958 = vmul.f32 %v1915, %v1923
      %v1959 = vmul.f32 %v1899, %v1927
      %v1960 = vmul.f32 %v1916, %v1923
      %v1961 = vmul.f32 %v1900, %v1927
      %v1962 = vld [vmem:[#allocation2] sm:$0xff]
      %v1963 = vld [vmem:[#allocation2 + $0x8] sm:$0xff]
      %v1964 = vld [vmem:[#allocation2 + $0x10] sm:$0xff]
      %v1965 = vld [vmem:[#allocation2 + $0x18] sm:$0xff]
      %v1966 = vld [vmem:[#allocation2 + $0x20] sm:$0xff]
      %v1967 = vld [vmem:[#allocation2 + $0x28] sm:$0xff]
      %v1968 = vld [vmem:[#allocation2 + $0x30] sm:$0xff]
      %v1969 = vld [vmem:[#allocation2 + $0x38] sm:$0xff]
      %v1970 = vld [vmem:[#allocation2 + $0x40] sm:$0xff]
      %v1971 = vld [vmem:[#allocation2 + $0x48] sm:$0xff]
      %v1972 = vld [vmem:[#allocation2 + $0x50] sm:$0xff]
      %v1973 = vld [vmem:[#allocation2 + $0x58] sm:$0xff]
      %v1974 = vld [vmem:[#allocation2 + $0x60] sm:$0xff]
      %v1975 = vld [vmem:[#allocation2 + $0x68] sm:$0xff]
      %v1976 = vld [vmem:[#allocation2 + $0x70] sm:$0xff]
      %v1977 = vld [vmem:[#allocation2 + $0x78] sm:$0xff]
      %v1978 = vld [vmem:[#allocation2 + $0x80] sm:$0xff]
      %v1979 = vld [vmem:[#allocation2 + $0x88] sm:$0xff]
      %v1980 = vld [vmem:[#allocation2 + $0x90] sm:$0xff]
      %v1981 = vld [vmem:[#allocation2 + $0x98] sm:$0xff]
      %v1982 = vld [vmem:[#allocation2 + $0xa0] sm:$0xff]
      %v1983 = vld [vmem:[#allocation2 + $0xa8] sm:$0xff]
      %v1984 = vld [vmem:[#allocation2 + $0xb0] sm:$0xff]
      %v1985 = vld [vmem:[#allocation2 + $0xb8] sm:$0xff]
      %v1986 = vld [vmem:[#allocation2 + $0xc0] sm:$0xff]
      %v1987 = vld [vmem:[#allocation2 + $0xc8] sm:$0xff]
      %v1988 = vld [vmem:[#allocation2 + $0xd0] sm:$0xff]
      %v1989 = vld [vmem:[#allocation2 + $0xd8] sm:$0xff]
      %v1990 = vld [vmem:[#allocation2 + $0xe0] sm:$0xff]
      %v1991 = vld [vmem:[#allocation2 + $0xe8] sm:$0xff]
      %v1992 = vld [vmem:[#allocation2 + $0xf0] sm:$0xff]
      %v1993 = vld [vmem:[#allocation2 + $0xf8] sm:$0xff]
      %s1994 = scalar_lea.vmem %s1, 192
      %v1995 = vld [vmem:[%s1994] sm:$0xf]
      %v1996 = vld [vmem:[%s1994 + $0x4] sm:$0xf]
      %v1997 = vld [vmem:[%s1994 + $0x8] sm:$0xf]
      %v1998 = vld [vmem:[%s1994 + $0xc] sm:$0xf]
      %v1999 = vld [vmem:[%s1994 + $0x10] sm:$0xf]
      %v2000 = vld [vmem:[%s1994 + $0x14] sm:$0xf]
      %v2001 = vld [vmem:[%s1994 + $0x18] sm:$0xf]
      %v2002 = vld [vmem:[%s1994 + $0x1c] sm:$0xf]
      %v2003 = vld [vmem:[%s1994 + $0x20] sm:$0xf]
      %v2004 = vld [vmem:[%s1994 + $0x24] sm:$0xf]
      %v2005 = vld [vmem:[%s1994 + $0x28] sm:$0xf]
      %v2006 = vld [vmem:[%s1994 + $0x2c] sm:$0xf]
      %v2007 = vld [vmem:[%s1994 + $0x30] sm:$0xf]
      %v2008 = vld [vmem:[%s1994 + $0x34] sm:$0xf]
      %v2009 = vld [vmem:[%s1994 + $0x38] sm:$0xf]
      %v2010 = vld [vmem:[%s1994 + $0x3c] sm:$0xf]
      %v2011 = vpack.c.bf16 %v1932, %v1930
      %v2012 = vpack.c.bf16 %v1933, %v1931
      %v2013 = vpack.c.bf16 %v1936, %v1934
      %v2014 = vpack.c.bf16 %v1937, %v1935
      %v2015 = vpack.c.bf16 %v1940, %v1938
      %v2016 = vpack.c.bf16 %v1941, %v1939
      %v2017 = vpack.c.bf16 %v1944, %v1942
      %v2018 = vpack.c.bf16 %v1945, %v1943
      %v2019 = vpack.c.bf16 %v1948, %v1946
      %v2020 = vpack.c.bf16 %v1949, %v1947
      %v2021 = vpack.c.bf16 %v1952, %v1950
      %v2022 = vpack.c.bf16 %v1953, %v1951
      %v2023 = vpack.c.bf16 %v1956, %v1954
      %v2024 = vpack.c.bf16 %v1957, %v1955
      %v2025 = vpack.c.bf16 %v1960, %v1958
      %v2026 = vpack.c.bf16 %v1961, %v1959
      %v2043 = vunpack.c.l.b16 %v1995
      %v2044 = vunpack.c.l.b16 %v1996
      %v2045 = vunpack.c.l.b16 %v1997
      %v2046 = vunpack.c.l.b16 %v1998
      %v2047 = vunpack.c.l.b16 %v1999
      %v2048 = vunpack.c.l.b16 %v2000
      %v2049 = vunpack.c.l.b16 %v2001
      %v2050 = vunpack.c.l.b16 %v2002
      %v2051 = vunpack.c.l.b16 %v2003
      %v2052 = vunpack.c.l.b16 %v2004
      %v2053 = vunpack.c.l.b16 %v2005
      %v2054 = vunpack.c.l.b16 %v2006
      %v2055 = vunpack.c.l.b16 %v2007
      %v2056 = vunpack.c.l.b16 %v2008
      %v2057 = vunpack.c.l.b16 %v2009
      %v2058 = vunpack.c.l.b16 %v2010
      %v2059 = vpack.c.b16 %v2044, %v2043
      %v2060 = vpack.c.b16 %v2046, %v2045
      %v2061 = vpack.c.b16 %v2048, %v2047
      %v2062 = vpack.c.b16 %v2050, %v2049
      %v2063 = vpack.c.b16 %v2052, %v2051
      %v2064 = vpack.c.b16 %v2054, %v2053
      %v2065 = vpack.c.b16 %v2056, %v2055
      %v2066 = vpack.c.b16 %v2058, %v2057
      %2075 = vmatprep.subr.bf16.mxu0 %v2026
      %2076 = vmatpush1.bf16.msra.mxu0 %v2025
      %2077 = vmatprep.subr.bf16.mxu0 %v2024
      %2078 = vmatpush1.bf16.msra.mxu0 %v2023
      %2079 = vmatprep.subr.bf16.mxu0 %v2022
      %2080 = vmatpush1.bf16.msra.mxu0 %v2021
      %2081 = vmatprep.subr.bf16.mxu0 %v2020
      %2082 = vmatpush1.bf16.msra.mxu0 %v2019
      %2083 = vmatprep.subr.bf16.mxu0 %v2018
      %2084 = vmatpush1.bf16.msra.mxu0 %v2017
      %2085 = vmatprep.subr.bf16.mxu0 %v2016
      %2086 = vmatpush1.bf16.msra.mxu0 %v2015
      %2087 = vmatprep.subr.bf16.mxu0 %v2014
      %2088 = vmatpush1.bf16.msra.mxu0 %v2013
      %2089 = vmatprep.subr.bf16.mxu0 %v2012
      %2090 = vmatpush1.bf16.msra.mxu0 %v2011
      %2091 = vmatprep.subr.bf16.mxu0 0
      %2092 = vmatpush2.bf16.msra.mxu0 0
      %2093 = vmatprep.subr.bf16.mxu0 0
      %2094 = vmatpush2.bf16.msra.mxu0 0
      %2095 = vmatprep.subr.bf16.mxu0 0
      %2096 = vmatpush2.bf16.msra.mxu0 0
      %2097 = vmatprep.subr.bf16.mxu0 0
      %2098 = vmatpush2.bf16.msra.mxu0 0
      %2099 = vmatprep.subr.bf16.mxu0 0
      %2100 = vmatpush2.bf16.msra.mxu0 0
      %2101 = vmatprep.subr.bf16.mxu0 0
      %2102 = vmatpush2.bf16.msra.mxu0 0
      %2103 = vmatprep.subr.bf16.mxu0 0
      %2104 = vmatpush2.bf16.msra.mxu0 0
      %2105 = vmatprep.subr.bf16.mxu0 0
      %2106 = vmatpush2.bf16.msra.mxu0 0
      %2107 = vmatprep.mubr.bf16.mxu0 0
      %2108 = vmatmul.mubr.bf16.gmra.mxu0 %v2059
      %v2109 = vpop.f32.mrf.mxu0
      %v2110 = vadd.f32 0.0, %v2109
      %v2111 = vpop.f32.mrf.mxu0
      %v2112 = vadd.f32 0.0, %v2111
      %v2113 = vpop.f32.mrf.mxu0
      %v2114 = vadd.f32 0.0, %v2113
      %v2115 = vpop.f32.mrf.mxu0
      %v2116 = vadd.f32 0.0, %v2115
      %2117 = vmatprep.mubr.bf16.mxu0 0
      %2118 = vmatmul.mubr.bf16.gmra.mxu0 %v2060
      %v2119 = vpop.f32.mrf.mxu0
      %v2120 = vadd.f32 0.0, %v2119
      %v2121 = vpop.f32.mrf.mxu0
      %v2122 = vadd.f32 0.0, %v2121
      %v2123 = vpop.f32.mrf.mxu0
      %v2124 = vadd.f32 0.0, %v2123
      %v2125 = vpop.f32.mrf.mxu0
      %v2126 = vadd.f32 0.0, %v2125
      %2127 = vmatprep.mubr.bf16.mxu0 0
      %2128 = vmatmul.mubr.bf16.gmra.mxu0 %v2061
      %v2129 = vpop.f32.mrf.mxu0
      %v2130 = vadd.f32 0.0, %v2129
      %v2131 = vpop.f32.mrf.mxu0
      %v2132 = vadd.f32 0.0, %v2131
      %v2133 = vpop.f32.mrf.mxu0
      %v2134 = vadd.f32 0.0, %v2133
      %v2135 = vpop.f32.mrf.mxu0
      %v2136 = vadd.f32 0.0, %v2135
      %2137 = vmatprep.mubr.bf16.mxu0 0
      %2138 = vmatmul.mubr.bf16.gmra.mxu0 %v2062
      %v2139 = vpop.f32.mrf.mxu0
      %v2140 = vadd.f32 0.0, %v2139
      %v2141 = vpop.f32.mrf.mxu0
      %v2142 = vadd.f32 0.0, %v2141
      %v2143 = vpop.f32.mrf.mxu0
      %v2144 = vadd.f32 0.0, %v2143
      %v2145 = vpop.f32.mrf.mxu0
      %v2146 = vadd.f32 0.0, %v2145
      %2147 = vmatprep.mubr.bf16.mxu0 0
      %2148 = vmatmul.mubr.bf16.gmra.mxu0 %v2063
      %v2149 = vpop.f32.mrf.mxu0
      %v2150 = vadd.f32 0.0, %v2149
      %v2151 = vpop.f32.mrf.mxu0
      %v2152 = vadd.f32 0.0, %v2151
      %v2153 = vpop.f32.mrf.mxu0
      %v2154 = vadd.f32 0.0, %v2153
      %v2155 = vpop.f32.mrf.mxu0
      %v2156 = vadd.f32 0.0, %v2155
      %2157 = vmatprep.mubr.bf16.mxu0 0
      %2158 = vmatmul.mubr.bf16.gmra.mxu0 %v2064
      %v2159 = vpop.f32.mrf.mxu0
      %v2160 = vadd.f32 0.0, %v2159
      %v2161 = vpop.f32.mrf.mxu0
      %v2162 = vadd.f32 0.0, %v2161
      %v2163 = vpop.f32.mrf.mxu0
      %v2164 = vadd.f32 0.0, %v2163
      %v2165 = vpop.f32.mrf.mxu0
      %v2166 = vadd.f32 0.0, %v2165
      %2167 = vmatprep.mubr.bf16.mxu0 0
      %2168 = vmatmul.mubr.bf16.gmra.mxu0 %v2065
      %v2169 = vpop.f32.mrf.mxu0
      %v2170 = vadd.f32 0.0, %v2169
      %v2171 = vpop.f32.mrf.mxu0
      %v2172 = vadd.f32 0.0, %v2171
      %v2173 = vpop.f32.mrf.mxu0
      %v2174 = vadd.f32 0.0, %v2173
      %v2175 = vpop.f32.mrf.mxu0
      %v2176 = vadd.f32 0.0, %v2175
      %2177 = vmatprep.mubr.bf16.mxu0 0
      %2178 = vmatmul.mubr.bf16.gmra.mxu0 %v2066
      %v2179 = vpop.f32.mrf.mxu0
      %v2180 = vadd.f32 0.0, %v2179
      %v2181 = vpop.f32.mrf.mxu0
      %v2182 = vadd.f32 0.0, %v2181
      %v2183 = vpop.f32.mrf.mxu0
      %v2184 = vadd.f32 0.0, %v2183
      %v2185 = vpop.f32.mrf.mxu0
      %v2186 = vadd.f32 0.0, %v2185
      %2187 = vdwg.mxu0
      %v2188 = vadd.f32 %v1962, %v2110
      %v2189 = vadd.f32 %v1963, %v2112
      %v2190 = vadd.f32 %v1964, %v2114
      %v2191 = vadd.f32 %v1965, %v2116
      %v2192 = vadd.f32 %v1966, %v2120
      %v2193 = vadd.f32 %v1967, %v2122
      %v2194 = vadd.f32 %v1968, %v2124
      %v2195 = vadd.f32 %v1969, %v2126
      %v2196 = vadd.f32 %v1970, %v2130
      %v2197 = vadd.f32 %v1971, %v2132
      %v2198 = vadd.f32 %v1972, %v2134
      %v2199 = vadd.f32 %v1973, %v2136
      %v2200 = vadd.f32 %v1974, %v2140
      %v2201 = vadd.f32 %v1975, %v2142
      %v2202 = vadd.f32 %v1976, %v2144
      %v2203 = vadd.f32 %v1977, %v2146
      %v2204 = vadd.f32 %v1978, %v2150
      %v2205 = vadd.f32 %v1979, %v2152
      %v2206 = vadd.f32 %v1980, %v2154
      %v2207 = vadd.f32 %v1981, %v2156
      %v2208 = vadd.f32 %v1982, %v2160
      %v2209 = vadd.f32 %v1983, %v2162
      %v2210 = vadd.f32 %v1984, %v2164
      %v2211 = vadd.f32 %v1985, %v2166
      %v2212 = vadd.f32 %v1986, %v2170
      %v2213 = vadd.f32 %v1987, %v2172
      %v2214 = vadd.f32 %v1988, %v2174
      %v2215 = vadd.f32 %v1989, %v2176
      %v2216 = vadd.f32 %v1990, %v2180
      %v2217 = vadd.f32 %v1991, %v2182
      %v2218 = vadd.f32 %v1992, %v2184
      %v2219 = vadd.f32 %v1993, %v2186
      %2220 = vst [vmem:[#allocation2] sm:$0xff] %v2188
      %2221 = vst [vmem:[#allocation2 + $0x8] sm:$0xff] %v2189
      %2222 = vst [vmem:[#allocation2 + $0x10] sm:$0xff] %v2190
      %2223 = vst [vmem:[#allocation2 + $0x18] sm:$0xff] %v2191
      %2224 = vst [vmem:[#allocation2 + $0x20] sm:$0xff] %v2192
      %2225 = vst [vmem:[#allocation2 + $0x28] sm:$0xff] %v2193
      %2226 = vst [vmem:[#allocation2 + $0x30] sm:$0xff] %v2194
      %2227 = vst [vmem:[#allocation2 + $0x38] sm:$0xff] %v2195
      %2228 = vst [vmem:[#allocation2 + $0x40] sm:$0xff] %v2196
      %2229 = vst [vmem:[#allocation2 + $0x48] sm:$0xff] %v2197
      %2230 = vst [vmem:[#allocation2 + $0x50] sm:$0xff] %v2198
      %2231 = vst [vmem:[#allocation2 + $0x58] sm:$0xff] %v2199
      %2232 = vst [vmem:[#allocation2 + $0x60] sm:$0xff] %v2200
      %2233 = vst [vmem:[#allocation2 + $0x68] sm:$0xff] %v2201
      %2234 = vst [vmem:[#allocation2 + $0x70] sm:$0xff] %v2202
      %2235 = vst [vmem:[#allocation2 + $0x78] sm:$0xff] %v2203
      %2236 = vst [vmem:[#allocation2 + $0x80] sm:$0xff] %v2204
      %2237 = vst [vmem:[#allocation2 + $0x88] sm:$0xff] %v2205
      %2238 = vst [vmem:[#allocation2 + $0x90] sm:$0xff] %v2206
      %2239 = vst [vmem:[#allocation2 + $0x98] sm:$0xff] %v2207
      %2240 = vst [vmem:[#allocation2 + $0xa0] sm:$0xff] %v2208
      %2241 = vst [vmem:[#allocation2 + $0xa8] sm:$0xff] %v2209
      %2242 = vst [vmem:[#allocation2 + $0xb0] sm:$0xff] %v2210
      %2243 = vst [vmem:[#allocation2 + $0xb8] sm:$0xff] %v2211
      %2244 = vst [vmem:[#allocation2 + $0xc0] sm:$0xff] %v2212
      %2245 = vst [vmem:[#allocation2 + $0xc8] sm:$0xff] %v2213
      %2246 = vst [vmem:[#allocation2 + $0xd0] sm:$0xff] %v2214
      %2247 = vst [vmem:[#allocation2 + $0xd8] sm:$0xff] %v2215
      %2248 = vst [vmem:[#allocation2 + $0xe0] sm:$0xff] %v2216
      %2249 = vst [vmem:[#allocation2 + $0xe8] sm:$0xff] %v2217
      %2250 = vst [vmem:[#allocation2 + $0xf0] sm:$0xff] %v2218
      %2251 = vst [vmem:[#allocation2 + $0xf8] sm:$0xff] %v2219
      %v2252 = vld [vmem:[%s288] sm:$0xff]
      %v2253 = vld [vmem:[%s288 + $0x8] sm:$0xff]
      %v2254 = vld [vmem:[%s288 + $0x10] sm:$0xff]
      %v2255 = vld [vmem:[%s288 + $0x18] sm:$0xff]
      %v2256 = vld [vmem:[%s288 + $0x20] sm:$0xff]
      %v2257 = vld [vmem:[%s288 + $0x28] sm:$0xff]
      %v2258 = vld [vmem:[%s288 + $0x30] sm:$0xff]
      %v2259 = vld [vmem:[%s288 + $0x38] sm:$0xff]
      %v2260 = vld [vmem:[%s288 + $0x40] sm:$0xff]
      %v2261 = vld [vmem:[%s288 + $0x48] sm:$0xff]
      %v2262 = vld [vmem:[%s288 + $0x50] sm:$0xff]
      %v2263 = vld [vmem:[%s288 + $0x58] sm:$0xff]
      %v2264 = vld [vmem:[%s288 + $0x60] sm:$0xff]
      %v2265 = vld [vmem:[%s288 + $0x68] sm:$0xff]
      %v2266 = vld [vmem:[%s288 + $0x70] sm:$0xff]
      %v2267 = vld [vmem:[%s288 + $0x78] sm:$0xff]
      %v2268 = vld [vmem:[#allocation2] sm:$0xff]
      %v2269 = vld [vmem:[#allocation2 + $0x8] sm:$0xff]
      %v2270 = vld [vmem:[#allocation2 + $0x10] sm:$0xff]
      %v2271 = vld [vmem:[#allocation2 + $0x18] sm:$0xff]
      %v2272 = vld [vmem:[#allocation2 + $0x20] sm:$0xff]
      %v2273 = vld [vmem:[#allocation2 + $0x28] sm:$0xff]
      %v2274 = vld [vmem:[#allocation2 + $0x30] sm:$0xff]
      %v2275 = vld [vmem:[#allocation2 + $0x38] sm:$0xff]
      %v2276 = vld [vmem:[#allocation2 + $0x40] sm:$0xff]
      %v2277 = vld [vmem:[#allocation2 + $0x48] sm:$0xff]
      %v2278 = vld [vmem:[#allocation2 + $0x50] sm:$0xff]
      %v2279 = vld [vmem:[#allocation2 + $0x58] sm:$0xff]
      %v2280 = vld [vmem:[#allocation2 + $0x60] sm:$0xff]
      %v2281 = vld [vmem:[#allocation2 + $0x68] sm:$0xff]
      %v2282 = vld [vmem:[#allocation2 + $0x70] sm:$0xff]
      %v2283 = vld [vmem:[#allocation2 + $0x78] sm:$0xff]
      %v2284 = vld [vmem:[#allocation2 + $0x80] sm:$0xff]
      %v2285 = vld [vmem:[#allocation2 + $0x88] sm:$0xff]
      %v2286 = vld [vmem:[#allocation2 + $0x90] sm:$0xff]
      %v2287 = vld [vmem:[#allocation2 + $0x98] sm:$0xff]
      %v2288 = vld [vmem:[#allocation2 + $0xa0] sm:$0xff]
      %v2289 = vld [vmem:[#allocation2 + $0xa8] sm:$0xff]
      %v2290 = vld [vmem:[#allocation2 + $0xb0] sm:$0xff]
      %v2291 = vld [vmem:[#allocation2 + $0xb8] sm:$0xff]
      %v2292 = vld [vmem:[#allocation2 + $0xc0] sm:$0xff]
      %v2293 = vld [vmem:[#allocation2 + $0xc8] sm:$0xff]
      %v2294 = vld [vmem:[#allocation2 + $0xd0] sm:$0xff]
      %v2295 = vld [vmem:[#allocation2 + $0xd8] sm:$0xff]
      %v2296 = vld [vmem:[#allocation2 + $0xe0] sm:$0xff]
      %v2297 = vld [vmem:[#allocation2 + $0xe8] sm:$0xff]
      %v2298 = vld [vmem:[#allocation2 + $0xf0] sm:$0xff]
      %v2299 = vld [vmem:[#allocation2 + $0xf8] sm:$0xff]
      %s2300 = scalar_lea.vmem %s1, 256
      %v2301 = vld [vmem:[%s2300] sm:$0xf]
      %v2302 = vld [vmem:[%s2300 + $0x4] sm:$0xf]
      %v2303 = vld [vmem:[%s2300 + $0x8] sm:$0xf]
      %v2304 = vld [vmem:[%s2300 + $0xc] sm:$0xf]
      %v2305 = vld [vmem:[%s2300 + $0x10] sm:$0xf]
      %v2306 = vld [vmem:[%s2300 + $0x14] sm:$0xf]
      %v2307 = vld [vmem:[%s2300 + $0x18] sm:$0xf]
      %v2308 = vld [vmem:[%s2300 + $0x1c] sm:$0xf]
      %v2309 = vld [vmem:[%s2300 + $0x20] sm:$0xf]
      %v2310 = vld [vmem:[%s2300 + $0x24] sm:$0xf]
      %v2311 = vld [vmem:[%s2300 + $0x28] sm:$0xf]
      %v2312 = vld [vmem:[%s2300 + $0x2c] sm:$0xf]
      %v2313 = vld [vmem:[%s2300 + $0x30] sm:$0xf]
      %v2314 = vld [vmem:[%s2300 + $0x34] sm:$0xf]
      %v2315 = vld [vmem:[%s2300 + $0x38] sm:$0xf]
      %v2316 = vld [vmem:[%s2300 + $0x3c] sm:$0xf]
      %v2333 = vunpack.c.l.b16 %v2301
      %v2334 = vunpack.c.l.b16 %v2302
      %v2335 = vunpack.c.l.b16 %v2303
      %v2336 = vunpack.c.l.b16 %v2304
      %v2337 = vunpack.c.l.b16 %v2305
      %v2338 = vunpack.c.l.b16 %v2306
      %v2339 = vunpack.c.l.b16 %v2307
      %v2340 = vunpack.c.l.b16 %v2308
      %v2341 = vunpack.c.l.b16 %v2309
      %v2342 = vunpack.c.l.b16 %v2310
      %v2343 = vunpack.c.l.b16 %v2311
      %v2344 = vunpack.c.l.b16 %v2312
      %v2345 = vunpack.c.l.b16 %v2313
      %v2346 = vunpack.c.l.b16 %v2314
      %v2347 = vunpack.c.l.b16 %v2315
      %v2348 = vunpack.c.l.b16 %v2316
      %v2349 = vpack.c.b16 %v2334, %v2333
      %v2350 = vpack.c.b16 %v2336, %v2335
      %v2351 = vpack.c.b16 %v2338, %v2337
      %v2352 = vpack.c.b16 %v2340, %v2339
      %v2353 = vpack.c.b16 %v2342, %v2341
      %v2354 = vpack.c.b16 %v2344, %v2343
      %v2355 = vpack.c.b16 %v2346, %v2345
      %v2356 = vpack.c.b16 %v2348, %v2347
      %v2381 = vunpack.c.l.b16 %v2252
      %v2382 = vunpack.c.h.b16 %v2252
      %v2383 = vunpack.c.l.b16 %v2253
      %v2384 = vunpack.c.h.b16 %v2253
      %v2385 = vunpack.c.l.b16 %v2254
      %v2386 = vunpack.c.h.b16 %v2254
      %v2387 = vunpack.c.l.b16 %v2255
      %v2388 = vunpack.c.h.b16 %v2255
      %v2389 = vunpack.c.l.b16 %v2256
      %v2390 = vunpack.c.h.b16 %v2256
      %v2391 = vunpack.c.l.b16 %v2257
      %v2392 = vunpack.c.h.b16 %v2257
      %v2393 = vunpack.c.l.b16 %v2258
      %v2394 = vunpack.c.h.b16 %v2258
      %v2395 = vunpack.c.l.b16 %v2259
      %v2396 = vunpack.c.h.b16 %v2259
      %v2397 = vunpack.c.l.b16 %v2260
      %v2398 = vunpack.c.h.b16 %v2260
      %v2399 = vunpack.c.l.b16 %v2261
      %v2400 = vunpack.c.h.b16 %v2261
      %v2401 = vunpack.c.l.b16 %v2262
      %v2402 = vunpack.c.h.b16 %v2262
      %v2403 = vunpack.c.l.b16 %v2263
      %v2404 = vunpack.c.h.b16 %v2263
      %v2405 = vunpack.c.l.b16 %v2264
      %v2406 = vunpack.c.h.b16 %v2264
      %v2407 = vunpack.c.l.b16 %v2265
      %v2408 = vunpack.c.h.b16 %v2265
      %v2409 = vunpack.c.l.b16 %v2266
      %v2410 = vunpack.c.h.b16 %v2266
      %v2411 = vunpack.c.l.b16 %v2267
      %v2412 = vunpack.c.h.b16 %v2267
      %v2413 = vpack.c.b16 %v2383, %v2381
      %v2414 = vpack.c.b16 %v2384, %v2382
      %v2415 = vpack.c.b16 %v2387, %v2385
      %v2416 = vpack.c.b16 %v2388, %v2386
      %v2417 = vpack.c.b16 %v2391, %v2389
      %v2418 = vpack.c.b16 %v2392, %v2390
      %v2419 = vpack.c.b16 %v2395, %v2393
      %v2420 = vpack.c.b16 %v2396, %v2394
      %v2421 = vpack.c.b16 %v2399, %v2397
      %v2422 = vpack.c.b16 %v2400, %v2398
      %v2423 = vpack.c.b16 %v2403, %v2401
      %v2424 = vpack.c.b16 %v2404, %v2402
      %v2425 = vpack.c.b16 %v2407, %v2405
      %v2426 = vpack.c.b16 %v2408, %v2406
      %v2427 = vpack.c.b16 %v2411, %v2409
      %v2428 = vpack.c.b16 %v2412, %v2410
      %2445 = vmatprep.subr.bf16.mxu0 %v2428
      %2446 = vmatpush1.bf16.msra.mxu0 %v2427
      %2447 = vmatprep.subr.bf16.mxu0 %v2426
      %2448 = vmatpush1.bf16.msra.mxu0 %v2425
      %2449 = vmatprep.subr.bf16.mxu0 %v2424
      %2450 = vmatpush1.bf16.msra.mxu0 %v2423
      %2451 = vmatprep.subr.bf16.mxu0 %v2422
      %2452 = vmatpush1.bf16.msra.mxu0 %v2421
      %2453 = vmatprep.subr.bf16.mxu0 %v2420
      %2454 = vmatpush1.bf16.msra.mxu0 %v2419
      %2455 = vmatprep.subr.bf16.mxu0 %v2418
      %2456 = vmatpush1.bf16.msra.mxu0 %v2417
      %2457 = vmatprep.subr.bf16.mxu0 %v2416
      %2458 = vmatpush1.bf16.msra.mxu0 %v2415
      %2459 = vmatprep.subr.bf16.mxu0 %v2414
      %2460 = vmatpush1.bf16.msra.mxu0 %v2413
      %2461 = vmatprep.subr.bf16.mxu0 0
      %2462 = vmatpush2.bf16.msra.mxu0 0
      %2463 = vmatprep.subr.bf16.mxu0 0
      %2464 = vmatpush2.bf16.msra.mxu0 0
      %2465 = vmatprep.subr.bf16.mxu0 0
      %2466 = vmatpush2.bf16.msra.mxu0 0
      %2467 = vmatprep.subr.bf16.mxu0 0
      %2468 = vmatpush2.bf16.msra.mxu0 0
      %2469 = vmatprep.subr.bf16.mxu0 0
      %2470 = vmatpush2.bf16.msra.mxu0 0
      %2471 = vmatprep.subr.bf16.mxu0 0
      %2472 = vmatpush2.bf16.msra.mxu0 0
      %2473 = vmatprep.subr.bf16.mxu0 0
      %2474 = vmatpush2.bf16.msra.mxu0 0
      %2475 = vmatprep.subr.bf16.mxu0 0
      %2476 = vmatpush2.bf16.msra.mxu0 0
      %2477 = vmatprep.mubr.bf16.mxu0 0
      %2478 = vmatmul.mubr.bf16.gmra.mxu0 %v2349
      %v2479 = vpop.f32.mrf.mxu0
      %v2480 = vadd.f32 0.0, %v2479
      %v2481 = vpop.f32.mrf.mxu0
      %v2482 = vadd.f32 0.0, %v2481
      %v2483 = vpop.f32.mrf.mxu0
      %v2484 = vadd.f32 0.0, %v2483
      %v2485 = vpop.f32.mrf.mxu0
      %v2486 = vadd.f32 0.0, %v2485
      %2487 = vmatprep.mubr.bf16.mxu0 0
      %2488 = vmatmul.mubr.bf16.gmra.mxu0 %v2350
      %v2489 = vpop.f32.mrf.mxu0
      %v2490 = vadd.f32 0.0, %v2489
      %v2491 = vpop.f32.mrf.mxu0
      %v2492 = vadd.f32 0.0, %v2491
      %v2493 = vpop.f32.mrf.mxu0
      %v2494 = vadd.f32 0.0, %v2493
      %v2495 = vpop.f32.mrf.mxu0
      %v2496 = vadd.f32 0.0, %v2495
      %2497 = vmatprep.mubr.bf16.mxu0 0
      %2498 = vmatmul.mubr.bf16.gmra.mxu0 %v2351
      %v2499 = vpop.f32.mrf.mxu0
      %v2500 = vadd.f32 0.0, %v2499
      %v2501 = vpop.f32.mrf.mxu0
      %v2502 = vadd.f32 0.0, %v2501
      %v2503 = vpop.f32.mrf.mxu0
      %v2504 = vadd.f32 0.0, %v2503
      %v2505 = vpop.f32.mrf.mxu0
      %v2506 = vadd.f32 0.0, %v2505
      %2507 = vmatprep.mubr.bf16.mxu0 0
      %2508 = vmatmul.mubr.bf16.gmra.mxu0 %v2352
      %v2509 = vpop.f32.mrf.mxu0
      %v2510 = vadd.f32 0.0, %v2509
      %v2511 = vpop.f32.mrf.mxu0
      %v2512 = vadd.f32 0.0, %v2511
      %v2513 = vpop.f32.mrf.mxu0
      %v2514 = vadd.f32 0.0, %v2513
      %v2515 = vpop.f32.mrf.mxu0
      %v2516 = vadd.f32 0.0, %v2515
      %2517 = vmatprep.mubr.bf16.mxu0 0
      %2518 = vmatmul.mubr.bf16.gmra.mxu0 %v2353
      %v2519 = vpop.f32.mrf.mxu0
      %v2520 = vadd.f32 0.0, %v2519
      %v2521 = vpop.f32.mrf.mxu0
      %v2522 = vadd.f32 0.0, %v2521
      %v2523 = vpop.f32.mrf.mxu0
      %v2524 = vadd.f32 0.0, %v2523
      %v2525 = vpop.f32.mrf.mxu0
      %v2526 = vadd.f32 0.0, %v2525
      %2527 = vmatprep.mubr.bf16.mxu0 0
      %2528 = vmatmul.mubr.bf16.gmra.mxu0 %v2354
      %v2529 = vpop.f32.mrf.mxu0
      %v2530 = vadd.f32 0.0, %v2529
      %v2531 = vpop.f32.mrf.mxu0
      %v2532 = vadd.f32 0.0, %v2531
      %v2533 = vpop.f32.mrf.mxu0
      %v2534 = vadd.f32 0.0, %v2533
      %v2535 = vpop.f32.mrf.mxu0
      %v2536 = vadd.f32 0.0, %v2535
      %2537 = vmatprep.mubr.bf16.mxu0 0
      %2538 = vmatmul.mubr.bf16.gmra.mxu0 %v2355
      %v2539 = vpop.f32.mrf.mxu0
      %v2540 = vadd.f32 0.0, %v2539
      %v2541 = vpop.f32.mrf.mxu0
      %v2542 = vadd.f32 0.0, %v2541
      %v2543 = vpop.f32.mrf.mxu0
      %v2544 = vadd.f32 0.0, %v2543
      %v2545 = vpop.f32.mrf.mxu0
      %v2546 = vadd.f32 0.0, %v2545
      %2547 = vmatprep.mubr.bf16.mxu0 0
      %2548 = vmatmul.mubr.bf16.gmra.mxu0 %v2356
      %v2549 = vpop.f32.mrf.mxu0
      %v2550 = vadd.f32 0.0, %v2549
      %v2551 = vpop.f32.mrf.mxu0
      %v2552 = vadd.f32 0.0, %v2551
      %v2553 = vpop.f32.mrf.mxu0
      %v2554 = vadd.f32 0.0, %v2553
      %v2555 = vpop.f32.mrf.mxu0
      %v2556 = vadd.f32 0.0, %v2555
      %2557 = vdwg.mxu0
      %v2558 = vadd.f32 %v2268, %v2480
      %v2559 = vadd.f32 %v2269, %v2482
      %v2560 = vadd.f32 %v2270, %v2484
      %v2561 = vadd.f32 %v2271, %v2486
      %v2562 = vadd.f32 %v2272, %v2490
      %v2563 = vadd.f32 %v2273, %v2492
      %v2564 = vadd.f32 %v2274, %v2494
      %v2565 = vadd.f32 %v2275, %v2496
      %v2566 = vadd.f32 %v2276, %v2500
      %v2567 = vadd.f32 %v2277, %v2502
      %v2568 = vadd.f32 %v2278, %v2504
      %v2569 = vadd.f32 %v2279, %v2506
      %v2570 = vadd.f32 %v2280, %v2510
      %v2571 = vadd.f32 %v2281, %v2512
      %v2572 = vadd.f32 %v2282, %v2514
      %v2573 = vadd.f32 %v2283, %v2516
      %v2574 = vadd.f32 %v2284, %v2520
      %v2575 = vadd.f32 %v2285, %v2522
      %v2576 = vadd.f32 %v2286, %v2524
      %v2577 = vadd.f32 %v2287, %v2526
      %v2578 = vadd.f32 %v2288, %v2530
      %v2579 = vadd.f32 %v2289, %v2532
      %v2580 = vadd.f32 %v2290, %v2534
      %v2581 = vadd.f32 %v2291, %v2536
      %v2582 = vadd.f32 %v2292, %v2540
      %v2583 = vadd.f32 %v2293, %v2542
      %v2584 = vadd.f32 %v2294, %v2544
      %v2585 = vadd.f32 %v2295, %v2546
      %v2586 = vadd.f32 %v2296, %v2550
      %v2587 = vadd.f32 %v2297, %v2552
      %v2588 = vadd.f32 %v2298, %v2554
      %v2589 = vadd.f32 %v2299, %v2556
      %2590 = vst [vmem:[#allocation2] sm:$0xff] %v2558
      %2591 = vst [vmem:[#allocation2 + $0x8] sm:$0xff] %v2559
      %2592 = vst [vmem:[#allocation2 + $0x10] sm:$0xff] %v2560
      %2593 = vst [vmem:[#allocation2 + $0x18] sm:$0xff] %v2561
      %2594 = vst [vmem:[#allocation2 + $0x20] sm:$0xff] %v2562
      %2595 = vst [vmem:[#allocation2 + $0x28] sm:$0xff] %v2563
      %2596 = vst [vmem:[#allocation2 + $0x30] sm:$0xff] %v2564
      %2597 = vst [vmem:[#allocation2 + $0x38] sm:$0xff] %v2565
      %2598 = vst [vmem:[#allocation2 + $0x40] sm:$0xff] %v2566
      %2599 = vst [vmem:[#allocation2 + $0x48] sm:$0xff] %v2567
      %2600 = vst [vmem:[#allocation2 + $0x50] sm:$0xff] %v2568
      %2601 = vst [vmem:[#allocation2 + $0x58] sm:$0xff] %v2569
      %2602 = vst [vmem:[#allocation2 + $0x60] sm:$0xff] %v2570
      %2603 = vst [vmem:[#allocation2 + $0x68] sm:$0xff] %v2571
      %2604 = vst [vmem:[#allocation2 + $0x70] sm:$0xff] %v2572
      %2605 = vst [vmem:[#allocation2 + $0x78] sm:$0xff] %v2573
      %2606 = vst [vmem:[#allocation2 + $0x80] sm:$0xff] %v2574
      %2607 = vst [vmem:[#allocation2 + $0x88] sm:$0xff] %v2575
      %2608 = vst [vmem:[#allocation2 + $0x90] sm:$0xff] %v2576
      %2609 = vst [vmem:[#allocation2 + $0x98] sm:$0xff] %v2577
      %2610 = vst [vmem:[#allocation2 + $0xa0] sm:$0xff] %v2578
      %2611 = vst [vmem:[#allocation2 + $0xa8] sm:$0xff] %v2579
      %2612 = vst [vmem:[#allocation2 + $0xb0] sm:$0xff] %v2580
      %2613 = vst [vmem:[#allocation2 + $0xb8] sm:$0xff] %v2581
      %2614 = vst [vmem:[#allocation2 + $0xc0] sm:$0xff] %v2582
      %2615 = vst [vmem:[#allocation2 + $0xc8] sm:$0xff] %v2583
      %2616 = vst [vmem:[#allocation2 + $0xd0] sm:$0xff] %v2584
      %2617 = vst [vmem:[#allocation2 + $0xd8] sm:$0xff] %v2585
      %2618 = vst [vmem:[#allocation2 + $0xe0] sm:$0xff] %v2586
      %2619 = vst [vmem:[#allocation2 + $0xe8] sm:$0xff] %v2587
      %2620 = vst [vmem:[#allocation2 + $0xf0] sm:$0xff] %v2588
      %2621 = vst [vmem:[#allocation2 + $0xf8] sm:$0xff] %v2589
      %v2622 = vld [vmem:[%s288] sm:$0xff]
      %v2623 = vld [vmem:[%s288 + $0x8] sm:$0xff]
      %v2624 = vld [vmem:[%s288 + $0x10] sm:$0xff]
      %v2625 = vld [vmem:[%s288 + $0x18] sm:$0xff]
      %v2626 = vld [vmem:[%s288 + $0x20] sm:$0xff]
      %v2627 = vld [vmem:[%s288 + $0x28] sm:$0xff]
      %v2628 = vld [vmem:[%s288 + $0x30] sm:$0xff]
      %v2629 = vld [vmem:[%s288 + $0x38] sm:$0xff]
      %v2630 = vld [vmem:[%s288 + $0x40] sm:$0xff]
      %v2631 = vld [vmem:[%s288 + $0x48] sm:$0xff]
      %v2632 = vld [vmem:[%s288 + $0x50] sm:$0xff]
      %v2633 = vld [vmem:[%s288 + $0x58] sm:$0xff]
      %v2634 = vld [vmem:[%s288 + $0x60] sm:$0xff]
      %v2635 = vld [vmem:[%s288 + $0x68] sm:$0xff]
      %v2636 = vld [vmem:[%s288 + $0x70] sm:$0xff]
      %v2637 = vld [vmem:[%s288 + $0x78] sm:$0xff]
      %v2638 = vunpack.c.l.bf16 %v2622
      %v2639 = vunpack.c.h.bf16 %v2622
      %v2640 = vunpack.c.l.bf16 %v2623
      %v2641 = vunpack.c.h.bf16 %v2623
      %v2642 = vunpack.c.l.bf16 %v2624
      %v2643 = vunpack.c.h.bf16 %v2624
      %v2644 = vunpack.c.l.bf16 %v2625
      %v2645 = vunpack.c.h.bf16 %v2625
      %v2646 = vunpack.c.l.bf16 %v2626
      %v2647 = vunpack.c.h.bf16 %v2626
      %v2648 = vunpack.c.l.bf16 %v2627
      %v2649 = vunpack.c.h.bf16 %v2627
      %v2650 = vunpack.c.l.bf16 %v2628
      %v2651 = vunpack.c.h.bf16 %v2628
      %v2652 = vunpack.c.l.bf16 %v2629
      %v2653 = vunpack.c.h.bf16 %v2629
      %v2654 = vunpack.c.l.bf16 %v2630
      %v2655 = vunpack.c.h.bf16 %v2630
      %v2656 = vunpack.c.l.bf16 %v2631
      %v2657 = vunpack.c.h.bf16 %v2631
      %v2658 = vunpack.c.l.bf16 %v2632
      %v2659 = vunpack.c.h.bf16 %v2632
      %v2660 = vunpack.c.l.bf16 %v2633
      %v2661 = vunpack.c.h.bf16 %v2633
      %v2662 = vunpack.c.l.bf16 %v2634
      %v2663 = vunpack.c.h.bf16 %v2634
      %v2664 = vunpack.c.l.bf16 %v2635
      %v2665 = vunpack.c.h.bf16 %v2635
      %v2666 = vunpack.c.l.bf16 %v2636
      %v2667 = vunpack.c.h.bf16 %v2636
      %v2668 = vunpack.c.l.bf16 %v2637
      %v2669 = vunpack.c.h.bf16 %v2637
      %2670 = vrot.lane.b32.xlu0 %v2638, 127
      %v2671 = vpop.permute.xlu0 %2670
      %2672 = vrot.lane.b32.xlu0 %v2640, 127
      %v2673 = vpop.permute.xlu0 %2672
      %2674 = vrot.lane.b32.xlu0 %v2642, 127
      %v2675 = vpop.permute.xlu0 %2674
      %2676 = vrot.lane.b32.xlu0 %v2644, 127
      %v2677 = vpop.permute.xlu0 %2676
      %2678 = vrot.lane.b32.xlu0 %v2646, 127
      %v2679 = vpop.permute.xlu0 %2678
      %2680 = vrot.lane.b32.xlu0 %v2648, 127
      %v2681 = vpop.permute.xlu0 %2680
      %2682 = vrot.lane.b32.xlu0 %v2650, 127
      %v2683 = vpop.permute.xlu0 %2682
      %2684 = vrot.lane.b32.xlu0 %v2652, 127
      %v2685 = vpop.permute.xlu0 %2684
      %2686 = vrot.lane.b32.xlu0 %v2654, 127
      %v2687 = vpop.permute.xlu0 %2686
      %2688 = vrot.lane.b32.xlu0 %v2656, 127
      %v2689 = vpop.permute.xlu0 %2688
      %2690 = vrot.lane.b32.xlu0 %v2658, 127
      %v2691 = vpop.permute.xlu0 %2690
      %2692 = vrot.lane.b32.xlu0 %v2660, 127
      %v2693 = vpop.permute.xlu0 %2692
      %2694 = vrot.lane.b32.xlu0 %v2662, 127
      %v2695 = vpop.permute.xlu0 %2694
      %2696 = vrot.lane.b32.xlu0 %v2664, 127
      %v2697 = vpop.permute.xlu0 %2696
      %2698 = vrot.lane.b32.xlu0 %v2666, 127
      %v2699 = vpop.permute.xlu0 %2698
      %2700 = vrot.lane.b32.xlu0 %v2668, 127
      %v2701 = vpop.permute.xlu0 %2700
      %2702 = vrot.lane.b32.xlu0 %v2639, 127
      %v2703 = vpop.permute.xlu0 %2702
      %2704 = vrot.lane.b32.xlu0 %v2641, 127
      %v2705 = vpop.permute.xlu0 %2704
      %2706 = vrot.lane.b32.xlu0 %v2643, 127
      %v2707 = vpop.permute.xlu0 %2706
      %2708 = vrot.lane.b32.xlu0 %v2645, 127
      %v2709 = vpop.permute.xlu0 %2708
      %2710 = vrot.lane.b32.xlu0 %v2647, 127
      %v2711 = vpop.permute.xlu0 %2710
      %2712 = vrot.lane.b32.xlu0 %v2649, 127
      %v2713 = vpop.permute.xlu0 %2712
      %2714 = vrot.lane.b32.xlu0 %v2651, 127
      %v2715 = vpop.permute.xlu0 %2714
      %2716 = vrot.lane.b32.xlu0 %v2653, 127
      %v2717 = vpop.permute.xlu0 %2716
      %2718 = vrot.lane.b32.xlu0 %v2655, 127
      %v2719 = vpop.permute.xlu0 %2718
      %2720 = vrot.lane.b32.xlu0 %v2657, 127
      %v2721 = vpop.permute.xlu0 %2720
      %2722 = vrot.lane.b32.xlu0 %v2659, 127
      %v2723 = vpop.permute.xlu0 %2722
      %2724 = vrot.lane.b32.xlu0 %v2661, 127
      %v2725 = vpop.permute.xlu0 %2724
      %2726 = vrot.lane.b32.xlu0 %v2663, 127
      %v2727 = vpop.permute.xlu0 %2726
      %2728 = vrot.lane.b32.xlu0 %v2665, 127
      %v2729 = vpop.permute.xlu0 %2728
      %2730 = vrot.lane.b32.xlu0 %v2667, 127
      %v2731 = vpop.permute.xlu0 %2730
      %2732 = vrot.lane.b32.xlu0 %v2669, 127
      %v2733 = vpop.permute.xlu0 %2732
      %vm2734 = vcmp.lt.s32.totalorder %v445, 127
      %v2735 = vsel %vm2734, %v2671, %v2703
      %v2736 = vsel %vm2734, %v2673, %v2705
      %v2737 = vsel %vm2734, %v2675, %v2707
      %v2738 = vsel %vm2734, %v2677, %v2709
      %v2739 = vsel %vm2734, %v2679, %v2711
      %v2740 = vsel %vm2734, %v2681, %v2713
      %v2741 = vsel %vm2734, %v2683, %v2715
      %v2742 = vsel %vm2734, %v2685, %v2717
      %v2743 = vsel %vm2734, %v2687, %v2719
      %v2744 = vsel %vm2734, %v2689, %v2721
      %v2745 = vsel %vm2734, %v2691, %v2723
      %v2746 = vsel %vm2734, %v2693, %v2725
      %v2747 = vsel %vm2734, %v2695, %v2727
      %v2748 = vsel %vm2734, %v2697, %v2729
      %v2749 = vsel %vm2734, %v2699, %v2731
      %v2750 = vsel %vm2734, %v2701, %v2733
      %v2751 = vsel %vm2734, %v2703, %v2671
      %v2752 = vsel %vm2734, %v2705, %v2673
      %v2753 = vsel %vm2734, %v2707, %v2675
      %v2754 = vsel %vm2734, %v2709, %v2677
      %v2755 = vsel %vm2734, %v2711, %v2679
      %v2756 = vsel %vm2734, %v2713, %v2681
      %v2757 = vsel %vm2734, %v2715, %v2683
      %v2758 = vsel %vm2734, %v2717, %v2685
      %v2759 = vsel %vm2734, %v2719, %v2687
      %v2760 = vsel %vm2734, %v2721, %v2689
      %v2761 = vsel %vm2734, %v2723, %v2691
      %v2762 = vsel %vm2734, %v2725, %v2693
      %v2763 = vsel %vm2734, %v2727, %v2695
      %v2764 = vsel %vm2734, %v2729, %v2697
      %v2765 = vsel %vm2734, %v2731, %v2699
      %v2766 = vsel %vm2734, %v2733, %v2701
      %s2767 = scalar_lea.vmem %s5, 10
      %v2768 = vld [vmem:[%s2767] sm:$0x3]
      %v2770 = vlaneseq
      %v2771 = vshrl.u32 %v2770, 7
      %v2772 = vsub.s32 0, %v2771
      %v2773 = vrot.slane %v2768, %v2772
      %v2774 = vlaneseq
      %v2775 = vshrl.u32 %v2774, 7
      %v2776 = vsub.s32 1, %v2775
      %v2777 = vrot.slane %v2768, %v2776
      %v2780 = vmul.f32 %v2735, %v2773
      %v2781 = vmul.f32 %v2751, %v2777
      %v2782 = vmul.f32 %v2736, %v2773
      %v2783 = vmul.f32 %v2752, %v2777
      %v2784 = vmul.f32 %v2737, %v2773
      %v2785 = vmul.f32 %v2753, %v2777
      %v2786 = vmul.f32 %v2738, %v2773
      %v2787 = vmul.f32 %v2754, %v2777
      %v2788 = vmul.f32 %v2739, %v2773
      %v2789 = vmul.f32 %v2755, %v2777
      %v2790 = vmul.f32 %v2740, %v2773
      %v2791 = vmul.f32 %v2756, %v2777
      %v2792 = vmul.f32 %v2741, %v2773
      %v2793 = vmul.f32 %v2757, %v2777
      %v2794 = vmul.f32 %v2742, %v2773
      %v2795 = vmul.f32 %v2758, %v2777
      %v2796 = vmul.f32 %v2743, %v2773
      %v2797 = vmul.f32 %v2759, %v2777
      %v2798 = vmul.f32 %v2744, %v2773
      %v2799 = vmul.f32 %v2760, %v2777
      %v2800 = vmul.f32 %v2745, %v2773
      %v2801 = vmul.f32 %v2761, %v2777
      %v2802 = vmul.f32 %v2746, %v2773
      %v2803 = vmul.f32 %v2762, %v2777
      %v2804 = vmul.f32 %v2747, %v2773
      %v2805 = vmul.f32 %v2763, %v2777
      %v2806 = vmul.f32 %v2748, %v2773
      %v2807 = vmul.f32 %v2764, %v2777
      %v2808 = vmul.f32 %v2749, %v2773
      %v2809 = vmul.f32 %v2765, %v2777
      %v2810 = vmul.f32 %v2750, %v2773
      %v2811 = vmul.f32 %v2766, %v2777
      %v2812 = vld [vmem:[#allocation2] sm:$0xff]
      %v2813 = vld [vmem:[#allocation2 + $0x8] sm:$0xff]
      %v2814 = vld [vmem:[#allocation2 + $0x10] sm:$0xff]
      %v2815 = vld [vmem:[#allocation2 + $0x18] sm:$0xff]
      %v2816 = vld [vmem:[#allocation2 + $0x20] sm:$0xff]
      %v2817 = vld [vmem:[#allocation2 + $0x28] sm:$0xff]
      %v2818 = vld [vmem:[#allocation2 + $0x30] sm:$0xff]
      %v2819 = vld [vmem:[#allocation2 + $0x38] sm:$0xff]
      %v2820 = vld [vmem:[#allocation2 + $0x40] sm:$0xff]
      %v2821 = vld [vmem:[#allocation2 + $0x48] sm:$0xff]
      %v2822 = vld [vmem:[#allocation2 + $0x50] sm:$0xff]
      %v2823 = vld [vmem:[#allocation2 + $0x58] sm:$0xff]
      %v2824 = vld [vmem:[#allocation2 + $0x60] sm:$0xff]
      %v2825 = vld [vmem:[#allocation2 + $0x68] sm:$0xff]
      %v2826 = vld [vmem:[#allocation2 + $0x70] sm:$0xff]
      %v2827 = vld [vmem:[#allocation2 + $0x78] sm:$0xff]
      %v2828 = vld [vmem:[#allocation2 + $0x80] sm:$0xff]
      %v2829 = vld [vmem:[#allocation2 + $0x88] sm:$0xff]
      %v2830 = vld [vmem:[#allocation2 + $0x90] sm:$0xff]
      %v2831 = vld [vmem:[#allocation2 + $0x98] sm:$0xff]
      %v2832 = vld [vmem:[#allocation2 + $0xa0] sm:$0xff]
      %v2833 = vld [vmem:[#allocation2 + $0xa8] sm:$0xff]
      %v2834 = vld [vmem:[#allocation2 + $0xb0] sm:$0xff]
      %v2835 = vld [vmem:[#allocation2 + $0xb8] sm:$0xff]
      %v2836 = vld [vmem:[#allocation2 + $0xc0] sm:$0xff]
      %v2837 = vld [vmem:[#allocation2 + $0xc8] sm:$0xff]
      %v2838 = vld [vmem:[#allocation2 + $0xd0] sm:$0xff]
      %v2839 = vld [vmem:[#allocation2 + $0xd8] sm:$0xff]
      %v2840 = vld [vmem:[#allocation2 + $0xe0] sm:$0xff]
      %v2841 = vld [vmem:[#allocation2 + $0xe8] sm:$0xff]
      %v2842 = vld [vmem:[#allocation2 + $0xf0] sm:$0xff]
      %v2843 = vld [vmem:[#allocation2 + $0xf8] sm:$0xff]
      %s2844 = scalar_lea.vmem %s1, 320
      %v2845 = vld [vmem:[%s2844] sm:$0xf]
      %v2846 = vld [vmem:[%s2844 + $0x4] sm:$0xf]
      %v2847 = vld [vmem:[%s2844 + $0x8] sm:$0xf]
      %v2848 = vld [vmem:[%s2844 + $0xc] sm:$0xf]
      %v2849 = vld [vmem:[%s2844 + $0x10] sm:$0xf]
      %v2850 = vld [vmem:[%s2844 + $0x14] sm:$0xf]
      %v2851 = vld [vmem:[%s2844 + $0x18] sm:$0xf]
      %v2852 = vld [vmem:[%s2844 + $0x1c] sm:$0xf]
      %v2853 = vld [vmem:[%s2844 + $0x20] sm:$0xf]
      %v2854 = vld [vmem:[%s2844 + $0x24] sm:$0xf]
      %v2855 = vld [vmem:[%s2844 + $0x28] sm:$0xf]
      %v2856 = vld [vmem:[%s2844 + $0x2c] sm:$0xf]
      %v2857 = vld [vmem:[%s2844 + $0x30] sm:$0xf]
      %v2858 = vld [vmem:[%s2844 + $0x34] sm:$0xf]
      %v2859 = vld [vmem:[%s2844 + $0x38] sm:$0xf]
      %v2860 = vld [vmem:[%s2844 + $0x3c] sm:$0xf]
      %v2861 = vpack.c.bf16 %v2782, %v2780
      %v2862 = vpack.c.bf16 %v2783, %v2781
      %v2863 = vpack.c.bf16 %v2786, %v2784
      %v2864 = vpack.c.bf16 %v2787, %v2785
      %v2865 = vpack.c.bf16 %v2790, %v2788
      %v2866 = vpack.c.bf16 %v2791, %v2789
      %v2867 = vpack.c.bf16 %v2794, %v2792
      %v2868 = vpack.c.bf16 %v2795, %v2793
      %v2869 = vpack.c.bf16 %v2798, %v2796
      %v2870 = vpack.c.bf16 %v2799, %v2797
      %v2871 = vpack.c.bf16 %v2802, %v2800
      %v2872 = vpack.c.bf16 %v2803, %v2801
      %v2873 = vpack.c.bf16 %v2806, %v2804
      %v2874 = vpack.c.bf16 %v2807, %v2805
      %v2875 = vpack.c.bf16 %v2810, %v2808
      %v2876 = vpack.c.bf16 %v2811, %v2809
      %v2893 = vunpack.c.l.b16 %v2845
      %v2894 = vunpack.c.l.b16 %v2846
      %v2895 = vunpack.c.l.b16 %v2847
      %v2896 = vunpack.c.l.b16 %v2848
      %v2897 = vunpack.c.l.b16 %v2849
      %v2898 = vunpack.c.l.b16 %v2850
      %v2899 = vunpack.c.l.b16 %v2851
      %v2900 = vunpack.c.l.b16 %v2852
      %v2901 = vunpack.c.l.b16 %v2853
      %v2902 = vunpack.c.l.b16 %v2854
      %v2903 = vunpack.c.l.b16 %v2855
      %v2904 = vunpack.c.l.b16 %v2856
      %v2905 = vunpack.c.l.b16 %v2857
      %v2906 = vunpack.c.l.b16 %v2858
      %v2907 = vunpack.c.l.b16 %v2859
      %v2908 = vunpack.c.l.b16 %v2860
      %v2909 = vpack.c.b16 %v2894, %v2893
      %v2910 = vpack.c.b16 %v2896, %v2895
      %v2911 = vpack.c.b16 %v2898, %v2897
      %v2912 = vpack.c.b16 %v2900, %v2899
      %v2913 = vpack.c.b16 %v2902, %v2901
      %v2914 = vpack.c.b16 %v2904, %v2903
      %v2915 = vpack.c.b16 %v2906, %v2905
      %v2916 = vpack.c.b16 %v2908, %v2907
      %2925 = vmatprep.subr.bf16.mxu0 %v2876
      %2926 = vmatpush1.bf16.msra.mxu0 %v2875
      %2927 = vmatprep.subr.bf16.mxu0 %v2874
      %2928 = vmatpush1.bf16.msra.mxu0 %v2873
      %2929 = vmatprep.subr.bf16.mxu0 %v2872
      %2930 = vmatpush1.bf16.msra.mxu0 %v2871
      %2931 = vmatprep.subr.bf16.mxu0 %v2870
      %2932 = vmatpush1.bf16.msra.mxu0 %v2869
      %2933 = vmatprep.subr.bf16.mxu0 %v2868
      %2934 = vmatpush1.bf16.msra.mxu0 %v2867
      %2935 = vmatprep.subr.bf16.mxu0 %v2866
      %2936 = vmatpush1.bf16.msra.mxu0 %v2865
      %2937 = vmatprep.subr.bf16.mxu0 %v2864
      %2938 = vmatpush1.bf16.msra.mxu0 %v2863
      %2939 = vmatprep.subr.bf16.mxu0 %v2862
      %2940 = vmatpush1.bf16.msra.mxu0 %v2861
      %2941 = vmatprep.subr.bf16.mxu0 0
      %2942 = vmatpush2.bf16.msra.mxu0 0
      %2943 = vmatprep.subr.bf16.mxu0 0
      %2944 = vmatpush2.bf16.msra.mxu0 0
      %2945 = vmatprep.subr.bf16.mxu0 0
      %2946 = vmatpush2.bf16.msra.mxu0 0
      %2947 = vmatprep.subr.bf16.mxu0 0
      %2948 = vmatpush2.bf16.msra.mxu0 0
      %2949 = vmatprep.subr.bf16.mxu0 0
      %2950 = vmatpush2.bf16.msra.mxu0 0
      %2951 = vmatprep.subr.bf16.mxu0 0
      %2952 = vmatpush2.bf16.msra.mxu0 0
      %2953 = vmatprep.subr.bf16.mxu0 0
      %2954 = vmatpush2.bf16.msra.mxu0 0
      %2955 = vmatprep.subr.bf16.mxu0 0
      %2956 = vmatpush2.bf16.msra.mxu0 0
      %2957 = vmatprep.mubr.bf16.mxu0 0
      %2958 = vmatmul.mubr.bf16.gmra.mxu0 %v2909
      %v2959 = vpop.f32.mrf.mxu0
      %v2960 = vadd.f32 0.0, %v2959
      %v2961 = vpop.f32.mrf.mxu0
      %v2962 = vadd.f32 0.0, %v2961
      %v2963 = vpop.f32.mrf.mxu0
      %v2964 = vadd.f32 0.0, %v2963
      %v2965 = vpop.f32.mrf.mxu0
      %v2966 = vadd.f32 0.0, %v2965
      %2967 = vmatprep.mubr.bf16.mxu0 0
      %2968 = vmatmul.mubr.bf16.gmra.mxu0 %v2910
      %v2969 = vpop.f32.mrf.mxu0
      %v2970 = vadd.f32 0.0, %v2969
      %v2971 = vpop.f32.mrf.mxu0
      %v2972 = vadd.f32 0.0, %v2971
      %v2973 = vpop.f32.mrf.mxu0
      %v2974 = vadd.f32 0.0, %v2973
      %v2975 = vpop.f32.mrf.mxu0
      %v2976 = vadd.f32 0.0, %v2975
      %2977 = vmatprep.mubr.bf16.mxu0 0
      %2978 = vmatmul.mubr.bf16.gmra.mxu0 %v2911
      %v2979 = vpop.f32.mrf.mxu0
      %v2980 = vadd.f32 0.0, %v2979
      %v2981 = vpop.f32.mrf.mxu0
      %v2982 = vadd.f32 0.0, %v2981
      %v2983 = vpop.f32.mrf.mxu0
      %v2984 = vadd.f32 0.0, %v2983
      %v2985 = vpop.f32.mrf.mxu0
      %v2986 = vadd.f32 0.0, %v2985
      %2987 = vmatprep.mubr.bf16.mxu0 0
      %2988 = vmatmul.mubr.bf16.gmra.mxu0 %v2912
      %v2989 = vpop.f32.mrf.mxu0
      %v2990 = vadd.f32 0.0, %v2989
      %v2991 = vpop.f32.mrf.mxu0
      %v2992 = vadd.f32 0.0, %v2991
      %v2993 = vpop.f32.mrf.mxu0
      %v2994 = vadd.f32 0.0, %v2993
      %v2995 = vpop.f32.mrf.mxu0
      %v2996 = vadd.f32 0.0, %v2995
      %2997 = vmatprep.mubr.bf16.mxu0 0
      %2998 = vmatmul.mubr.bf16.gmra.mxu0 %v2913
      %v2999 = vpop.f32.mrf.mxu0
      %v3000 = vadd.f32 0.0, %v2999
      %v3001 = vpop.f32.mrf.mxu0
      %v3002 = vadd.f32 0.0, %v3001
      %v3003 = vpop.f32.mrf.mxu0
      %v3004 = vadd.f32 0.0, %v3003
      %v3005 = vpop.f32.mrf.mxu0
      %v3006 = vadd.f32 0.0, %v3005
      %3007 = vmatprep.mubr.bf16.mxu0 0
      %3008 = vmatmul.mubr.bf16.gmra.mxu0 %v2914
      %v3009 = vpop.f32.mrf.mxu0
      %v3010 = vadd.f32 0.0, %v3009
      %v3011 = vpop.f32.mrf.mxu0
      %v3012 = vadd.f32 0.0, %v3011
      %v3013 = vpop.f32.mrf.mxu0
      %v3014 = vadd.f32 0.0, %v3013
      %v3015 = vpop.f32.mrf.mxu0
      %v3016 = vadd.f32 0.0, %v3015
      %3017 = vmatprep.mubr.bf16.mxu0 0
      %3018 = vmatmul.mubr.bf16.gmra.mxu0 %v2915
      %v3019 = vpop.f32.mrf.mxu0
      %v3020 = vadd.f32 0.0, %v3019
      %v3021 = vpop.f32.mrf.mxu0
      %v3022 = vadd.f32 0.0, %v3021
      %v3023 = vpop.f32.mrf.mxu0
      %v3024 = vadd.f32 0.0, %v3023
      %v3025 = vpop.f32.mrf.mxu0
      %v3026 = vadd.f32 0.0, %v3025
      %3027 = vmatprep.mubr.bf16.mxu0 0
      %3028 = vmatmul.mubr.bf16.gmra.mxu0 %v2916
      %v3029 = vpop.f32.mrf.mxu0
      %v3030 = vadd.f32 0.0, %v3029
      %v3031 = vpop.f32.mrf.mxu0
      %v3032 = vadd.f32 0.0, %v3031
      %v3033 = vpop.f32.mrf.mxu0
      %v3034 = vadd.f32 0.0, %v3033
      %v3035 = vpop.f32.mrf.mxu0
      %v3036 = vadd.f32 0.0, %v3035
      %3037 = vdwg.mxu0
      %v3038 = vadd.f32 %v2812, %v2960
      %v3039 = vadd.f32 %v2813, %v2962
      %v3040 = vadd.f32 %v2814, %v2964
      %v3041 = vadd.f32 %v2815, %v2966
      %v3042 = vadd.f32 %v2816, %v2970
      %v3043 = vadd.f32 %v2817, %v2972
      %v3044 = vadd.f32 %v2818, %v2974
      %v3045 = vadd.f32 %v2819, %v2976
      %v3046 = vadd.f32 %v2820, %v2980
      %v3047 = vadd.f32 %v2821, %v2982
      %v3048 = vadd.f32 %v2822, %v2984
      %v3049 = vadd.f32 %v2823, %v2986
      %v3050 = vadd.f32 %v2824, %v2990
      %v3051 = vadd.f32 %v2825, %v2992
      %v3052 = vadd.f32 %v2826, %v2994
      %v3053 = vadd.f32 %v2827, %v2996
      %v3054 = vadd.f32 %v2828, %v3000
      %v3055 = vadd.f32 %v2829, %v3002
      %v3056 = vadd.f32 %v2830, %v3004
      %v3057 = vadd.f32 %v2831, %v3006
      %v3058 = vadd.f32 %v2832, %v3010
      %v3059 = vadd.f32 %v2833, %v3012
      %v3060 = vadd.f32 %v2834, %v3014
      %v3061 = vadd.f32 %v2835, %v3016
      %v3062 = vadd.f32 %v2836, %v3020
      %v3063 = vadd.f32 %v2837, %v3022
      %v3064 = vadd.f32 %v2838, %v3024
      %v3065 = vadd.f32 %v2839, %v3026
      %v3066 = vadd.f32 %v2840, %v3030
      %v3067 = vadd.f32 %v2841, %v3032
      %v3068 = vadd.f32 %v2842, %v3034
      %v3069 = vadd.f32 %v2843, %v3036
      %3070 = vst [vmem:[#allocation2] sm:$0xff] %v3038
      %3071 = vst [vmem:[#allocation2 + $0x8] sm:$0xff] %v3039
      %3072 = vst [vmem:[#allocation2 + $0x10] sm:$0xff] %v3040
      %3073 = vst [vmem:[#allocation2 + $0x18] sm:$0xff] %v3041
      %3074 = vst [vmem:[#allocation2 + $0x20] sm:$0xff] %v3042
      %3075 = vst [vmem:[#allocation2 + $0x28] sm:$0xff] %v3043
      %3076 = vst [vmem:[#allocation2 + $0x30] sm:$0xff] %v3044
      %3077 = vst [vmem:[#allocation2 + $0x38] sm:$0xff] %v3045
      %3078 = vst [vmem:[#allocation2 + $0x40] sm:$0xff] %v3046
      %3079 = vst [vmem:[#allocation2 + $0x48] sm:$0xff] %v3047
      %3080 = vst [vmem:[#allocation2 + $0x50] sm:$0xff] %v3048
      %3081 = vst [vmem:[#allocation2 + $0x58] sm:$0xff] %v3049
      %3082 = vst [vmem:[#allocation2 + $0x60] sm:$0xff] %v3050
      %3083 = vst [vmem:[#allocation2 + $0x68] sm:$0xff] %v3051
      %3084 = vst [vmem:[#allocation2 + $0x70] sm:$0xff] %v3052
      %3085 = vst [vmem:[#allocation2 + $0x78] sm:$0xff] %v3053
      %3086 = vst [vmem:[#allocation2 + $0x80] sm:$0xff] %v3054
      %3087 = vst [vmem:[#allocation2 + $0x88] sm:$0xff] %v3055
      %3088 = vst [vmem:[#allocation2 + $0x90] sm:$0xff] %v3056
      %3089 = vst [vmem:[#allocation2 + $0x98] sm:$0xff] %v3057
      %3090 = vst [vmem:[#allocation2 + $0xa0] sm:$0xff] %v3058
      %3091 = vst [vmem:[#allocation2 + $0xa8] sm:$0xff] %v3059
      %3092 = vst [vmem:[#allocation2 + $0xb0] sm:$0xff] %v3060
      %3093 = vst [vmem:[#allocation2 + $0xb8] sm:$0xff] %v3061
      %3094 = vst [vmem:[#allocation2 + $0xc0] sm:$0xff] %v3062
      %3095 = vst [vmem:[#allocation2 + $0xc8] sm:$0xff] %v3063
      %3096 = vst [vmem:[#allocation2 + $0xd0] sm:$0xff] %v3064
      %3097 = vst [vmem:[#allocation2 + $0xd8] sm:$0xff] %v3065
      %3098 = vst [vmem:[#allocation2 + $0xe0] sm:$0xff] %v3066
      %3099 = vst [vmem:[#allocation2 + $0xe8] sm:$0xff] %v3067
      %3100 = vst [vmem:[#allocation2 + $0xf0] sm:$0xff] %v3068
      %3101 = vst [vmem:[#allocation2 + $0xf8] sm:$0xff] %v3069
      %v3102 = vld [vmem:[%s288] sm:$0xff]
      %v3103 = vld [vmem:[%s288 + $0x8] sm:$0xff]
      %v3104 = vld [vmem:[%s288 + $0x10] sm:$0xff]
      %v3105 = vld [vmem:[%s288 + $0x18] sm:$0xff]
      %v3106 = vld [vmem:[%s288 + $0x20] sm:$0xff]
      %v3107 = vld [vmem:[%s288 + $0x28] sm:$0xff]
      %v3108 = vld [vmem:[%s288 + $0x30] sm:$0xff]
      %v3109 = vld [vmem:[%s288 + $0x38] sm:$0xff]
      %v3110 = vld [vmem:[%s288 + $0x40] sm:$0xff]
      %v3111 = vld [vmem:[%s288 + $0x48] sm:$0xff]
      %v3112 = vld [vmem:[%s288 + $0x50] sm:$0xff]
      %v3113 = vld [vmem:[%s288 + $0x58] sm:$0xff]
      %v3114 = vld [vmem:[%s288 + $0x60] sm:$0xff]
      %v3115 = vld [vmem:[%s288 + $0x68] sm:$0xff]
      %v3116 = vld [vmem:[%s288 + $0x70] sm:$0xff]
      %v3117 = vld [vmem:[%s288 + $0x78] sm:$0xff]
      %v3118 = vunpack.c.l.bf16 %v3102
      %v3119 = vunpack.c.h.bf16 %v3102
      %v3120 = vunpack.c.l.bf16 %v3103
      %v3121 = vunpack.c.h.bf16 %v3103
      %v3122 = vunpack.c.l.bf16 %v3104
      %v3123 = vunpack.c.h.bf16 %v3104
      %v3124 = vunpack.c.l.bf16 %v3105
      %v3125 = vunpack.c.h.bf16 %v3105
      %v3126 = vunpack.c.l.bf16 %v3106
      %v3127 = vunpack.c.h.bf16 %v3106
      %v3128 = vunpack.c.l.bf16 %v3107
      %v3129 = vunpack.c.h.bf16 %v3107
      %v3130 = vunpack.c.l.bf16 %v3108
      %v3131 = vunpack.c.h.bf16 %v3108
      %v3132 = vunpack.c.l.bf16 %v3109
      %v3133 = vunpack.c.h.bf16 %v3109
      %v3134 = vunpack.c.l.bf16 %v3110
      %v3135 = vunpack.c.h.bf16 %v3110
      %v3136 = vunpack.c.l.bf16 %v3111
      %v3137 = vunpack.c.h.bf16 %v3111
      %v3138 = vunpack.c.l.bf16 %v3112
      %v3139 = vunpack.c.h.bf16 %v3112
      %v3140 = vunpack.c.l.bf16 %v3113
      %v3141 = vunpack.c.h.bf16 %v3113
      %v3142 = vunpack.c.l.bf16 %v3114
      %v3143 = vunpack.c.h.bf16 %v3114
      %v3144 = vunpack.c.l.bf16 %v3115
      %v3145 = vunpack.c.h.bf16 %v3115
      %v3146 = vunpack.c.l.bf16 %v3116
      %v3147 = vunpack.c.h.bf16 %v3116
      %v3148 = vunpack.c.l.bf16 %v3117
      %v3149 = vunpack.c.h.bf16 %v3117
      %3150 = vrot.lane.b32.xlu0 %v3118, 113
      %v3151 = vpop.permute.xlu0 %3150
      %3152 = vrot.lane.b32.xlu0 %v3120, 113
      %v3153 = vpop.permute.xlu0 %3152
      %3154 = vrot.lane.b32.xlu0 %v3122, 113
      %v3155 = vpop.permute.xlu0 %3154
      %3156 = vrot.lane.b32.xlu0 %v3124, 113
      %v3157 = vpop.permute.xlu0 %3156
      %3158 = vrot.lane.b32.xlu0 %v3126, 113
      %v3159 = vpop.permute.xlu0 %3158
      %3160 = vrot.lane.b32.xlu0 %v3128, 113
      %v3161 = vpop.permute.xlu0 %3160
      %3162 = vrot.lane.b32.xlu0 %v3130, 113
      %v3163 = vpop.permute.xlu0 %3162
      %3164 = vrot.lane.b32.xlu0 %v3132, 113
      %v3165 = vpop.permute.xlu0 %3164
      %3166 = vrot.lane.b32.xlu0 %v3134, 113
      %v3167 = vpop.permute.xlu0 %3166
      %3168 = vrot.lane.b32.xlu0 %v3136, 113
      %v3169 = vpop.permute.xlu0 %3168
      %3170 = vrot.lane.b32.xlu0 %v3138, 113
      %v3171 = vpop.permute.xlu0 %3170
      %3172 = vrot.lane.b32.xlu0 %v3140, 113
      %v3173 = vpop.permute.xlu0 %3172
      %3174 = vrot.lane.b32.xlu0 %v3142, 113
      %v3175 = vpop.permute.xlu0 %3174
      %3176 = vrot.lane.b32.xlu0 %v3144, 113
      %v3177 = vpop.permute.xlu0 %3176
      %3178 = vrot.lane.b32.xlu0 %v3146, 113
      %v3179 = vpop.permute.xlu0 %3178
      %3180 = vrot.lane.b32.xlu0 %v3148, 113
      %v3181 = vpop.permute.xlu0 %3180
      %3182 = vrot.lane.b32.xlu0 %v3119, 113
      %v3183 = vpop.permute.xlu0 %3182
      %3184 = vrot.lane.b32.xlu0 %v3121, 113
      %v3185 = vpop.permute.xlu0 %3184
      %3186 = vrot.lane.b32.xlu0 %v3123, 113
      %v3187 = vpop.permute.xlu0 %3186
      %3188 = vrot.lane.b32.xlu0 %v3125, 113
      %v3189 = vpop.permute.xlu0 %3188
      %3190 = vrot.lane.b32.xlu0 %v3127, 113
      %v3191 = vpop.permute.xlu0 %3190
      %3192 = vrot.lane.b32.xlu0 %v3129, 113
      %v3193 = vpop.permute.xlu0 %3192
      %3194 = vrot.lane.b32.xlu0 %v3131, 113
      %v3195 = vpop.permute.xlu0 %3194
      %3196 = vrot.lane.b32.xlu0 %v3133, 113
      %v3197 = vpop.permute.xlu0 %3196
      %3198 = vrot.lane.b32.xlu0 %v3135, 113
      %v3199 = vpop.permute.xlu0 %3198
      %3200 = vrot.lane.b32.xlu0 %v3137, 113
      %v3201 = vpop.permute.xlu0 %3200
      %3202 = vrot.lane.b32.xlu0 %v3139, 113
      %v3203 = vpop.permute.xlu0 %3202
      %3204 = vrot.lane.b32.xlu0 %v3141, 113
      %v3205 = vpop.permute.xlu0 %3204
      %3206 = vrot.lane.b32.xlu0 %v3143, 113
      %v3207 = vpop.permute.xlu0 %3206
      %3208 = vrot.lane.b32.xlu0 %v3145, 113
      %v3209 = vpop.permute.xlu0 %3208
      %3210 = vrot.lane.b32.xlu0 %v3147, 113
      %v3211 = vpop.permute.xlu0 %3210
      %3212 = vrot.lane.b32.xlu0 %v3149, 113
      %v3213 = vpop.permute.xlu0 %3212
      %vm3214 = vcmp.lt.s32.totalorder %v445, 113
      %v3215 = vsel %vm3214, %v3151, %v3183
      %v3216 = vsel %vm3214, %v3153, %v3185
      %v3217 = vsel %vm3214, %v3155, %v3187
      %v3218 = vsel %vm3214, %v3157, %v3189
      %v3219 = vsel %vm3214, %v3159, %v3191
      %v3220 = vsel %vm3214, %v3161, %v3193
      %v3221 = vsel %vm3214, %v3163, %v3195
      %v3222 = vsel %vm3214, %v3165, %v3197
      %v3223 = vsel %vm3214, %v3167, %v3199
      %v3224 = vsel %vm3214, %v3169, %v3201
      %v3225 = vsel %vm3214, %v3171, %v3203
      %v3226 = vsel %vm3214, %v3173, %v3205
      %v3227 = vsel %vm3214, %v3175, %v3207
      %v3228 = vsel %vm3214, %v3177, %v3209
      %v3229 = vsel %vm3214, %v3179, %v3211
      %v3230 = vsel %vm3214, %v3181, %v3213
      %v3231 = vsel %vm3214, %v3183, %v3151
      %v3232 = vsel %vm3214, %v3185, %v3153
      %v3233 = vsel %vm3214, %v3187, %v3155
      %v3234 = vsel %vm3214, %v3189, %v3157
      %v3235 = vsel %vm3214, %v3191, %v3159
      %v3236 = vsel %vm3214, %v3193, %v3161
      %v3237 = vsel %vm3214, %v3195, %v3163
      %v3238 = vsel %vm3214, %v3197, %v3165
      %v3239 = vsel %vm3214, %v3199, %v3167
      %v3240 = vsel %vm3214, %v3201, %v3169
      %v3241 = vsel %vm3214, %v3203, %v3171
      %v3242 = vsel %vm3214, %v3205, %v3173
      %v3243 = vsel %vm3214, %v3207, %v3175
      %v3244 = vsel %vm3214, %v3209, %v3177
      %v3245 = vsel %vm3214, %v3211, %v3179
      %v3246 = vsel %vm3214, %v3213, %v3181
      %s3247 = scalar_lea.vmem %s5, 12
      %v3248 = vld [vmem:[%s3247] sm:$0x3]
      %v3250 = vlaneseq
      %v3251 = vshrl.u32 %v3250, 7
      %v3252 = vsub.s32 0, %v3251
      %v3253 = vrot.slane %v3248, %v3252
      %v3254 = vlaneseq
      %v3255 = vshrl.u32 %v3254, 7
      %v3256 = vsub.s32 1, %v3255
      %v3257 = vrot.slane %v3248, %v3256
      %v3260 = vmul.f32 %v3215, %v3253
      %v3261 = vmul.f32 %v3231, %v3257
      %v3262 = vmul.f32 %v3216, %v3253
      %v3263 = vmul.f32 %v3232, %v3257
      %v3264 = vmul.f32 %v3217, %v3253
      %v3265 = vmul.f32 %v3233, %v3257
      %v3266 = vmul.f32 %v3218, %v3253
      %v3267 = vmul.f32 %v3234, %v3257
      %v3268 = vmul.f32 %v3219, %v3253
      %v3269 = vmul.f32 %v3235, %v3257
      %v3270 = vmul.f32 %v3220, %v3253
      %v3271 = vmul.f32 %v3236, %v3257
      %v3272 = vmul.f32 %v3221, %v3253
      %v3273 = vmul.f32 %v3237, %v3257
      %v3274 = vmul.f32 %v3222, %v3253
      %v3275 = vmul.f32 %v3238, %v3257
      %v3276 = vmul.f32 %v3223, %v3253
      %v3277 = vmul.f32 %v3239, %v3257
      %v3278 = vmul.f32 %v3224, %v3253
      %v3279 = vmul.f32 %v3240, %v3257
      %v3280 = vmul.f32 %v3225, %v3253
      %v3281 = vmul.f32 %v3241, %v3257
      %v3282 = vmul.f32 %v3226, %v3253
      %v3283 = vmul.f32 %v3242, %v3257
      %v3284 = vmul.f32 %v3227, %v3253
      %v3285 = vmul.f32 %v3243, %v3257
      %v3286 = vmul.f32 %v3228, %v3253
      %v3287 = vmul.f32 %v3244, %v3257
      %v3288 = vmul.f32 %v3229, %v3253
      %v3289 = vmul.f32 %v3245, %v3257
      %v3290 = vmul.f32 %v3230, %v3253
      %v3291 = vmul.f32 %v3246, %v3257
      %v3292 = vld [vmem:[#allocation2] sm:$0xff]
      %v3293 = vld [vmem:[#allocation2 + $0x8] sm:$0xff]
      %v3294 = vld [vmem:[#allocation2 + $0x10] sm:$0xff]
      %v3295 = vld [vmem:[#allocation2 + $0x18] sm:$0xff]
      %v3296 = vld [vmem:[#allocation2 + $0x20] sm:$0xff]
      %v3297 = vld [vmem:[#allocation2 + $0x28] sm:$0xff]
      %v3298 = vld [vmem:[#allocation2 + $0x30] sm:$0xff]
      %v3299 = vld [vmem:[#allocation2 + $0x38] sm:$0xff]
      %v3300 = vld [vmem:[#allocation2 + $0x40] sm:$0xff]
      %v3301 = vld [vmem:[#allocation2 + $0x48] sm:$0xff]
      %v3302 = vld [vmem:[#allocation2 + $0x50] sm:$0xff]
      %v3303 = vld [vmem:[#allocation2 + $0x58] sm:$0xff]
      %v3304 = vld [vmem:[#allocation2 + $0x60] sm:$0xff]
      %v3305 = vld [vmem:[#allocation2 + $0x68] sm:$0xff]
      %v3306 = vld [vmem:[#allocation2 + $0x70] sm:$0xff]
      %v3307 = vld [vmem:[#allocation2 + $0x78] sm:$0xff]
      %v3308 = vld [vmem:[#allocation2 + $0x80] sm:$0xff]
      %v3309 = vld [vmem:[#allocation2 + $0x88] sm:$0xff]
      %v3310 = vld [vmem:[#allocation2 + $0x90] sm:$0xff]
      %v3311 = vld [vmem:[#allocation2 + $0x98] sm:$0xff]
      %v3312 = vld [vmem:[#allocation2 + $0xa0] sm:$0xff]
      %v3313 = vld [vmem:[#allocation2 + $0xa8] sm:$0xff]
      %v3314 = vld [vmem:[#allocation2 + $0xb0] sm:$0xff]
      %v3315 = vld [vmem:[#allocation2 + $0xb8] sm:$0xff]
      %v3316 = vld [vmem:[#allocation2 + $0xc0] sm:$0xff]
      %v3317 = vld [vmem:[#allocation2 + $0xc8] sm:$0xff]
      %v3318 = vld [vmem:[#allocation2 + $0xd0] sm:$0xff]
      %v3319 = vld [vmem:[#allocation2 + $0xd8] sm:$0xff]
      %v3320 = vld [vmem:[#allocation2 + $0xe0] sm:$0xff]
      %v3321 = vld [vmem:[#allocation2 + $0xe8] sm:$0xff]
      %v3322 = vld [vmem:[#allocation2 + $0xf0] sm:$0xff]
      %v3323 = vld [vmem:[#allocation2 + $0xf8] sm:$0xff]
      %s3324 = scalar_lea.vmem %s1, 384
      %v3325 = vld [vmem:[%s3324] sm:$0xf]
      %v3326 = vld [vmem:[%s3324 + $0x4] sm:$0xf]
      %v3327 = vld [vmem:[%s3324 + $0x8] sm:$0xf]
      %v3328 = vld [vmem:[%s3324 + $0xc] sm:$0xf]
      %v3329 = vld [vmem:[%s3324 + $0x10] sm:$0xf]
      %v3330 = vld [vmem:[%s3324 + $0x14] sm:$0xf]
      %v3331 = vld [vmem:[%s3324 + $0x18] sm:$0xf]
      %v3332 = vld [vmem:[%s3324 + $0x1c] sm:$0xf]
      %v3333 = vld [vmem:[%s3324 + $0x20] sm:$0xf]
      %v3334 = vld [vmem:[%s3324 + $0x24] sm:$0xf]
      %v3335 = vld [vmem:[%s3324 + $0x28] sm:$0xf]
      %v3336 = vld [vmem:[%s3324 + $0x2c] sm:$0xf]
      %v3337 = vld [vmem:[%s3324 + $0x30] sm:$0xf]
      %v3338 = vld [vmem:[%s3324 + $0x34] sm:$0xf]
      %v3339 = vld [vmem:[%s3324 + $0x38] sm:$0xf]
      %v3340 = vld [vmem:[%s3324 + $0x3c] sm:$0xf]
      %v3341 = vpack.c.bf16 %v3262, %v3260
      %v3342 = vpack.c.bf16 %v3263, %v3261
      %v3343 = vpack.c.bf16 %v3266, %v3264
      %v3344 = vpack.c.bf16 %v3267, %v3265
      %v3345 = vpack.c.bf16 %v3270, %v3268
      %v3346 = vpack.c.bf16 %v3271, %v3269
      %v3347 = vpack.c.bf16 %v3274, %v3272
      %v3348 = vpack.c.bf16 %v3275, %v3273
      %v3349 = vpack.c.bf16 %v3278, %v3276
      %v3350 = vpack.c.bf16 %v3279, %v3277
      %v3351 = vpack.c.bf16 %v3282, %v3280
      %v3352 = vpack.c.bf16 %v3283, %v3281
      %v3353 = vpack.c.bf16 %v3286, %v3284
      %v3354 = vpack.c.bf16 %v3287, %v3285
      %v3355 = vpack.c.bf16 %v3290, %v3288
      %v3356 = vpack.c.bf16 %v3291, %v3289
      %v3373 = vunpack.c.l.b16 %v3325
      %v3374 = vunpack.c.l.b16 %v3326
      %v3375 = vunpack.c.l.b16 %v3327
      %v3376 = vunpack.c.l.b16 %v3328
      %v3377 = vunpack.c.l.b16 %v3329
      %v3378 = vunpack.c.l.b16 %v3330
      %v3379 = vunpack.c.l.b16 %v3331
      %v3380 = vunpack.c.l.b16 %v3332
      %v3381 = vunpack.c.l.b16 %v3333
      %v3382 = vunpack.c.l.b16 %v3334
      %v3383 = vunpack.c.l.b16 %v3335
      %v3384 = vunpack.c.l.b16 %v3336
      %v3385 = vunpack.c.l.b16 %v3337
      %v3386 = vunpack.c.l.b16 %v3338
      %v3387 = vunpack.c.l.b16 %v3339
      %v3388 = vunpack.c.l.b16 %v3340
      %v3389 = vpack.c.b16 %v3374, %v3373
      %v3390 = vpack.c.b16 %v3376, %v3375
      %v3391 = vpack.c.b16 %v3378, %v3377
      %v3392 = vpack.c.b16 %v3380, %v3379
      %v3393 = vpack.c.b16 %v3382, %v3381
      %v3394 = vpack.c.b16 %v3384, %v3383
      %v3395 = vpack.c.b16 %v3386, %v3385
      %v3396 = vpack.c.b16 %v3388, %v3387
      %3405 = vmatprep.subr.bf16.mxu0 %v3356
      %3406 = vmatpush1.bf16.msra.mxu0 %v3355
      %3407 = vmatprep.subr.bf16.mxu0 %v3354
      %3408 = vmatpush1.bf16.msra.mxu0 %v3353
      %3409 = vmatprep.subr.bf16.mxu0 %v3352
      %3410 = vmatpush1.bf16.msra.mxu0 %v3351
      %3411 = vmatprep.subr.bf16.mxu0 %v3350
      %3412 = vmatpush1.bf16.msra.mxu0 %v3349
      %3413 = vmatprep.subr.bf16.mxu0 %v3348
      %3414 = vmatpush1.bf16.msra.mxu0 %v3347
      %3415 = vmatprep.subr.bf16.mxu0 %v3346
      %3416 = vmatpush1.bf16.msra.mxu0 %v3345
      %3417 = vmatprep.subr.bf16.mxu0 %v3344
      %3418 = vmatpush1.bf16.msra.mxu0 %v3343
      %3419 = vmatprep.subr.bf16.mxu0 %v3342
      %3420 = vmatpush1.bf16.msra.mxu0 %v3341
      %3421 = vmatprep.subr.bf16.mxu0 0
      %3422 = vmatpush2.bf16.msra.mxu0 0
      %3423 = vmatprep.subr.bf16.mxu0 0
      %3424 = vmatpush2.bf16.msra.mxu0 0
      %3425 = vmatprep.subr.bf16.mxu0 0
      %3426 = vmatpush2.bf16.msra.mxu0 0
      %3427 = vmatprep.subr.bf16.mxu0 0
      %3428 = vmatpush2.bf16.msra.mxu0 0
      %3429 = vmatprep.subr.bf16.mxu0 0
      %3430 = vmatpush2.bf16.msra.mxu0 0
      %3431 = vmatprep.subr.bf16.mxu0 0
      %3432 = vmatpush2.bf16.msra.mxu0 0
      %3433 = vmatprep.subr.bf16.mxu0 0
      %3434 = vmatpush2.bf16.msra.mxu0 0
      %3435 = vmatprep.subr.bf16.mxu0 0
      %3436 = vmatpush2.bf16.msra.mxu0 0
      %3437 = vmatprep.mubr.bf16.mxu0 0
      %3438 = vmatmul.mubr.bf16.gmra.mxu0 %v3389
      %v3439 = vpop.f32.mrf.mxu0
      %v3440 = vadd.f32 0.0, %v3439
      %v3441 = vpop.f32.mrf.mxu0
      %v3442 = vadd.f32 0.0, %v3441
      %v3443 = vpop.f32.mrf.mxu0
      %v3444 = vadd.f32 0.0, %v3443
      %v3445 = vpop.f32.mrf.mxu0
      %v3446 = vadd.f32 0.0, %v3445
      %3447 = vmatprep.mubr.bf16.mxu0 0
      %3448 = vmatmul.mubr.bf16.gmra.mxu0 %v3390
      %v3449 = vpop.f32.mrf.mxu0
      %v3450 = vadd.f32 0.0, %v3449
      %v3451 = vpop.f32.mrf.mxu0
      %v3452 = vadd.f32 0.0, %v3451
      %v3453 = vpop.f32.mrf.mxu0
      %v3454 = vadd.f32 0.0, %v3453
      %v3455 = vpop.f32.mrf.mxu0
      %v3456 = vadd.f32 0.0, %v3455
      %3457 = vmatprep.mubr.bf16.mxu0 0
      %3458 = vmatmul.mubr.bf16.gmra.mxu0 %v3391
      %v3459 = vpop.f32.mrf.mxu0
      %v3460 = vadd.f32 0.0, %v3459
      %v3461 = vpop.f32.mrf.mxu0
      %v3462 = vadd.f32 0.0, %v3461
      %v3463 = vpop.f32.mrf.mxu0
      %v3464 = vadd.f32 0.0, %v3463
      %v3465 = vpop.f32.mrf.mxu0
      %v3466 = vadd.f32 0.0, %v3465
      %3467 = vmatprep.mubr.bf16.mxu0 0
      %3468 = vmatmul.mubr.bf16.gmra.mxu0 %v3392
      %v3469 = vpop.f32.mrf.mxu0
      %v3470 = vadd.f32 0.0, %v3469
      %v3471 = vpop.f32.mrf.mxu0
      %v3472 = vadd.f32 0.0, %v3471
      %v3473 = vpop.f32.mrf.mxu0
      %v3474 = vadd.f32 0.0, %v3473
      %v3475 = vpop.f32.mrf.mxu0
      %v3476 = vadd.f32 0.0, %v3475
      %3477 = vmatprep.mubr.bf16.mxu0 0
      %3478 = vmatmul.mubr.bf16.gmra.mxu0 %v3393
      %v3479 = vpop.f32.mrf.mxu0
      %v3480 = vadd.f32 0.0, %v3479
      %v3481 = vpop.f32.mrf.mxu0
      %v3482 = vadd.f32 0.0, %v3481
      %v3483 = vpop.f32.mrf.mxu0
      %v3484 = vadd.f32 0.0, %v3483
      %v3485 = vpop.f32.mrf.mxu0
      %v3486 = vadd.f32 0.0, %v3485
      %3487 = vmatprep.mubr.bf16.mxu0 0
      %3488 = vmatmul.mubr.bf16.gmra.mxu0 %v3394
      %v3489 = vpop.f32.mrf.mxu0
      %v3490 = vadd.f32 0.0, %v3489
      %v3491 = vpop.f32.mrf.mxu0
      %v3492 = vadd.f32 0.0, %v3491
      %v3493 = vpop.f32.mrf.mxu0
      %v3494 = vadd.f32 0.0, %v3493
      %v3495 = vpop.f32.mrf.mxu0
      %v3496 = vadd.f32 0.0, %v3495
      %3497 = vmatprep.mubr.bf16.mxu0 0
      %3498 = vmatmul.mubr.bf16.gmra.mxu0 %v3395
      %v3499 = vpop.f32.mrf.mxu0
      %v3500 = vadd.f32 0.0, %v3499
      %v3501 = vpop.f32.mrf.mxu0
      %v3502 = vadd.f32 0.0, %v3501
      %v3503 = vpop.f32.mrf.mxu0
      %v3504 = vadd.f32 0.0, %v3503
      %v3505 = vpop.f32.mrf.mxu0
      %v3506 = vadd.f32 0.0, %v3505
      %3507 = vmatprep.mubr.bf16.mxu0 0
      %3508 = vmatmul.mubr.bf16.gmra.mxu0 %v3396
      %v3509 = vpop.f32.mrf.mxu0
      %v3510 = vadd.f32 0.0, %v3509
      %v3511 = vpop.f32.mrf.mxu0
      %v3512 = vadd.f32 0.0, %v3511
      %v3513 = vpop.f32.mrf.mxu0
      %v3514 = vadd.f32 0.0, %v3513
      %v3515 = vpop.f32.mrf.mxu0
      %v3516 = vadd.f32 0.0, %v3515
      %3517 = vdwg.mxu0
      %v3518 = vadd.f32 %v3292, %v3440
      %v3519 = vadd.f32 %v3293, %v3442
      %v3520 = vadd.f32 %v3294, %v3444
      %v3521 = vadd.f32 %v3295, %v3446
      %v3522 = vadd.f32 %v3296, %v3450
      %v3523 = vadd.f32 %v3297, %v3452
      %v3524 = vadd.f32 %v3298, %v3454
      %v3525 = vadd.f32 %v3299, %v3456
      %v3526 = vadd.f32 %v3300, %v3460
      %v3527 = vadd.f32 %v3301, %v3462
      %v3528 = vadd.f32 %v3302, %v3464
      %v3529 = vadd.f32 %v3303, %v3466
      %v3530 = vadd.f32 %v3304, %v3470
      %v3531 = vadd.f32 %v3305, %v3472
      %v3532 = vadd.f32 %v3306, %v3474
      %v3533 = vadd.f32 %v3307, %v3476
      %v3534 = vadd.f32 %v3308, %v3480
      %v3535 = vadd.f32 %v3309, %v3482
      %v3536 = vadd.f32 %v3310, %v3484
      %v3537 = vadd.f32 %v3311, %v3486
      %v3538 = vadd.f32 %v3312, %v3490
      %v3539 = vadd.f32 %v3313, %v3492
      %v3540 = vadd.f32 %v3314, %v3494
      %v3541 = vadd.f32 %v3315, %v3496
      %v3542 = vadd.f32 %v3316, %v3500
      %v3543 = vadd.f32 %v3317, %v3502
      %v3544 = vadd.f32 %v3318, %v3504
      %v3545 = vadd.f32 %v3319, %v3506
      %v3546 = vadd.f32 %v3320, %v3510
      %v3547 = vadd.f32 %v3321, %v3512
      %v3548 = vadd.f32 %v3322, %v3514
      %v3549 = vadd.f32 %v3323, %v3516
      %3550 = vst [vmem:[#allocation2] sm:$0xff] %v3518
      %3551 = vst [vmem:[#allocation2 + $0x8] sm:$0xff] %v3519
      %3552 = vst [vmem:[#allocation2 + $0x10] sm:$0xff] %v3520
      %3553 = vst [vmem:[#allocation2 + $0x18] sm:$0xff] %v3521
      %3554 = vst [vmem:[#allocation2 + $0x20] sm:$0xff] %v3522
      %3555 = vst [vmem:[#allocation2 + $0x28] sm:$0xff] %v3523
      %3556 = vst [vmem:[#allocation2 + $0x30] sm:$0xff] %v3524
      %3557 = vst [vmem:[#allocation2 + $0x38] sm:$0xff] %v3525
      %3558 = vst [vmem:[#allocation2 + $0x40] sm:$0xff] %v3526
      %3559 = vst [vmem:[#allocation2 + $0x48] sm:$0xff] %v3527
      %3560 = vst [vmem:[#allocation2 + $0x50] sm:$0xff] %v3528
      %3561 = vst [vmem:[#allocation2 + $0x58] sm:$0xff] %v3529
      %3562 = vst [vmem:[#allocation2 + $0x60] sm:$0xff] %v3530
      %3563 = vst [vmem:[#allocation2 + $0x68] sm:$0xff] %v3531
      %3564 = vst [vmem:[#allocation2 + $0x70] sm:$0xff] %v3532
      %3565 = vst [vmem:[#allocation2 + $0x78] sm:$0xff] %v3533
      %3566 = vst [vmem:[#allocation2 + $0x80] sm:$0xff] %v3534
      %3567 = vst [vmem:[#allocation2 + $0x88] sm:$0xff] %v3535
      %3568 = vst [vmem:[#allocation2 + $0x90] sm:$0xff] %v3536
      %3569 = vst [vmem:[#allocation2 + $0x98] sm:$0xff] %v3537
      %3570 = vst [vmem:[#allocation2 + $0xa0] sm:$0xff] %v3538
      %3571 = vst [vmem:[#allocation2 + $0xa8] sm:$0xff] %v3539
      %3572 = vst [vmem:[#allocation2 + $0xb0] sm:$0xff] %v3540
      %3573 = vst [vmem:[#allocation2 + $0xb8] sm:$0xff] %v3541
      %3574 = vst [vmem:[#allocation2 + $0xc0] sm:$0xff] %v3542
      %3575 = vst [vmem:[#allocation2 + $0xc8] sm:$0xff] %v3543
      %3576 = vst [vmem:[#allocation2 + $0xd0] sm:$0xff] %v3544
      %3577 = vst [vmem:[#allocation2 + $0xd8] sm:$0xff] %v3545
      %3578 = vst [vmem:[#allocation2 + $0xe0] sm:$0xff] %v3546
      %3579 = vst [vmem:[#allocation2 + $0xe8] sm:$0xff] %v3547
      %3580 = vst [vmem:[#allocation2 + $0xf0] sm:$0xff] %v3548
      %3581 = vst [vmem:[#allocation2 + $0xf8] sm:$0xff] %v3549
      %v3582 = vld [vmem:[%s288] sm:$0xff]
      %v3583 = vld [vmem:[%s288 + $0x8] sm:$0xff]
      %v3584 = vld [vmem:[%s288 + $0x10] sm:$0xff]
      %v3585 = vld [vmem:[%s288 + $0x18] sm:$0xff]
      %v3586 = vld [vmem:[%s288 + $0x20] sm:$0xff]
      %v3587 = vld [vmem:[%s288 + $0x28] sm:$0xff]
      %v3588 = vld [vmem:[%s288 + $0x30] sm:$0xff]
      %v3589 = vld [vmem:[%s288 + $0x38] sm:$0xff]
      %v3590 = vld [vmem:[%s288 + $0x40] sm:$0xff]
      %v3591 = vld [vmem:[%s288 + $0x48] sm:$0xff]
      %v3592 = vld [vmem:[%s288 + $0x50] sm:$0xff]
      %v3593 = vld [vmem:[%s288 + $0x58] sm:$0xff]
      %v3594 = vld [vmem:[%s288 + $0x60] sm:$0xff]
      %v3595 = vld [vmem:[%s288 + $0x68] sm:$0xff]
      %v3596 = vld [vmem:[%s288 + $0x70] sm:$0xff]
      %v3597 = vld [vmem:[%s288 + $0x78] sm:$0xff]
      %v3598 = vunpack.c.l.bf16 %v3582
      %v3599 = vunpack.c.h.bf16 %v3582
      %v3600 = vunpack.c.l.bf16 %v3583
      %v3601 = vunpack.c.h.bf16 %v3583
      %v3602 = vunpack.c.l.bf16 %v3584
      %v3603 = vunpack.c.h.bf16 %v3584
      %v3604 = vunpack.c.l.bf16 %v3585
      %v3605 = vunpack.c.h.bf16 %v3585
      %v3606 = vunpack.c.l.bf16 %v3586
      %v3607 = vunpack.c.h.bf16 %v3586
      %v3608 = vunpack.c.l.bf16 %v3587
      %v3609 = vunpack.c.h.bf16 %v3587
      %v3610 = vunpack.c.l.bf16 %v3588
      %v3611 = vunpack.c.h.bf16 %v3588
      %v3612 = vunpack.c.l.bf16 %v3589
      %v3613 = vunpack.c.h.bf16 %v3589
      %v3614 = vunpack.c.l.bf16 %v3590
      %v3615 = vunpack.c.h.bf16 %v3590
      %v3616 = vunpack.c.l.bf16 %v3591
      %v3617 = vunpack.c.h.bf16 %v3591
      %v3618 = vunpack.c.l.bf16 %v3592
      %v3619 = vunpack.c.h.bf16 %v3592
      %v3620 = vunpack.c.l.bf16 %v3593
      %v3621 = vunpack.c.h.bf16 %v3593
      %v3622 = vunpack.c.l.bf16 %v3594
      %v3623 = vunpack.c.h.bf16 %v3594
      %v3624 = vunpack.c.l.bf16 %v3595
      %v3625 = vunpack.c.h.bf16 %v3595
      %v3626 = vunpack.c.l.bf16 %v3596
      %v3627 = vunpack.c.h.bf16 %v3596
      %v3628 = vunpack.c.l.bf16 %v3597
      %v3629 = vunpack.c.h.bf16 %v3597
      %3630 = vrot.lane.b32.xlu0 %v3598, 112
      %v3631 = vpop.permute.xlu0 %3630
      %3632 = vrot.lane.b32.xlu0 %v3600, 112
      %v3633 = vpop.permute.xlu0 %3632
      %3634 = vrot.lane.b32.xlu0 %v3602, 112
      %v3635 = vpop.permute.xlu0 %3634
      %3636 = vrot.lane.b32.xlu0 %v3604, 112
      %v3637 = vpop.permute.xlu0 %3636
      %3638 = vrot.lane.b32.xlu0 %v3606, 112
      %v3639 = vpop.permute.xlu0 %3638
      %3640 = vrot.lane.b32.xlu0 %v3608, 112
      %v3641 = vpop.permute.xlu0 %3640
      %3642 = vrot.lane.b32.xlu0 %v3610, 112
      %v3643 = vpop.permute.xlu0 %3642
      %3644 = vrot.lane.b32.xlu0 %v3612, 112
      %v3645 = vpop.permute.xlu0 %3644
      %3646 = vrot.lane.b32.xlu0 %v3614, 112
      %v3647 = vpop.permute.xlu0 %3646
      %3648 = vrot.lane.b32.xlu0 %v3616, 112
      %v3649 = vpop.permute.xlu0 %3648
      %3650 = vrot.lane.b32.xlu0 %v3618, 112
      %v3651 = vpop.permute.xlu0 %3650
      %3652 = vrot.lane.b32.xlu0 %v3620, 112
      %v3653 = vpop.permute.xlu0 %3652
      %3654 = vrot.lane.b32.xlu0 %v3622, 112
      %v3655 = vpop.permute.xlu0 %3654
      %3656 = vrot.lane.b32.xlu0 %v3624, 112
      %v3657 = vpop.permute.xlu0 %3656
      %3658 = vrot.lane.b32.xlu0 %v3626, 112
      %v3659 = vpop.permute.xlu0 %3658
      %3660 = vrot.lane.b32.xlu0 %v3628, 112
      %v3661 = vpop.permute.xlu0 %3660
      %3662 = vrot.lane.b32.xlu0 %v3599, 112
      %v3663 = vpop.permute.xlu0 %3662
      %3664 = vrot.lane.b32.xlu0 %v3601, 112
      %v3665 = vpop.permute.xlu0 %3664
      %3666 = vrot.lane.b32.xlu0 %v3603, 112
      %v3667 = vpop.permute.xlu0 %3666
      %3668 = vrot.lane.b32.xlu0 %v3605, 112
      %v3669 = vpop.permute.xlu0 %3668
      %3670 = vrot.lane.b32.xlu0 %v3607, 112
      %v3671 = vpop.permute.xlu0 %3670
      %3672 = vrot.lane.b32.xlu0 %v3609, 112
      %v3673 = vpop.permute.xlu0 %3672
      %3674 = vrot.lane.b32.xlu0 %v3611, 112
      %v3675 = vpop.permute.xlu0 %3674
      %3676 = vrot.lane.b32.xlu0 %v3613, 112
      %v3677 = vpop.permute.xlu0 %3676
      %3678 = vrot.lane.b32.xlu0 %v3615, 112
      %v3679 = vpop.permute.xlu0 %3678
      %3680 = vrot.lane.b32.xlu0 %v3617, 112
      %v3681 = vpop.permute.xlu0 %3680
      %3682 = vrot.lane.b32.xlu0 %v3619, 112
      %v3683 = vpop.permute.xlu0 %3682
      %3684 = vrot.lane.b32.xlu0 %v3621, 112
      %v3685 = vpop.permute.xlu0 %3684
      %3686 = vrot.lane.b32.xlu0 %v3623, 112
      %v3687 = vpop.permute.xlu0 %3686
      %3688 = vrot.lane.b32.xlu0 %v3625, 112
      %v3689 = vpop.permute.xlu0 %3688
      %3690 = vrot.lane.b32.xlu0 %v3627, 112
      %v3691 = vpop.permute.xlu0 %3690
      %3692 = vrot.lane.b32.xlu0 %v3629, 112
      %v3693 = vpop.permute.xlu0 %3692
      %vm3694 = vcmp.lt.s32.totalorder %v445, 112
      %v3695 = vsel %vm3694, %v3631, %v3663
      %v3696 = vsel %vm3694, %v3633, %v3665
      %v3697 = vsel %vm3694, %v3635, %v3667
      %v3698 = vsel %vm3694, %v3637, %v3669
      %v3699 = vsel %vm3694, %v3639, %v3671
      %v3700 = vsel %vm3694, %v3641, %v3673
      %v3701 = vsel %vm3694, %v3643, %v3675
      %v3702 = vsel %vm3694, %v3645, %v3677
      %v3703 = vsel %vm3694, %v3647, %v3679
      %v3704 = vsel %vm3694, %v3649, %v3681
      %v3705 = vsel %vm3694, %v3651, %v3683
      %v3706 = vsel %vm3694, %v3653, %v3685
      %v3707 = vsel %vm3694, %v3655, %v3687
      %v3708 = vsel %vm3694, %v3657, %v3689
      %v3709 = vsel %vm3694, %v3659, %v3691
      %v3710 = vsel %vm3694, %v3661, %v3693
      %v3711 = vsel %vm3694, %v3663, %v3631
      %v3712 = vsel %vm3694, %v3665, %v3633
      %v3713 = vsel %vm3694, %v3667, %v3635
      %v3714 = vsel %vm3694, %v3669, %v3637
      %v3715 = vsel %vm3694, %v3671, %v3639
      %v3716 = vsel %vm3694, %v3673, %v3641
      %v3717 = vsel %vm3694, %v3675, %v3643
      %v3718 = vsel %vm3694, %v3677, %v3645
      %v3719 = vsel %vm3694, %v3679, %v3647
      %v3720 = vsel %vm3694, %v3681, %v3649
      %v3721 = vsel %vm3694, %v3683, %v3651
      %v3722 = vsel %vm3694, %v3685, %v3653
      %v3723 = vsel %vm3694, %v3687, %v3655
      %v3724 = vsel %vm3694, %v3689, %v3657
      %v3725 = vsel %vm3694, %v3691, %v3659
      %v3726 = vsel %vm3694, %v3693, %v3661
      %s3727 = scalar_lea.vmem %s5, 14
      %v3728 = vld [vmem:[%s3727] sm:$0x3]
      %v3730 = vlaneseq
      %v3731 = vshrl.u32 %v3730, 7
      %v3732 = vsub.s32 0, %v3731
      %v3733 = vrot.slane %v3728, %v3732
      %v3734 = vlaneseq
      %v3735 = vshrl.u32 %v3734, 7
      %v3736 = vsub.s32 1, %v3735
      %v3737 = vrot.slane %v3728, %v3736
      %v3740 = vmul.f32 %v3695, %v3733
      %v3741 = vmul.f32 %v3711, %v3737
      %v3742 = vmul.f32 %v3696, %v3733
      %v3743 = vmul.f32 %v3712, %v3737
      %v3744 = vmul.f32 %v3697, %v3733
      %v3745 = vmul.f32 %v3713, %v3737
      %v3746 = vmul.f32 %v3698, %v3733
      %v3747 = vmul.f32 %v3714, %v3737
      %v3748 = vmul.f32 %v3699, %v3733
      %v3749 = vmul.f32 %v3715, %v3737
      %v3750 = vmul.f32 %v3700, %v3733
      %v3751 = vmul.f32 %v3716, %v3737
      %v3752 = vmul.f32 %v3701, %v3733
      %v3753 = vmul.f32 %v3717, %v3737
      %v3754 = vmul.f32 %v3702, %v3733
      %v3755 = vmul.f32 %v3718, %v3737
      %v3756 = vmul.f32 %v3703, %v3733
      %v3757 = vmul.f32 %v3719, %v3737
      %v3758 = vmul.f32 %v3704, %v3733
      %v3759 = vmul.f32 %v3720, %v3737
      %v3760 = vmul.f32 %v3705, %v3733
      %v3761 = vmul.f32 %v3721, %v3737
      %v3762 = vmul.f32 %v3706, %v3733
      %v3763 = vmul.f32 %v3722, %v3737
      %v3764 = vmul.f32 %v3707, %v3733
      %v3765 = vmul.f32 %v3723, %v3737
      %v3766 = vmul.f32 %v3708, %v3733
      %v3767 = vmul.f32 %v3724, %v3737
      %v3768 = vmul.f32 %v3709, %v3733
      %v3769 = vmul.f32 %v3725, %v3737
      %v3770 = vmul.f32 %v3710, %v3733
      %v3771 = vmul.f32 %v3726, %v3737
      %v3772 = vld [vmem:[#allocation2] sm:$0xff]
      %v3773 = vld [vmem:[#allocation2 + $0x8] sm:$0xff]
      %v3774 = vld [vmem:[#allocation2 + $0x10] sm:$0xff]
      %v3775 = vld [vmem:[#allocation2 + $0x18] sm:$0xff]
      %v3776 = vld [vmem:[#allocation2 + $0x20] sm:$0xff]
      %v3777 = vld [vmem:[#allocation2 + $0x28] sm:$0xff]
      %v3778 = vld [vmem:[#allocation2 + $0x30] sm:$0xff]
      %v3779 = vld [vmem:[#allocation2 + $0x38] sm:$0xff]
      %v3780 = vld [vmem:[#allocation2 + $0x40] sm:$0xff]
      %v3781 = vld [vmem:[#allocation2 + $0x48] sm:$0xff]
      %v3782 = vld [vmem:[#allocation2 + $0x50] sm:$0xff]
      %v3783 = vld [vmem:[#allocation2 + $0x58] sm:$0xff]
      %v3784 = vld [vmem:[#allocation2 + $0x60] sm:$0xff]
      %v3785 = vld [vmem:[#allocation2 + $0x68] sm:$0xff]
      %v3786 = vld [vmem:[#allocation2 + $0x70] sm:$0xff]
      %v3787 = vld [vmem:[#allocation2 + $0x78] sm:$0xff]
      %v3788 = vld [vmem:[#allocation2 + $0x80] sm:$0xff]
      %v3789 = vld [vmem:[#allocation2 + $0x88] sm:$0xff]
      %v3790 = vld [vmem:[#allocation2 + $0x90] sm:$0xff]
      %v3791 = vld [vmem:[#allocation2 + $0x98] sm:$0xff]
      %v3792 = vld [vmem:[#allocation2 + $0xa0] sm:$0xff]
      %v3793 = vld [vmem:[#allocation2 + $0xa8] sm:$0xff]
      %v3794 = vld [vmem:[#allocation2 + $0xb0] sm:$0xff]
      %v3795 = vld [vmem:[#allocation2 + $0xb8] sm:$0xff]
      %v3796 = vld [vmem:[#allocation2 + $0xc0] sm:$0xff]
      %v3797 = vld [vmem:[#allocation2 + $0xc8] sm:$0xff]
      %v3798 = vld [vmem:[#allocation2 + $0xd0] sm:$0xff]
      %v3799 = vld [vmem:[#allocation2 + $0xd8] sm:$0xff]
      %v3800 = vld [vmem:[#allocation2 + $0xe0] sm:$0xff]
      %v3801 = vld [vmem:[#allocation2 + $0xe8] sm:$0xff]
      %v3802 = vld [vmem:[#allocation2 + $0xf0] sm:$0xff]
      %v3803 = vld [vmem:[#allocation2 + $0xf8] sm:$0xff]
      %s3804 = scalar_lea.vmem %s1, 448
      %v3805 = vld [vmem:[%s3804] sm:$0xf]
      %v3806 = vld [vmem:[%s3804 + $0x4] sm:$0xf]
      %v3807 = vld [vmem:[%s3804 + $0x8] sm:$0xf]
      %v3808 = vld [vmem:[%s3804 + $0xc] sm:$0xf]
      %v3809 = vld [vmem:[%s3804 + $0x10] sm:$0xf]
      %v3810 = vld [vmem:[%s3804 + $0x14] sm:$0xf]
      %v3811 = vld [vmem:[%s3804 + $0x18] sm:$0xf]
      %v3812 = vld [vmem:[%s3804 + $0x1c] sm:$0xf]
      %v3813 = vld [vmem:[%s3804 + $0x20] sm:$0xf]
      %v3814 = vld [vmem:[%s3804 + $0x24] sm:$0xf]
      %v3815 = vld [vmem:[%s3804 + $0x28] sm:$0xf]
      %v3816 = vld [vmem:[%s3804 + $0x2c] sm:$0xf]
      %v3817 = vld [vmem:[%s3804 + $0x30] sm:$0xf]
      %v3818 = vld [vmem:[%s3804 + $0x34] sm:$0xf]
      %v3819 = vld [vmem:[%s3804 + $0x38] sm:$0xf]
      %v3820 = vld [vmem:[%s3804 + $0x3c] sm:$0xf]
      %v3821 = vpack.c.bf16 %v3742, %v3740
      %v3822 = vpack.c.bf16 %v3743, %v3741
      %v3823 = vpack.c.bf16 %v3746, %v3744
      %v3824 = vpack.c.bf16 %v3747, %v3745
      %v3825 = vpack.c.bf16 %v3750, %v3748
      %v3826 = vpack.c.bf16 %v3751, %v3749
      %v3827 = vpack.c.bf16 %v3754, %v3752
      %v3828 = vpack.c.bf16 %v3755, %v3753
      %v3829 = vpack.c.bf16 %v3758, %v3756
      %v3830 = vpack.c.bf16 %v3759, %v3757
      %v3831 = vpack.c.bf16 %v3762, %v3760
      %v3832 = vpack.c.bf16 %v3763, %v3761
      %v3833 = vpack.c.bf16 %v3766, %v3764
      %v3834 = vpack.c.bf16 %v3767, %v3765
      %v3835 = vpack.c.bf16 %v3770, %v3768
      %v3836 = vpack.c.bf16 %v3771, %v3769
      %v3853 = vunpack.c.l.b16 %v3805
      %v3854 = vunpack.c.l.b16 %v3806
      %v3855 = vunpack.c.l.b16 %v3807
      %v3856 = vunpack.c.l.b16 %v3808
      %v3857 = vunpack.c.l.b16 %v3809
      %v3858 = vunpack.c.l.b16 %v3810
      %v3859 = vunpack.c.l.b16 %v3811
      %v3860 = vunpack.c.l.b16 %v3812
      %v3861 = vunpack.c.l.b16 %v3813
      %v3862 = vunpack.c.l.b16 %v3814
      %v3863 = vunpack.c.l.b16 %v3815
      %v3864 = vunpack.c.l.b16 %v3816
      %v3865 = vunpack.c.l.b16 %v3817
      %v3866 = vunpack.c.l.b16 %v3818
      %v3867 = vunpack.c.l.b16 %v3819
      %v3868 = vunpack.c.l.b16 %v3820
      %v3869 = vpack.c.b16 %v3854, %v3853
      %v3870 = vpack.c.b16 %v3856, %v3855
      %v3871 = vpack.c.b16 %v3858, %v3857
      %v3872 = vpack.c.b16 %v3860, %v3859
      %v3873 = vpack.c.b16 %v3862, %v3861
      %v3874 = vpack.c.b16 %v3864, %v3863
      %v3875 = vpack.c.b16 %v3866, %v3865
      %v3876 = vpack.c.b16 %v3868, %v3867
      %3885 = vmatprep.subr.bf16.mxu0 %v3836
      %3886 = vmatpush1.bf16.msra.mxu0 %v3835
      %3887 = vmatprep.subr.bf16.mxu0 %v3834
      %3888 = vmatpush1.bf16.msra.mxu0 %v3833
      %3889 = vmatprep.subr.bf16.mxu0 %v3832
      %3890 = vmatpush1.bf16.msra.mxu0 %v3831
      %3891 = vmatprep.subr.bf16.mxu0 %v3830
      %3892 = vmatpush1.bf16.msra.mxu0 %v3829
      %3893 = vmatprep.subr.bf16.mxu0 %v3828
      %3894 = vmatpush1.bf16.msra.mxu0 %v3827
      %3895 = vmatprep.subr.bf16.mxu0 %v3826
      %3896 = vmatpush1.bf16.msra.mxu0 %v3825
      %3897 = vmatprep.subr.bf16.mxu0 %v3824
      %3898 = vmatpush1.bf16.msra.mxu0 %v3823
      %3899 = vmatprep.subr.bf16.mxu0 %v3822
      %3900 = vmatpush1.bf16.msra.mxu0 %v3821
      %3901 = vmatprep.subr.bf16.mxu0 0
      %3902 = vmatpush2.bf16.msra.mxu0 0
      %3903 = vmatprep.subr.bf16.mxu0 0
      %3904 = vmatpush2.bf16.msra.mxu0 0
      %3905 = vmatprep.subr.bf16.mxu0 0
      %3906 = vmatpush2.bf16.msra.mxu0 0
      %3907 = vmatprep.subr.bf16.mxu0 0
      %3908 = vmatpush2.bf16.msra.mxu0 0
      %3909 = vmatprep.subr.bf16.mxu0 0
      %3910 = vmatpush2.bf16.msra.mxu0 0
      %3911 = vmatprep.subr.bf16.mxu0 0
      %3912 = vmatpush2.bf16.msra.mxu0 0
      %3913 = vmatprep.subr.bf16.mxu0 0
      %3914 = vmatpush2.bf16.msra.mxu0 0
      %3915 = vmatprep.subr.bf16.mxu0 0
      %3916 = vmatpush2.bf16.msra.mxu0 0
      %3917 = vmatprep.mubr.bf16.mxu0 0
      %3918 = vmatmul.mubr.bf16.gmra.mxu0 %v3869
      %v3919 = vpop.f32.mrf.mxu0
      %v3920 = vadd.f32 0.0, %v3919
      %v3921 = vpop.f32.mrf.mxu0
      %v3922 = vadd.f32 0.0, %v3921
      %v3923 = vpop.f32.mrf.mxu0
      %v3924 = vadd.f32 0.0, %v3923
      %v3925 = vpop.f32.mrf.mxu0
      %v3926 = vadd.f32 0.0, %v3925
      %3927 = vmatprep.mubr.bf16.mxu0 0
      %3928 = vmatmul.mubr.bf16.gmra.mxu0 %v3870
      %v3929 = vpop.f32.mrf.mxu0
      %v3930 = vadd.f32 0.0, %v3929
      %v3931 = vpop.f32.mrf.mxu0
      %v3932 = vadd.f32 0.0, %v3931
      %v3933 = vpop.f32.mrf.mxu0
      %v3934 = vadd.f32 0.0, %v3933
      %v3935 = vpop.f32.mrf.mxu0
      %v3936 = vadd.f32 0.0, %v3935
      %3937 = vmatprep.mubr.bf16.mxu0 0
      %3938 = vmatmul.mubr.bf16.gmra.mxu0 %v3871
      %v3939 = vpop.f32.mrf.mxu0
      %v3940 = vadd.f32 0.0, %v3939
      %v3941 = vpop.f32.mrf.mxu0
      %v3942 = vadd.f32 0.0, %v3941
      %v3943 = vpop.f32.mrf.mxu0
      %v3944 = vadd.f32 0.0, %v3943
      %v3945 = vpop.f32.mrf.mxu0
      %v3946 = vadd.f32 0.0, %v3945
      %3947 = vmatprep.mubr.bf16.mxu0 0
      %3948 = vmatmul.mubr.bf16.gmra.mxu0 %v3872
      %v3949 = vpop.f32.mrf.mxu0
      %v3950 = vadd.f32 0.0, %v3949
      %v3951 = vpop.f32.mrf.mxu0
      %v3952 = vadd.f32 0.0, %v3951
      %v3953 = vpop.f32.mrf.mxu0
      %v3954 = vadd.f32 0.0, %v3953
      %v3955 = vpop.f32.mrf.mxu0
      %v3956 = vadd.f32 0.0, %v3955
      %3957 = vmatprep.mubr.bf16.mxu0 0
      %3958 = vmatmul.mubr.bf16.gmra.mxu0 %v3873
      %v3959 = vpop.f32.mrf.mxu0
      %v3960 = vadd.f32 0.0, %v3959
      %v3961 = vpop.f32.mrf.mxu0
      %v3962 = vadd.f32 0.0, %v3961
      %v3963 = vpop.f32.mrf.mxu0
      %v3964 = vadd.f32 0.0, %v3963
      %v3965 = vpop.f32.mrf.mxu0
      %v3966 = vadd.f32 0.0, %v3965
      %3967 = vmatprep.mubr.bf16.mxu0 0
      %3968 = vmatmul.mubr.bf16.gmra.mxu0 %v3874
      %v3969 = vpop.f32.mrf.mxu0
      %v3970 = vadd.f32 0.0, %v3969
      %v3971 = vpop.f32.mrf.mxu0
      %v3972 = vadd.f32 0.0, %v3971
      %v3973 = vpop.f32.mrf.mxu0
      %v3974 = vadd.f32 0.0, %v3973
      %v3975 = vpop.f32.mrf.mxu0
      %v3976 = vadd.f32 0.0, %v3975
      %3977 = vmatprep.mubr.bf16.mxu0 0
      %3978 = vmatmul.mubr.bf16.gmra.mxu0 %v3875
      %v3979 = vpop.f32.mrf.mxu0
      %v3980 = vadd.f32 0.0, %v3979
      %v3981 = vpop.f32.mrf.mxu0
      %v3982 = vadd.f32 0.0, %v3981
      %v3983 = vpop.f32.mrf.mxu0
      %v3984 = vadd.f32 0.0, %v3983
      %v3985 = vpop.f32.mrf.mxu0
      %v3986 = vadd.f32 0.0, %v3985
      %3987 = vmatprep.mubr.bf16.mxu0 0
      %3988 = vmatmul.mubr.bf16.gmra.mxu0 %v3876
      %v3989 = vpop.f32.mrf.mxu0
      %v3990 = vadd.f32 0.0, %v3989
      %v3991 = vpop.f32.mrf.mxu0
      %v3992 = vadd.f32 0.0, %v3991
      %v3993 = vpop.f32.mrf.mxu0
      %v3994 = vadd.f32 0.0, %v3993
      %v3995 = vpop.f32.mrf.mxu0
      %v3996 = vadd.f32 0.0, %v3995
      %3997 = vdwg.mxu0
      %v3998 = vadd.f32 %v3772, %v3920
      %v3999 = vadd.f32 %v3773, %v3922
      %v4000 = vadd.f32 %v3774, %v3924
      %v4001 = vadd.f32 %v3775, %v3926
      %v4002 = vadd.f32 %v3776, %v3930
      %v4003 = vadd.f32 %v3777, %v3932
      %v4004 = vadd.f32 %v3778, %v3934
      %v4005 = vadd.f32 %v3779, %v3936
      %v4006 = vadd.f32 %v3780, %v3940
      %v4007 = vadd.f32 %v3781, %v3942
      %v4008 = vadd.f32 %v3782, %v3944
      %v4009 = vadd.f32 %v3783, %v3946
      %v4010 = vadd.f32 %v3784, %v3950
      %v4011 = vadd.f32 %v3785, %v3952
      %v4012 = vadd.f32 %v3786, %v3954
      %v4013 = vadd.f32 %v3787, %v3956
      %v4014 = vadd.f32 %v3788, %v3960
      %v4015 = vadd.f32 %v3789, %v3962
      %v4016 = vadd.f32 %v3790, %v3964
      %v4017 = vadd.f32 %v3791, %v3966
      %v4018 = vadd.f32 %v3792, %v3970
      %v4019 = vadd.f32 %v3793, %v3972
      %v4020 = vadd.f32 %v3794, %v3974
      %v4021 = vadd.f32 %v3795, %v3976
      %v4022 = vadd.f32 %v3796, %v3980
      %v4023 = vadd.f32 %v3797, %v3982
      %v4024 = vadd.f32 %v3798, %v3984
      %v4025 = vadd.f32 %v3799, %v3986
      %v4026 = vadd.f32 %v3800, %v3990
      %v4027 = vadd.f32 %v3801, %v3992
      %v4028 = vadd.f32 %v3802, %v3994
      %v4029 = vadd.f32 %v3803, %v3996
      %4030 = vst [vmem:[#allocation2] sm:$0xff] %v3998
      %4031 = vst [vmem:[#allocation2 + $0x8] sm:$0xff] %v3999
      %4032 = vst [vmem:[#allocation2 + $0x10] sm:$0xff] %v4000
      %4033 = vst [vmem:[#allocation2 + $0x18] sm:$0xff] %v4001
      %4034 = vst [vmem:[#allocation2 + $0x20] sm:$0xff] %v4002
      %4035 = vst [vmem:[#allocation2 + $0x28] sm:$0xff] %v4003
      %4036 = vst [vmem:[#allocation2 + $0x30] sm:$0xff] %v4004
      %4037 = vst [vmem:[#allocation2 + $0x38] sm:$0xff] %v4005
      %4038 = vst [vmem:[#allocation2 + $0x40] sm:$0xff] %v4006
      %4039 = vst [vmem:[#allocation2 + $0x48] sm:$0xff] %v4007
      %4040 = vst [vmem:[#allocation2 + $0x50] sm:$0xff] %v4008
      %4041 = vst [vmem:[#allocation2 + $0x58] sm:$0xff] %v4009
      %4042 = vst [vmem:[#allocation2 + $0x60] sm:$0xff] %v4010
      %4043 = vst [vmem:[#allocation2 + $0x68] sm:$0xff] %v4011
      %4044 = vst [vmem:[#allocation2 + $0x70] sm:$0xff] %v4012
      %4045 = vst [vmem:[#allocation2 + $0x78] sm:$0xff] %v4013
      %4046 = vst [vmem:[#allocation2 + $0x80] sm:$0xff] %v4014
      %4047 = vst [vmem:[#allocation2 + $0x88] sm:$0xff] %v4015
      %4048 = vst [vmem:[#allocation2 + $0x90] sm:$0xff] %v4016
      %4049 = vst [vmem:[#allocation2 + $0x98] sm:$0xff] %v4017
      %4050 = vst [vmem:[#allocation2 + $0xa0] sm:$0xff] %v4018
      %4051 = vst [vmem:[#allocation2 + $0xa8] sm:$0xff] %v4019
      %4052 = vst [vmem:[#allocation2 + $0xb0] sm:$0xff] %v4020
      %4053 = vst [vmem:[#allocation2 + $0xb8] sm:$0xff] %v4021
      %4054 = vst [vmem:[#allocation2 + $0xc0] sm:$0xff] %v4022
      %4055 = vst [vmem:[#allocation2 + $0xc8] sm:$0xff] %v4023
      %4056 = vst [vmem:[#allocation2 + $0xd0] sm:$0xff] %v4024
      %4057 = vst [vmem:[#allocation2 + $0xd8] sm:$0xff] %v4025
      %4058 = vst [vmem:[#allocation2 + $0xe0] sm:$0xff] %v4026
      %4059 = vst [vmem:[#allocation2 + $0xe8] sm:$0xff] %v4027
      %4060 = vst [vmem:[#allocation2 + $0xf0] sm:$0xff] %v4028
      %4061 = vst [vmem:[#allocation2 + $0xf8] sm:$0xff] %v4029
      %v4062 = vld [vmem:[%s288] sm:$0xff]
      %v4063 = vld [vmem:[%s288 + $0x8] sm:$0xff]
      %v4064 = vld [vmem:[%s288 + $0x10] sm:$0xff]
      %v4065 = vld [vmem:[%s288 + $0x18] sm:$0xff]
      %v4066 = vld [vmem:[%s288 + $0x20] sm:$0xff]
      %v4067 = vld [vmem:[%s288 + $0x28] sm:$0xff]
      %v4068 = vld [vmem:[%s288 + $0x30] sm:$0xff]
      %v4069 = vld [vmem:[%s288 + $0x38] sm:$0xff]
      %v4070 = vld [vmem:[%s288 + $0x40] sm:$0xff]
      %v4071 = vld [vmem:[%s288 + $0x48] sm:$0xff]
      %v4072 = vld [vmem:[%s288 + $0x50] sm:$0xff]
      %v4073 = vld [vmem:[%s288 + $0x58] sm:$0xff]
      %v4074 = vld [vmem:[%s288 + $0x60] sm:$0xff]
      %v4075 = vld [vmem:[%s288 + $0x68] sm:$0xff]
      %v4076 = vld [vmem:[%s288 + $0x70] sm:$0xff]
      %v4077 = vld [vmem:[%s288 + $0x78] sm:$0xff]
      %v4078 = vunpack.c.l.bf16 %v4062
      %v4079 = vunpack.c.h.bf16 %v4062
      %v4080 = vunpack.c.l.bf16 %v4063
      %v4081 = vunpack.c.h.bf16 %v4063
      %v4082 = vunpack.c.l.bf16 %v4064
      %v4083 = vunpack.c.h.bf16 %v4064
      %v4084 = vunpack.c.l.bf16 %v4065
      %v4085 = vunpack.c.h.bf16 %v4065
      %v4086 = vunpack.c.l.bf16 %v4066
      %v4087 = vunpack.c.h.bf16 %v4066
      %v4088 = vunpack.c.l.bf16 %v4067
      %v4089 = vunpack.c.h.bf16 %v4067
      %v4090 = vunpack.c.l.bf16 %v4068
      %v4091 = vunpack.c.h.bf16 %v4068
      %v4092 = vunpack.c.l.bf16 %v4069
      %v4093 = vunpack.c.h.bf16 %v4069
      %v4094 = vunpack.c.l.bf16 %v4070
      %v4095 = vunpack.c.h.bf16 %v4070
      %v4096 = vunpack.c.l.bf16 %v4071
      %v4097 = vunpack.c.h.bf16 %v4071
      %v4098 = vunpack.c.l.bf16 %v4072
      %v4099 = vunpack.c.h.bf16 %v4072
      %v4100 = vunpack.c.l.bf16 %v4073
      %v4101 = vunpack.c.h.bf16 %v4073
      %v4102 = vunpack.c.l.bf16 %v4074
      %v4103 = vunpack.c.h.bf16 %v4074
      %v4104 = vunpack.c.l.bf16 %v4075
      %v4105 = vunpack.c.h.bf16 %v4075
      %v4106 = vunpack.c.l.bf16 %v4076
      %v4107 = vunpack.c.h.bf16 %v4076
      %v4108 = vunpack.c.l.bf16 %v4077
      %v4109 = vunpack.c.h.bf16 %v4077
      %4110 = vrot.lane.b32.xlu0 %v4078, 111
      %v4111 = vpop.permute.xlu0 %4110
      %4112 = vrot.lane.b32.xlu0 %v4080, 111
      %v4113 = vpop.permute.xlu0 %4112
      %4114 = vrot.lane.b32.xlu0 %v4082, 111
      %v4115 = vpop.permute.xlu0 %4114
      %4116 = vrot.lane.b32.xlu0 %v4084, 111
      %v4117 = vpop.permute.xlu0 %4116
      %4118 = vrot.lane.b32.xlu0 %v4086, 111
      %v4119 = vpop.permute.xlu0 %4118
      %4120 = vrot.lane.b32.xlu0 %v4088, 111
      %v4121 = vpop.permute.xlu0 %4120
      %4122 = vrot.lane.b32.xlu0 %v4090, 111
      %v4123 = vpop.permute.xlu0 %4122
      %4124 = vrot.lane.b32.xlu0 %v4092, 111
      %v4125 = vpop.permute.xlu0 %4124
      %4126 = vrot.lane.b32.xlu0 %v4094, 111
      %v4127 = vpop.permute.xlu0 %4126
      %4128 = vrot.lane.b32.xlu0 %v4096, 111
      %v4129 = vpop.permute.xlu0 %4128
      %4130 = vrot.lane.b32.xlu0 %v4098, 111
      %v4131 = vpop.permute.xlu0 %4130
      %4132 = vrot.lane.b32.xlu0 %v4100, 111
      %v4133 = vpop.permute.xlu0 %4132
      %4134 = vrot.lane.b32.xlu0 %v4102, 111
      %v4135 = vpop.permute.xlu0 %4134
      %4136 = vrot.lane.b32.xlu0 %v4104, 111
      %v4137 = vpop.permute.xlu0 %4136
      %4138 = vrot.lane.b32.xlu0 %v4106, 111
      %v4139 = vpop.permute.xlu0 %4138
      %4140 = vrot.lane.b32.xlu0 %v4108, 111
      %v4141 = vpop.permute.xlu0 %4140
      %4142 = vrot.lane.b32.xlu0 %v4079, 111
      %v4143 = vpop.permute.xlu0 %4142
      %4144 = vrot.lane.b32.xlu0 %v4081, 111
      %v4145 = vpop.permute.xlu0 %4144
      %4146 = vrot.lane.b32.xlu0 %v4083, 111
      %v4147 = vpop.permute.xlu0 %4146
      %4148 = vrot.lane.b32.xlu0 %v4085, 111
      %v4149 = vpop.permute.xlu0 %4148
      %4150 = vrot.lane.b32.xlu0 %v4087, 111
      %v4151 = vpop.permute.xlu0 %4150
      %4152 = vrot.lane.b32.xlu0 %v4089, 111
      %v4153 = vpop.permute.xlu0 %4152
      %4154 = vrot.lane.b32.xlu0 %v4091, 111
      %v4155 = vpop.permute.xlu0 %4154
      %4156 = vrot.lane.b32.xlu0 %v4093, 111
      %v4157 = vpop.permute.xlu0 %4156
      %4158 = vrot.lane.b32.xlu0 %v4095, 111
      %v4159 = vpop.permute.xlu0 %4158
      %4160 = vrot.lane.b32.xlu0 %v4097, 111
      %v4161 = vpop.permute.xlu0 %4160
      %4162 = vrot.lane.b32.xlu0 %v4099, 111
      %v4163 = vpop.permute.xlu0 %4162
      %4164 = vrot.lane.b32.xlu0 %v4101, 111
      %v4165 = vpop.permute.xlu0 %4164
      %4166 = vrot.lane.b32.xlu0 %v4103, 111
      %v4167 = vpop.permute.xlu0 %4166
      %4168 = vrot.lane.b32.xlu0 %v4105, 111
      %v4169 = vpop.permute.xlu0 %4168
      %4170 = vrot.lane.b32.xlu0 %v4107, 111
      %v4171 = vpop.permute.xlu0 %4170
      %4172 = vrot.lane.b32.xlu0 %v4109, 111
      %v4173 = vpop.permute.xlu0 %4172
      %vm4174 = vcmp.lt.s32.totalorder %v445, 111
      %v4175 = vsel %vm4174, %v4111, %v4143
      %v4176 = vsel %vm4174, %v4113, %v4145
      %v4177 = vsel %vm4174, %v4115, %v4147
      %v4178 = vsel %vm4174, %v4117, %v4149
      %v4179 = vsel %vm4174, %v4119, %v4151
      %v4180 = vsel %vm4174, %v4121, %v4153
      %v4181 = vsel %vm4174, %v4123, %v4155
      %v4182 = vsel %vm4174, %v4125, %v4157
      %v4183 = vsel %vm4174, %v4127, %v4159
      %v4184 = vsel %vm4174, %v4129, %v4161
      %v4185 = vsel %vm4174, %v4131, %v4163
      %v4186 = vsel %vm4174, %v4133, %v4165
      %v4187 = vsel %vm4174, %v4135, %v4167
      %v4188 = vsel %vm4174, %v4137, %v4169
      %v4189 = vsel %vm4174, %v4139, %v4171
      %v4190 = vsel %vm4174, %v4141, %v4173
      %v4191 = vsel %vm4174, %v4143, %v4111
      %v4192 = vsel %vm4174, %v4145, %v4113
      %v4193 = vsel %vm4174, %v4147, %v4115
      %v4194 = vsel %vm4174, %v4149, %v4117
      %v4195 = vsel %vm4174, %v4151, %v4119
      %v4196 = vsel %vm4174, %v4153, %v4121
      %v4197 = vsel %vm4174, %v4155, %v4123
      %v4198 = vsel %vm4174, %v4157, %v4125
      %v4199 = vsel %vm4174, %v4159, %v4127
      %v4200 = vsel %vm4174, %v4161, %v4129
      %v4201 = vsel %vm4174, %v4163, %v4131
      %v4202 = vsel %vm4174, %v4165, %v4133
      %v4203 = vsel %vm4174, %v4167, %v4135
      %v4204 = vsel %vm4174, %v4169, %v4137
      %v4205 = vsel %vm4174, %v4171, %v4139
      %v4206 = vsel %vm4174, %v4173, %v4141
      %s4207 = scalar_lea.vmem %s5, 16
      %v4208 = vld [vmem:[%s4207] sm:$0x3]
      %v4210 = vlaneseq
      %v4211 = vshrl.u32 %v4210, 7
      %v4212 = vsub.s32 0, %v4211
      %v4213 = vrot.slane %v4208, %v4212
      %v4214 = vlaneseq
      %v4215 = vshrl.u32 %v4214, 7
      %v4216 = vsub.s32 1, %v4215
      %v4217 = vrot.slane %v4208, %v4216
      %v4220 = vmul.f32 %v4175, %v4213
      %v4221 = vmul.f32 %v4191, %v4217
      %v4222 = vmul.f32 %v4176, %v4213
      %v4223 = vmul.f32 %v4192, %v4217
      %v4224 = vmul.f32 %v4177, %v4213
      %v4225 = vmul.f32 %v4193, %v4217
      %v4226 = vmul.f32 %v4178, %v4213
      %v4227 = vmul.f32 %v4194, %v4217
      %v4228 = vmul.f32 %v4179, %v4213
      %v4229 = vmul.f32 %v4195, %v4217
      %v4230 = vmul.f32 %v4180, %v4213
      %v4231 = vmul.f32 %v4196, %v4217
      %v4232 = vmul.f32 %v4181, %v4213
      %v4233 = vmul.f32 %v4197, %v4217
      %v4234 = vmul.f32 %v4182, %v4213
      %v4235 = vmul.f32 %v4198, %v4217
      %v4236 = vmul.f32 %v4183, %v4213
      %v4237 = vmul.f32 %v4199, %v4217
      %v4238 = vmul.f32 %v4184, %v4213
      %v4239 = vmul.f32 %v4200, %v4217
      %v4240 = vmul.f32 %v4185, %v4213
      %v4241 = vmul.f32 %v4201, %v4217
      %v4242 = vmul.f32 %v4186, %v4213
      %v4243 = vmul.f32 %v4202, %v4217
      %v4244 = vmul.f32 %v4187, %v4213
      %v4245 = vmul.f32 %v4203, %v4217
      %v4246 = vmul.f32 %v4188, %v4213
      %v4247 = vmul.f32 %v4204, %v4217
      %v4248 = vmul.f32 %v4189, %v4213
      %v4249 = vmul.f32 %v4205, %v4217
      %v4250 = vmul.f32 %v4190, %v4213
      %v4251 = vmul.f32 %v4206, %v4217
      %v4252 = vld [vmem:[#allocation2] sm:$0xff]
      %v4253 = vld [vmem:[#allocation2 + $0x8] sm:$0xff]
      %v4254 = vld [vmem:[#allocation2 + $0x10] sm:$0xff]
      %v4255 = vld [vmem:[#allocation2 + $0x18] sm:$0xff]
      %v4256 = vld [vmem:[#allocation2 + $0x20] sm:$0xff]
      %v4257 = vld [vmem:[#allocation2 + $0x28] sm:$0xff]
      %v4258 = vld [vmem:[#allocation2 + $0x30] sm:$0xff]
      %v4259 = vld [vmem:[#allocation2 + $0x38] sm:$0xff]
      %v4260 = vld [vmem:[#allocation2 + $0x40] sm:$0xff]
      %v4261 = vld [vmem:[#allocation2 + $0x48] sm:$0xff]
      %v4262 = vld [vmem:[#allocation2 + $0x50] sm:$0xff]
      %v4263 = vld [vmem:[#allocation2 + $0x58] sm:$0xff]
      %v4264 = vld [vmem:[#allocation2 + $0x60] sm:$0xff]
      %v4265 = vld [vmem:[#allocation2 + $0x68] sm:$0xff]
      %v4266 = vld [vmem:[#allocation2 + $0x70] sm:$0xff]
      %v4267 = vld [vmem:[#allocation2 + $0x78] sm:$0xff]
      %v4268 = vld [vmem:[#allocation2 + $0x80] sm:$0xff]
      %v4269 = vld [vmem:[#allocation2 + $0x88] sm:$0xff]
      %v4270 = vld [vmem:[#allocation2 + $0x90] sm:$0xff]
      %v4271 = vld [vmem:[#allocation2 + $0x98] sm:$0xff]
      %v4272 = vld [vmem:[#allocation2 + $0xa0] sm:$0xff]
      %v4273 = vld [vmem:[#allocation2 + $0xa8] sm:$0xff]
      %v4274 = vld [vmem:[#allocation2 + $0xb0] sm:$0xff]
      %v4275 = vld [vmem:[#allocation2 + $0xb8] sm:$0xff]
      %v4276 = vld [vmem:[#allocation2 + $0xc0] sm:$0xff]
      %v4277 = vld [vmem:[#allocation2 + $0xc8] sm:$0xff]
      %v4278 = vld [vmem:[#allocation2 + $0xd0] sm:$0xff]
      %v4279 = vld [vmem:[#allocation2 + $0xd8] sm:$0xff]
      %v4280 = vld [vmem:[#allocation2 + $0xe0] sm:$0xff]
      %v4281 = vld [vmem:[#allocation2 + $0xe8] sm:$0xff]
      %v4282 = vld [vmem:[#allocation2 + $0xf0] sm:$0xff]
      %v4283 = vld [vmem:[#allocation2 + $0xf8] sm:$0xff]
      %s4284 = scalar_lea.vmem %s1, 512
      %v4285 = vld [vmem:[%s4284] sm:$0xf]
      %v4286 = vld [vmem:[%s4284 + $0x4] sm:$0xf]
      %v4287 = vld [vmem:[%s4284 + $0x8] sm:$0xf]
      %v4288 = vld [vmem:[%s4284 + $0xc] sm:$0xf]
      %v4289 = vld [vmem:[%s4284 + $0x10] sm:$0xf]
      %v4290 = vld [vmem:[%s4284 + $0x14] sm:$0xf]
      %v4291 = vld [vmem:[%s4284 + $0x18] sm:$0xf]
      %v4292 = vld [vmem:[%s4284 + $0x1c] sm:$0xf]
      %v4293 = vld [vmem:[%s4284 + $0x20] sm:$0xf]
      %v4294 = vld [vmem:[%s4284 + $0x24] sm:$0xf]
      %v4295 = vld [vmem:[%s4284 + $0x28] sm:$0xf]
      %v4296 = vld [vmem:[%s4284 + $0x2c] sm:$0xf]
      %v4297 = vld [vmem:[%s4284 + $0x30] sm:$0xf]
      %v4298 = vld [vmem:[%s4284 + $0x34] sm:$0xf]
      %v4299 = vld [vmem:[%s4284 + $0x38] sm:$0xf]
      %v4300 = vld [vmem:[%s4284 + $0x3c] sm:$0xf]
      %v4301 = vpack.c.bf16 %v4222, %v4220
      %v4302 = vpack.c.bf16 %v4223, %v4221
      %v4303 = vpack.c.bf16 %v4226, %v4224
      %v4304 = vpack.c.bf16 %v4227, %v4225
      %v4305 = vpack.c.bf16 %v4230, %v4228
      %v4306 = vpack.c.bf16 %v4231, %v4229
      %v4307 = vpack.c.bf16 %v4234, %v4232
      %v4308 = vpack.c.bf16 %v4235, %v4233
      %v4309 = vpack.c.bf16 %v4238, %v4236
      %v4310 = vpack.c.bf16 %v4239, %v4237
      %v4311 = vpack.c.bf16 %v4242, %v4240
      %v4312 = vpack.c.bf16 %v4243, %v4241
      %v4313 = vpack.c.bf16 %v4246, %v4244
      %v4314 = vpack.c.bf16 %v4247, %v4245
      %v4315 = vpack.c.bf16 %v4250, %v4248
      %v4316 = vpack.c.bf16 %v4251, %v4249
      %v4333 = vunpack.c.l.b16 %v4285
      %v4334 = vunpack.c.l.b16 %v4286
      %v4335 = vunpack.c.l.b16 %v4287
      %v4336 = vunpack.c.l.b16 %v4288
      %v4337 = vunpack.c.l.b16 %v4289
      %v4338 = vunpack.c.l.b16 %v4290
      %v4339 = vunpack.c.l.b16 %v4291
      %v4340 = vunpack.c.l.b16 %v4292
      %v4341 = vunpack.c.l.b16 %v4293
      %v4342 = vunpack.c.l.b16 %v4294
      %v4343 = vunpack.c.l.b16 %v4295
      %v4344 = vunpack.c.l.b16 %v4296
      %v4345 = vunpack.c.l.b16 %v4297
      %v4346 = vunpack.c.l.b16 %v4298
      %v4347 = vunpack.c.l.b16 %v4299
      %v4348 = vunpack.c.l.b16 %v4300
      %v4349 = vpack.c.b16 %v4334, %v4333
      %v4350 = vpack.c.b16 %v4336, %v4335
      %v4351 = vpack.c.b16 %v4338, %v4337
      %v4352 = vpack.c.b16 %v4340, %v4339
      %v4353 = vpack.c.b16 %v4342, %v4341
      %v4354 = vpack.c.b16 %v4344, %v4343
      %v4355 = vpack.c.b16 %v4346, %v4345
      %v4356 = vpack.c.b16 %v4348, %v4347
      %4365 = vmatprep.subr.bf16.mxu0 %v4316
      %4366 = vmatpush1.bf16.msra.mxu0 %v4315
      %4367 = vmatprep.subr.bf16.mxu0 %v4314
      %4368 = vmatpush1.bf16.msra.mxu0 %v4313
      %4369 = vmatprep.subr.bf16.mxu0 %v4312
      %4370 = vmatpush1.bf16.msra.mxu0 %v4311
      %4371 = vmatprep.subr.bf16.mxu0 %v4310
      %4372 = vmatpush1.bf16.msra.mxu0 %v4309
      %4373 = vmatprep.subr.bf16.mxu0 %v4308
      %4374 = vmatpush1.bf16.msra.mxu0 %v4307
      %4375 = vmatprep.subr.bf16.mxu0 %v4306
      %4376 = vmatpush1.bf16.msra.mxu0 %v4305
      %4377 = vmatprep.subr.bf16.mxu0 %v4304
      %4378 = vmatpush1.bf16.msra.mxu0 %v4303
      %4379 = vmatprep.subr.bf16.mxu0 %v4302
      %4380 = vmatpush1.bf16.msra.mxu0 %v4301
      %4381 = vmatprep.subr.bf16.mxu0 0
      %4382 = vmatpush2.bf16.msra.mxu0 0
      %4383 = vmatprep.subr.bf16.mxu0 0
      %4384 = vmatpush2.bf16.msra.mxu0 0
      %4385 = vmatprep.subr.bf16.mxu0 0
      %4386 = vmatpush2.bf16.msra.mxu0 0
      %4387 = vmatprep.subr.bf16.mxu0 0
      %4388 = vmatpush2.bf16.msra.mxu0 0
      %4389 = vmatprep.subr.bf16.mxu0 0
      %4390 = vmatpush2.bf16.msra.mxu0 0
      %4391 = vmatprep.subr.bf16.mxu0 0
      %4392 = vmatpush2.bf16.msra.mxu0 0
      %4393 = vmatprep.subr.bf16.mxu0 0
      %4394 = vmatpush2.bf16.msra.mxu0 0
      %4395 = vmatprep.subr.bf16.mxu0 0
      %4396 = vmatpush2.bf16.msra.mxu0 0
      %4397 = vmatprep.mubr.bf16.mxu0 0
      %4398 = vmatmul.mubr.bf16.gmra.mxu0 %v4349
      %v4399 = vpop.f32.mrf.mxu0
      %v4400 = vadd.f32 0.0, %v4399
      %v4401 = vpop.f32.mrf.mxu0
      %v4402 = vadd.f32 0.0, %v4401
      %v4403 = vpop.f32.mrf.mxu0
      %v4404 = vadd.f32 0.0, %v4403
      %v4405 = vpop.f32.mrf.mxu0
      %v4406 = vadd.f32 0.0, %v4405
      %4407 = vmatprep.mubr.bf16.mxu0 0
      %4408 = vmatmul.mubr.bf16.gmra.mxu0 %v4350
      %v4409 = vpop.f32.mrf.mxu0
      %v4410 = vadd.f32 0.0, %v4409
      %v4411 = vpop.f32.mrf.mxu0
      %v4412 = vadd.f32 0.0, %v4411
      %v4413 = vpop.f32.mrf.mxu0
      %v4414 = vadd.f32 0.0, %v4413
      %v4415 = vpop.f32.mrf.mxu0
      %v4416 = vadd.f32 0.0, %v4415
      %4417 = vmatprep.mubr.bf16.mxu0 0
      %4418 = vmatmul.mubr.bf16.gmra.mxu0 %v4351
      %v4419 = vpop.f32.mrf.mxu0
      %v4420 = vadd.f32 0.0, %v4419
      %v4421 = vpop.f32.mrf.mxu0
      %v4422 = vadd.f32 0.0, %v4421
      %v4423 = vpop.f32.mrf.mxu0
      %v4424 = vadd.f32 0.0, %v4423
      %v4425 = vpop.f32.mrf.mxu0
      %v4426 = vadd.f32 0.0, %v4425
      %4427 = vmatprep.mubr.bf16.mxu0 0
      %4428 = vmatmul.mubr.bf16.gmra.mxu0 %v4352
      %v4429 = vpop.f32.mrf.mxu0
      %v4430 = vadd.f32 0.0, %v4429
      %v4431 = vpop.f32.mrf.mxu0
      %v4432 = vadd.f32 0.0, %v4431
      %v4433 = vpop.f32.mrf.mxu0
      %v4434 = vadd.f32 0.0, %v4433
      %v4435 = vpop.f32.mrf.mxu0
      %v4436 = vadd.f32 0.0, %v4435
      %4437 = vmatprep.mubr.bf16.mxu0 0
      %4438 = vmatmul.mubr.bf16.gmra.mxu0 %v4353
      %v4439 = vpop.f32.mrf.mxu0
      %v4440 = vadd.f32 0.0, %v4439
      %v4441 = vpop.f32.mrf.mxu0
      %v4442 = vadd.f32 0.0, %v4441
      %v4443 = vpop.f32.mrf.mxu0
      %v4444 = vadd.f32 0.0, %v4443
      %v4445 = vpop.f32.mrf.mxu0
      %v4446 = vadd.f32 0.0, %v4445
      %4447 = vmatprep.mubr.bf16.mxu0 0
      %4448 = vmatmul.mubr.bf16.gmra.mxu0 %v4354
      %v4449 = vpop.f32.mrf.mxu0
      %v4450 = vadd.f32 0.0, %v4449
      %v4451 = vpop.f32.mrf.mxu0
      %v4452 = vadd.f32 0.0, %v4451
      %v4453 = vpop.f32.mrf.mxu0
      %v4454 = vadd.f32 0.0, %v4453
      %v4455 = vpop.f32.mrf.mxu0
      %v4456 = vadd.f32 0.0, %v4455
      %4457 = vmatprep.mubr.bf16.mxu0 0
      %4458 = vmatmul.mubr.bf16.gmra.mxu0 %v4355
      %v4459 = vpop.f32.mrf.mxu0
      %v4460 = vadd.f32 0.0, %v4459
      %v4461 = vpop.f32.mrf.mxu0
      %v4462 = vadd.f32 0.0, %v4461
      %v4463 = vpop.f32.mrf.mxu0
      %v4464 = vadd.f32 0.0, %v4463
      %v4465 = vpop.f32.mrf.mxu0
      %v4466 = vadd.f32 0.0, %v4465
      %4467 = vmatprep.mubr.bf16.mxu0 0
      %4468 = vmatmul.mubr.bf16.gmra.mxu0 %v4356
      %v4469 = vpop.f32.mrf.mxu0
      %v4470 = vadd.f32 0.0, %v4469
      %v4471 = vpop.f32.mrf.mxu0
      %v4472 = vadd.f32 0.0, %v4471
      %v4473 = vpop.f32.mrf.mxu0
      %v4474 = vadd.f32 0.0, %v4473
      %v4475 = vpop.f32.mrf.mxu0
      %v4476 = vadd.f32 0.0, %v4475
      %4477 = vdwg.mxu0
      %v4478 = vadd.f32 %v4252, %v4400
      %v4479 = vadd.f32 %v4253, %v4402
      %v4480 = vadd.f32 %v4254, %v4404
      %v4481 = vadd.f32 %v4255, %v4406
      %v4482 = vadd.f32 %v4256, %v4410
      %v4483 = vadd.f32 %v4257, %v4412
      %v4484 = vadd.f32 %v4258, %v4414
      %v4485 = vadd.f32 %v4259, %v4416
      %v4486 = vadd.f32 %v4260, %v4420
      %v4487 = vadd.f32 %v4261, %v4422
      %v4488 = vadd.f32 %v4262, %v4424
      %v4489 = vadd.f32 %v4263, %v4426
      %v4490 = vadd.f32 %v4264, %v4430
      %v4491 = vadd.f32 %v4265, %v4432
      %v4492 = vadd.f32 %v4266, %v4434
      %v4493 = vadd.f32 %v4267, %v4436
      %v4494 = vadd.f32 %v4268, %v4440
      %v4495 = vadd.f32 %v4269, %v4442
      %v4496 = vadd.f32 %v4270, %v4444
      %v4497 = vadd.f32 %v4271, %v4446
      %v4498 = vadd.f32 %v4272, %v4450
      %v4499 = vadd.f32 %v4273, %v4452
      %v4500 = vadd.f32 %v4274, %v4454
      %v4501 = vadd.f32 %v4275, %v4456
      %v4502 = vadd.f32 %v4276, %v4460
      %v4503 = vadd.f32 %v4277, %v4462
      %v4504 = vadd.f32 %v4278, %v4464
      %v4505 = vadd.f32 %v4279, %v4466
      %v4506 = vadd.f32 %v4280, %v4470
      %v4507 = vadd.f32 %v4281, %v4472
      %v4508 = vadd.f32 %v4282, %v4474
      %v4509 = vadd.f32 %v4283, %v4476
      %4510 = vst [vmem:[#allocation2] sm:$0xff] %v4478
      %4511 = vst [vmem:[#allocation2 + $0x8] sm:$0xff] %v4479
      %4512 = vst [vmem:[#allocation2 + $0x10] sm:$0xff] %v4480
      %4513 = vst [vmem:[#allocation2 + $0x18] sm:$0xff] %v4481
      %4514 = vst [vmem:[#allocation2 + $0x20] sm:$0xff] %v4482
      %4515 = vst [vmem:[#allocation2 + $0x28] sm:$0xff] %v4483
      %4516 = vst [vmem:[#allocation2 + $0x30] sm:$0xff] %v4484
      %4517 = vst [vmem:[#allocation2 + $0x38] sm:$0xff] %v4485
      %4518 = vst [vmem:[#allocation2 + $0x40] sm:$0xff] %v4486
      %4519 = vst [vmem:[#allocation2 + $0x48] sm:$0xff] %v4487
      %4520 = vst [vmem:[#allocation2 + $0x50] sm:$0xff] %v4488
      %4521 = vst [vmem:[#allocation2 + $0x58] sm:$0xff] %v4489
      %4522 = vst [vmem:[#allocation2 + $0x60] sm:$0xff] %v4490
      %4523 = vst [vmem:[#allocation2 + $0x68] sm:$0xff] %v4491
      %4524 = vst [vmem:[#allocation2 + $0x70] sm:$0xff] %v4492
      %4525 = vst [vmem:[#allocation2 + $0x78] sm:$0xff] %v4493
      %4526 = vst [vmem:[#allocation2 + $0x80] sm:$0xff] %v4494
      %4527 = vst [vmem:[#allocation2 + $0x88] sm:$0xff] %v4495
      %4528 = vst [vmem:[#allocation2 + $0x90] sm:$0xff] %v4496
      %4529 = vst [vmem:[#allocation2 + $0x98] sm:$0xff] %v4497
      %4530 = vst [vmem:[#allocation2 + $0xa0] sm:$0xff] %v4498
      %4531 = vst [vmem:[#allocation2 + $0xa8] sm:$0xff] %v4499
      %4532 = vst [vmem:[#allocation2 + $0xb0] sm:$0xff] %v4500
      %4533 = vst [vmem:[#allocation2 + $0xb8] sm:$0xff] %v4501
      %4534 = vst [vmem:[#allocation2 + $0xc0] sm:$0xff] %v4502
      %4535 = vst [vmem:[#allocation2 + $0xc8] sm:$0xff] %v4503
      %4536 = vst [vmem:[#allocation2 + $0xd0] sm:$0xff] %v4504
      %4537 = vst [vmem:[#allocation2 + $0xd8] sm:$0xff] %v4505
      %4538 = vst [vmem:[#allocation2 + $0xe0] sm:$0xff] %v4506
      %4539 = vst [vmem:[#allocation2 + $0xe8] sm:$0xff] %v4507
      %4540 = vst [vmem:[#allocation2 + $0xf0] sm:$0xff] %v4508
      %4541 = vst [vmem:[#allocation2 + $0xf8] sm:$0xff] %v4509
      %v4542 = vld [vmem:[#allocation2] sm:$0xff]
      %v4543 = vld [vmem:[#allocation2 + $0x8] sm:$0xff]
      %v4544 = vld [vmem:[#allocation2 + $0x10] sm:$0xff]
      %v4545 = vld [vmem:[#allocation2 + $0x18] sm:$0xff]
      %v4546 = vld [vmem:[#allocation2 + $0x20] sm:$0xff]
      %v4547 = vld [vmem:[#allocation2 + $0x28] sm:$0xff]
      %v4548 = vld [vmem:[#allocation2 + $0x30] sm:$0xff]
      %v4549 = vld [vmem:[#allocation2 + $0x38] sm:$0xff]
      %v4550 = vld [vmem:[#allocation2 + $0x40] sm:$0xff]
      %v4551 = vld [vmem:[#allocation2 + $0x48] sm:$0xff]
      %v4552 = vld [vmem:[#allocation2 + $0x50] sm:$0xff]
      %v4553 = vld [vmem:[#allocation2 + $0x58] sm:$0xff]
      %v4554 = vld [vmem:[#allocation2 + $0x60] sm:$0xff]
      %v4555 = vld [vmem:[#allocation2 + $0x68] sm:$0xff]
      %v4556 = vld [vmem:[#allocation2 + $0x70] sm:$0xff]
      %v4557 = vld [vmem:[#allocation2 + $0x78] sm:$0xff]
      %v4558 = vld [vmem:[#allocation2 + $0x80] sm:$0xff]
      %v4559 = vld [vmem:[#allocation2 + $0x88] sm:$0xff]
      %v4560 = vld [vmem:[#allocation2 + $0x90] sm:$0xff]
      %v4561 = vld [vmem:[#allocation2 + $0x98] sm:$0xff]
      %v4562 = vld [vmem:[#allocation2 + $0xa0] sm:$0xff]
      %v4563 = vld [vmem:[#allocation2 + $0xa8] sm:$0xff]
      %v4564 = vld [vmem:[#allocation2 + $0xb0] sm:$0xff]
      %v4565 = vld [vmem:[#allocation2 + $0xb8] sm:$0xff]
      %v4566 = vld [vmem:[#allocation2 + $0xc0] sm:$0xff]
      %v4567 = vld [vmem:[#allocation2 + $0xc8] sm:$0xff]
      %v4568 = vld [vmem:[#allocation2 + $0xd0] sm:$0xff]
      %v4569 = vld [vmem:[#allocation2 + $0xd8] sm:$0xff]
      %v4570 = vld [vmem:[#allocation2 + $0xe0] sm:$0xff]
      %v4571 = vld [vmem:[#allocation2 + $0xe8] sm:$0xff]
      %v4572 = vld [vmem:[#allocation2 + $0xf0] sm:$0xff]
      %v4573 = vld [vmem:[#allocation2 + $0xf8] sm:$0xff]
      %v4574 = vld [vmem:[%s2] sm:$0xff]
      %v4575 = vld [vmem:[%s2 + $0x8] sm:$0xff]
      %v4576 = vld [vmem:[%s2 + $0x10] sm:$0xff]
      %v4577 = vld [vmem:[%s2 + $0x18] sm:$0xff]
      %v4578 = vld [vmem:[%s2 + $0x20] sm:$0xff]
      %v4579 = vld [vmem:[%s2 + $0x28] sm:$0xff]
      %v4580 = vld [vmem:[%s2 + $0x30] sm:$0xff]
      %v4581 = vld [vmem:[%s2 + $0x38] sm:$0xff]
      %v4582 = vld [vmem:[%s2 + $0x40] sm:$0xff]
      %v4583 = vld [vmem:[%s2 + $0x48] sm:$0xff]
      %v4584 = vld [vmem:[%s2 + $0x50] sm:$0xff]
      %v4585 = vld [vmem:[%s2 + $0x58] sm:$0xff]
      %v4586 = vld [vmem:[%s2 + $0x60] sm:$0xff]
      %v4587 = vld [vmem:[%s2 + $0x68] sm:$0xff]
      %v4588 = vld [vmem:[%s2 + $0x70] sm:$0xff]
      %v4589 = vld [vmem:[%s2 + $0x78] sm:$0xff]
      %4591 = vset.pattern.permute.xlu0 0
      %4592 = vperm.xlu0 %4591, %v4574
      %v4593 = vpop.permute.xlu0 %4592
      %4596 = vset.pattern.permute.xlu0 0
      %4597 = vperm.xlu0 %4596, %v4575
      %v4598 = vpop.permute.xlu0 %4597
      %4601 = vset.pattern.permute.xlu0 0
      %4602 = vperm.xlu0 %4601, %v4576
      %v4603 = vpop.permute.xlu0 %4602
      %4606 = vset.pattern.permute.xlu0 0
      %4607 = vperm.xlu0 %4606, %v4577
      %v4608 = vpop.permute.xlu0 %4607
      %4611 = vset.pattern.permute.xlu0 0
      %4612 = vperm.xlu0 %4611, %v4578
      %v4613 = vpop.permute.xlu0 %4612
      %4616 = vset.pattern.permute.xlu0 0
      %4617 = vperm.xlu0 %4616, %v4579
      %v4618 = vpop.permute.xlu0 %4617
      %4621 = vset.pattern.permute.xlu0 0
      %4622 = vperm.xlu0 %4621, %v4580
      %v4623 = vpop.permute.xlu0 %4622
      %4626 = vset.pattern.permute.xlu0 0
      %4627 = vperm.xlu0 %4626, %v4581
      %v4628 = vpop.permute.xlu0 %4627
      %4631 = vset.pattern.permute.xlu0 0
      %4632 = vperm.xlu0 %4631, %v4582
      %v4633 = vpop.permute.xlu0 %4632
      %4636 = vset.pattern.permute.xlu0 0
      %4637 = vperm.xlu0 %4636, %v4583
      %v4638 = vpop.permute.xlu0 %4637
      %4641 = vset.pattern.permute.xlu0 0
      %4642 = vperm.xlu0 %4641, %v4584
      %v4643 = vpop.permute.xlu0 %4642
      %4646 = vset.pattern.permute.xlu0 0
      %4647 = vperm.xlu0 %4646, %v4585
      %v4648 = vpop.permute.xlu0 %4647
      %4651 = vset.pattern.permute.xlu0 0
      %4652 = vperm.xlu0 %4651, %v4586
      %v4653 = vpop.permute.xlu0 %4652
      %4656 = vset.pattern.permute.xlu0 0
      %4657 = vperm.xlu0 %4656, %v4587
      %v4658 = vpop.permute.xlu0 %4657
      %4661 = vset.pattern.permute.xlu0 0
      %4662 = vperm.xlu0 %4661, %v4588
      %v4663 = vpop.permute.xlu0 %4662
      %4666 = vset.pattern.permute.xlu0 0
      %4667 = vperm.xlu0 %4666, %v4589
      %v4668 = vpop.permute.xlu0 %4667
      %v4670 = vadd.f32 %v4542, %v4593
      %v4671 = vadd.f32 %v4543, %v4593
      %v4672 = vadd.f32 %v4544, %v4598
      %v4673 = vadd.f32 %v4545, %v4598
      %v4674 = vadd.f32 %v4546, %v4603
      %v4675 = vadd.f32 %v4547, %v4603
      %v4676 = vadd.f32 %v4548, %v4608
      %v4677 = vadd.f32 %v4549, %v4608
      %v4678 = vadd.f32 %v4550, %v4613
      %v4679 = vadd.f32 %v4551, %v4613
      %v4680 = vadd.f32 %v4552, %v4618
      %v4681 = vadd.f32 %v4553, %v4618
      %v4682 = vadd.f32 %v4554, %v4623
      %v4683 = vadd.f32 %v4555, %v4623
      %v4684 = vadd.f32 %v4556, %v4628
      %v4685 = vadd.f32 %v4557, %v4628
      %v4686 = vadd.f32 %v4558, %v4633
      %v4687 = vadd.f32 %v4559, %v4633
      %v4688 = vadd.f32 %v4560, %v4638
      %v4689 = vadd.f32 %v4561, %v4638
      %v4690 = vadd.f32 %v4562, %v4643
      %v4691 = vadd.f32 %v4563, %v4643
      %v4692 = vadd.f32 %v4564, %v4648
      %v4693 = vadd.f32 %v4565, %v4648
      %v4694 = vadd.f32 %v4566, %v4653
      %v4695 = vadd.f32 %v4567, %v4653
      %v4696 = vadd.f32 %v4568, %v4658
      %v4697 = vadd.f32 %v4569, %v4658
      %v4698 = vadd.f32 %v4570, %v4663
      %v4699 = vadd.f32 %v4571, %v4663
      %v4700 = vadd.f32 %v4572, %v4668
      %v4701 = vadd.f32 %v4573, %v4668
      %v4702 = vmax.f32 %v4670, 0.0
      %v4703 = vmax.f32 %v4671, 0.0
      %v4704 = vmax.f32 %v4672, 0.0
      %v4705 = vmax.f32 %v4673, 0.0
      %v4706 = vmax.f32 %v4674, 0.0
      %v4707 = vmax.f32 %v4675, 0.0
      %v4708 = vmax.f32 %v4676, 0.0
      %v4709 = vmax.f32 %v4677, 0.0
      %v4710 = vmax.f32 %v4678, 0.0
      %v4711 = vmax.f32 %v4679, 0.0
      %v4712 = vmax.f32 %v4680, 0.0
      %v4713 = vmax.f32 %v4681, 0.0
      %v4714 = vmax.f32 %v4682, 0.0
      %v4715 = vmax.f32 %v4683, 0.0
      %v4716 = vmax.f32 %v4684, 0.0
      %v4717 = vmax.f32 %v4685, 0.0
      %v4718 = vmax.f32 %v4686, 0.0
      %v4719 = vmax.f32 %v4687, 0.0
      %v4720 = vmax.f32 %v4688, 0.0
      %v4721 = vmax.f32 %v4689, 0.0
      %v4722 = vmax.f32 %v4690, 0.0
      %v4723 = vmax.f32 %v4691, 0.0
      %v4724 = vmax.f32 %v4692, 0.0
      %v4725 = vmax.f32 %v4693, 0.0
      %v4726 = vmax.f32 %v4694, 0.0
      %v4727 = vmax.f32 %v4695, 0.0
      %v4728 = vmax.f32 %v4696, 0.0
      %v4729 = vmax.f32 %v4697, 0.0
      %v4730 = vmax.f32 %v4698, 0.0
      %v4731 = vmax.f32 %v4699, 0.0
      %v4732 = vmax.f32 %v4700, 0.0
      %v4733 = vmax.f32 %v4701, 0.0
      %4734 = vst [vmem:[#allocation2] sm:$0xff] %v4702
      %4735 = vst [vmem:[#allocation2 + $0x8] sm:$0xff] %v4703
      %4736 = vst [vmem:[#allocation2 + $0x10] sm:$0xff] %v4704
      %4737 = vst [vmem:[#allocation2 + $0x18] sm:$0xff] %v4705
      %4738 = vst [vmem:[#allocation2 + $0x20] sm:$0xff] %v4706
      %4739 = vst [vmem:[#allocation2 + $0x28] sm:$0xff] %v4707
      %4740 = vst [vmem:[#allocation2 + $0x30] sm:$0xff] %v4708
      %4741 = vst [vmem:[#allocation2 + $0x38] sm:$0xff] %v4709
      %4742 = vst [vmem:[#allocation2 + $0x40] sm:$0xff] %v4710
      %4743 = vst [vmem:[#allocation2 + $0x48] sm:$0xff] %v4711
      %4744 = vst [vmem:[#allocation2 + $0x50] sm:$0xff] %v4712
      %4745 = vst [vmem:[#allocation2 + $0x58] sm:$0xff] %v4713
      %4746 = vst [vmem:[#allocation2 + $0x60] sm:$0xff] %v4714
      %4747 = vst [vmem:[#allocation2 + $0x68] sm:$0xff] %v4715
      %4748 = vst [vmem:[#allocation2 + $0x70] sm:$0xff] %v4716
      %4749 = vst [vmem:[#allocation2 + $0x78] sm:$0xff] %v4717
      %4750 = vst [vmem:[#allocation2 + $0x80] sm:$0xff] %v4718
      %4751 = vst [vmem:[#allocation2 + $0x88] sm:$0xff] %v4719
      %4752 = vst [vmem:[#allocation2 + $0x90] sm:$0xff] %v4720
      %4753 = vst [vmem:[#allocation2 + $0x98] sm:$0xff] %v4721
      %4754 = vst [vmem:[#allocation2 + $0xa0] sm:$0xff] %v4722
      %4755 = vst [vmem:[#allocation2 + $0xa8] sm:$0xff] %v4723
      %4756 = vst [vmem:[#allocation2 + $0xb0] sm:$0xff] %v4724
      %4757 = vst [vmem:[#allocation2 + $0xb8] sm:$0xff] %v4725
      %4758 = vst [vmem:[#allocation2 + $0xc0] sm:$0xff] %v4726
      %4759 = vst [vmem:[#allocation2 + $0xc8] sm:$0xff] %v4727
      %4760 = vst [vmem:[#allocation2 + $0xd0] sm:$0xff] %v4728
      %4761 = vst [vmem:[#allocation2 + $0xd8] sm:$0xff] %v4729
      %4762 = vst [vmem:[#allocation2 + $0xe0] sm:$0xff] %v4730
      %4763 = vst [vmem:[#allocation2 + $0xe8] sm:$0xff] %v4731
      %4764 = vst [vmem:[#allocation2 + $0xf0] sm:$0xff] %v4732
      %4765 = vst [vmem:[#allocation2 + $0xf8] sm:$0xff] %v4733
      %4766 = vst [vmem:[#allocation3] sm:$0xff] 0.0
      %4767 = vst [vmem:[#allocation3 + $0x8] sm:$0xff] 0.0
      %4768 = vst [vmem:[#allocation3 + $0x10] sm:$0xff] 0.0
      %4769 = vst [vmem:[#allocation3 + $0x18] sm:$0xff] 0.0
      %4770 = vst [vmem:[#allocation3 + $0x20] sm:$0xff] 0.0
      %4771 = vst [vmem:[#allocation3 + $0x28] sm:$0xff] 0.0
      %4772 = vst [vmem:[#allocation3 + $0x30] sm:$0xff] 0.0
      %4773 = vst [vmem:[#allocation3 + $0x38] sm:$0xff] 0.0
      %4774 = vst [vmem:[#allocation3 + $0x40] sm:$0xff] 0.0
      %4775 = vst [vmem:[#allocation3 + $0x48] sm:$0xff] 0.0
      %4776 = vst [vmem:[#allocation3 + $0x50] sm:$0xff] 0.0
      %4777 = vst [vmem:[#allocation3 + $0x58] sm:$0xff] 0.0
      %4778 = vst [vmem:[#allocation3 + $0x60] sm:$0xff] 0.0
      %4779 = vst [vmem:[#allocation3 + $0x68] sm:$0xff] 0.0
      %4780 = vst [vmem:[#allocation3 + $0x70] sm:$0xff] 0.0
      %4781 = vst [vmem:[#allocation3 + $0x78] sm:$0xff] 0.0
      %v4782 = vld [vmem:[#allocation2] sm:$0xff]
      %v4783 = vld [vmem:[#allocation2 + $0x8] sm:$0xff]
      %v4784 = vld [vmem:[#allocation2 + $0x10] sm:$0xff]
      %v4785 = vld [vmem:[#allocation2 + $0x18] sm:$0xff]
      %v4786 = vld [vmem:[#allocation2 + $0x20] sm:$0xff]
      %v4787 = vld [vmem:[#allocation2 + $0x28] sm:$0xff]
      %v4788 = vld [vmem:[#allocation2 + $0x30] sm:$0xff]
      %v4789 = vld [vmem:[#allocation2 + $0x38] sm:$0xff]
      %v4790 = vld [vmem:[#allocation2 + $0x40] sm:$0xff]
      %v4791 = vld [vmem:[#allocation2 + $0x48] sm:$0xff]
      %v4792 = vld [vmem:[#allocation2 + $0x50] sm:$0xff]
      %v4793 = vld [vmem:[#allocation2 + $0x58] sm:$0xff]
      %v4794 = vld [vmem:[#allocation2 + $0x60] sm:$0xff]
      %v4795 = vld [vmem:[#allocation2 + $0x68] sm:$0xff]
      %v4796 = vld [vmem:[#allocation2 + $0x70] sm:$0xff]
      %v4797 = vld [vmem:[#allocation2 + $0x78] sm:$0xff]
      %v4798 = vld [vmem:[#allocation2 + $0x80] sm:$0xff]
      %v4799 = vld [vmem:[#allocation2 + $0x88] sm:$0xff]
      %v4800 = vld [vmem:[#allocation2 + $0x90] sm:$0xff]
      %v4801 = vld [vmem:[#allocation2 + $0x98] sm:$0xff]
      %v4802 = vld [vmem:[#allocation2 + $0xa0] sm:$0xff]
      %v4803 = vld [vmem:[#allocation2 + $0xa8] sm:$0xff]
      %v4804 = vld [vmem:[#allocation2 + $0xb0] sm:$0xff]
      %v4805 = vld [vmem:[#allocation2 + $0xb8] sm:$0xff]
      %v4806 = vld [vmem:[#allocation2 + $0xc0] sm:$0xff]
      %v4807 = vld [vmem:[#allocation2 + $0xc8] sm:$0xff]
      %v4808 = vld [vmem:[#allocation2 + $0xd0] sm:$0xff]
      %v4809 = vld [vmem:[#allocation2 + $0xd8] sm:$0xff]
      %v4810 = vld [vmem:[#allocation2 + $0xe0] sm:$0xff]
      %v4811 = vld [vmem:[#allocation2 + $0xe8] sm:$0xff]
      %v4812 = vld [vmem:[#allocation2 + $0xf0] sm:$0xff]
      %v4813 = vld [vmem:[#allocation2 + $0xf8] sm:$0xff]
      %4814 = vrot.lane.b32.xlu0 %v4782, 17
      %v4815 = vpop.permute.xlu0 %4814
      %4816 = vrot.lane.b32.xlu0 %v4784, 17
      %v4817 = vpop.permute.xlu0 %4816
      %4818 = vrot.lane.b32.xlu0 %v4786, 17
      %v4819 = vpop.permute.xlu0 %4818
      %4820 = vrot.lane.b32.xlu0 %v4788, 17
      %v4821 = vpop.permute.xlu0 %4820
      %4822 = vrot.lane.b32.xlu0 %v4790, 17
      %v4823 = vpop.permute.xlu0 %4822
      %4824 = vrot.lane.b32.xlu0 %v4792, 17
      %v4825 = vpop.permute.xlu0 %4824
      %4826 = vrot.lane.b32.xlu0 %v4794, 17
      %v4827 = vpop.permute.xlu0 %4826
      %4828 = vrot.lane.b32.xlu0 %v4796, 17
      %v4829 = vpop.permute.xlu0 %4828
      %4830 = vrot.lane.b32.xlu0 %v4798, 17
      %v4831 = vpop.permute.xlu0 %4830
      %4832 = vrot.lane.b32.xlu0 %v4800, 17
      %v4833 = vpop.permute.xlu0 %4832
      %4834 = vrot.lane.b32.xlu0 %v4802, 17
      %v4835 = vpop.permute.xlu0 %4834
      %4836 = vrot.lane.b32.xlu0 %v4804, 17
      %v4837 = vpop.permute.xlu0 %4836
      %4838 = vrot.lane.b32.xlu0 %v4806, 17
      %v4839 = vpop.permute.xlu0 %4838
      %4840 = vrot.lane.b32.xlu0 %v4808, 17
      %v4841 = vpop.permute.xlu0 %4840
      %4842 = vrot.lane.b32.xlu0 %v4810, 17
      %v4843 = vpop.permute.xlu0 %4842
      %4844 = vrot.lane.b32.xlu0 %v4812, 17
      %v4845 = vpop.permute.xlu0 %4844
      %4846 = vrot.lane.b32.xlu0 %v4783, 17
      %v4847 = vpop.permute.xlu0 %4846
      %4848 = vrot.lane.b32.xlu0 %v4785, 17
      %v4849 = vpop.permute.xlu0 %4848
      %4850 = vrot.lane.b32.xlu0 %v4787, 17
      %v4851 = vpop.permute.xlu0 %4850
      %4852 = vrot.lane.b32.xlu0 %v4789, 17
      %v4853 = vpop.permute.xlu0 %4852
      %4854 = vrot.lane.b32.xlu0 %v4791, 17
      %v4855 = vpop.permute.xlu0 %4854
      %4856 = vrot.lane.b32.xlu0 %v4793, 17
      %v4857 = vpop.permute.xlu0 %4856
      %4858 = vrot.lane.b32.xlu0 %v4795, 17
      %v4859 = vpop.permute.xlu0 %4858
      %4860 = vrot.lane.b32.xlu0 %v4797, 17
      %v4861 = vpop.permute.xlu0 %4860
      %4862 = vrot.lane.b32.xlu0 %v4799, 17
      %v4863 = vpop.permute.xlu0 %4862
      %4864 = vrot.lane.b32.xlu0 %v4801, 17
      %v4865 = vpop.permute.xlu0 %4864
      %4866 = vrot.lane.b32.xlu0 %v4803, 17
      %v4867 = vpop.permute.xlu0 %4866
      %4868 = vrot.lane.b32.xlu0 %v4805, 17
      %v4869 = vpop.permute.xlu0 %4868
      %4870 = vrot.lane.b32.xlu0 %v4807, 17
      %v4871 = vpop.permute.xlu0 %4870
      %4872 = vrot.lane.b32.xlu0 %v4809, 17
      %v4873 = vpop.permute.xlu0 %4872
      %4874 = vrot.lane.b32.xlu0 %v4811, 17
      %v4875 = vpop.permute.xlu0 %4874
      %4876 = vrot.lane.b32.xlu0 %v4813, 17
      %v4877 = vpop.permute.xlu0 %4876
      %v4878 = vsel %vm446, %v4815, %v4847
      %v4879 = vsel %vm446, %v4817, %v4849
      %v4880 = vsel %vm446, %v4819, %v4851
      %v4881 = vsel %vm446, %v4821, %v4853
      %v4882 = vsel %vm446, %v4823, %v4855
      %v4883 = vsel %vm446, %v4825, %v4857
      %v4884 = vsel %vm446, %v4827, %v4859
      %v4885 = vsel %vm446, %v4829, %v4861
      %v4886 = vsel %vm446, %v4831, %v4863
      %v4887 = vsel %vm446, %v4833, %v4865
      %v4888 = vsel %vm446, %v4835, %v4867
      %v4889 = vsel %vm446, %v4837, %v4869
      %v4890 = vsel %vm446, %v4839, %v4871
      %v4891 = vsel %vm446, %v4841, %v4873
      %v4892 = vsel %vm446, %v4843, %v4875
      %v4893 = vsel %vm446, %v4845, %v4877
      %v4894 = vsel %vm446, %v4847, %v4815
      %v4895 = vsel %vm446, %v4849, %v4817
      %v4896 = vsel %vm446, %v4851, %v4819
      %v4897 = vsel %vm446, %v4853, %v4821
      %v4898 = vsel %vm446, %v4855, %v4823
      %v4899 = vsel %vm446, %v4857, %v4825
      %v4900 = vsel %vm446, %v4859, %v4827
      %v4901 = vsel %vm446, %v4861, %v4829
      %v4902 = vsel %vm446, %v4863, %v4831
      %v4903 = vsel %vm446, %v4865, %v4833
      %v4904 = vsel %vm446, %v4867, %v4835
      %v4905 = vsel %vm446, %v4869, %v4837
      %v4906 = vsel %vm446, %v4871, %v4839
      %v4907 = vsel %vm446, %v4873, %v4841
      %v4908 = vsel %vm446, %v4875, %v4843
      %v4909 = vsel %vm446, %v4877, %v4845
      %v4910 = vld [vmem:[%s5] sm:$0x3]
      %v4912 = vlaneseq
      %v4913 = vshrl.u32 %v4912, 7
      %v4914 = vsub.s32 0, %v4913
      %v4915 = vrot.slane %v4910, %v4914
      %v4916 = vlaneseq
      %v4917 = vshrl.u32 %v4916, 7
      %v4918 = vsub.s32 1, %v4917
      %v4919 = vrot.slane %v4910, %v4918
      %v4922 = vmul.f32 %v4894, %v4915
      %v4923 = vmul.f32 %v4878, %v4919
      %v4924 = vmul.f32 %v4895, %v4915
      %v4925 = vmul.f32 %v4879, %v4919
      %v4926 = vmul.f32 %v4896, %v4915
      %v4927 = vmul.f32 %v4880, %v4919
      %v4928 = vmul.f32 %v4897, %v4915
      %v4929 = vmul.f32 %v4881, %v4919
      %v4930 = vmul.f32 %v4898, %v4915
      %v4931 = vmul.f32 %v4882, %v4919
      %v4932 = vmul.f32 %v4899, %v4915
      %v4933 = vmul.f32 %v4883, %v4919
      %v4934 = vmul.f32 %v4900, %v4915
      %v4935 = vmul.f32 %v4884, %v4919
      %v4936 = vmul.f32 %v4901, %v4915
      %v4937 = vmul.f32 %v4885, %v4919
      %v4938 = vmul.f32 %v4902, %v4915
      %v4939 = vmul.f32 %v4886, %v4919
      %v4940 = vmul.f32 %v4903, %v4915
      %v4941 = vmul.f32 %v4887, %v4919
      %v4942 = vmul.f32 %v4904, %v4915
      %v4943 = vmul.f32 %v4888, %v4919
      %v4944 = vmul.f32 %v4905, %v4915
      %v4945 = vmul.f32 %v4889, %v4919
      %v4946 = vmul.f32 %v4906, %v4915
      %v4947 = vmul.f32 %v4890, %v4919
      %v4948 = vmul.f32 %v4907, %v4915
      %v4949 = vmul.f32 %v4891, %v4919
      %v4950 = vmul.f32 %v4908, %v4915
      %v4951 = vmul.f32 %v4892, %v4919
      %v4952 = vmul.f32 %v4909, %v4915
      %v4953 = vmul.f32 %v4893, %v4919
      %v4954 = vld [vmem:[#allocation3] sm:$0xff]
      %v4955 = vld [vmem:[#allocation3 + $0x8] sm:$0xff]
      %v4956 = vld [vmem:[#allocation3 + $0x10] sm:$0xff]
      %v4957 = vld [vmem:[#allocation3 + $0x18] sm:$0xff]
      %v4958 = vld [vmem:[#allocation3 + $0x20] sm:$0xff]
      %v4959 = vld [vmem:[#allocation3 + $0x28] sm:$0xff]
      %v4960 = vld [vmem:[#allocation3 + $0x30] sm:$0xff]
      %v4961 = vld [vmem:[#allocation3 + $0x38] sm:$0xff]
      %v4962 = vld [vmem:[#allocation3 + $0x40] sm:$0xff]
      %v4963 = vld [vmem:[#allocation3 + $0x48] sm:$0xff]
      %v4964 = vld [vmem:[#allocation3 + $0x50] sm:$0xff]
      %v4965 = vld [vmem:[#allocation3 + $0x58] sm:$0xff]
      %v4966 = vld [vmem:[#allocation3 + $0x60] sm:$0xff]
      %v4967 = vld [vmem:[#allocation3 + $0x68] sm:$0xff]
      %v4968 = vld [vmem:[#allocation3 + $0x70] sm:$0xff]
      %v4969 = vld [vmem:[#allocation3 + $0x78] sm:$0xff]
      %v4970 = vld [vmem:[%s3] sm:$0xf]
      %v4971 = vld [vmem:[%s3 + $0x4] sm:$0xf]
      %v4972 = vld [vmem:[%s3 + $0x8] sm:$0xf]
      %v4973 = vld [vmem:[%s3 + $0xc] sm:$0xf]
      %v4974 = vld [vmem:[%s3 + $0x10] sm:$0xf]
      %v4975 = vld [vmem:[%s3 + $0x14] sm:$0xf]
      %v4976 = vld [vmem:[%s3 + $0x18] sm:$0xf]
      %v4977 = vld [vmem:[%s3 + $0x1c] sm:$0xf]
      %v4978 = vpack.c.bf16 %v4924, %v4922
      %v4979 = vpack.c.bf16 %v4925, %v4923
      %v4980 = vpack.c.bf16 %v4928, %v4926
      %v4981 = vpack.c.bf16 %v4929, %v4927
      %v4982 = vpack.c.bf16 %v4932, %v4930
      %v4983 = vpack.c.bf16 %v4933, %v4931
      %v4984 = vpack.c.bf16 %v4936, %v4934
      %v4985 = vpack.c.bf16 %v4937, %v4935
      %v4986 = vpack.c.bf16 %v4940, %v4938
      %v4987 = vpack.c.bf16 %v4941, %v4939
      %v4988 = vpack.c.bf16 %v4944, %v4942
      %v4989 = vpack.c.bf16 %v4945, %v4943
      %v4990 = vpack.c.bf16 %v4948, %v4946
      %v4991 = vpack.c.bf16 %v4949, %v4947
      %v4992 = vpack.c.bf16 %v4952, %v4950
      %v4993 = vpack.c.bf16 %v4953, %v4951
      %v5002 = vunpack.c.l.b16 %v4970
      %v5003 = vunpack.c.l.b16 %v4971
      %v5004 = vunpack.c.l.b16 %v4972
      %v5005 = vunpack.c.l.b16 %v4973
      %v5006 = vunpack.c.l.b16 %v4974
      %v5007 = vunpack.c.l.b16 %v4975
      %v5008 = vunpack.c.l.b16 %v4976
      %v5009 = vunpack.c.l.b16 %v4977
      %v5010 = vpack.c.b16 %v5003, %v5002
      %v5011 = vpack.c.b16 %v5005, %v5004
      %v5012 = vpack.c.b16 %v5007, %v5006
      %v5013 = vpack.c.b16 %v5009, %v5008
      %5018 = vmatprep.subr.bf16.mxu0 %v4993
      %5019 = vmatpush1.bf16.msra.mxu0 %v4992
      %5020 = vmatprep.subr.bf16.mxu0 %v4991
      %5021 = vmatpush1.bf16.msra.mxu0 %v4990
      %5022 = vmatprep.subr.bf16.mxu0 %v4989
      %5023 = vmatpush1.bf16.msra.mxu0 %v4988
      %5024 = vmatprep.subr.bf16.mxu0 %v4987
      %5025 = vmatpush1.bf16.msra.mxu0 %v4986
      %5026 = vmatprep.subr.bf16.mxu0 %v4985
      %5027 = vmatpush1.bf16.msra.mxu0 %v4984
      %5028 = vmatprep.subr.bf16.mxu0 %v4983
      %5029 = vmatpush1.bf16.msra.mxu0 %v4982
      %5030 = vmatprep.subr.bf16.mxu0 %v4981
      %5031 = vmatpush1.bf16.msra.mxu0 %v4980
      %5032 = vmatprep.subr.bf16.mxu0 %v4979
      %5033 = vmatpush1.bf16.msra.mxu0 %v4978
      %5034 = vmatprep.subr.bf16.mxu0 0
      %5035 = vmatpush2.bf16.msra.mxu0 0
      %5036 = vmatprep.subr.bf16.mxu0 0
      %5037 = vmatpush2.bf16.msra.mxu0 0
      %5038 = vmatprep.subr.bf16.mxu0 0
      %5039 = vmatpush2.bf16.msra.mxu0 0
      %5040 = vmatprep.subr.bf16.mxu0 0
      %5041 = vmatpush2.bf16.msra.mxu0 0
      %5042 = vmatprep.subr.bf16.mxu0 0
      %5043 = vmatpush2.bf16.msra.mxu0 0
      %5044 = vmatprep.subr.bf16.mxu0 0
      %5045 = vmatpush2.bf16.msra.mxu0 0
      %5046 = vmatprep.subr.bf16.mxu0 0
      %5047 = vmatpush2.bf16.msra.mxu0 0
      %5048 = vmatprep.subr.bf16.mxu0 0
      %5049 = vmatpush2.bf16.msra.mxu0 0
      %5050 = vmatprep.mubr.bf16.mxu0 0
      %5051 = vmatmul.mubr.bf16.gmra.mxu0 %v5010
      %v5052 = vpop.f32.mrf.mxu0
      %v5053 = vadd.f32 0.0, %v5052
      %v5054 = vpop.f32.mrf.mxu0
      %v5055 = vadd.f32 0.0, %v5054
      %v5056 = vpop.f32.mrf.mxu0
      %v5057 = vadd.f32 0.0, %v5056
      %v5058 = vpop.f32.mrf.mxu0
      %v5059 = vadd.f32 0.0, %v5058
      %5060 = vmatprep.mubr.bf16.mxu0 0
      %5061 = vmatmul.mubr.bf16.gmra.mxu0 %v5011
      %v5062 = vpop.f32.mrf.mxu0
      %v5063 = vadd.f32 0.0, %v5062
      %v5064 = vpop.f32.mrf.mxu0
      %v5065 = vadd.f32 0.0, %v5064
      %v5066 = vpop.f32.mrf.mxu0
      %v5067 = vadd.f32 0.0, %v5066
      %v5068 = vpop.f32.mrf.mxu0
      %v5069 = vadd.f32 0.0, %v5068
      %5070 = vmatprep.mubr.bf16.mxu0 0
      %5071 = vmatmul.mubr.bf16.gmra.mxu0 %v5012
      %v5072 = vpop.f32.mrf.mxu0
      %v5073 = vadd.f32 0.0, %v5072
      %v5074 = vpop.f32.mrf.mxu0
      %v5075 = vadd.f32 0.0, %v5074
      %v5076 = vpop.f32.mrf.mxu0
      %v5077 = vadd.f32 0.0, %v5076
      %v5078 = vpop.f32.mrf.mxu0
      %v5079 = vadd.f32 0.0, %v5078
      %5080 = vmatprep.mubr.bf16.mxu0 0
      %5081 = vmatmul.mubr.bf16.gmra.mxu0 %v5013
      %v5082 = vpop.f32.mrf.mxu0
      %v5083 = vadd.f32 0.0, %v5082
      %v5084 = vpop.f32.mrf.mxu0
      %v5085 = vadd.f32 0.0, %v5084
      %v5086 = vpop.f32.mrf.mxu0
      %v5087 = vadd.f32 0.0, %v5086
      %v5088 = vpop.f32.mrf.mxu0
      %v5089 = vadd.f32 0.0, %v5088
      %5090 = vdwg.mxu0
      %v5091 = vadd.f32 %v4954, %v5053
      %v5092 = vadd.f32 %v4955, %v5055
      %v5093 = vadd.f32 %v4956, %v5057
      %v5094 = vadd.f32 %v4957, %v5059
      %v5095 = vadd.f32 %v4958, %v5063
      %v5096 = vadd.f32 %v4959, %v5065
      %v5097 = vadd.f32 %v4960, %v5067
      %v5098 = vadd.f32 %v4961, %v5069
      %v5099 = vadd.f32 %v4962, %v5073
      %v5100 = vadd.f32 %v4963, %v5075
      %v5101 = vadd.f32 %v4964, %v5077
      %v5102 = vadd.f32 %v4965, %v5079
      %v5103 = vadd.f32 %v4966, %v5083
      %v5104 = vadd.f32 %v4967, %v5085
      %v5105 = vadd.f32 %v4968, %v5087
      %v5106 = vadd.f32 %v4969, %v5089
      %5107 = vst [vmem:[#allocation3] sm:$0xff] %v5091
      %5108 = vst [vmem:[#allocation3 + $0x8] sm:$0xff] %v5092
      %5109 = vst [vmem:[#allocation3 + $0x10] sm:$0xff] %v5093
      %5110 = vst [vmem:[#allocation3 + $0x18] sm:$0xff] %v5094
      %5111 = vst [vmem:[#allocation3 + $0x20] sm:$0xff] %v5095
      %5112 = vst [vmem:[#allocation3 + $0x28] sm:$0xff] %v5096
      %5113 = vst [vmem:[#allocation3 + $0x30] sm:$0xff] %v5097
      %5114 = vst [vmem:[#allocation3 + $0x38] sm:$0xff] %v5098
      %5115 = vst [vmem:[#allocation3 + $0x40] sm:$0xff] %v5099
      %5116 = vst [vmem:[#allocation3 + $0x48] sm:$0xff] %v5100
      %5117 = vst [vmem:[#allocation3 + $0x50] sm:$0xff] %v5101
      %5118 = vst [vmem:[#allocation3 + $0x58] sm:$0xff] %v5102
      %5119 = vst [vmem:[#allocation3 + $0x60] sm:$0xff] %v5103
      %5120 = vst [vmem:[#allocation3 + $0x68] sm:$0xff] %v5104
      %5121 = vst [vmem:[#allocation3 + $0x70] sm:$0xff] %v5105
      %5122 = vst [vmem:[#allocation3 + $0x78] sm:$0xff] %v5106
      %v5123 = vld [vmem:[#allocation2] sm:$0xff]
      %v5124 = vld [vmem:[#allocation2 + $0x8] sm:$0xff]
      %v5125 = vld [vmem:[#allocation2 + $0x10] sm:$0xff]
      %v5126 = vld [vmem:[#allocation2 + $0x18] sm:$0xff]
      %v5127 = vld [vmem:[#allocation2 + $0x20] sm:$0xff]
      %v5128 = vld [vmem:[#allocation2 + $0x28] sm:$0xff]
      %v5129 = vld [vmem:[#allocation2 + $0x30] sm:$0xff]
      %v5130 = vld [vmem:[#allocation2 + $0x38] sm:$0xff]
      %v5131 = vld [vmem:[#allocation2 + $0x40] sm:$0xff]
      %v5132 = vld [vmem:[#allocation2 + $0x48] sm:$0xff]
      %v5133 = vld [vmem:[#allocation2 + $0x50] sm:$0xff]
      %v5134 = vld [vmem:[#allocation2 + $0x58] sm:$0xff]
      %v5135 = vld [vmem:[#allocation2 + $0x60] sm:$0xff]
      %v5136 = vld [vmem:[#allocation2 + $0x68] sm:$0xff]
      %v5137 = vld [vmem:[#allocation2 + $0x70] sm:$0xff]
      %v5138 = vld [vmem:[#allocation2 + $0x78] sm:$0xff]
      %v5139 = vld [vmem:[#allocation2 + $0x80] sm:$0xff]
      %v5140 = vld [vmem:[#allocation2 + $0x88] sm:$0xff]
      %v5141 = vld [vmem:[#allocation2 + $0x90] sm:$0xff]
      %v5142 = vld [vmem:[#allocation2 + $0x98] sm:$0xff]
      %v5143 = vld [vmem:[#allocation2 + $0xa0] sm:$0xff]
      %v5144 = vld [vmem:[#allocation2 + $0xa8] sm:$0xff]
      %v5145 = vld [vmem:[#allocation2 + $0xb0] sm:$0xff]
      %v5146 = vld [vmem:[#allocation2 + $0xb8] sm:$0xff]
      %v5147 = vld [vmem:[#allocation2 + $0xc0] sm:$0xff]
      %v5148 = vld [vmem:[#allocation2 + $0xc8] sm:$0xff]
      %v5149 = vld [vmem:[#allocation2 + $0xd0] sm:$0xff]
      %v5150 = vld [vmem:[#allocation2 + $0xd8] sm:$0xff]
      %v5151 = vld [vmem:[#allocation2 + $0xe0] sm:$0xff]
      %v5152 = vld [vmem:[#allocation2 + $0xe8] sm:$0xff]
      %v5153 = vld [vmem:[#allocation2 + $0xf0] sm:$0xff]
      %v5154 = vld [vmem:[#allocation2 + $0xf8] sm:$0xff]
      %5155 = vrot.lane.b32.xlu0 %v5123, 16
      %v5156 = vpop.permute.xlu0 %5155
      %5157 = vrot.lane.b32.xlu0 %v5125, 16
      %v5158 = vpop.permute.xlu0 %5157
      %5159 = vrot.lane.b32.xlu0 %v5127, 16
      %v5160 = vpop.permute.xlu0 %5159
      %5161 = vrot.lane.b32.xlu0 %v5129, 16
      %v5162 = vpop.permute.xlu0 %5161
      %5163 = vrot.lane.b32.xlu0 %v5131, 16
      %v5164 = vpop.permute.xlu0 %5163
      %5165 = vrot.lane.b32.xlu0 %v5133, 16
      %v5166 = vpop.permute.xlu0 %5165
      %5167 = vrot.lane.b32.xlu0 %v5135, 16
      %v5168 = vpop.permute.xlu0 %5167
      %5169 = vrot.lane.b32.xlu0 %v5137, 16
      %v5170 = vpop.permute.xlu0 %5169
      %5171 = vrot.lane.b32.xlu0 %v5139, 16
      %v5172 = vpop.permute.xlu0 %5171
      %5173 = vrot.lane.b32.xlu0 %v5141, 16
      %v5174 = vpop.permute.xlu0 %5173
      %5175 = vrot.lane.b32.xlu0 %v5143, 16
      %v5176 = vpop.permute.xlu0 %5175
      %5177 = vrot.lane.b32.xlu0 %v5145, 16
      %v5178 = vpop.permute.xlu0 %5177
      %5179 = vrot.lane.b32.xlu0 %v5147, 16
      %v5180 = vpop.permute.xlu0 %5179
      %5181 = vrot.lane.b32.xlu0 %v5149, 16
      %v5182 = vpop.permute.xlu0 %5181
      %5183 = vrot.lane.b32.xlu0 %v5151, 16
      %v5184 = vpop.permute.xlu0 %5183
      %5185 = vrot.lane.b32.xlu0 %v5153, 16
      %v5186 = vpop.permute.xlu0 %5185
      %5187 = vrot.lane.b32.xlu0 %v5124, 16
      %v5188 = vpop.permute.xlu0 %5187
      %5189 = vrot.lane.b32.xlu0 %v5126, 16
      %v5190 = vpop.permute.xlu0 %5189
      %5191 = vrot.lane.b32.xlu0 %v5128, 16
      %v5192 = vpop.permute.xlu0 %5191
      %5193 = vrot.lane.b32.xlu0 %v5130, 16
      %v5194 = vpop.permute.xlu0 %5193
      %5195 = vrot.lane.b32.xlu0 %v5132, 16
      %v5196 = vpop.permute.xlu0 %5195
      %5197 = vrot.lane.b32.xlu0 %v5134, 16
      %v5198 = vpop.permute.xlu0 %5197
      %5199 = vrot.lane.b32.xlu0 %v5136, 16
      %v5200 = vpop.permute.xlu0 %5199
      %5201 = vrot.lane.b32.xlu0 %v5138, 16
      %v5202 = vpop.permute.xlu0 %5201
      %5203 = vrot.lane.b32.xlu0 %v5140, 16
      %v5204 = vpop.permute.xlu0 %5203
      %5205 = vrot.lane.b32.xlu0 %v5142, 16
      %v5206 = vpop.permute.xlu0 %5205
      %5207 = vrot.lane.b32.xlu0 %v5144, 16
      %v5208 = vpop.permute.xlu0 %5207
      %5209 = vrot.lane.b32.xlu0 %v5146, 16
      %v5210 = vpop.permute.xlu0 %5209
      %5211 = vrot.lane.b32.xlu0 %v5148, 16
      %v5212 = vpop.permute.xlu0 %5211
      %5213 = vrot.lane.b32.xlu0 %v5150, 16
      %v5214 = vpop.permute.xlu0 %5213
      %5215 = vrot.lane.b32.xlu0 %v5152, 16
      %v5216 = vpop.permute.xlu0 %5215
      %5217 = vrot.lane.b32.xlu0 %v5154, 16
      %v5218 = vpop.permute.xlu0 %5217
      %v5219 = vsel %vm924, %v5156, %v5188
      %v5220 = vsel %vm924, %v5158, %v5190
      %v5221 = vsel %vm924, %v5160, %v5192
      %v5222 = vsel %vm924, %v5162, %v5194
      %v5223 = vsel %vm924, %v5164, %v5196
      %v5224 = vsel %vm924, %v5166, %v5198
      %v5225 = vsel %vm924, %v5168, %v5200
      %v5226 = vsel %vm924, %v5170, %v5202
      %v5227 = vsel %vm924, %v5172, %v5204
      %v5228 = vsel %vm924, %v5174, %v5206
      %v5229 = vsel %vm924, %v5176, %v5208
      %v5230 = vsel %vm924, %v5178, %v5210
      %v5231 = vsel %vm924, %v5180, %v5212
      %v5232 = vsel %vm924, %v5182, %v5214
      %v5233 = vsel %vm924, %v5184, %v5216
      %v5234 = vsel %vm924, %v5186, %v5218
      %v5235 = vsel %vm924, %v5188, %v5156
      %v5236 = vsel %vm924, %v5190, %v5158
      %v5237 = vsel %vm924, %v5192, %v5160
      %v5238 = vsel %vm924, %v5194, %v5162
      %v5239 = vsel %vm924, %v5196, %v5164
      %v5240 = vsel %vm924, %v5198, %v5166
      %v5241 = vsel %vm924, %v5200, %v5168
      %v5242 = vsel %vm924, %v5202, %v5170
      %v5243 = vsel %vm924, %v5204, %v5172
      %v5244 = vsel %vm924, %v5206, %v5174
      %v5245 = vsel %vm924, %v5208, %v5176
      %v5246 = vsel %vm924, %v5210, %v5178
      %v5247 = vsel %vm924, %v5212, %v5180
      %v5248 = vsel %vm924, %v5214, %v5182
      %v5249 = vsel %vm924, %v5216, %v5184
      %v5250 = vsel %vm924, %v5218, %v5186
      %v5251 = vld [vmem:[%s957] sm:$0x3]
      %v5253 = vlaneseq
      %v5254 = vshrl.u32 %v5253, 7
      %v5255 = vsub.s32 0, %v5254
      %v5256 = vrot.slane %v5251, %v5255
      %v5257 = vlaneseq
      %v5258 = vshrl.u32 %v5257, 7
      %v5259 = vsub.s32 1, %v5258
      %v5260 = vrot.slane %v5251, %v5259
      %v5263 = vmul.f32 %v5235, %v5256
      %v5264 = vmul.f32 %v5219, %v5260
      %v5265 = vmul.f32 %v5236, %v5256
      %v5266 = vmul.f32 %v5220, %v5260
      %v5267 = vmul.f32 %v5237, %v5256
      %v5268 = vmul.f32 %v5221, %v5260
      %v5269 = vmul.f32 %v5238, %v5256
      %v5270 = vmul.f32 %v5222, %v5260
      %v5271 = vmul.f32 %v5239, %v5256
      %v5272 = vmul.f32 %v5223, %v5260
      %v5273 = vmul.f32 %v5240, %v5256
      %v5274 = vmul.f32 %v5224, %v5260
      %v5275 = vmul.f32 %v5241, %v5256
      %v5276 = vmul.f32 %v5225, %v5260
      %v5277 = vmul.f32 %v5242, %v5256
      %v5278 = vmul.f32 %v5226, %v5260
      %v5279 = vmul.f32 %v5243, %v5256
      %v5280 = vmul.f32 %v5227, %v5260
      %v5281 = vmul.f32 %v5244, %v5256
      %v5282 = vmul.f32 %v5228, %v5260
      %v5283 = vmul.f32 %v5245, %v5256
      %v5284 = vmul.f32 %v5229, %v5260
      %v5285 = vmul.f32 %v5246, %v5256
      %v5286 = vmul.f32 %v5230, %v5260
      %v5287 = vmul.f32 %v5247, %v5256
      %v5288 = vmul.f32 %v5231, %v5260
      %v5289 = vmul.f32 %v5248, %v5256
      %v5290 = vmul.f32 %v5232, %v5260
      %v5291 = vmul.f32 %v5249, %v5256
      %v5292 = vmul.f32 %v5233, %v5260
      %v5293 = vmul.f32 %v5250, %v5256
      %v5294 = vmul.f32 %v5234, %v5260
      %v5295 = vld [vmem:[#allocation3] sm:$0xff]
      %v5296 = vld [vmem:[#allocation3 + $0x8] sm:$0xff]
      %v5297 = vld [vmem:[#allocation3 + $0x10] sm:$0xff]
      %v5298 = vld [vmem:[#allocation3 + $0x18] sm:$0xff]
      %v5299 = vld [vmem:[#allocation3 + $0x20] sm:$0xff]
      %v5300 = vld [vmem:[#allocation3 + $0x28] sm:$0xff]
      %v5301 = vld [vmem:[#allocation3 + $0x30] sm:$0xff]
      %v5302 = vld [vmem:[#allocation3 + $0x38] sm:$0xff]
      %v5303 = vld [vmem:[#allocation3 + $0x40] sm:$0xff]
      %v5304 = vld [vmem:[#allocation3 + $0x48] sm:$0xff]
      %v5305 = vld [vmem:[#allocation3 + $0x50] sm:$0xff]
      %v5306 = vld [vmem:[#allocation3 + $0x58] sm:$0xff]
      %v5307 = vld [vmem:[#allocation3 + $0x60] sm:$0xff]
      %v5308 = vld [vmem:[#allocation3 + $0x68] sm:$0xff]
      %v5309 = vld [vmem:[#allocation3 + $0x70] sm:$0xff]
      %v5310 = vld [vmem:[#allocation3 + $0x78] sm:$0xff]
      %s5311 = scalar_lea.vmem %s3, 32
      %v5312 = vld [vmem:[%s5311] sm:$0xf]
      %v5313 = vld [vmem:[%s5311 + $0x4] sm:$0xf]
      %v5314 = vld [vmem:[%s5311 + $0x8] sm:$0xf]
      %v5315 = vld [vmem:[%s5311 + $0xc] sm:$0xf]
      %v5316 = vld [vmem:[%s5311 + $0x10] sm:$0xf]
      %v5317 = vld [vmem:[%s5311 + $0x14] sm:$0xf]
      %v5318 = vld [vmem:[%s5311 + $0x18] sm:$0xf]
      %v5319 = vld [vmem:[%s5311 + $0x1c] sm:$0xf]
      %v5320 = vpack.c.bf16 %v5265, %v5263
      %v5321 = vpack.c.bf16 %v5266, %v5264
      %v5322 = vpack.c.bf16 %v5269, %v5267
      %v5323 = vpack.c.bf16 %v5270, %v5268
      %v5324 = vpack.c.bf16 %v5273, %v5271
      %v5325 = vpack.c.bf16 %v5274, %v5272
      %v5326 = vpack.c.bf16 %v5277, %v5275
      %v5327 = vpack.c.bf16 %v5278, %v5276
      %v5328 = vpack.c.bf16 %v5281, %v5279
      %v5329 = vpack.c.bf16 %v5282, %v5280
      %v5330 = vpack.c.bf16 %v5285, %v5283
      %v5331 = vpack.c.bf16 %v5286, %v5284
      %v5332 = vpack.c.bf16 %v5289, %v5287
      %v5333 = vpack.c.bf16 %v5290, %v5288
      %v5334 = vpack.c.bf16 %v5293, %v5291
      %v5335 = vpack.c.bf16 %v5294, %v5292
      %v5344 = vunpack.c.l.b16 %v5312
      %v5345 = vunpack.c.l.b16 %v5313
      %v5346 = vunpack.c.l.b16 %v5314
      %v5347 = vunpack.c.l.b16 %v5315
      %v5348 = vunpack.c.l.b16 %v5316
      %v5349 = vunpack.c.l.b16 %v5317
      %v5350 = vunpack.c.l.b16 %v5318
      %v5351 = vunpack.c.l.b16 %v5319
      %v5352 = vpack.c.b16 %v5345, %v5344
      %v5353 = vpack.c.b16 %v5347, %v5346
      %v5354 = vpack.c.b16 %v5349, %v5348
      %v5355 = vpack.c.b16 %v5351, %v5350
      %5360 = vmatprep.subr.bf16.mxu0 %v5335
      %5361 = vmatpush1.bf16.msra.mxu0 %v5334
      %5362 = vmatprep.subr.bf16.mxu0 %v5333
      %5363 = vmatpush1.bf16.msra.mxu0 %v5332
      %5364 = vmatprep.subr.bf16.mxu0 %v5331
      %5365 = vmatpush1.bf16.msra.mxu0 %v5330
      %5366 = vmatprep.subr.bf16.mxu0 %v5329
      %5367 = vmatpush1.bf16.msra.mxu0 %v5328
      %5368 = vmatprep.subr.bf16.mxu0 %v5327
      %5369 = vmatpush1.bf16.msra.mxu0 %v5326
      %5370 = vmatprep.subr.bf16.mxu0 %v5325
      %5371 = vmatpush1.bf16.msra.mxu0 %v5324
      %5372 = vmatprep.subr.bf16.mxu0 %v5323
      %5373 = vmatpush1.bf16.msra.mxu0 %v5322
      %5374 = vmatprep.subr.bf16.mxu0 %v5321
      %5375 = vmatpush1.bf16.msra.mxu0 %v5320
      %5376 = vmatprep.subr.bf16.mxu0 0
      %5377 = vmatpush2.bf16.msra.mxu0 0
      %5378 = vmatprep.subr.bf16.mxu0 0
      %5379 = vmatpush2.bf16.msra.mxu0 0
      %5380 = vmatprep.subr.bf16.mxu0 0
      %5381 = vmatpush2.bf16.msra.mxu0 0
      %5382 = vmatprep.subr.bf16.mxu0 0
      %5383 = vmatpush2.bf16.msra.mxu0 0
      %5384 = vmatprep.subr.bf16.mxu0 0
      %5385 = vmatpush2.bf16.msra.mxu0 0
      %5386 = vmatprep.subr.bf16.mxu0 0
      %5387 = vmatpush2.bf16.msra.mxu0 0
      %5388 = vmatprep.subr.bf16.mxu0 0
      %5389 = vmatpush2.bf16.msra.mxu0 0
      %5390 = vmatprep.subr.bf16.mxu0 0
      %5391 = vmatpush2.bf16.msra.mxu0 0
      %5392 = vmatprep.mubr.bf16.mxu0 0
      %5393 = vmatmul.mubr.bf16.gmra.mxu0 %v5352
      %v5394 = vpop.f32.mrf.mxu0
      %v5395 = vadd.f32 0.0, %v5394
      %v5396 = vpop.f32.mrf.mxu0
      %v5397 = vadd.f32 0.0, %v5396
      %v5398 = vpop.f32.mrf.mxu0
      %v5399 = vadd.f32 0.0, %v5398
      %v5400 = vpop.f32.mrf.mxu0
      %v5401 = vadd.f32 0.0, %v5400
      %5402 = vmatprep.mubr.bf16.mxu0 0
      %5403 = vmatmul.mubr.bf16.gmra.mxu0 %v5353
      %v5404 = vpop.f32.mrf.mxu0
      %v5405 = vadd.f32 0.0, %v5404
      %v5406 = vpop.f32.mrf.mxu0
      %v5407 = vadd.f32 0.0, %v5406
      %v5408 = vpop.f32.mrf.mxu0
      %v5409 = vadd.f32 0.0, %v5408
      %v5410 = vpop.f32.mrf.mxu0
      %v5411 = vadd.f32 0.0, %v5410
      %5412 = vmatprep.mubr.bf16.mxu0 0
      %5413 = vmatmul.mubr.bf16.gmra.mxu0 %v5354
      %v5414 = vpop.f32.mrf.mxu0
      %v5415 = vadd.f32 0.0, %v5414
      %v5416 = vpop.f32.mrf.mxu0
      %v5417 = vadd.f32 0.0, %v5416
      %v5418 = vpop.f32.mrf.mxu0
      %v5419 = vadd.f32 0.0, %v5418
      %v5420 = vpop.f32.mrf.mxu0
      %v5421 = vadd.f32 0.0, %v5420
      %5422 = vmatprep.mubr.bf16.mxu0 0
      %5423 = vmatmul.mubr.bf16.gmra.mxu0 %v5355
      %v5424 = vpop.f32.mrf.mxu0
      %v5425 = vadd.f32 0.0, %v5424
      %v5426 = vpop.f32.mrf.mxu0
      %v5427 = vadd.f32 0.0, %v5426
      %v5428 = vpop.f32.mrf.mxu0
      %v5429 = vadd.f32 0.0, %v5428
      %v5430 = vpop.f32.mrf.mxu0
      %v5431 = vadd.f32 0.0, %v5430
      %5432 = vdwg.mxu0
      %v5433 = vadd.f32 %v5295, %v5395
      %v5434 = vadd.f32 %v5296, %v5397
      %v5435 = vadd.f32 %v5297, %v5399
      %v5436 = vadd.f32 %v5298, %v5401
      %v5437 = vadd.f32 %v5299, %v5405
      %v5438 = vadd.f32 %v5300, %v5407
      %v5439 = vadd.f32 %v5301, %v5409
      %v5440 = vadd.f32 %v5302, %v5411
      %v5441 = vadd.f32 %v5303, %v5415
      %v5442 = vadd.f32 %v5304, %v5417
      %v5443 = vadd.f32 %v5305, %v5419
      %v5444 = vadd.f32 %v5306, %v5421
      %v5445 = vadd.f32 %v5307, %v5425
      %v5446 = vadd.f32 %v5308, %v5427
      %v5447 = vadd.f32 %v5309, %v5429
      %v5448 = vadd.f32 %v5310, %v5431
      %5449 = vst [vmem:[#allocation3] sm:$0xff] %v5433
      %5450 = vst [vmem:[#allocation3 + $0x8] sm:$0xff] %v5434
      %5451 = vst [vmem:[#allocation3 + $0x10] sm:$0xff] %v5435
      %5452 = vst [vmem:[#allocation3 + $0x18] sm:$0xff] %v5436
      %5453 = vst [vmem:[#allocation3 + $0x20] sm:$0xff] %v5437
      %5454 = vst [vmem:[#allocation3 + $0x28] sm:$0xff] %v5438
      %5455 = vst [vmem:[#allocation3 + $0x30] sm:$0xff] %v5439
      %5456 = vst [vmem:[#allocation3 + $0x38] sm:$0xff] %v5440
      %5457 = vst [vmem:[#allocation3 + $0x40] sm:$0xff] %v5441
      %5458 = vst [vmem:[#allocation3 + $0x48] sm:$0xff] %v5442
      %5459 = vst [vmem:[#allocation3 + $0x50] sm:$0xff] %v5443
      %5460 = vst [vmem:[#allocation3 + $0x58] sm:$0xff] %v5444
      %5461 = vst [vmem:[#allocation3 + $0x60] sm:$0xff] %v5445
      %5462 = vst [vmem:[#allocation3 + $0x68] sm:$0xff] %v5446
      %5463 = vst [vmem:[#allocation3 + $0x70] sm:$0xff] %v5447
      %5464 = vst [vmem:[#allocation3 + $0x78] sm:$0xff] %v5448
      %v5465 = vld [vmem:[#allocation2] sm:$0xff]
      %v5466 = vld [vmem:[#allocation2 + $0x8] sm:$0xff]
      %v5467 = vld [vmem:[#allocation2 + $0x10] sm:$0xff]
      %v5468 = vld [vmem:[#allocation2 + $0x18] sm:$0xff]
      %v5469 = vld [vmem:[#allocation2 + $0x20] sm:$0xff]
      %v5470 = vld [vmem:[#allocation2 + $0x28] sm:$0xff]
      %v5471 = vld [vmem:[#allocation2 + $0x30] sm:$0xff]
      %v5472 = vld [vmem:[#allocation2 + $0x38] sm:$0xff]
      %v5473 = vld [vmem:[#allocation2 + $0x40] sm:$0xff]
      %v5474 = vld [vmem:[#allocation2 + $0x48] sm:$0xff]
      %v5475 = vld [vmem:[#allocation2 + $0x50] sm:$0xff]
      %v5476 = vld [vmem:[#allocation2 + $0x58] sm:$0xff]
      %v5477 = vld [vmem:[#allocation2 + $0x60] sm:$0xff]
      %v5478 = vld [vmem:[#allocation2 + $0x68] sm:$0xff]
      %v5479 = vld [vmem:[#allocation2 + $0x70] sm:$0xff]
      %v5480 = vld [vmem:[#allocation2 + $0x78] sm:$0xff]
      %v5481 = vld [vmem:[#allocation2 + $0x80] sm:$0xff]
      %v5482 = vld [vmem:[#allocation2 + $0x88] sm:$0xff]
      %v5483 = vld [vmem:[#allocation2 + $0x90] sm:$0xff]
      %v5484 = vld [vmem:[#allocation2 + $0x98] sm:$0xff]
      %v5485 = vld [vmem:[#allocation2 + $0xa0] sm:$0xff]
      %v5486 = vld [vmem:[#allocation2 + $0xa8] sm:$0xff]
      %v5487 = vld [vmem:[#allocation2 + $0xb0] sm:$0xff]
      %v5488 = vld [vmem:[#allocation2 + $0xb8] sm:$0xff]
      %v5489 = vld [vmem:[#allocation2 + $0xc0] sm:$0xff]
      %v5490 = vld [vmem:[#allocation2 + $0xc8] sm:$0xff]
      %v5491 = vld [vmem:[#allocation2 + $0xd0] sm:$0xff]
      %v5492 = vld [vmem:[#allocation2 + $0xd8] sm:$0xff]
      %v5493 = vld [vmem:[#allocation2 + $0xe0] sm:$0xff]
      %v5494 = vld [vmem:[#allocation2 + $0xe8] sm:$0xff]
      %v5495 = vld [vmem:[#allocation2 + $0xf0] sm:$0xff]
      %v5496 = vld [vmem:[#allocation2 + $0xf8] sm:$0xff]
      %5497 = vrot.lane.b32.xlu0 %v5465, 15
      %v5498 = vpop.permute.xlu0 %5497
      %5499 = vrot.lane.b32.xlu0 %v5467, 15
      %v5500 = vpop.permute.xlu0 %5499
      %5501 = vrot.lane.b32.xlu0 %v5469, 15
      %v5502 = vpop.permute.xlu0 %5501
      %5503 = vrot.lane.b32.xlu0 %v5471, 15
      %v5504 = vpop.permute.xlu0 %5503
      %5505 = vrot.lane.b32.xlu0 %v5473, 15
      %v5506 = vpop.permute.xlu0 %5505
      %5507 = vrot.lane.b32.xlu0 %v5475, 15
      %v5508 = vpop.permute.xlu0 %5507
      %5509 = vrot.lane.b32.xlu0 %v5477, 15
      %v5510 = vpop.permute.xlu0 %5509
      %5511 = vrot.lane.b32.xlu0 %v5479, 15
      %v5512 = vpop.permute.xlu0 %5511
      %5513 = vrot.lane.b32.xlu0 %v5481, 15
      %v5514 = vpop.permute.xlu0 %5513
      %5515 = vrot.lane.b32.xlu0 %v5483, 15
      %v5516 = vpop.permute.xlu0 %5515
      %5517 = vrot.lane.b32.xlu0 %v5485, 15
      %v5518 = vpop.permute.xlu0 %5517
      %5519 = vrot.lane.b32.xlu0 %v5487, 15
      %v5520 = vpop.permute.xlu0 %5519
      %5521 = vrot.lane.b32.xlu0 %v5489, 15
      %v5522 = vpop.permute.xlu0 %5521
      %5523 = vrot.lane.b32.xlu0 %v5491, 15
      %v5524 = vpop.permute.xlu0 %5523
      %5525 = vrot.lane.b32.xlu0 %v5493, 15
      %v5526 = vpop.permute.xlu0 %5525
      %5527 = vrot.lane.b32.xlu0 %v5495, 15
      %v5528 = vpop.permute.xlu0 %5527
      %5529 = vrot.lane.b32.xlu0 %v5466, 15
      %v5530 = vpop.permute.xlu0 %5529
      %5531 = vrot.lane.b32.xlu0 %v5468, 15
      %v5532 = vpop.permute.xlu0 %5531
      %5533 = vrot.lane.b32.xlu0 %v5470, 15
      %v5534 = vpop.permute.xlu0 %5533
      %5535 = vrot.lane.b32.xlu0 %v5472, 15
      %v5536 = vpop.permute.xlu0 %5535
      %5537 = vrot.lane.b32.xlu0 %v5474, 15
      %v5538 = vpop.permute.xlu0 %5537
      %5539 = vrot.lane.b32.xlu0 %v5476, 15
      %v5540 = vpop.permute.xlu0 %5539
      %5541 = vrot.lane.b32.xlu0 %v5478, 15
      %v5542 = vpop.permute.xlu0 %5541
      %5543 = vrot.lane.b32.xlu0 %v5480, 15
      %v5544 = vpop.permute.xlu0 %5543
      %5545 = vrot.lane.b32.xlu0 %v5482, 15
      %v5546 = vpop.permute.xlu0 %5545
      %5547 = vrot.lane.b32.xlu0 %v5484, 15
      %v5548 = vpop.permute.xlu0 %5547
      %5549 = vrot.lane.b32.xlu0 %v5486, 15
      %v5550 = vpop.permute.xlu0 %5549
      %5551 = vrot.lane.b32.xlu0 %v5488, 15
      %v5552 = vpop.permute.xlu0 %5551
      %5553 = vrot.lane.b32.xlu0 %v5490, 15
      %v5554 = vpop.permute.xlu0 %5553
      %5555 = vrot.lane.b32.xlu0 %v5492, 15
      %v5556 = vpop.permute.xlu0 %5555
      %5557 = vrot.lane.b32.xlu0 %v5494, 15
      %v5558 = vpop.permute.xlu0 %5557
      %5559 = vrot.lane.b32.xlu0 %v5496, 15
      %v5560 = vpop.permute.xlu0 %5559
      %v5561 = vsel %vm1404, %v5498, %v5530
      %v5562 = vsel %vm1404, %v5500, %v5532
      %v5563 = vsel %vm1404, %v5502, %v5534
      %v5564 = vsel %vm1404, %v5504, %v5536
      %v5565 = vsel %vm1404, %v5506, %v5538
      %v5566 = vsel %vm1404, %v5508, %v5540
      %v5567 = vsel %vm1404, %v5510, %v5542
      %v5568 = vsel %vm1404, %v5512, %v5544
      %v5569 = vsel %vm1404, %v5514, %v5546
      %v5570 = vsel %vm1404, %v5516, %v5548
      %v5571 = vsel %vm1404, %v5518, %v5550
      %v5572 = vsel %vm1404, %v5520, %v5552
      %v5573 = vsel %vm1404, %v5522, %v5554
      %v5574 = vsel %vm1404, %v5524, %v5556
      %v5575 = vsel %vm1404, %v5526, %v5558
      %v5576 = vsel %vm1404, %v5528, %v5560
      %v5577 = vsel %vm1404, %v5530, %v5498
      %v5578 = vsel %vm1404, %v5532, %v5500
      %v5579 = vsel %vm1404, %v5534, %v5502
      %v5580 = vsel %vm1404, %v5536, %v5504
      %v5581 = vsel %vm1404, %v5538, %v5506
      %v5582 = vsel %vm1404, %v5540, %v5508
      %v5583 = vsel %vm1404, %v5542, %v5510
      %v5584 = vsel %vm1404, %v5544, %v5512
      %v5585 = vsel %vm1404, %v5546, %v5514
      %v5586 = vsel %vm1404, %v5548, %v5516
      %v5587 = vsel %vm1404, %v5550, %v5518
      %v5588 = vsel %vm1404, %v5552, %v5520
      %v5589 = vsel %vm1404, %v5554, %v5522
      %v5590 = vsel %vm1404, %v5556, %v5524
      %v5591 = vsel %vm1404, %v5558, %v5526
      %v5592 = vsel %vm1404, %v5560, %v5528
      %v5593 = vld [vmem:[%s1437] sm:$0x3]
      %v5595 = vlaneseq
      %v5596 = vshrl.u32 %v5595, 7
      %v5597 = vsub.s32 0, %v5596
      %v5598 = vrot.slane %v5593, %v5597
      %v5599 = vlaneseq
      %v5600 = vshrl.u32 %v5599, 7
      %v5601 = vsub.s32 1, %v5600
      %v5602 = vrot.slane %v5593, %v5601
      %v5605 = vmul.f32 %v5577, %v5598
      %v5606 = vmul.f32 %v5561, %v5602
      %v5607 = vmul.f32 %v5578, %v5598
      %v5608 = vmul.f32 %v5562, %v5602
      %v5609 = vmul.f32 %v5579, %v5598
      %v5610 = vmul.f32 %v5563, %v5602
      %v5611 = vmul.f32 %v5580, %v5598
      %v5612 = vmul.f32 %v5564, %v5602
      %v5613 = vmul.f32 %v5581, %v5598
      %v5614 = vmul.f32 %v5565, %v5602
      %v5615 = vmul.f32 %v5582, %v5598
      %v5616 = vmul.f32 %v5566, %v5602
      %v5617 = vmul.f32 %v5583, %v5598
      %v5618 = vmul.f32 %v5567, %v5602
      %v5619 = vmul.f32 %v5584, %v5598
      %v5620 = vmul.f32 %v5568, %v5602
      %v5621 = vmul.f32 %v5585, %v5598
      %v5622 = vmul.f32 %v5569, %v5602
      %v5623 = vmul.f32 %v5586, %v5598
      %v5624 = vmul.f32 %v5570, %v5602
      %v5625 = vmul.f32 %v5587, %v5598
      %v5626 = vmul.f32 %v5571, %v5602
      %v5627 = vmul.f32 %v5588, %v5598
      %v5628 = vmul.f32 %v5572, %v5602
      %v5629 = vmul.f32 %v5589, %v5598
      %v5630 = vmul.f32 %v5573, %v5602
      %v5631 = vmul.f32 %v5590, %v5598
      %v5632 = vmul.f32 %v5574, %v5602
      %v5633 = vmul.f32 %v5591, %v5598
      %v5634 = vmul.f32 %v5575, %v5602
      %v5635 = vmul.f32 %v5592, %v5598
      %v5636 = vmul.f32 %v5576, %v5602
      %v5637 = vld [vmem:[#allocation3] sm:$0xff]
      %v5638 = vld [vmem:[#allocation3 + $0x8] sm:$0xff]
      %v5639 = vld [vmem:[#allocation3 + $0x10] sm:$0xff]
      %v5640 = vld [vmem:[#allocation3 + $0x18] sm:$0xff]
      %v5641 = vld [vmem:[#allocation3 + $0x20] sm:$0xff]
      %v5642 = vld [vmem:[#allocation3 + $0x28] sm:$0xff]
      %v5643 = vld [vmem:[#allocation3 + $0x30] sm:$0xff]
      %v5644 = vld [vmem:[#allocation3 + $0x38] sm:$0xff]
      %v5645 = vld [vmem:[#allocation3 + $0x40] sm:$0xff]
      %v5646 = vld [vmem:[#allocation3 + $0x48] sm:$0xff]
      %v5647 = vld [vmem:[#allocation3 + $0x50] sm:$0xff]
      %v5648 = vld [vmem:[#allocation3 + $0x58] sm:$0xff]
      %v5649 = vld [vmem:[#allocation3 + $0x60] sm:$0xff]
      %v5650 = vld [vmem:[#allocation3 + $0x68] sm:$0xff]
      %v5651 = vld [vmem:[#allocation3 + $0x70] sm:$0xff]
      %v5652 = vld [vmem:[#allocation3 + $0x78] sm:$0xff]
      %s5653 = scalar_lea.vmem %s3, 64
      %v5654 = vld [vmem:[%s5653] sm:$0xf]
      %v5655 = vld [vmem:[%s5653 + $0x4] sm:$0xf]
      %v5656 = vld [vmem:[%s5653 + $0x8] sm:$0xf]
      %v5657 = vld [vmem:[%s5653 + $0xc] sm:$0xf]
      %v5658 = vld [vmem:[%s5653 + $0x10] sm:$0xf]
      %v5659 = vld [vmem:[%s5653 + $0x14] sm:$0xf]
      %v5660 = vld [vmem:[%s5653 + $0x18] sm:$0xf]
      %v5661 = vld [vmem:[%s5653 + $0x1c] sm:$0xf]
      %v5662 = vpack.c.bf16 %v5607, %v5605
      %v5663 = vpack.c.bf16 %v5608, %v5606
      %v5664 = vpack.c.bf16 %v5611, %v5609
      %v5665 = vpack.c.bf16 %v5612, %v5610
      %v5666 = vpack.c.bf16 %v5615, %v5613
      %v5667 = vpack.c.bf16 %v5616, %v5614
      %v5668 = vpack.c.bf16 %v5619, %v5617
      %v5669 = vpack.c.bf16 %v5620, %v5618
      %v5670 = vpack.c.bf16 %v5623, %v5621
      %v5671 = vpack.c.bf16 %v5624, %v5622
      %v5672 = vpack.c.bf16 %v5627, %v5625
      %v5673 = vpack.c.bf16 %v5628, %v5626
      %v5674 = vpack.c.bf16 %v5631, %v5629
      %v5675 = vpack.c.bf16 %v5632, %v5630
      %v5676 = vpack.c.bf16 %v5635, %v5633
      %v5677 = vpack.c.bf16 %v5636, %v5634
      %v5686 = vunpack.c.l.b16 %v5654
      %v5687 = vunpack.c.l.b16 %v5655
      %v5688 = vunpack.c.l.b16 %v5656
      %v5689 = vunpack.c.l.b16 %v5657
      %v5690 = vunpack.c.l.b16 %v5658
      %v5691 = vunpack.c.l.b16 %v5659
      %v5692 = vunpack.c.l.b16 %v5660
      %v5693 = vunpack.c.l.b16 %v5661
      %v5694 = vpack.c.b16 %v5687, %v5686
      %v5695 = vpack.c.b16 %v5689, %v5688
      %v5696 = vpack.c.b16 %v5691, %v5690
      %v5697 = vpack.c.b16 %v5693, %v5692
      %5702 = vmatprep.subr.bf16.mxu0 %v5677
      %5703 = vmatpush1.bf16.msra.mxu0 %v5676
      %5704 = vmatprep.subr.bf16.mxu0 %v5675
      %5705 = vmatpush1.bf16.msra.mxu0 %v5674
      %5706 = vmatprep.subr.bf16.mxu0 %v5673
      %5707 = vmatpush1.bf16.msra.mxu0 %v5672
      %5708 = vmatprep.subr.bf16.mxu0 %v5671
      %5709 = vmatpush1.bf16.msra.mxu0 %v5670
      %5710 = vmatprep.subr.bf16.mxu0 %v5669
      %5711 = vmatpush1.bf16.msra.mxu0 %v5668
      %5712 = vmatprep.subr.bf16.mxu0 %v5667
      %5713 = vmatpush1.bf16.msra.mxu0 %v5666
      %5714 = vmatprep.subr.bf16.mxu0 %v5665
      %5715 = vmatpush1.bf16.msra.mxu0 %v5664
      %5716 = vmatprep.subr.bf16.mxu0 %v5663
      %5717 = vmatpush1.bf16.msra.mxu0 %v5662
      %5718 = vmatprep.subr.bf16.mxu0 0
      %5719 = vmatpush2.bf16.msra.mxu0 0
      %5720 = vmatprep.subr.bf16.mxu0 0
      %5721 = vmatpush2.bf16.msra.mxu0 0
      %5722 = vmatprep.subr.bf16.mxu0 0
      %5723 = vmatpush2.bf16.msra.mxu0 0
      %5724 = vmatprep.subr.bf16.mxu0 0
      %5725 = vmatpush2.bf16.msra.mxu0 0
      %5726 = vmatprep.subr.bf16.mxu0 0
      %5727 = vmatpush2.bf16.msra.mxu0 0
      %5728 = vmatprep.subr.bf16.mxu0 0
      %5729 = vmatpush2.bf16.msra.mxu0 0
      %5730 = vmatprep.subr.bf16.mxu0 0
      %5731 = vmatpush2.bf16.msra.mxu0 0
      %5732 = vmatprep.subr.bf16.mxu0 0
      %5733 = vmatpush2.bf16.msra.mxu0 0
      %5734 = vmatprep.mubr.bf16.mxu0 0
      %5735 = vmatmul.mubr.bf16.gmra.mxu0 %v5694
      %v5736 = vpop.f32.mrf.mxu0
      %v5737 = vadd.f32 0.0, %v5736
      %v5738 = vpop.f32.mrf.mxu0
      %v5739 = vadd.f32 0.0, %v5738
      %v5740 = vpop.f32.mrf.mxu0
      %v5741 = vadd.f32 0.0, %v5740
      %v5742 = vpop.f32.mrf.mxu0
      %v5743 = vadd.f32 0.0, %v5742
      %5744 = vmatprep.mubr.bf16.mxu0 0
      %5745 = vmatmul.mubr.bf16.gmra.mxu0 %v5695
      %v5746 = vpop.f32.mrf.mxu0
      %v5747 = vadd.f32 0.0, %v5746
      %v5748 = vpop.f32.mrf.mxu0
      %v5749 = vadd.f32 0.0, %v5748
      %v5750 = vpop.f32.mrf.mxu0
      %v5751 = vadd.f32 0.0, %v5750
      %v5752 = vpop.f32.mrf.mxu0
      %v5753 = vadd.f32 0.0, %v5752
      %5754 = vmatprep.mubr.bf16.mxu0 0
      %5755 = vmatmul.mubr.bf16.gmra.mxu0 %v5696
      %v5756 = vpop.f32.mrf.mxu0
      %v5757 = vadd.f32 0.0, %v5756
      %v5758 = vpop.f32.mrf.mxu0
      %v5759 = vadd.f32 0.0, %v5758
      %v5760 = vpop.f32.mrf.mxu0
      %v5761 = vadd.f32 0.0, %v5760
      %v5762 = vpop.f32.mrf.mxu0
      %v5763 = vadd.f32 0.0, %v5762
      %5764 = vmatprep.mubr.bf16.mxu0 0
      %5765 = vmatmul.mubr.bf16.gmra.mxu0 %v5697
      %v5766 = vpop.f32.mrf.mxu0
      %v5767 = vadd.f32 0.0, %v5766
      %v5768 = vpop.f32.mrf.mxu0
      %v5769 = vadd.f32 0.0, %v5768
      %v5770 = vpop.f32.mrf.mxu0
      %v5771 = vadd.f32 0.0, %v5770
      %v5772 = vpop.f32.mrf.mxu0
      %v5773 = vadd.f32 0.0, %v5772
      %5774 = vdwg.mxu0
      %v5775 = vadd.f32 %v5637, %v5737
      %v5776 = vadd.f32 %v5638, %v5739
      %v5777 = vadd.f32 %v5639, %v5741
      %v5778 = vadd.f32 %v5640, %v5743
      %v5779 = vadd.f32 %v5641, %v5747
      %v5780 = vadd.f32 %v5642, %v5749
      %v5781 = vadd.f32 %v5643, %v5751
      %v5782 = vadd.f32 %v5644, %v5753
      %v5783 = vadd.f32 %v5645, %v5757
      %v5784 = vadd.f32 %v5646, %v5759
      %v5785 = vadd.f32 %v5647, %v5761
      %v5786 = vadd.f32 %v5648, %v5763
      %v5787 = vadd.f32 %v5649, %v5767
      %v5788 = vadd.f32 %v5650, %v5769
      %v5789 = vadd.f32 %v5651, %v5771
      %v5790 = vadd.f32 %v5652, %v5773
      %5791 = vst [vmem:[#allocation3] sm:$0xff] %v5775
      %5792 = vst [vmem:[#allocation3 + $0x8] sm:$0xff] %v5776
      %5793 = vst [vmem:[#allocation3 + $0x10] sm:$0xff] %v5777
      %5794 = vst [vmem:[#allocation3 + $0x18] sm:$0xff] %v5778
      %5795 = vst [vmem:[#allocation3 + $0x20] sm:$0xff] %v5779
      %5796 = vst [vmem:[#allocation3 + $0x28] sm:$0xff] %v5780
      %5797 = vst [vmem:[#allocation3 + $0x30] sm:$0xff] %v5781
      %5798 = vst [vmem:[#allocation3 + $0x38] sm:$0xff] %v5782
      %5799 = vst [vmem:[#allocation3 + $0x40] sm:$0xff] %v5783
      %5800 = vst [vmem:[#allocation3 + $0x48] sm:$0xff] %v5784
      %5801 = vst [vmem:[#allocation3 + $0x50] sm:$0xff] %v5785
      %5802 = vst [vmem:[#allocation3 + $0x58] sm:$0xff] %v5786
      %5803 = vst [vmem:[#allocation3 + $0x60] sm:$0xff] %v5787
      %5804 = vst [vmem:[#allocation3 + $0x68] sm:$0xff] %v5788
      %5805 = vst [vmem:[#allocation3 + $0x70] sm:$0xff] %v5789
      %5806 = vst [vmem:[#allocation3 + $0x78] sm:$0xff] %v5790
      %v5807 = vld [vmem:[#allocation2] sm:$0xff]
      %v5808 = vld [vmem:[#allocation2 + $0x8] sm:$0xff]
      %v5809 = vld [vmem:[#allocation2 + $0x10] sm:$0xff]
      %v5810 = vld [vmem:[#allocation2 + $0x18] sm:$0xff]
      %v5811 = vld [vmem:[#allocation2 + $0x20] sm:$0xff]
      %v5812 = vld [vmem:[#allocation2 + $0x28] sm:$0xff]
      %v5813 = vld [vmem:[#allocation2 + $0x30] sm:$0xff]
      %v5814 = vld [vmem:[#allocation2 + $0x38] sm:$0xff]
      %v5815 = vld [vmem:[#allocation2 + $0x40] sm:$0xff]
      %v5816 = vld [vmem:[#allocation2 + $0x48] sm:$0xff]
      %v5817 = vld [vmem:[#allocation2 + $0x50] sm:$0xff]
      %v5818 = vld [vmem:[#allocation2 + $0x58] sm:$0xff]
      %v5819 = vld [vmem:[#allocation2 + $0x60] sm:$0xff]
      %v5820 = vld [vmem:[#allocation2 + $0x68] sm:$0xff]
      %v5821 = vld [vmem:[#allocation2 + $0x70] sm:$0xff]
      %v5822 = vld [vmem:[#allocation2 + $0x78] sm:$0xff]
      %v5823 = vld [vmem:[#allocation2 + $0x80] sm:$0xff]
      %v5824 = vld [vmem:[#allocation2 + $0x88] sm:$0xff]
      %v5825 = vld [vmem:[#allocation2 + $0x90] sm:$0xff]
      %v5826 = vld [vmem:[#allocation2 + $0x98] sm:$0xff]
      %v5827 = vld [vmem:[#allocation2 + $0xa0] sm:$0xff]
      %v5828 = vld [vmem:[#allocation2 + $0xa8] sm:$0xff]
      %v5829 = vld [vmem:[#allocation2 + $0xb0] sm:$0xff]
      %v5830 = vld [vmem:[#allocation2 + $0xb8] sm:$0xff]
      %v5831 = vld [vmem:[#allocation2 + $0xc0] sm:$0xff]
      %v5832 = vld [vmem:[#allocation2 + $0xc8] sm:$0xff]
      %v5833 = vld [vmem:[#allocation2 + $0xd0] sm:$0xff]
      %v5834 = vld [vmem:[#allocation2 + $0xd8] sm:$0xff]
      %v5835 = vld [vmem:[#allocation2 + $0xe0] sm:$0xff]
      %v5836 = vld [vmem:[#allocation2 + $0xe8] sm:$0xff]
      %v5837 = vld [vmem:[#allocation2 + $0xf0] sm:$0xff]
      %v5838 = vld [vmem:[#allocation2 + $0xf8] sm:$0xff]
      %5839 = vrot.lane.b32.xlu0 %v5807, 1
      %v5840 = vpop.permute.xlu0 %5839
      %5841 = vrot.lane.b32.xlu0 %v5809, 1
      %v5842 = vpop.permute.xlu0 %5841
      %5843 = vrot.lane.b32.xlu0 %v5811, 1
      %v5844 = vpop.permute.xlu0 %5843
      %5845 = vrot.lane.b32.xlu0 %v5813, 1
      %v5846 = vpop.permute.xlu0 %5845
      %5847 = vrot.lane.b32.xlu0 %v5815, 1
      %v5848 = vpop.permute.xlu0 %5847
      %5849 = vrot.lane.b32.xlu0 %v5817, 1
      %v5850 = vpop.permute.xlu0 %5849
      %5851 = vrot.lane.b32.xlu0 %v5819, 1
      %v5852 = vpop.permute.xlu0 %5851
      %5853 = vrot.lane.b32.xlu0 %v5821, 1
      %v5854 = vpop.permute.xlu0 %5853
      %5855 = vrot.lane.b32.xlu0 %v5823, 1
      %v5856 = vpop.permute.xlu0 %5855
      %5857 = vrot.lane.b32.xlu0 %v5825, 1
      %v5858 = vpop.permute.xlu0 %5857
      %5859 = vrot.lane.b32.xlu0 %v5827, 1
      %v5860 = vpop.permute.xlu0 %5859
      %5861 = vrot.lane.b32.xlu0 %v5829, 1
      %v5862 = vpop.permute.xlu0 %5861
      %5863 = vrot.lane.b32.xlu0 %v5831, 1
      %v5864 = vpop.permute.xlu0 %5863
      %5865 = vrot.lane.b32.xlu0 %v5833, 1
      %v5866 = vpop.permute.xlu0 %5865
      %5867 = vrot.lane.b32.xlu0 %v5835, 1
      %v5868 = vpop.permute.xlu0 %5867
      %5869 = vrot.lane.b32.xlu0 %v5837, 1
      %v5870 = vpop.permute.xlu0 %5869
      %5871 = vrot.lane.b32.xlu0 %v5808, 1
      %v5872 = vpop.permute.xlu0 %5871
      %5873 = vrot.lane.b32.xlu0 %v5810, 1
      %v5874 = vpop.permute.xlu0 %5873
      %5875 = vrot.lane.b32.xlu0 %v5812, 1
      %v5876 = vpop.permute.xlu0 %5875
      %5877 = vrot.lane.b32.xlu0 %v5814, 1
      %v5878 = vpop.permute.xlu0 %5877
      %5879 = vrot.lane.b32.xlu0 %v5816, 1
      %v5880 = vpop.permute.xlu0 %5879
      %5881 = vrot.lane.b32.xlu0 %v5818, 1
      %v5882 = vpop.permute.xlu0 %5881
      %5883 = vrot.lane.b32.xlu0 %v5820, 1
      %v5884 = vpop.permute.xlu0 %5883
      %5885 = vrot.lane.b32.xlu0 %v5822, 1
      %v5886 = vpop.permute.xlu0 %5885
      %5887 = vrot.lane.b32.xlu0 %v5824, 1
      %v5888 = vpop.permute.xlu0 %5887
      %5889 = vrot.lane.b32.xlu0 %v5826, 1
      %v5890 = vpop.permute.xlu0 %5889
      %5891 = vrot.lane.b32.xlu0 %v5828, 1
      %v5892 = vpop.permute.xlu0 %5891
      %5893 = vrot.lane.b32.xlu0 %v5830, 1
      %v5894 = vpop.permute.xlu0 %5893
      %5895 = vrot.lane.b32.xlu0 %v5832, 1
      %v5896 = vpop.permute.xlu0 %5895
      %5897 = vrot.lane.b32.xlu0 %v5834, 1
      %v5898 = vpop.permute.xlu0 %5897
      %5899 = vrot.lane.b32.xlu0 %v5836, 1
      %v5900 = vpop.permute.xlu0 %5899
      %5901 = vrot.lane.b32.xlu0 %v5838, 1
      %v5902 = vpop.permute.xlu0 %5901
      %v5903 = vsel %vm1884, %v5840, %v5872
      %v5904 = vsel %vm1884, %v5842, %v5874
      %v5905 = vsel %vm1884, %v5844, %v5876
      %v5906 = vsel %vm1884, %v5846, %v5878
      %v5907 = vsel %vm1884, %v5848, %v5880
      %v5908 = vsel %vm1884, %v5850, %v5882
      %v5909 = vsel %vm1884, %v5852, %v5884
      %v5910 = vsel %vm1884, %v5854, %v5886
      %v5911 = vsel %vm1884, %v5856, %v5888
      %v5912 = vsel %vm1884, %v5858, %v5890
      %v5913 = vsel %vm1884, %v5860, %v5892
      %v5914 = vsel %vm1884, %v5862, %v5894
      %v5915 = vsel %vm1884, %v5864, %v5896
      %v5916 = vsel %vm1884, %v5866, %v5898
      %v5917 = vsel %vm1884, %v5868, %v5900
      %v5918 = vsel %vm1884, %v5870, %v5902
      %v5919 = vsel %vm1884, %v5872, %v5840
      %v5920 = vsel %vm1884, %v5874, %v5842
      %v5921 = vsel %vm1884, %v5876, %v5844
      %v5922 = vsel %vm1884, %v5878, %v5846
      %v5923 = vsel %vm1884, %v5880, %v5848
      %v5924 = vsel %vm1884, %v5882, %v5850
      %v5925 = vsel %vm1884, %v5884, %v5852
      %v5926 = vsel %vm1884, %v5886, %v5854
      %v5927 = vsel %vm1884, %v5888, %v5856
      %v5928 = vsel %vm1884, %v5890, %v5858
      %v5929 = vsel %vm1884, %v5892, %v5860
      %v5930 = vsel %vm1884, %v5894, %v5862
      %v5931 = vsel %vm1884, %v5896, %v5864
      %v5932 = vsel %vm1884, %v5898, %v5866
      %v5933 = vsel %vm1884, %v5900, %v5868
      %v5934 = vsel %vm1884, %v5902, %v5870
      %v5935 = vld [vmem:[%s1917] sm:$0x3]
      %v5937 = vlaneseq
      %v5938 = vshrl.u32 %v5937, 7
      %v5939 = vsub.s32 0, %v5938
      %v5940 = vrot.slane %v5935, %v5939
      %v5941 = vlaneseq
      %v5942 = vshrl.u32 %v5941, 7
      %v5943 = vsub.s32 1, %v5942
      %v5944 = vrot.slane %v5935, %v5943
      %v5947 = vmul.f32 %v5919, %v5940
      %v5948 = vmul.f32 %v5903, %v5944
      %v5949 = vmul.f32 %v5920, %v5940
      %v5950 = vmul.f32 %v5904, %v5944
      %v5951 = vmul.f32 %v5921, %v5940
      %v5952 = vmul.f32 %v5905, %v5944
      %v5953 = vmul.f32 %v5922, %v5940
      %v5954 = vmul.f32 %v5906, %v5944
      %v5955 = vmul.f32 %v5923, %v5940
      %v5956 = vmul.f32 %v5907, %v5944
      %v5957 = vmul.f32 %v5924, %v5940
      %v5958 = vmul.f32 %v5908, %v5944
      %v5959 = vmul.f32 %v5925, %v5940
      %v5960 = vmul.f32 %v5909, %v5944
      %v5961 = vmul.f32 %v5926, %v5940
      %v5962 = vmul.f32 %v5910, %v5944
      %v5963 = vmul.f32 %v5927, %v5940
      %v5964 = vmul.f32 %v5911, %v5944
      %v5965 = vmul.f32 %v5928, %v5940
      %v5966 = vmul.f32 %v5912, %v5944
      %v5967 = vmul.f32 %v5929, %v5940
      %v5968 = vmul.f32 %v5913, %v5944
      %v5969 = vmul.f32 %v5930, %v5940
      %v5970 = vmul.f32 %v5914, %v5944
      %v5971 = vmul.f32 %v5931, %v5940
      %v5972 = vmul.f32 %v5915, %v5944
      %v5973 = vmul.f32 %v5932, %v5940
      %v5974 = vmul.f32 %v5916, %v5944
      %v5975 = vmul.f32 %v5933, %v5940
      %v5976 = vmul.f32 %v5917, %v5944
      %v5977 = vmul.f32 %v5934, %v5940
      %v5978 = vmul.f32 %v5918, %v5944
      %v5979 = vld [vmem:[#allocation3] sm:$0xff]
      %v5980 = vld [vmem:[#allocation3 + $0x8] sm:$0xff]
      %v5981 = vld [vmem:[#allocation3 + $0x10] sm:$0xff]
      %v5982 = vld [vmem:[#allocation3 + $0x18] sm:$0xff]
      %v5983 = vld [vmem:[#allocation3 + $0x20] sm:$0xff]
      %v5984 = vld [vmem:[#allocation3 + $0x28] sm:$0xff]
      %v5985 = vld [vmem:[#allocation3 + $0x30] sm:$0xff]
      %v5986 = vld [vmem:[#allocation3 + $0x38] sm:$0xff]
      %v5987 = vld [vmem:[#allocation3 + $0x40] sm:$0xff]
      %v5988 = vld [vmem:[#allocation3 + $0x48] sm:$0xff]
      %v5989 = vld [vmem:[#allocation3 + $0x50] sm:$0xff]
      %v5990 = vld [vmem:[#allocation3 + $0x58] sm:$0xff]
      %v5991 = vld [vmem:[#allocation3 + $0x60] sm:$0xff]
      %v5992 = vld [vmem:[#allocation3 + $0x68] sm:$0xff]
      %v5993 = vld [vmem:[#allocation3 + $0x70] sm:$0xff]
      %v5994 = vld [vmem:[#allocation3 + $0x78] sm:$0xff]
      %s5995 = scalar_lea.vmem %s3, 96
      %v5996 = vld [vmem:[%s5995] sm:$0xf]
      %v5997 = vld [vmem:[%s5995 + $0x4] sm:$0xf]
      %v5998 = vld [vmem:[%s5995 + $0x8] sm:$0xf]
      %v5999 = vld [vmem:[%s5995 + $0xc] sm:$0xf]
      %v6000 = vld [vmem:[%s5995 + $0x10] sm:$0xf]
      %v6001 = vld [vmem:[%s5995 + $0x14] sm:$0xf]
      %v6002 = vld [vmem:[%s5995 + $0x18] sm:$0xf]
      %v6003 = vld [vmem:[%s5995 + $0x1c] sm:$0xf]
      %v6004 = vpack.c.bf16 %v5949, %v5947
      %v6005 = vpack.c.bf16 %v5950, %v5948
      %v6006 = vpack.c.bf16 %v5953, %v5951
      %v6007 = vpack.c.bf16 %v5954, %v5952
      %v6008 = vpack.c.bf16 %v5957, %v5955
      %v6009 = vpack.c.bf16 %v5958, %v5956
      %v6010 = vpack.c.bf16 %v5961, %v5959
      %v6011 = vpack.c.bf16 %v5962, %v5960
      %v6012 = vpack.c.bf16 %v5965, %v5963
      %v6013 = vpack.c.bf16 %v5966, %v5964
      %v6014 = vpack.c.bf16 %v5969, %v5967
      %v6015 = vpack.c.bf16 %v5970, %v5968
      %v6016 = vpack.c.bf16 %v5973, %v5971
      %v6017 = vpack.c.bf16 %v5974, %v5972
      %v6018 = vpack.c.bf16 %v5977, %v5975
      %v6019 = vpack.c.bf16 %v5978, %v5976
      %v6028 = vunpack.c.l.b16 %v5996
      %v6029 = vunpack.c.l.b16 %v5997
      %v6030 = vunpack.c.l.b16 %v5998
      %v6031 = vunpack.c.l.b16 %v5999
      %v6032 = vunpack.c.l.b16 %v6000
      %v6033 = vunpack.c.l.b16 %v6001
      %v6034 = vunpack.c.l.b16 %v6002
      %v6035 = vunpack.c.l.b16 %v6003
      %v6036 = vpack.c.b16 %v6029, %v6028
      %v6037 = vpack.c.b16 %v6031, %v6030
      %v6038 = vpack.c.b16 %v6033, %v6032
      %v6039 = vpack.c.b16 %v6035, %v6034
      %6044 = vmatprep.subr.bf16.mxu0 %v6019
      %6045 = vmatpush1.bf16.msra.mxu0 %v6018
      %6046 = vmatprep.subr.bf16.mxu0 %v6017
      %6047 = vmatpush1.bf16.msra.mxu0 %v6016
      %6048 = vmatprep.subr.bf16.mxu0 %v6015
      %6049 = vmatpush1.bf16.msra.mxu0 %v6014
      %6050 = vmatprep.subr.bf16.mxu0 %v6013
      %6051 = vmatpush1.bf16.msra.mxu0 %v6012
      %6052 = vmatprep.subr.bf16.mxu0 %v6011
      %6053 = vmatpush1.bf16.msra.mxu0 %v6010
      %6054 = vmatprep.subr.bf16.mxu0 %v6009
      %6055 = vmatpush1.bf16.msra.mxu0 %v6008
      %6056 = vmatprep.subr.bf16.mxu0 %v6007
      %6057 = vmatpush1.bf16.msra.mxu0 %v6006
      %6058 = vmatprep.subr.bf16.mxu0 %v6005
      %6059 = vmatpush1.bf16.msra.mxu0 %v6004
      %6060 = vmatprep.subr.bf16.mxu0 0
      %6061 = vmatpush2.bf16.msra.mxu0 0
      %6062 = vmatprep.subr.bf16.mxu0 0
      %6063 = vmatpush2.bf16.msra.mxu0 0
      %6064 = vmatprep.subr.bf16.mxu0 0
      %6065 = vmatpush2.bf16.msra.mxu0 0
      %6066 = vmatprep.subr.bf16.mxu0 0
      %6067 = vmatpush2.bf16.msra.mxu0 0
      %6068 = vmatprep.subr.bf16.mxu0 0
      %6069 = vmatpush2.bf16.msra.mxu0 0
      %6070 = vmatprep.subr.bf16.mxu0 0
      %6071 = vmatpush2.bf16.msra.mxu0 0
      %6072 = vmatprep.subr.bf16.mxu0 0
      %6073 = vmatpush2.bf16.msra.mxu0 0
      %6074 = vmatprep.subr.bf16.mxu0 0
      %6075 = vmatpush2.bf16.msra.mxu0 0
      %6076 = vmatprep.mubr.bf16.mxu0 0
      %6077 = vmatmul.mubr.bf16.gmra.mxu0 %v6036
      %v6078 = vpop.f32.mrf.mxu0
      %v6079 = vadd.f32 0.0, %v6078
      %v6080 = vpop.f32.mrf.mxu0
      %v6081 = vadd.f32 0.0, %v6080
      %v6082 = vpop.f32.mrf.mxu0
      %v6083 = vadd.f32 0.0, %v6082
      %v6084 = vpop.f32.mrf.mxu0
      %v6085 = vadd.f32 0.0, %v6084
      %6086 = vmatprep.mubr.bf16.mxu0 0
      %6087 = vmatmul.mubr.bf16.gmra.mxu0 %v6037
      %v6088 = vpop.f32.mrf.mxu0
      %v6089 = vadd.f32 0.0, %v6088
      %v6090 = vpop.f32.mrf.mxu0
      %v6091 = vadd.f32 0.0, %v6090
      %v6092 = vpop.f32.mrf.mxu0
      %v6093 = vadd.f32 0.0, %v6092
      %v6094 = vpop.f32.mrf.mxu0
      %v6095 = vadd.f32 0.0, %v6094
      %6096 = vmatprep.mubr.bf16.mxu0 0
      %6097 = vmatmul.mubr.bf16.gmra.mxu0 %v6038
      %v6098 = vpop.f32.mrf.mxu0
      %v6099 = vadd.f32 0.0, %v6098
      %v6100 = vpop.f32.mrf.mxu0
      %v6101 = vadd.f32 0.0, %v6100
      %v6102 = vpop.f32.mrf.mxu0
      %v6103 = vadd.f32 0.0, %v6102
      %v6104 = vpop.f32.mrf.mxu0
      %v6105 = vadd.f32 0.0, %v6104
      %6106 = vmatprep.mubr.bf16.mxu0 0
      %6107 = vmatmul.mubr.bf16.gmra.mxu0 %v6039
      %v6108 = vpop.f32.mrf.mxu0
      %v6109 = vadd.f32 0.0, %v6108
      %v6110 = vpop.f32.mrf.mxu0
      %v6111 = vadd.f32 0.0, %v6110
      %v6112 = vpop.f32.mrf.mxu0
      %v6113 = vadd.f32 0.0, %v6112
      %v6114 = vpop.f32.mrf.mxu0
      %v6115 = vadd.f32 0.0, %v6114
      %6116 = vdwg.mxu0
      %v6117 = vadd.f32 %v5979, %v6079
      %v6118 = vadd.f32 %v5980, %v6081
      %v6119 = vadd.f32 %v5981, %v6083
      %v6120 = vadd.f32 %v5982, %v6085
      %v6121 = vadd.f32 %v5983, %v6089
      %v6122 = vadd.f32 %v5984, %v6091
      %v6123 = vadd.f32 %v5985, %v6093
      %v6124 = vadd.f32 %v5986, %v6095
      %v6125 = vadd.f32 %v5987, %v6099
      %v6126 = vadd.f32 %v5988, %v6101
      %v6127 = vadd.f32 %v5989, %v6103
      %v6128 = vadd.f32 %v5990, %v6105
      %v6129 = vadd.f32 %v5991, %v6109
      %v6130 = vadd.f32 %v5992, %v6111
      %v6131 = vadd.f32 %v5993, %v6113
      %v6132 = vadd.f32 %v5994, %v6115
      %6133 = vst [vmem:[#allocation3] sm:$0xff] %v6117
      %6134 = vst [vmem:[#allocation3 + $0x8] sm:$0xff] %v6118
      %6135 = vst [vmem:[#allocation3 + $0x10] sm:$0xff] %v6119
      %6136 = vst [vmem:[#allocation3 + $0x18] sm:$0xff] %v6120
      %6137 = vst [vmem:[#allocation3 + $0x20] sm:$0xff] %v6121
      %6138 = vst [vmem:[#allocation3 + $0x28] sm:$0xff] %v6122
      %6139 = vst [vmem:[#allocation3 + $0x30] sm:$0xff] %v6123
      %6140 = vst [vmem:[#allocation3 + $0x38] sm:$0xff] %v6124
      %6141 = vst [vmem:[#allocation3 + $0x40] sm:$0xff] %v6125
      %6142 = vst [vmem:[#allocation3 + $0x48] sm:$0xff] %v6126
      %6143 = vst [vmem:[#allocation3 + $0x50] sm:$0xff] %v6127
      %6144 = vst [vmem:[#allocation3 + $0x58] sm:$0xff] %v6128
      %6145 = vst [vmem:[#allocation3 + $0x60] sm:$0xff] %v6129
      %6146 = vst [vmem:[#allocation3 + $0x68] sm:$0xff] %v6130
      %6147 = vst [vmem:[#allocation3 + $0x70] sm:$0xff] %v6131
      %6148 = vst [vmem:[#allocation3 + $0x78] sm:$0xff] %v6132
      %v6149 = vld [vmem:[#allocation2] sm:$0xff]
      %v6150 = vld [vmem:[#allocation2 + $0x8] sm:$0xff]
      %v6151 = vld [vmem:[#allocation2 + $0x10] sm:$0xff]
      %v6152 = vld [vmem:[#allocation2 + $0x18] sm:$0xff]
      %v6153 = vld [vmem:[#allocation2 + $0x20] sm:$0xff]
      %v6154 = vld [vmem:[#allocation2 + $0x28] sm:$0xff]
      %v6155 = vld [vmem:[#allocation2 + $0x30] sm:$0xff]
      %v6156 = vld [vmem:[#allocation2 + $0x38] sm:$0xff]
      %v6157 = vld [vmem:[#allocation2 + $0x40] sm:$0xff]
      %v6158 = vld [vmem:[#allocation2 + $0x48] sm:$0xff]
      %v6159 = vld [vmem:[#allocation2 + $0x50] sm:$0xff]
      %v6160 = vld [vmem:[#allocation2 + $0x58] sm:$0xff]
      %v6161 = vld [vmem:[#allocation2 + $0x60] sm:$0xff]
      %v6162 = vld [vmem:[#allocation2 + $0x68] sm:$0xff]
      %v6163 = vld [vmem:[#allocation2 + $0x70] sm:$0xff]
      %v6164 = vld [vmem:[#allocation2 + $0x78] sm:$0xff]
      %v6165 = vld [vmem:[#allocation2 + $0x80] sm:$0xff]
      %v6166 = vld [vmem:[#allocation2 + $0x88] sm:$0xff]
      %v6167 = vld [vmem:[#allocation2 + $0x90] sm:$0xff]
      %v6168 = vld [vmem:[#allocation2 + $0x98] sm:$0xff]
      %v6169 = vld [vmem:[#allocation2 + $0xa0] sm:$0xff]
      %v6170 = vld [vmem:[#allocation2 + $0xa8] sm:$0xff]
      %v6171 = vld [vmem:[#allocation2 + $0xb0] sm:$0xff]
      %v6172 = vld [vmem:[#allocation2 + $0xb8] sm:$0xff]
      %v6173 = vld [vmem:[#allocation2 + $0xc0] sm:$0xff]
      %v6174 = vld [vmem:[#allocation2 + $0xc8] sm:$0xff]
      %v6175 = vld [vmem:[#allocation2 + $0xd0] sm:$0xff]
      %v6176 = vld [vmem:[#allocation2 + $0xd8] sm:$0xff]
      %v6177 = vld [vmem:[#allocation2 + $0xe0] sm:$0xff]
      %v6178 = vld [vmem:[#allocation2 + $0xe8] sm:$0xff]
      %v6179 = vld [vmem:[#allocation2 + $0xf0] sm:$0xff]
      %v6180 = vld [vmem:[#allocation2 + $0xf8] sm:$0xff]
      %v6181 = vld [vmem:[#allocation3] sm:$0xff]
      %v6182 = vld [vmem:[#allocation3 + $0x8] sm:$0xff]
      %v6183 = vld [vmem:[#allocation3 + $0x10] sm:$0xff]
      %v6184 = vld [vmem:[#allocation3 + $0x18] sm:$0xff]
      %v6185 = vld [vmem:[#allocation3 + $0x20] sm:$0xff]
      %v6186 = vld [vmem:[#allocation3 + $0x28] sm:$0xff]
      %v6187 = vld [vmem:[#allocation3 + $0x30] sm:$0xff]
      %v6188 = vld [vmem:[#allocation3 + $0x38] sm:$0xff]
      %v6189 = vld [vmem:[#allocation3 + $0x40] sm:$0xff]
      %v6190 = vld [vmem:[#allocation3 + $0x48] sm:$0xff]
      %v6191 = vld [vmem:[#allocation3 + $0x50] sm:$0xff]
      %v6192 = vld [vmem:[#allocation3 + $0x58] sm:$0xff]
      %v6193 = vld [vmem:[#allocation3 + $0x60] sm:$0xff]
      %v6194 = vld [vmem:[#allocation3 + $0x68] sm:$0xff]
      %v6195 = vld [vmem:[#allocation3 + $0x70] sm:$0xff]
      %v6196 = vld [vmem:[#allocation3 + $0x78] sm:$0xff]
      %s6197 = scalar_lea.vmem %s3, 128
      %v6198 = vld [vmem:[%s6197] sm:$0xf]
      %v6199 = vld [vmem:[%s6197 + $0x4] sm:$0xf]
      %v6200 = vld [vmem:[%s6197 + $0x8] sm:$0xf]
      %v6201 = vld [vmem:[%s6197 + $0xc] sm:$0xf]
      %v6202 = vld [vmem:[%s6197 + $0x10] sm:$0xf]
      %v6203 = vld [vmem:[%s6197 + $0x14] sm:$0xf]
      %v6204 = vld [vmem:[%s6197 + $0x18] sm:$0xf]
      %v6205 = vld [vmem:[%s6197 + $0x1c] sm:$0xf]
      %v6206 = vpack.c.bf16 %v6151, %v6149
      %v6207 = vpack.c.bf16 %v6152, %v6150
      %v6208 = vpack.c.bf16 %v6155, %v6153
      %v6209 = vpack.c.bf16 %v6156, %v6154
      %v6210 = vpack.c.bf16 %v6159, %v6157
      %v6211 = vpack.c.bf16 %v6160, %v6158
      %v6212 = vpack.c.bf16 %v6163, %v6161
      %v6213 = vpack.c.bf16 %v6164, %v6162
      %v6214 = vpack.c.bf16 %v6167, %v6165
      %v6215 = vpack.c.bf16 %v6168, %v6166
      %v6216 = vpack.c.bf16 %v6171, %v6169
      %v6217 = vpack.c.bf16 %v6172, %v6170
      %v6218 = vpack.c.bf16 %v6175, %v6173
      %v6219 = vpack.c.bf16 %v6176, %v6174
      %v6220 = vpack.c.bf16 %v6179, %v6177
      %v6221 = vpack.c.bf16 %v6180, %v6178
      %v6230 = vunpack.c.l.b16 %v6198
      %v6231 = vunpack.c.l.b16 %v6199
      %v6232 = vunpack.c.l.b16 %v6200
      %v6233 = vunpack.c.l.b16 %v6201
      %v6234 = vunpack.c.l.b16 %v6202
      %v6235 = vunpack.c.l.b16 %v6203
      %v6236 = vunpack.c.l.b16 %v6204
      %v6237 = vunpack.c.l.b16 %v6205
      %v6238 = vpack.c.b16 %v6231, %v6230
      %v6239 = vpack.c.b16 %v6233, %v6232
      %v6240 = vpack.c.b16 %v6235, %v6234
      %v6241 = vpack.c.b16 %v6237, %v6236
      %6246 = vmatprep.subr.bf16.mxu0 %v6221
      %6247 = vmatpush1.bf16.msra.mxu0 %v6220
      %6248 = vmatprep.subr.bf16.mxu0 %v6219
      %6249 = vmatpush1.bf16.msra.mxu0 %v6218
      %6250 = vmatprep.subr.bf16.mxu0 %v6217
      %6251 = vmatpush1.bf16.msra.mxu0 %v6216
      %6252 = vmatprep.subr.bf16.mxu0 %v6215
      %6253 = vmatpush1.bf16.msra.mxu0 %v6214
      %6254 = vmatprep.subr.bf16.mxu0 %v6213
      %6255 = vmatpush1.bf16.msra.mxu0 %v6212
      %6256 = vmatprep.subr.bf16.mxu0 %v6211
      %6257 = vmatpush1.bf16.msra.mxu0 %v6210
      %6258 = vmatprep.subr.bf16.mxu0 %v6209
      %6259 = vmatpush1.bf16.msra.mxu0 %v6208
      %6260 = vmatprep.subr.bf16.mxu0 %v6207
      %6261 = vmatpush1.bf16.msra.mxu0 %v6206
      %6262 = vmatprep.subr.bf16.mxu0 0
      %6263 = vmatpush2.bf16.msra.mxu0 0
      %6264 = vmatprep.subr.bf16.mxu0 0
      %6265 = vmatpush2.bf16.msra.mxu0 0
      %6266 = vmatprep.subr.bf16.mxu0 0
      %6267 = vmatpush2.bf16.msra.mxu0 0
      %6268 = vmatprep.subr.bf16.mxu0 0
      %6269 = vmatpush2.bf16.msra.mxu0 0
      %6270 = vmatprep.subr.bf16.mxu0 0
      %6271 = vmatpush2.bf16.msra.mxu0 0
      %6272 = vmatprep.subr.bf16.mxu0 0
      %6273 = vmatpush2.bf16.msra.mxu0 0
      %6274 = vmatprep.subr.bf16.mxu0 0
      %6275 = vmatpush2.bf16.msra.mxu0 0
      %6276 = vmatprep.subr.bf16.mxu0 0
      %6277 = vmatpush2.bf16.msra.mxu0 0
      %6278 = vmatprep.mubr.bf16.mxu0 0
      %6279 = vmatmul.mubr.bf16.gmra.mxu0 %v6238
      %v6280 = vpop.f32.mrf.mxu0
      %v6281 = vadd.f32 0.0, %v6280
      %v6282 = vpop.f32.mrf.mxu0
      %v6283 = vadd.f32 0.0, %v6282
      %v6284 = vpop.f32.mrf.mxu0
      %v6285 = vadd.f32 0.0, %v6284
      %v6286 = vpop.f32.mrf.mxu0
      %v6287 = vadd.f32 0.0, %v6286
      %6288 = vmatprep.mubr.bf16.mxu0 0
      %6289 = vmatmul.mubr.bf16.gmra.mxu0 %v6239
      %v6290 = vpop.f32.mrf.mxu0
      %v6291 = vadd.f32 0.0, %v6290
      %v6292 = vpop.f32.mrf.mxu0
      %v6293 = vadd.f32 0.0, %v6292
      %v6294 = vpop.f32.mrf.mxu0
      %v6295 = vadd.f32 0.0, %v6294
      %v6296 = vpop.f32.mrf.mxu0
      %v6297 = vadd.f32 0.0, %v6296
      %6298 = vmatprep.mubr.bf16.mxu0 0
      %6299 = vmatmul.mubr.bf16.gmra.mxu0 %v6240
      %v6300 = vpop.f32.mrf.mxu0
      %v6301 = vadd.f32 0.0, %v6300
      %v6302 = vpop.f32.mrf.mxu0
      %v6303 = vadd.f32 0.0, %v6302
      %v6304 = vpop.f32.mrf.mxu0
      %v6305 = vadd.f32 0.0, %v6304
      %v6306 = vpop.f32.mrf.mxu0
      %v6307 = vadd.f32 0.0, %v6306
      %6308 = vmatprep.mubr.bf16.mxu0 0
      %6309 = vmatmul.mubr.bf16.gmra.mxu0 %v6241
      %v6310 = vpop.f32.mrf.mxu0
      %v6311 = vadd.f32 0.0, %v6310
      %v6312 = vpop.f32.mrf.mxu0
      %v6313 = vadd.f32 0.0, %v6312
      %v6314 = vpop.f32.mrf.mxu0
      %v6315 = vadd.f32 0.0, %v6314
      %v6316 = vpop.f32.mrf.mxu0
      %v6317 = vadd.f32 0.0, %v6316
      %6318 = vdwg.mxu0
      %v6319 = vadd.f32 %v6181, %v6281
      %v6320 = vadd.f32 %v6182, %v6283
      %v6321 = vadd.f32 %v6183, %v6285
      %v6322 = vadd.f32 %v6184, %v6287
      %v6323 = vadd.f32 %v6185, %v6291
      %v6324 = vadd.f32 %v6186, %v6293
      %v6325 = vadd.f32 %v6187, %v6295
      %v6326 = vadd.f32 %v6188, %v6297
      %v6327 = vadd.f32 %v6189, %v6301
      %v6328 = vadd.f32 %v6190, %v6303
      %v6329 = vadd.f32 %v6191, %v6305
      %v6330 = vadd.f32 %v6192, %v6307
      %v6331 = vadd.f32 %v6193, %v6311
      %v6332 = vadd.f32 %v6194, %v6313
      %v6333 = vadd.f32 %v6195, %v6315
      %v6334 = vadd.f32 %v6196, %v6317
      %6335 = vst [vmem:[#allocation3] sm:$0xff] %v6319
      %6336 = vst [vmem:[#allocation3 + $0x8] sm:$0xff] %v6320
      %6337 = vst [vmem:[#allocation3 + $0x10] sm:$0xff] %v6321
      %6338 = vst [vmem:[#allocation3 + $0x18] sm:$0xff] %v6322
      %6339 = vst [vmem:[#allocation3 + $0x20] sm:$0xff] %v6323
      %6340 = vst [vmem:[#allocation3 + $0x28] sm:$0xff] %v6324
      %6341 = vst [vmem:[#allocation3 + $0x30] sm:$0xff] %v6325
      %6342 = vst [vmem:[#allocation3 + $0x38] sm:$0xff] %v6326
      %6343 = vst [vmem:[#allocation3 + $0x40] sm:$0xff] %v6327
      %6344 = vst [vmem:[#allocation3 + $0x48] sm:$0xff] %v6328
      %6345 = vst [vmem:[#allocation3 + $0x50] sm:$0xff] %v6329
      %6346 = vst [vmem:[#allocation3 + $0x58] sm:$0xff] %v6330
      %6347 = vst [vmem:[#allocation3 + $0x60] sm:$0xff] %v6331
      %6348 = vst [vmem:[#allocation3 + $0x68] sm:$0xff] %v6332
      %6349 = vst [vmem:[#allocation3 + $0x70] sm:$0xff] %v6333
      %6350 = vst [vmem:[#allocation3 + $0x78] sm:$0xff] %v6334
      %v6351 = vld [vmem:[#allocation2] sm:$0xff]
      %v6352 = vld [vmem:[#allocation2 + $0x8] sm:$0xff]
      %v6353 = vld [vmem:[#allocation2 + $0x10] sm:$0xff]
      %v6354 = vld [vmem:[#allocation2 + $0x18] sm:$0xff]
      %v6355 = vld [vmem:[#allocation2 + $0x20] sm:$0xff]
      %v6356 = vld [vmem:[#allocation2 + $0x28] sm:$0xff]
      %v6357 = vld [vmem:[#allocation2 + $0x30] sm:$0xff]
      %v6358 = vld [vmem:[#allocation2 + $0x38] sm:$0xff]
      %v6359 = vld [vmem:[#allocation2 + $0x40] sm:$0xff]
      %v6360 = vld [vmem:[#allocation2 + $0x48] sm:$0xff]
      %v6361 = vld [vmem:[#allocation2 + $0x50] sm:$0xff]
      %v6362 = vld [vmem:[#allocation2 + $0x58] sm:$0xff]
      %v6363 = vld [vmem:[#allocation2 + $0x60] sm:$0xff]
      %v6364 = vld [vmem:[#allocation2 + $0x68] sm:$0xff]
      %v6365 = vld [vmem:[#allocation2 + $0x70] sm:$0xff]
      %v6366 = vld [vmem:[#allocation2 + $0x78] sm:$0xff]
      %v6367 = vld [vmem:[#allocation2 + $0x80] sm:$0xff]
      %v6368 = vld [vmem:[#allocation2 + $0x88] sm:$0xff]
      %v6369 = vld [vmem:[#allocation2 + $0x90] sm:$0xff]
      %v6370 = vld [vmem:[#allocation2 + $0x98] sm:$0xff]
      %v6371 = vld [vmem:[#allocation2 + $0xa0] sm:$0xff]
      %v6372 = vld [vmem:[#allocation2 + $0xa8] sm:$0xff]
      %v6373 = vld [vmem:[#allocation2 + $0xb0] sm:$0xff]
      %v6374 = vld [vmem:[#allocation2 + $0xb8] sm:$0xff]
      %v6375 = vld [vmem:[#allocation2 + $0xc0] sm:$0xff]
      %v6376 = vld [vmem:[#allocation2 + $0xc8] sm:$0xff]
      %v6377 = vld [vmem:[#allocation2 + $0xd0] sm:$0xff]
      %v6378 = vld [vmem:[#allocation2 + $0xd8] sm:$0xff]
      %v6379 = vld [vmem:[#allocation2 + $0xe0] sm:$0xff]
      %v6380 = vld [vmem:[#allocation2 + $0xe8] sm:$0xff]
      %v6381 = vld [vmem:[#allocation2 + $0xf0] sm:$0xff]
      %v6382 = vld [vmem:[#allocation2 + $0xf8] sm:$0xff]
      %6383 = vrot.lane.b32.xlu0 %v6351, 127
      %v6384 = vpop.permute.xlu0 %6383
      %6385 = vrot.lane.b32.xlu0 %v6353, 127
      %v6386 = vpop.permute.xlu0 %6385
      %6387 = vrot.lane.b32.xlu0 %v6355, 127
      %v6388 = vpop.permute.xlu0 %6387
      %6389 = vrot.lane.b32.xlu0 %v6357, 127
      %v6390 = vpop.permute.xlu0 %6389
      %6391 = vrot.lane.b32.xlu0 %v6359, 127
      %v6392 = vpop.permute.xlu0 %6391
      %6393 = vrot.lane.b32.xlu0 %v6361, 127
      %v6394 = vpop.permute.xlu0 %6393
      %6395 = vrot.lane.b32.xlu0 %v6363, 127
      %v6396 = vpop.permute.xlu0 %6395
      %6397 = vrot.lane.b32.xlu0 %v6365, 127
      %v6398 = vpop.permute.xlu0 %6397
      %6399 = vrot.lane.b32.xlu0 %v6367, 127
      %v6400 = vpop.permute.xlu0 %6399
      %6401 = vrot.lane.b32.xlu0 %v6369, 127
      %v6402 = vpop.permute.xlu0 %6401
      %6403 = vrot.lane.b32.xlu0 %v6371, 127
      %v6404 = vpop.permute.xlu0 %6403
      %6405 = vrot.lane.b32.xlu0 %v6373, 127
      %v6406 = vpop.permute.xlu0 %6405
      %6407 = vrot.lane.b32.xlu0 %v6375, 127
      %v6408 = vpop.permute.xlu0 %6407
      %6409 = vrot.lane.b32.xlu0 %v6377, 127
      %v6410 = vpop.permute.xlu0 %6409
      %6411 = vrot.lane.b32.xlu0 %v6379, 127
      %v6412 = vpop.permute.xlu0 %6411
      %6413 = vrot.lane.b32.xlu0 %v6381, 127
      %v6414 = vpop.permute.xlu0 %6413
      %6415 = vrot.lane.b32.xlu0 %v6352, 127
      %v6416 = vpop.permute.xlu0 %6415
      %6417 = vrot.lane.b32.xlu0 %v6354, 127
      %v6418 = vpop.permute.xlu0 %6417
      %6419 = vrot.lane.b32.xlu0 %v6356, 127
      %v6420 = vpop.permute.xlu0 %6419
      %6421 = vrot.lane.b32.xlu0 %v6358, 127
      %v6422 = vpop.permute.xlu0 %6421
      %6423 = vrot.lane.b32.xlu0 %v6360, 127
      %v6424 = vpop.permute.xlu0 %6423
      %6425 = vrot.lane.b32.xlu0 %v6362, 127
      %v6426 = vpop.permute.xlu0 %6425
      %6427 = vrot.lane.b32.xlu0 %v6364, 127
      %v6428 = vpop.permute.xlu0 %6427
      %6429 = vrot.lane.b32.xlu0 %v6366, 127
      %v6430 = vpop.permute.xlu0 %6429
      %6431 = vrot.lane.b32.xlu0 %v6368, 127
      %v6432 = vpop.permute.xlu0 %6431
      %6433 = vrot.lane.b32.xlu0 %v6370, 127
      %v6434 = vpop.permute.xlu0 %6433
      %6435 = vrot.lane.b32.xlu0 %v6372, 127
      %v6436 = vpop.permute.xlu0 %6435
      %6437 = vrot.lane.b32.xlu0 %v6374, 127
      %v6438 = vpop.permute.xlu0 %6437
      %6439 = vrot.lane.b32.xlu0 %v6376, 127
      %v6440 = vpop.permute.xlu0 %6439
      %6441 = vrot.lane.b32.xlu0 %v6378, 127
      %v6442 = vpop.permute.xlu0 %6441
      %6443 = vrot.lane.b32.xlu0 %v6380, 127
      %v6444 = vpop.permute.xlu0 %6443
      %6445 = vrot.lane.b32.xlu0 %v6382, 127
      %v6446 = vpop.permute.xlu0 %6445
      %v6447 = vsel %vm2734, %v6384, %v6416
      %v6448 = vsel %vm2734, %v6386, %v6418
      %v6449 = vsel %vm2734, %v6388, %v6420
      %v6450 = vsel %vm2734, %v6390, %v6422
      %v6451 = vsel %vm2734, %v6392, %v6424
      %v6452 = vsel %vm2734, %v6394, %v6426
      %v6453 = vsel %vm2734, %v6396, %v6428
      %v6454 = vsel %vm2734, %v6398, %v6430
      %v6455 = vsel %vm2734, %v6400, %v6432
      %v6456 = vsel %vm2734, %v6402, %v6434
      %v6457 = vsel %vm2734, %v6404, %v6436
      %v6458 = vsel %vm2734, %v6406, %v6438
      %v6459 = vsel %vm2734, %v6408, %v6440
      %v6460 = vsel %vm2734, %v6410, %v6442
      %v6461 = vsel %vm2734, %v6412, %v6444
      %v6462 = vsel %vm2734, %v6414, %v6446
      %v6463 = vsel %vm2734, %v6416, %v6384
      %v6464 = vsel %vm2734, %v6418, %v6386
      %v6465 = vsel %vm2734, %v6420, %v6388
      %v6466 = vsel %vm2734, %v6422, %v6390
      %v6467 = vsel %vm2734, %v6424, %v6392
      %v6468 = vsel %vm2734, %v6426, %v6394
      %v6469 = vsel %vm2734, %v6428, %v6396
      %v6470 = vsel %vm2734, %v6430, %v6398
      %v6471 = vsel %vm2734, %v6432, %v6400
      %v6472 = vsel %vm2734, %v6434, %v6402
      %v6473 = vsel %vm2734, %v6436, %v6404
      %v6474 = vsel %vm2734, %v6438, %v6406
      %v6475 = vsel %vm2734, %v6440, %v6408
      %v6476 = vsel %vm2734, %v6442, %v6410
      %v6477 = vsel %vm2734, %v6444, %v6412
      %v6478 = vsel %vm2734, %v6446, %v6414
      %v6479 = vld [vmem:[%s2767] sm:$0x3]
      %v6481 = vlaneseq
      %v6482 = vshrl.u32 %v6481, 7
      %v6483 = vsub.s32 0, %v6482
      %v6484 = vrot.slane %v6479, %v6483
      %v6485 = vlaneseq
      %v6486 = vshrl.u32 %v6485, 7
      %v6487 = vsub.s32 1, %v6486
      %v6488 = vrot.slane %v6479, %v6487
      %v6491 = vmul.f32 %v6447, %v6484
      %v6492 = vmul.f32 %v6463, %v6488
      %v6493 = vmul.f32 %v6448, %v6484
      %v6494 = vmul.f32 %v6464, %v6488
      %v6495 = vmul.f32 %v6449, %v6484
      %v6496 = vmul.f32 %v6465, %v6488
      %v6497 = vmul.f32 %v6450, %v6484
      %v6498 = vmul.f32 %v6466, %v6488
      %v6499 = vmul.f32 %v6451, %v6484
      %v6500 = vmul.f32 %v6467, %v6488
      %v6501 = vmul.f32 %v6452, %v6484
      %v6502 = vmul.f32 %v6468, %v6488
      %v6503 = vmul.f32 %v6453, %v6484
      %v6504 = vmul.f32 %v6469, %v6488
      %v6505 = vmul.f32 %v6454, %v6484
      %v6506 = vmul.f32 %v6470, %v6488
      %v6507 = vmul.f32 %v6455, %v6484
      %v6508 = vmul.f32 %v6471, %v6488
      %v6509 = vmul.f32 %v6456, %v6484
      %v6510 = vmul.f32 %v6472, %v6488
      %v6511 = vmul.f32 %v6457, %v6484
      %v6512 = vmul.f32 %v6473, %v6488
      %v6513 = vmul.f32 %v6458, %v6484
      %v6514 = vmul.f32 %v6474, %v6488
      %v6515 = vmul.f32 %v6459, %v6484
      %v6516 = vmul.f32 %v6475, %v6488
      %v6517 = vmul.f32 %v6460, %v6484
      %v6518 = vmul.f32 %v6476, %v6488
      %v6519 = vmul.f32 %v6461, %v6484
      %v6520 = vmul.f32 %v6477, %v6488
      %v6521 = vmul.f32 %v6462, %v6484
      %v6522 = vmul.f32 %v6478, %v6488
      %v6523 = vld [vmem:[#allocation3] sm:$0xff]
      %v6524 = vld [vmem:[#allocation3 + $0x8] sm:$0xff]
      %v6525 = vld [vmem:[#allocation3 + $0x10] sm:$0xff]
      %v6526 = vld [vmem:[#allocation3 + $0x18] sm:$0xff]
      %v6527 = vld [vmem:[#allocation3 + $0x20] sm:$0xff]
      %v6528 = vld [vmem:[#allocation3 + $0x28] sm:$0xff]
      %v6529 = vld [vmem:[#allocation3 + $0x30] sm:$0xff]
      %v6530 = vld [vmem:[#allocation3 + $0x38] sm:$0xff]
      %v6531 = vld [vmem:[#allocation3 + $0x40] sm:$0xff]
      %v6532 = vld [vmem:[#allocation3 + $0x48] sm:$0xff]
      %v6533 = vld [vmem:[#allocation3 + $0x50] sm:$0xff]
      %v6534 = vld [vmem:[#allocation3 + $0x58] sm:$0xff]
      %v6535 = vld [vmem:[#allocation3 + $0x60] sm:$0xff]
      %v6536 = vld [vmem:[#allocation3 + $0x68] sm:$0xff]
      %v6537 = vld [vmem:[#allocation3 + $0x70] sm:$0xff]
      %v6538 = vld [vmem:[#allocation3 + $0x78] sm:$0xff]
      %s6539 = scalar_lea.vmem %s3, 160
      %v6540 = vld [vmem:[%s6539] sm:$0xf]
      %v6541 = vld [vmem:[%s6539 + $0x4] sm:$0xf]
      %v6542 = vld [vmem:[%s6539 + $0x8] sm:$0xf]
      %v6543 = vld [vmem:[%s6539 + $0xc] sm:$0xf]
      %v6544 = vld [vmem:[%s6539 + $0x10] sm:$0xf]
      %v6545 = vld [vmem:[%s6539 + $0x14] sm:$0xf]
      %v6546 = vld [vmem:[%s6539 + $0x18] sm:$0xf]
      %v6547 = vld [vmem:[%s6539 + $0x1c] sm:$0xf]
      %v6548 = vpack.c.bf16 %v6493, %v6491
      %v6549 = vpack.c.bf16 %v6494, %v6492
      %v6550 = vpack.c.bf16 %v6497, %v6495
      %v6551 = vpack.c.bf16 %v6498, %v6496
      %v6552 = vpack.c.bf16 %v6501, %v6499
      %v6553 = vpack.c.bf16 %v6502, %v6500
      %v6554 = vpack.c.bf16 %v6505, %v6503
      %v6555 = vpack.c.bf16 %v6506, %v6504
      %v6556 = vpack.c.bf16 %v6509, %v6507
      %v6557 = vpack.c.bf16 %v6510, %v6508
      %v6558 = vpack.c.bf16 %v6513, %v6511
      %v6559 = vpack.c.bf16 %v6514, %v6512
      %v6560 = vpack.c.bf16 %v6517, %v6515
      %v6561 = vpack.c.bf16 %v6518, %v6516
      %v6562 = vpack.c.bf16 %v6521, %v6519
      %v6563 = vpack.c.bf16 %v6522, %v6520
      %v6572 = vunpack.c.l.b16 %v6540
      %v6573 = vunpack.c.l.b16 %v6541
      %v6574 = vunpack.c.l.b16 %v6542
      %v6575 = vunpack.c.l.b16 %v6543
      %v6576 = vunpack.c.l.b16 %v6544
      %v6577 = vunpack.c.l.b16 %v6545
      %v6578 = vunpack.c.l.b16 %v6546
      %v6579 = vunpack.c.l.b16 %v6547
      %v6580 = vpack.c.b16 %v6573, %v6572
      %v6581 = vpack.c.b16 %v6575, %v6574
      %v6582 = vpack.c.b16 %v6577, %v6576
      %v6583 = vpack.c.b16 %v6579, %v6578
      %6588 = vmatprep.subr.bf16.mxu0 %v6563
      %6589 = vmatpush1.bf16.msra.mxu0 %v6562
      %6590 = vmatprep.subr.bf16.mxu0 %v6561
      %6591 = vmatpush1.bf16.msra.mxu0 %v6560
      %6592 = vmatprep.subr.bf16.mxu0 %v6559
      %6593 = vmatpush1.bf16.msra.mxu0 %v6558
      %6594 = vmatprep.subr.bf16.mxu0 %v6557
      %6595 = vmatpush1.bf16.msra.mxu0 %v6556
      %6596 = vmatprep.subr.bf16.mxu0 %v6555
      %6597 = vmatpush1.bf16.msra.mxu0 %v6554
      %6598 = vmatprep.subr.bf16.mxu0 %v6553
      %6599 = vmatpush1.bf16.msra.mxu0 %v6552
      %6600 = vmatprep.subr.bf16.mxu0 %v6551
      %6601 = vmatpush1.bf16.msra.mxu0 %v6550
      %6602 = vmatprep.subr.bf16.mxu0 %v6549
      %6603 = vmatpush1.bf16.msra.mxu0 %v6548
      %6604 = vmatprep.subr.bf16.mxu0 0
      %6605 = vmatpush2.bf16.msra.mxu0 0
      %6606 = vmatprep.subr.bf16.mxu0 0
      %6607 = vmatpush2.bf16.msra.mxu0 0
      %6608 = vmatprep.subr.bf16.mxu0 0
      %6609 = vmatpush2.bf16.msra.mxu0 0
      %6610 = vmatprep.subr.bf16.mxu0 0
      %6611 = vmatpush2.bf16.msra.mxu0 0
      %6612 = vmatprep.subr.bf16.mxu0 0
      %6613 = vmatpush2.bf16.msra.mxu0 0
      %6614 = vmatprep.subr.bf16.mxu0 0
      %6615 = vmatpush2.bf16.msra.mxu0 0
      %6616 = vmatprep.subr.bf16.mxu0 0
      %6617 = vmatpush2.bf16.msra.mxu0 0
      %6618 = vmatprep.subr.bf16.mxu0 0
      %6619 = vmatpush2.bf16.msra.mxu0 0
      %6620 = vmatprep.mubr.bf16.mxu0 0
      %6621 = vmatmul.mubr.bf16.gmra.mxu0 %v6580
      %v6622 = vpop.f32.mrf.mxu0
      %v6623 = vadd.f32 0.0, %v6622
      %v6624 = vpop.f32.mrf.mxu0
      %v6625 = vadd.f32 0.0, %v6624
      %v6626 = vpop.f32.mrf.mxu0
      %v6627 = vadd.f32 0.0, %v6626
      %v6628 = vpop.f32.mrf.mxu0
      %v6629 = vadd.f32 0.0, %v6628
      %6630 = vmatprep.mubr.bf16.mxu0 0
      %6631 = vmatmul.mubr.bf16.gmra.mxu0 %v6581
      %v6632 = vpop.f32.mrf.mxu0
      %v6633 = vadd.f32 0.0, %v6632
      %v6634 = vpop.f32.mrf.mxu0
      %v6635 = vadd.f32 0.0, %v6634
      %v6636 = vpop.f32.mrf.mxu0
      %v6637 = vadd.f32 0.0, %v6636
      %v6638 = vpop.f32.mrf.mxu0
      %v6639 = vadd.f32 0.0, %v6638
      %6640 = vmatprep.mubr.bf16.mxu0 0
      %6641 = vmatmul.mubr.bf16.gmra.mxu0 %v6582
      %v6642 = vpop.f32.mrf.mxu0
      %v6643 = vadd.f32 0.0, %v6642
      %v6644 = vpop.f32.mrf.mxu0
      %v6645 = vadd.f32 0.0, %v6644
      %v6646 = vpop.f32.mrf.mxu0
      %v6647 = vadd.f32 0.0, %v6646
      %v6648 = vpop.f32.mrf.mxu0
      %v6649 = vadd.f32 0.0, %v6648
      %6650 = vmatprep.mubr.bf16.mxu0 0
      %6651 = vmatmul.mubr.bf16.gmra.mxu0 %v6583
      %v6652 = vpop.f32.mrf.mxu0
      %v6653 = vadd.f32 0.0, %v6652
      %v6654 = vpop.f32.mrf.mxu0
      %v6655 = vadd.f32 0.0, %v6654
      %v6656 = vpop.f32.mrf.mxu0
      %v6657 = vadd.f32 0.0, %v6656
      %v6658 = vpop.f32.mrf.mxu0
      %v6659 = vadd.f32 0.0, %v6658
      %6660 = vdwg.mxu0
      %v6661 = vadd.f32 %v6523, %v6623
      %v6662 = vadd.f32 %v6524, %v6625
      %v6663 = vadd.f32 %v6525, %v6627
      %v6664 = vadd.f32 %v6526, %v6629
      %v6665 = vadd.f32 %v6527, %v6633
      %v6666 = vadd.f32 %v6528, %v6635
      %v6667 = vadd.f32 %v6529, %v6637
      %v6668 = vadd.f32 %v6530, %v6639
      %v6669 = vadd.f32 %v6531, %v6643
      %v6670 = vadd.f32 %v6532, %v6645
      %v6671 = vadd.f32 %v6533, %v6647
      %v6672 = vadd.f32 %v6534, %v6649
      %v6673 = vadd.f32 %v6535, %v6653
      %v6674 = vadd.f32 %v6536, %v6655
      %v6675 = vadd.f32 %v6537, %v6657
      %v6676 = vadd.f32 %v6538, %v6659
      %6677 = vst [vmem:[#allocation3] sm:$0xff] %v6661
      %6678 = vst [vmem:[#allocation3 + $0x8] sm:$0xff] %v6662
      %6679 = vst [vmem:[#allocation3 + $0x10] sm:$0xff] %v6663
      %6680 = vst [vmem:[#allocation3 + $0x18] sm:$0xff] %v6664
      %6681 = vst [vmem:[#allocation3 + $0x20] sm:$0xff] %v6665
      %6682 = vst [vmem:[#allocation3 + $0x28] sm:$0xff] %v6666
      %6683 = vst [vmem:[#allocation3 + $0x30] sm:$0xff] %v6667
      %6684 = vst [vmem:[#allocation3 + $0x38] sm:$0xff] %v6668
      %6685 = vst [vmem:[#allocation3 + $0x40] sm:$0xff] %v6669
      %6686 = vst [vmem:[#allocation3 + $0x48] sm:$0xff] %v6670
      %6687 = vst [vmem:[#allocation3 + $0x50] sm:$0xff] %v6671
      %6688 = vst [vmem:[#allocation3 + $0x58] sm:$0xff] %v6672
      %6689 = vst [vmem:[#allocation3 + $0x60] sm:$0xff] %v6673
      %6690 = vst [vmem:[#allocation3 + $0x68] sm:$0xff] %v6674
      %6691 = vst [vmem:[#allocation3 + $0x70] sm:$0xff] %v6675
      %6692 = vst [vmem:[#allocation3 + $0x78] sm:$0xff] %v6676
      %v6693 = vld [vmem:[#allocation2] sm:$0xff]
      %v6694 = vld [vmem:[#allocation2 + $0x8] sm:$0xff]
      %v6695 = vld [vmem:[#allocation2 + $0x10] sm:$0xff]
      %v6696 = vld [vmem:[#allocation2 + $0x18] sm:$0xff]
      %v6697 = vld [vmem:[#allocation2 + $0x20] sm:$0xff]
      %v6698 = vld [vmem:[#allocation2 + $0x28] sm:$0xff]
      %v6699 = vld [vmem:[#allocation2 + $0x30] sm:$0xff]
      %v6700 = vld [vmem:[#allocation2 + $0x38] sm:$0xff]
      %v6701 = vld [vmem:[#allocation2 + $0x40] sm:$0xff]
      %v6702 = vld [vmem:[#allocation2 + $0x48] sm:$0xff]
      %v6703 = vld [vmem:[#allocation2 + $0x50] sm:$0xff]
      %v6704 = vld [vmem:[#allocation2 + $0x58] sm:$0xff]
      %v6705 = vld [vmem:[#allocation2 + $0x60] sm:$0xff]
      %v6706 = vld [vmem:[#allocation2 + $0x68] sm:$0xff]
      %v6707 = vld [vmem:[#allocation2 + $0x70] sm:$0xff]
      %v6708 = vld [vmem:[#allocation2 + $0x78] sm:$0xff]
      %v6709 = vld [vmem:[#allocation2 + $0x80] sm:$0xff]
      %v6710 = vld [vmem:[#allocation2 + $0x88] sm:$0xff]
      %v6711 = vld [vmem:[#allocation2 + $0x90] sm:$0xff]
      %v6712 = vld [vmem:[#allocation2 + $0x98] sm:$0xff]
      %v6713 = vld [vmem:[#allocation2 + $0xa0] sm:$0xff]
      %v6714 = vld [vmem:[#allocation2 + $0xa8] sm:$0xff]
      %v6715 = vld [vmem:[#allocation2 + $0xb0] sm:$0xff]
      %v6716 = vld [vmem:[#allocation2 + $0xb8] sm:$0xff]
      %v6717 = vld [vmem:[#allocation2 + $0xc0] sm:$0xff]
      %v6718 = vld [vmem:[#allocation2 + $0xc8] sm:$0xff]
      %v6719 = vld [vmem:[#allocation2 + $0xd0] sm:$0xff]
      %v6720 = vld [vmem:[#allocation2 + $0xd8] sm:$0xff]
      %v6721 = vld [vmem:[#allocation2 + $0xe0] sm:$0xff]
      %v6722 = vld [vmem:[#allocation2 + $0xe8] sm:$0xff]
      %v6723 = vld [vmem:[#allocation2 + $0xf0] sm:$0xff]
      %v6724 = vld [vmem:[#allocation2 + $0xf8] sm:$0xff]
      %6725 = vrot.lane.b32.xlu0 %v6693, 113
      %v6726 = vpop.permute.xlu0 %6725
      %6727 = vrot.lane.b32.xlu0 %v6695, 113
      %v6728 = vpop.permute.xlu0 %6727
      %6729 = vrot.lane.b32.xlu0 %v6697, 113
      %v6730 = vpop.permute.xlu0 %6729
      %6731 = vrot.lane.b32.xlu0 %v6699, 113
      %v6732 = vpop.permute.xlu0 %6731
      %6733 = vrot.lane.b32.xlu0 %v6701, 113
      %v6734 = vpop.permute.xlu0 %6733
      %6735 = vrot.lane.b32.xlu0 %v6703, 113
      %v6736 = vpop.permute.xlu0 %6735
      %6737 = vrot.lane.b32.xlu0 %v6705, 113
      %v6738 = vpop.permute.xlu0 %6737
      %6739 = vrot.lane.b32.xlu0 %v6707, 113
      %v6740 = vpop.permute.xlu0 %6739
      %6741 = vrot.lane.b32.xlu0 %v6709, 113
      %v6742 = vpop.permute.xlu0 %6741
      %6743 = vrot.lane.b32.xlu0 %v6711, 113
      %v6744 = vpop.permute.xlu0 %6743
      %6745 = vrot.lane.b32.xlu0 %v6713, 113
      %v6746 = vpop.permute.xlu0 %6745
      %6747 = vrot.lane.b32.xlu0 %v6715, 113
      %v6748 = vpop.permute.xlu0 %6747
      %6749 = vrot.lane.b32.xlu0 %v6717, 113
      %v6750 = vpop.permute.xlu0 %6749
      %6751 = vrot.lane.b32.xlu0 %v6719, 113
      %v6752 = vpop.permute.xlu0 %6751
      %6753 = vrot.lane.b32.xlu0 %v6721, 113
      %v6754 = vpop.permute.xlu0 %6753
      %6755 = vrot.lane.b32.xlu0 %v6723, 113
      %v6756 = vpop.permute.xlu0 %6755
      %6757 = vrot.lane.b32.xlu0 %v6694, 113
      %v6758 = vpop.permute.xlu0 %6757
      %6759 = vrot.lane.b32.xlu0 %v6696, 113
      %v6760 = vpop.permute.xlu0 %6759
      %6761 = vrot.lane.b32.xlu0 %v6698, 113
      %v6762 = vpop.permute.xlu0 %6761
      %6763 = vrot.lane.b32.xlu0 %v6700, 113
      %v6764 = vpop.permute.xlu0 %6763
      %6765 = vrot.lane.b32.xlu0 %v6702, 113
      %v6766 = vpop.permute.xlu0 %6765
      %6767 = vrot.lane.b32.xlu0 %v6704, 113
      %v6768 = vpop.permute.xlu0 %6767
      %6769 = vrot.lane.b32.xlu0 %v6706, 113
      %v6770 = vpop.permute.xlu0 %6769
      %6771 = vrot.lane.b32.xlu0 %v6708, 113
      %v6772 = vpop.permute.xlu0 %6771
      %6773 = vrot.lane.b32.xlu0 %v6710, 113
      %v6774 = vpop.permute.xlu0 %6773
      %6775 = vrot.lane.b32.xlu0 %v6712, 113
      %v6776 = vpop.permute.xlu0 %6775
      %6777 = vrot.lane.b32.xlu0 %v6714, 113
      %v6778 = vpop.permute.xlu0 %6777
      %6779 = vrot.lane.b32.xlu0 %v6716, 113
      %v6780 = vpop.permute.xlu0 %6779
      %6781 = vrot.lane.b32.xlu0 %v6718, 113
      %v6782 = vpop.permute.xlu0 %6781
      %6783 = vrot.lane.b32.xlu0 %v6720, 113
      %v6784 = vpop.permute.xlu0 %6783
      %6785 = vrot.lane.b32.xlu0 %v6722, 113
      %v6786 = vpop.permute.xlu0 %6785
      %6787 = vrot.lane.b32.xlu0 %v6724, 113
      %v6788 = vpop.permute.xlu0 %6787
      %v6789 = vsel %vm3214, %v6726, %v6758
      %v6790 = vsel %vm3214, %v6728, %v6760
      %v6791 = vsel %vm3214, %v6730, %v6762
      %v6792 = vsel %vm3214, %v6732, %v6764
      %v6793 = vsel %vm3214, %v6734, %v6766
      %v6794 = vsel %vm3214, %v6736, %v6768
      %v6795 = vsel %vm3214, %v6738, %v6770
      %v6796 = vsel %vm3214, %v6740, %v6772
      %v6797 = vsel %vm3214, %v6742, %v6774
      %v6798 = vsel %vm3214, %v6744, %v6776
      %v6799 = vsel %vm3214, %v6746, %v6778
      %v6800 = vsel %vm3214, %v6748, %v6780
      %v6801 = vsel %vm3214, %v6750, %v6782
      %v6802 = vsel %vm3214, %v6752, %v6784
      %v6803 = vsel %vm3214, %v6754, %v6786
      %v6804 = vsel %vm3214, %v6756, %v6788
      %v6805 = vsel %vm3214, %v6758, %v6726
      %v6806 = vsel %vm3214, %v6760, %v6728
      %v6807 = vsel %vm3214, %v6762, %v6730
      %v6808 = vsel %vm3214, %v6764, %v6732
      %v6809 = vsel %vm3214, %v6766, %v6734
      %v6810 = vsel %vm3214, %v6768, %v6736
      %v6811 = vsel %vm3214, %v6770, %v6738
      %v6812 = vsel %vm3214, %v6772, %v6740
      %v6813 = vsel %vm3214, %v6774, %v6742
      %v6814 = vsel %vm3214, %v6776, %v6744
      %v6815 = vsel %vm3214, %v6778, %v6746
      %v6816 = vsel %vm3214, %v6780, %v6748
      %v6817 = vsel %vm3214, %v6782, %v6750
      %v6818 = vsel %vm3214, %v6784, %v6752
      %v6819 = vsel %vm3214, %v6786, %v6754
      %v6820 = vsel %vm3214, %v6788, %v6756
      %v6821 = vld [vmem:[%s3247] sm:$0x3]
      %v6823 = vlaneseq
      %v6824 = vshrl.u32 %v6823, 7
      %v6825 = vsub.s32 0, %v6824
      %v6826 = vrot.slane %v6821, %v6825
      %v6827 = vlaneseq
      %v6828 = vshrl.u32 %v6827, 7
      %v6829 = vsub.s32 1, %v6828
      %v6830 = vrot.slane %v6821, %v6829
      %v6833 = vmul.f32 %v6789, %v6826
      %v6834 = vmul.f32 %v6805, %v6830
      %v6835 = vmul.f32 %v6790, %v6826
      %v6836 = vmul.f32 %v6806, %v6830
      %v6837 = vmul.f32 %v6791, %v6826
      %v6838 = vmul.f32 %v6807, %v6830
      %v6839 = vmul.f32 %v6792, %v6826
      %v6840 = vmul.f32 %v6808, %v6830
      %v6841 = vmul.f32 %v6793, %v6826
      %v6842 = vmul.f32 %v6809, %v6830
      %v6843 = vmul.f32 %v6794, %v6826
      %v6844 = vmul.f32 %v6810, %v6830
      %v6845 = vmul.f32 %v6795, %v6826
      %v6846 = vmul.f32 %v6811, %v6830
      %v6847 = vmul.f32 %v6796, %v6826
      %v6848 = vmul.f32 %v6812, %v6830
      %v6849 = vmul.f32 %v6797, %v6826
      %v6850 = vmul.f32 %v6813, %v6830
      %v6851 = vmul.f32 %v6798, %v6826
      %v6852 = vmul.f32 %v6814, %v6830
      %v6853 = vmul.f32 %v6799, %v6826
      %v6854 = vmul.f32 %v6815, %v6830
      %v6855 = vmul.f32 %v6800, %v6826
      %v6856 = vmul.f32 %v6816, %v6830
      %v6857 = vmul.f32 %v6801, %v6826
      %v6858 = vmul.f32 %v6817, %v6830
      %v6859 = vmul.f32 %v6802, %v6826
      %v6860 = vmul.f32 %v6818, %v6830
      %v6861 = vmul.f32 %v6803, %v6826
      %v6862 = vmul.f32 %v6819, %v6830
      %v6863 = vmul.f32 %v6804, %v6826
      %v6864 = vmul.f32 %v6820, %v6830
      %v6865 = vld [vmem:[#allocation3] sm:$0xff]
      %v6866 = vld [vmem:[#allocation3 + $0x8] sm:$0xff]
      %v6867 = vld [vmem:[#allocation3 + $0x10] sm:$0xff]
      %v6868 = vld [vmem:[#allocation3 + $0x18] sm:$0xff]
      %v6869 = vld [vmem:[#allocation3 + $0x20] sm:$0xff]
      %v6870 = vld [vmem:[#allocation3 + $0x28] sm:$0xff]
      %v6871 = vld [vmem:[#allocation3 + $0x30] sm:$0xff]
      %v6872 = vld [vmem:[#allocation3 + $0x38] sm:$0xff]
      %v6873 = vld [vmem:[#allocation3 + $0x40] sm:$0xff]
      %v6874 = vld [vmem:[#allocation3 + $0x48] sm:$0xff]
      %v6875 = vld [vmem:[#allocation3 + $0x50] sm:$0xff]
      %v6876 = vld [vmem:[#allocation3 + $0x58] sm:$0xff]
      %v6877 = vld [vmem:[#allocation3 + $0x60] sm:$0xff]
      %v6878 = vld [vmem:[#allocation3 + $0x68] sm:$0xff]
      %v6879 = vld [vmem:[#allocation3 + $0x70] sm:$0xff]
      %v6880 = vld [vmem:[#allocation3 + $0x78] sm:$0xff]
      %s6881 = scalar_lea.vmem %s3, 192
      %v6882 = vld [vmem:[%s6881] sm:$0xf]
      %v6883 = vld [vmem:[%s6881 + $0x4] sm:$0xf]
      %v6884 = vld [vmem:[%s6881 + $0x8] sm:$0xf]
      %v6885 = vld [vmem:[%s6881 + $0xc] sm:$0xf]
      %v6886 = vld [vmem:[%s6881 + $0x10] sm:$0xf]
      %v6887 = vld [vmem:[%s6881 + $0x14] sm:$0xf]
      %v6888 = vld [vmem:[%s6881 + $0x18] sm:$0xf]
      %v6889 = vld [vmem:[%s6881 + $0x1c] sm:$0xf]
      %v6890 = vpack.c.bf16 %v6835, %v6833
      %v6891 = vpack.c.bf16 %v6836, %v6834
      %v6892 = vpack.c.bf16 %v6839, %v6837
      %v6893 = vpack.c.bf16 %v6840, %v6838
      %v6894 = vpack.c.bf16 %v6843, %v6841
      %v6895 = vpack.c.bf16 %v6844, %v6842
      %v6896 = vpack.c.bf16 %v6847, %v6845
      %v6897 = vpack.c.bf16 %v6848, %v6846
      %v6898 = vpack.c.bf16 %v6851, %v6849
      %v6899 = vpack.c.bf16 %v6852, %v6850
      %v6900 = vpack.c.bf16 %v6855, %v6853
      %v6901 = vpack.c.bf16 %v6856, %v6854
      %v6902 = vpack.c.bf16 %v6859, %v6857
      %v6903 = vpack.c.bf16 %v6860, %v6858
      %v6904 = vpack.c.bf16 %v6863, %v6861
      %v6905 = vpack.c.bf16 %v6864, %v6862
      %v6914 = vunpack.c.l.b16 %v6882
      %v6915 = vunpack.c.l.b16 %v6883
      %v6916 = vunpack.c.l.b16 %v6884
      %v6917 = vunpack.c.l.b16 %v6885
      %v6918 = vunpack.c.l.b16 %v6886
      %v6919 = vunpack.c.l.b16 %v6887
      %v6920 = vunpack.c.l.b16 %v6888
      %v6921 = vunpack.c.l.b16 %v6889
      %v6922 = vpack.c.b16 %v6915, %v6914
      %v6923 = vpack.c.b16 %v6917, %v6916
      %v6924 = vpack.c.b16 %v6919, %v6918
      %v6925 = vpack.c.b16 %v6921, %v6920
      %6930 = vmatprep.subr.bf16.mxu0 %v6905
      %6931 = vmatpush1.bf16.msra.mxu0 %v6904
      %6932 = vmatprep.subr.bf16.mxu0 %v6903
      %6933 = vmatpush1.bf16.msra.mxu0 %v6902
      %6934 = vmatprep.subr.bf16.mxu0 %v6901
      %6935 = vmatpush1.bf16.msra.mxu0 %v6900
      %6936 = vmatprep.subr.bf16.mxu0 %v6899
      %6937 = vmatpush1.bf16.msra.mxu0 %v6898
      %6938 = vmatprep.subr.bf16.mxu0 %v6897
      %6939 = vmatpush1.bf16.msra.mxu0 %v6896
      %6940 = vmatprep.subr.bf16.mxu0 %v6895
      %6941 = vmatpush1.bf16.msra.mxu0 %v6894
      %6942 = vmatprep.subr.bf16.mxu0 %v6893
      %6943 = vmatpush1.bf16.msra.mxu0 %v6892
      %6944 = vmatprep.subr.bf16.mxu0 %v6891
      %6945 = vmatpush1.bf16.msra.mxu0 %v6890
      %6946 = vmatprep.subr.bf16.mxu0 0
      %6947 = vmatpush2.bf16.msra.mxu0 0
      %6948 = vmatprep.subr.bf16.mxu0 0
      %6949 = vmatpush2.bf16.msra.mxu0 0
      %6950 = vmatprep.subr.bf16.mxu0 0
      %6951 = vmatpush2.bf16.msra.mxu0 0
      %6952 = vmatprep.subr.bf16.mxu0 0
      %6953 = vmatpush2.bf16.msra.mxu0 0
      %6954 = vmatprep.subr.bf16.mxu0 0
      %6955 = vmatpush2.bf16.msra.mxu0 0
      %6956 = vmatprep.subr.bf16.mxu0 0
      %6957 = vmatpush2.bf16.msra.mxu0 0
      %6958 = vmatprep.subr.bf16.mxu0 0
      %6959 = vmatpush2.bf16.msra.mxu0 0
      %6960 = vmatprep.subr.bf16.mxu0 0
      %6961 = vmatpush2.bf16.msra.mxu0 0
      %6962 = vmatprep.mubr.bf16.mxu0 0
      %6963 = vmatmul.mubr.bf16.gmra.mxu0 %v6922
      %v6964 = vpop.f32.mrf.mxu0
      %v6965 = vadd.f32 0.0, %v6964
      %v6966 = vpop.f32.mrf.mxu0
      %v6967 = vadd.f32 0.0, %v6966
      %v6968 = vpop.f32.mrf.mxu0
      %v6969 = vadd.f32 0.0, %v6968
      %v6970 = vpop.f32.mrf.mxu0
      %v6971 = vadd.f32 0.0, %v6970
      %6972 = vmatprep.mubr.bf16.mxu0 0
      %6973 = vmatmul.mubr.bf16.gmra.mxu0 %v6923
      %v6974 = vpop.f32.mrf.mxu0
      %v6975 = vadd.f32 0.0, %v6974
      %v6976 = vpop.f32.mrf.mxu0
      %v6977 = vadd.f32 0.0, %v6976
      %v6978 = vpop.f32.mrf.mxu0
      %v6979 = vadd.f32 0.0, %v6978
      %v6980 = vpop.f32.mrf.mxu0
      %v6981 = vadd.f32 0.0, %v6980
      %6982 = vmatprep.mubr.bf16.mxu0 0
      %6983 = vmatmul.mubr.bf16.gmra.mxu0 %v6924
      %v6984 = vpop.f32.mrf.mxu0
      %v6985 = vadd.f32 0.0, %v6984
      %v6986 = vpop.f32.mrf.mxu0
      %v6987 = vadd.f32 0.0, %v6986
      %v6988 = vpop.f32.mrf.mxu0
      %v6989 = vadd.f32 0.0, %v6988
      %v6990 = vpop.f32.mrf.mxu0
      %v6991 = vadd.f32 0.0, %v6990
      %6992 = vmatprep.mubr.bf16.mxu0 0
      %6993 = vmatmul.mubr.bf16.gmra.mxu0 %v6925
      %v6994 = vpop.f32.mrf.mxu0
      %v6995 = vadd.f32 0.0, %v6994
      %v6996 = vpop.f32.mrf.mxu0
      %v6997 = vadd.f32 0.0, %v6996
      %v6998 = vpop.f32.mrf.mxu0
      %v6999 = vadd.f32 0.0, %v6998
      %v7000 = vpop.f32.mrf.mxu0
      %v7001 = vadd.f32 0.0, %v7000
      %7002 = vdwg.mxu0
      %v7003 = vadd.f32 %v6865, %v6965
      %v7004 = vadd.f32 %v6866, %v6967
      %v7005 = vadd.f32 %v6867, %v6969
      %v7006 = vadd.f32 %v6868, %v6971
      %v7007 = vadd.f32 %v6869, %v6975
      %v7008 = vadd.f32 %v6870, %v6977
      %v7009 = vadd.f32 %v6871, %v6979
      %v7010 = vadd.f32 %v6872, %v6981
      %v7011 = vadd.f32 %v6873, %v6985
      %v7012 = vadd.f32 %v6874, %v6987
      %v7013 = vadd.f32 %v6875, %v6989
      %v7014 = vadd.f32 %v6876, %v6991
      %v7015 = vadd.f32 %v6877, %v6995
      %v7016 = vadd.f32 %v6878, %v6997
      %v7017 = vadd.f32 %v6879, %v6999
      %v7018 = vadd.f32 %v6880, %v7001
      %7019 = vst [vmem:[#allocation3] sm:$0xff] %v7003
      %7020 = vst [vmem:[#allocation3 + $0x8] sm:$0xff] %v7004
      %7021 = vst [vmem:[#allocation3 + $0x10] sm:$0xff] %v7005
      %7022 = vst [vmem:[#allocation3 + $0x18] sm:$0xff] %v7006
      %7023 = vst [vmem:[#allocation3 + $0x20] sm:$0xff] %v7007
      %7024 = vst [vmem:[#allocation3 + $0x28] sm:$0xff] %v7008
      %7025 = vst [vmem:[#allocation3 + $0x30] sm:$0xff] %v7009
      %7026 = vst [vmem:[#allocation3 + $0x38] sm:$0xff] %v7010
      %7027 = vst [vmem:[#allocation3 + $0x40] sm:$0xff] %v7011
      %7028 = vst [vmem:[#allocation3 + $0x48] sm:$0xff] %v7012
      %7029 = vst [vmem:[#allocation3 + $0x50] sm:$0xff] %v7013
      %7030 = vst [vmem:[#allocation3 + $0x58] sm:$0xff] %v7014
      %7031 = vst [vmem:[#allocation3 + $0x60] sm:$0xff] %v7015
      %7032 = vst [vmem:[#allocation3 + $0x68] sm:$0xff] %v7016
      %7033 = vst [vmem:[#allocation3 + $0x70] sm:$0xff] %v7017
      %7034 = vst [vmem:[#allocation3 + $0x78] sm:$0xff] %v7018
      %v7035 = vld [vmem:[#allocation2] sm:$0xff]
      %v7036 = vld [vmem:[#allocation2 + $0x8] sm:$0xff]
      %v7037 = vld [vmem:[#allocation2 + $0x10] sm:$0xff]
      %v7038 = vld [vmem:[#allocation2 + $0x18] sm:$0xff]
      %v7039 = vld [vmem:[#allocation2 + $0x20] sm:$0xff]
      %v7040 = vld [vmem:[#allocation2 + $0x28] sm:$0xff]
      %v7041 = vld [vmem:[#allocation2 + $0x30] sm:$0xff]
      %v7042 = vld [vmem:[#allocation2 + $0x38] sm:$0xff]
      %v7043 = vld [vmem:[#allocation2 + $0x40] sm:$0xff]
      %v7044 = vld [vmem:[#allocation2 + $0x48] sm:$0xff]
      %v7045 = vld [vmem:[#allocation2 + $0x50] sm:$0xff]
      %v7046 = vld [vmem:[#allocation2 + $0x58] sm:$0xff]
      %v7047 = vld [vmem:[#allocation2 + $0x60] sm:$0xff]
      %v7048 = vld [vmem:[#allocation2 + $0x68] sm:$0xff]
      %v7049 = vld [vmem:[#allocation2 + $0x70] sm:$0xff]
      %v7050 = vld [vmem:[#allocation2 + $0x78] sm:$0xff]
      %v7051 = vld [vmem:[#allocation2 + $0x80] sm:$0xff]
      %v7052 = vld [vmem:[#allocation2 + $0x88] sm:$0xff]
      %v7053 = vld [vmem:[#allocation2 + $0x90] sm:$0xff]
      %v7054 = vld [vmem:[#allocation2 + $0x98] sm:$0xff]
      %v7055 = vld [vmem:[#allocation2 + $0xa0] sm:$0xff]
      %v7056 = vld [vmem:[#allocation2 + $0xa8] sm:$0xff]
      %v7057 = vld [vmem:[#allocation2 + $0xb0] sm:$0xff]
      %v7058 = vld [vmem:[#allocation2 + $0xb8] sm:$0xff]
      %v7059 = vld [vmem:[#allocation2 + $0xc0] sm:$0xff]
      %v7060 = vld [vmem:[#allocation2 + $0xc8] sm:$0xff]
      %v7061 = vld [vmem:[#allocation2 + $0xd0] sm:$0xff]
      %v7062 = vld [vmem:[#allocation2 + $0xd8] sm:$0xff]
      %v7063 = vld [vmem:[#allocation2 + $0xe0] sm:$0xff]
      %v7064 = vld [vmem:[#allocation2 + $0xe8] sm:$0xff]
      %v7065 = vld [vmem:[#allocation2 + $0xf0] sm:$0xff]
      %v7066 = vld [vmem:[#allocation2 + $0xf8] sm:$0xff]
      %7067 = vrot.lane.b32.xlu0 %v7035, 112
      %v7068 = vpop.permute.xlu0 %7067
      %7069 = vrot.lane.b32.xlu0 %v7037, 112
      %v7070 = vpop.permute.xlu0 %7069
      %7071 = vrot.lane.b32.xlu0 %v7039, 112
      %v7072 = vpop.permute.xlu0 %7071
      %7073 = vrot.lane.b32.xlu0 %v7041, 112
      %v7074 = vpop.permute.xlu0 %7073
      %7075 = vrot.lane.b32.xlu0 %v7043, 112
      %v7076 = vpop.permute.xlu0 %7075
      %7077 = vrot.lane.b32.xlu0 %v7045, 112
      %v7078 = vpop.permute.xlu0 %7077
      %7079 = vrot.lane.b32.xlu0 %v7047, 112
      %v7080 = vpop.permute.xlu0 %7079
      %7081 = vrot.lane.b32.xlu0 %v7049, 112
      %v7082 = vpop.permute.xlu0 %7081
      %7083 = vrot.lane.b32.xlu0 %v7051, 112
      %v7084 = vpop.permute.xlu0 %7083
      %7085 = vrot.lane.b32.xlu0 %v7053, 112
      %v7086 = vpop.permute.xlu0 %7085
      %7087 = vrot.lane.b32.xlu0 %v7055, 112
      %v7088 = vpop.permute.xlu0 %7087
      %7089 = vrot.lane.b32.xlu0 %v7057, 112
      %v7090 = vpop.permute.xlu0 %7089
      %7091 = vrot.lane.b32.xlu0 %v7059, 112
      %v7092 = vpop.permute.xlu0 %7091
      %7093 = vrot.lane.b32.xlu0 %v7061, 112
      %v7094 = vpop.permute.xlu0 %7093
      %7095 = vrot.lane.b32.xlu0 %v7063, 112
      %v7096 = vpop.permute.xlu0 %7095
      %7097 = vrot.lane.b32.xlu0 %v7065, 112
      %v7098 = vpop.permute.xlu0 %7097
      %7099 = vrot.lane.b32.xlu0 %v7036, 112
      %v7100 = vpop.permute.xlu0 %7099
      %7101 = vrot.lane.b32.xlu0 %v7038, 112
      %v7102 = vpop.permute.xlu0 %7101
      %7103 = vrot.lane.b32.xlu0 %v7040, 112
      %v7104 = vpop.permute.xlu0 %7103
      %7105 = vrot.lane.b32.xlu0 %v7042, 112
      %v7106 = vpop.permute.xlu0 %7105
      %7107 = vrot.lane.b32.xlu0 %v7044, 112
      %v7108 = vpop.permute.xlu0 %7107
      %7109 = vrot.lane.b32.xlu0 %v7046, 112
      %v7110 = vpop.permute.xlu0 %7109
      %7111 = vrot.lane.b32.xlu0 %v7048, 112
      %v7112 = vpop.permute.xlu0 %7111
      %7113 = vrot.lane.b32.xlu0 %v7050, 112
      %v7114 = vpop.permute.xlu0 %7113
      %7115 = vrot.lane.b32.xlu0 %v7052, 112
      %v7116 = vpop.permute.xlu0 %7115
      %7117 = vrot.lane.b32.xlu0 %v7054, 112
      %v7118 = vpop.permute.xlu0 %7117
      %7119 = vrot.lane.b32.xlu0 %v7056, 112
      %v7120 = vpop.permute.xlu0 %7119
      %7121 = vrot.lane.b32.xlu0 %v7058, 112
      %v7122 = vpop.permute.xlu0 %7121
      %7123 = vrot.lane.b32.xlu0 %v7060, 112
      %v7124 = vpop.permute.xlu0 %7123
      %7125 = vrot.lane.b32.xlu0 %v7062, 112
      %v7126 = vpop.permute.xlu0 %7125
      %7127 = vrot.lane.b32.xlu0 %v7064, 112
      %v7128 = vpop.permute.xlu0 %7127
      %7129 = vrot.lane.b32.xlu0 %v7066, 112
      %v7130 = vpop.permute.xlu0 %7129
      %v7131 = vsel %vm3694, %v7068, %v7100
      %v7132 = vsel %vm3694, %v7070, %v7102
      %v7133 = vsel %vm3694, %v7072, %v7104
      %v7134 = vsel %vm3694, %v7074, %v7106
      %v7135 = vsel %vm3694, %v7076, %v7108
      %v7136 = vsel %vm3694, %v7078, %v7110
      %v7137 = vsel %vm3694, %v7080, %v7112
      %v7138 = vsel %vm3694, %v7082, %v7114
      %v7139 = vsel %vm3694, %v7084, %v7116
      %v7140 = vsel %vm3694, %v7086, %v7118
      %v7141 = vsel %vm3694, %v7088, %v7120
      %v7142 = vsel %vm3694, %v7090, %v7122
      %v7143 = vsel %vm3694, %v7092, %v7124
      %v7144 = vsel %vm3694, %v7094, %v7126
      %v7145 = vsel %vm3694, %v7096, %v7128
      %v7146 = vsel %vm3694, %v7098, %v7130
      %v7147 = vsel %vm3694, %v7100, %v7068
      %v7148 = vsel %vm3694, %v7102, %v7070
      %v7149 = vsel %vm3694, %v7104, %v7072
      %v7150 = vsel %vm3694, %v7106, %v7074
      %v7151 = vsel %vm3694, %v7108, %v7076
      %v7152 = vsel %vm3694, %v7110, %v7078
      %v7153 = vsel %vm3694, %v7112, %v7080
      %v7154 = vsel %vm3694, %v7114, %v7082
      %v7155 = vsel %vm3694, %v7116, %v7084
      %v7156 = vsel %vm3694, %v7118, %v7086
      %v7157 = vsel %vm3694, %v7120, %v7088
      %v7158 = vsel %vm3694, %v7122, %v7090
      %v7159 = vsel %vm3694, %v7124, %v7092
      %v7160 = vsel %vm3694, %v7126, %v7094
      %v7161 = vsel %vm3694, %v7128, %v7096
      %v7162 = vsel %vm3694, %v7130, %v7098
      %v7163 = vld [vmem:[%s3727] sm:$0x3]
      %v7165 = vlaneseq
      %v7166 = vshrl.u32 %v7165, 7
      %v7167 = vsub.s32 0, %v7166
      %v7168 = vrot.slane %v7163, %v7167
      %v7169 = vlaneseq
      %v7170 = vshrl.u32 %v7169, 7
      %v7171 = vsub.s32 1, %v7170
      %v7172 = vrot.slane %v7163, %v7171
      %v7175 = vmul.f32 %v7131, %v7168
      %v7176 = vmul.f32 %v7147, %v7172
      %v7177 = vmul.f32 %v7132, %v7168
      %v7178 = vmul.f32 %v7148, %v7172
      %v7179 = vmul.f32 %v7133, %v7168
      %v7180 = vmul.f32 %v7149, %v7172
      %v7181 = vmul.f32 %v7134, %v7168
      %v7182 = vmul.f32 %v7150, %v7172
      %v7183 = vmul.f32 %v7135, %v7168
      %v7184 = vmul.f32 %v7151, %v7172
      %v7185 = vmul.f32 %v7136, %v7168
      %v7186 = vmul.f32 %v7152, %v7172
      %v7187 = vmul.f32 %v7137, %v7168
      %v7188 = vmul.f32 %v7153, %v7172
      %v7189 = vmul.f32 %v7138, %v7168
      %v7190 = vmul.f32 %v7154, %v7172
      %v7191 = vmul.f32 %v7139, %v7168
      %v7192 = vmul.f32 %v7155, %v7172
      %v7193 = vmul.f32 %v7140, %v7168
      %v7194 = vmul.f32 %v7156, %v7172
      %v7195 = vmul.f32 %v7141, %v7168
      %v7196 = vmul.f32 %v7157, %v7172
      %v7197 = vmul.f32 %v7142, %v7168
      %v7198 = vmul.f32 %v7158, %v7172
      %v7199 = vmul.f32 %v7143, %v7168
      %v7200 = vmul.f32 %v7159, %v7172
      %v7201 = vmul.f32 %v7144, %v7168
      %v7202 = vmul.f32 %v7160, %v7172
      %v7203 = vmul.f32 %v7145, %v7168
      %v7204 = vmul.f32 %v7161, %v7172
      %v7205 = vmul.f32 %v7146, %v7168
      %v7206 = vmul.f32 %v7162, %v7172
      %v7207 = vld [vmem:[#allocation3] sm:$0xff]
      %v7208 = vld [vmem:[#allocation3 + $0x8] sm:$0xff]
      %v7209 = vld [vmem:[#allocation3 + $0x10] sm:$0xff]
      %v7210 = vld [vmem:[#allocation3 + $0x18] sm:$0xff]
      %v7211 = vld [vmem:[#allocation3 + $0x20] sm:$0xff]
      %v7212 = vld [vmem:[#allocation3 + $0x28] sm:$0xff]
      %v7213 = vld [vmem:[#allocation3 + $0x30] sm:$0xff]
      %v7214 = vld [vmem:[#allocation3 + $0x38] sm:$0xff]
      %v7215 = vld [vmem:[#allocation3 + $0x40] sm:$0xff]
      %v7216 = vld [vmem:[#allocation3 + $0x48] sm:$0xff]
      %v7217 = vld [vmem:[#allocation3 + $0x50] sm:$0xff]
      %v7218 = vld [vmem:[#allocation3 + $0x58] sm:$0xff]
      %v7219 = vld [vmem:[#allocation3 + $0x60] sm:$0xff]
      %v7220 = vld [vmem:[#allocation3 + $0x68] sm:$0xff]
      %v7221 = vld [vmem:[#allocation3 + $0x70] sm:$0xff]
      %v7222 = vld [vmem:[#allocation3 + $0x78] sm:$0xff]
      %s7223 = scalar_lea.vmem %s3, 224
      %v7224 = vld [vmem:[%s7223] sm:$0xf]
      %v7225 = vld [vmem:[%s7223 + $0x4] sm:$0xf]
      %v7226 = vld [vmem:[%s7223 + $0x8] sm:$0xf]
      %v7227 = vld [vmem:[%s7223 + $0xc] sm:$0xf]
      %v7228 = vld [vmem:[%s7223 + $0x10] sm:$0xf]
      %v7229 = vld [vmem:[%s7223 + $0x14] sm:$0xf]
      %v7230 = vld [vmem:[%s7223 + $0x18] sm:$0xf]
      %v7231 = vld [vmem:[%s7223 + $0x1c] sm:$0xf]
      %v7232 = vpack.c.bf16 %v7177, %v7175
      %v7233 = vpack.c.bf16 %v7178, %v7176
      %v7234 = vpack.c.bf16 %v7181, %v7179
      %v7235 = vpack.c.bf16 %v7182, %v7180
      %v7236 = vpack.c.bf16 %v7185, %v7183
      %v7237 = vpack.c.bf16 %v7186, %v7184
      %v7238 = vpack.c.bf16 %v7189, %v7187
      %v7239 = vpack.c.bf16 %v7190, %v7188
      %v7240 = vpack.c.bf16 %v7193, %v7191
      %v7241 = vpack.c.bf16 %v7194, %v7192
      %v7242 = vpack.c.bf16 %v7197, %v7195
      %v7243 = vpack.c.bf16 %v7198, %v7196
      %v7244 = vpack.c.bf16 %v7201, %v7199
      %v7245 = vpack.c.bf16 %v7202, %v7200
      %v7246 = vpack.c.bf16 %v7205, %v7203
      %v7247 = vpack.c.bf16 %v7206, %v7204
      %v7256 = vunpack.c.l.b16 %v7224
      %v7257 = vunpack.c.l.b16 %v7225
      %v7258 = vunpack.c.l.b16 %v7226
      %v7259 = vunpack.c.l.b16 %v7227
      %v7260 = vunpack.c.l.b16 %v7228
      %v7261 = vunpack.c.l.b16 %v7229
      %v7262 = vunpack.c.l.b16 %v7230
      %v7263 = vunpack.c.l.b16 %v7231
      %v7264 = vpack.c.b16 %v7257, %v7256
      %v7265 = vpack.c.b16 %v7259, %v7258
      %v7266 = vpack.c.b16 %v7261, %v7260
      %v7267 = vpack.c.b16 %v7263, %v7262
      %7272 = vmatprep.subr.bf16.mxu0 %v7247
      %7273 = vmatpush1.bf16.msra.mxu0 %v7246
      %7274 = vmatprep.subr.bf16.mxu0 %v7245
      %7275 = vmatpush1.bf16.msra.mxu0 %v7244
      %7276 = vmatprep.subr.bf16.mxu0 %v7243
      %7277 = vmatpush1.bf16.msra.mxu0 %v7242
      %7278 = vmatprep.subr.bf16.mxu0 %v7241
      %7279 = vmatpush1.bf16.msra.mxu0 %v7240
      %7280 = vmatprep.subr.bf16.mxu0 %v7239
      %7281 = vmatpush1.bf16.msra.mxu0 %v7238
      %7282 = vmatprep.subr.bf16.mxu0 %v7237
      %7283 = vmatpush1.bf16.msra.mxu0 %v7236
      %7284 = vmatprep.subr.bf16.mxu0 %v7235
      %7285 = vmatpush1.bf16.msra.mxu0 %v7234
      %7286 = vmatprep.subr.bf16.mxu0 %v7233
      %7287 = vmatpush1.bf16.msra.mxu0 %v7232
      %7288 = vmatprep.subr.bf16.mxu0 0
      %7289 = vmatpush2.bf16.msra.mxu0 0
      %7290 = vmatprep.subr.bf16.mxu0 0
      %7291 = vmatpush2.bf16.msra.mxu0 0
      %7292 = vmatprep.subr.bf16.mxu0 0
      %7293 = vmatpush2.bf16.msra.mxu0 0
      %7294 = vmatprep.subr.bf16.mxu0 0
      %7295 = vmatpush2.bf16.msra.mxu0 0
      %7296 = vmatprep.subr.bf16.mxu0 0
      %7297 = vmatpush2.bf16.msra.mxu0 0
      %7298 = vmatprep.subr.bf16.mxu0 0
      %7299 = vmatpush2.bf16.msra.mxu0 0
      %7300 = vmatprep.subr.bf16.mxu0 0
      %7301 = vmatpush2.bf16.msra.mxu0 0
      %7302 = vmatprep.subr.bf16.mxu0 0
      %7303 = vmatpush2.bf16.msra.mxu0 0
      %7304 = vmatprep.mubr.bf16.mxu0 0
      %7305 = vmatmul.mubr.bf16.gmra.mxu0 %v7264
      %v7306 = vpop.f32.mrf.mxu0
      %v7307 = vadd.f32 0.0, %v7306
      %v7308 = vpop.f32.mrf.mxu0
      %v7309 = vadd.f32 0.0, %v7308
      %v7310 = vpop.f32.mrf.mxu0
      %v7311 = vadd.f32 0.0, %v7310
      %v7312 = vpop.f32.mrf.mxu0
      %v7313 = vadd.f32 0.0, %v7312
      %7314 = vmatprep.mubr.bf16.mxu0 0
      %7315 = vmatmul.mubr.bf16.gmra.mxu0 %v7265
      %v7316 = vpop.f32.mrf.mxu0
      %v7317 = vadd.f32 0.0, %v7316
      %v7318 = vpop.f32.mrf.mxu0
      %v7319 = vadd.f32 0.0, %v7318
      %v7320 = vpop.f32.mrf.mxu0
      %v7321 = vadd.f32 0.0, %v7320
      %v7322 = vpop.f32.mrf.mxu0
      %v7323 = vadd.f32 0.0, %v7322
      %7324 = vmatprep.mubr.bf16.mxu0 0
      %7325 = vmatmul.mubr.bf16.gmra.mxu0 %v7266
      %v7326 = vpop.f32.mrf.mxu0
      %v7327 = vadd.f32 0.0, %v7326
      %v7328 = vpop.f32.mrf.mxu0
      %v7329 = vadd.f32 0.0, %v7328
      %v7330 = vpop.f32.mrf.mxu0
      %v7331 = vadd.f32 0.0, %v7330
      %v7332 = vpop.f32.mrf.mxu0
      %v7333 = vadd.f32 0.0, %v7332
      %7334 = vmatprep.mubr.bf16.mxu0 0
      %7335 = vmatmul.mubr.bf16.gmra.mxu0 %v7267
      %v7336 = vpop.f32.mrf.mxu0
      %v7337 = vadd.f32 0.0, %v7336
      %v7338 = vpop.f32.mrf.mxu0
      %v7339 = vadd.f32 0.0, %v7338
      %v7340 = vpop.f32.mrf.mxu0
      %v7341 = vadd.f32 0.0, %v7340
      %v7342 = vpop.f32.mrf.mxu0
      %v7343 = vadd.f32 0.0, %v7342
      %7344 = vdwg.mxu0
      %v7345 = vadd.f32 %v7207, %v7307
      %v7346 = vadd.f32 %v7208, %v7309
      %v7347 = vadd.f32 %v7209, %v7311
      %v7348 = vadd.f32 %v7210, %v7313
      %v7349 = vadd.f32 %v7211, %v7317
      %v7350 = vadd.f32 %v7212, %v7319
      %v7351 = vadd.f32 %v7213, %v7321
      %v7352 = vadd.f32 %v7214, %v7323
      %v7353 = vadd.f32 %v7215, %v7327
      %v7354 = vadd.f32 %v7216, %v7329
      %v7355 = vadd.f32 %v7217, %v7331
      %v7356 = vadd.f32 %v7218, %v7333
      %v7357 = vadd.f32 %v7219, %v7337
      %v7358 = vadd.f32 %v7220, %v7339
      %v7359 = vadd.f32 %v7221, %v7341
      %v7360 = vadd.f32 %v7222, %v7343
      %7361 = vst [vmem:[#allocation3] sm:$0xff] %v7345
      %7362 = vst [vmem:[#allocation3 + $0x8] sm:$0xff] %v7346
      %7363 = vst [vmem:[#allocation3 + $0x10] sm:$0xff] %v7347
      %7364 = vst [vmem:[#allocation3 + $0x18] sm:$0xff] %v7348
      %7365 = vst [vmem:[#allocation3 + $0x20] sm:$0xff] %v7349
      %7366 = vst [vmem:[#allocation3 + $0x28] sm:$0xff] %v7350
      %7367 = vst [vmem:[#allocation3 + $0x30] sm:$0xff] %v7351
      %7368 = vst [vmem:[#allocation3 + $0x38] sm:$0xff] %v7352
      %7369 = vst [vmem:[#allocation3 + $0x40] sm:$0xff] %v7353
      %7370 = vst [vmem:[#allocation3 + $0x48] sm:$0xff] %v7354
      %7371 = vst [vmem:[#allocation3 + $0x50] sm:$0xff] %v7355
      %7372 = vst [vmem:[#allocation3 + $0x58] sm:$0xff] %v7356
      %7373 = vst [vmem:[#allocation3 + $0x60] sm:$0xff] %v7357
      %7374 = vst [vmem:[#allocation3 + $0x68] sm:$0xff] %v7358
      %7375 = vst [vmem:[#allocation3 + $0x70] sm:$0xff] %v7359
      %7376 = vst [vmem:[#allocation3 + $0x78] sm:$0xff] %v7360
      %v7377 = vld [vmem:[#allocation2] sm:$0xff]
      %v7378 = vld [vmem:[#allocation2 + $0x8] sm:$0xff]
      %v7379 = vld [vmem:[#allocation2 + $0x10] sm:$0xff]
      %v7380 = vld [vmem:[#allocation2 + $0x18] sm:$0xff]
      %v7381 = vld [vmem:[#allocation2 + $0x20] sm:$0xff]
      %v7382 = vld [vmem:[#allocation2 + $0x28] sm:$0xff]
      %v7383 = vld [vmem:[#allocation2 + $0x30] sm:$0xff]
      %v7384 = vld [vmem:[#allocation2 + $0x38] sm:$0xff]
      %v7385 = vld [vmem:[#allocation2 + $0x40] sm:$0xff]
      %v7386 = vld [vmem:[#allocation2 + $0x48] sm:$0xff]
      %v7387 = vld [vmem:[#allocation2 + $0x50] sm:$0xff]
      %v7388 = vld [vmem:[#allocation2 + $0x58] sm:$0xff]
      %v7389 = vld [vmem:[#allocation2 + $0x60] sm:$0xff]
      %v7390 = vld [vmem:[#allocation2 + $0x68] sm:$0xff]
      %v7391 = vld [vmem:[#allocation2 + $0x70] sm:$0xff]
      %v7392 = vld [vmem:[#allocation2 + $0x78] sm:$0xff]
      %v7393 = vld [vmem:[#allocation2 + $0x80] sm:$0xff]
      %v7394 = vld [vmem:[#allocation2 + $0x88] sm:$0xff]
      %v7395 = vld [vmem:[#allocation2 + $0x90] sm:$0xff]
      %v7396 = vld [vmem:[#allocation2 + $0x98] sm:$0xff]
      %v7397 = vld [vmem:[#allocation2 + $0xa0] sm:$0xff]
      %v7398 = vld [vmem:[#allocation2 + $0xa8] sm:$0xff]
      %v7399 = vld [vmem:[#allocation2 + $0xb0] sm:$0xff]
      %v7400 = vld [vmem:[#allocation2 + $0xb8] sm:$0xff]
      %v7401 = vld [vmem:[#allocation2 + $0xc0] sm:$0xff]
      %v7402 = vld [vmem:[#allocation2 + $0xc8] sm:$0xff]
      %v7403 = vld [vmem:[#allocation2 + $0xd0] sm:$0xff]
      %v7404 = vld [vmem:[#allocation2 + $0xd8] sm:$0xff]
      %v7405 = vld [vmem:[#allocation2 + $0xe0] sm:$0xff]
      %v7406 = vld [vmem:[#allocation2 + $0xe8] sm:$0xff]
      %v7407 = vld [vmem:[#allocation2 + $0xf0] sm:$0xff]
      %v7408 = vld [vmem:[#allocation2 + $0xf8] sm:$0xff]
      %7409 = vrot.lane.b32.xlu0 %v7377, 111
      %v7410 = vpop.permute.xlu0 %7409
      %7411 = vrot.lane.b32.xlu0 %v7379, 111
      %v7412 = vpop.permute.xlu0 %7411
      %7413 = vrot.lane.b32.xlu0 %v7381, 111
      %v7414 = vpop.permute.xlu0 %7413
      %7415 = vrot.lane.b32.xlu0 %v7383, 111
      %v7416 = vpop.permute.xlu0 %7415
      %7417 = vrot.lane.b32.xlu0 %v7385, 111
      %v7418 = vpop.permute.xlu0 %7417
      %7419 = vrot.lane.b32.xlu0 %v7387, 111
      %v7420 = vpop.permute.xlu0 %7419
      %7421 = vrot.lane.b32.xlu0 %v7389, 111
      %v7422 = vpop.permute.xlu0 %7421
      %7423 = vrot.lane.b32.xlu0 %v7391, 111
      %v7424 = vpop.permute.xlu0 %7423
      %7425 = vrot.lane.b32.xlu0 %v7393, 111
      %v7426 = vpop.permute.xlu0 %7425
      %7427 = vrot.lane.b32.xlu0 %v7395, 111
      %v7428 = vpop.permute.xlu0 %7427
      %7429 = vrot.lane.b32.xlu0 %v7397, 111
      %v7430 = vpop.permute.xlu0 %7429
      %7431 = vrot.lane.b32.xlu0 %v7399, 111
      %v7432 = vpop.permute.xlu0 %7431
      %7433 = vrot.lane.b32.xlu0 %v7401, 111
      %v7434 = vpop.permute.xlu0 %7433
      %7435 = vrot.lane.b32.xlu0 %v7403, 111
      %v7436 = vpop.permute.xlu0 %7435
      %7437 = vrot.lane.b32.xlu0 %v7405, 111
      %v7438 = vpop.permute.xlu0 %7437
      %7439 = vrot.lane.b32.xlu0 %v7407, 111
      %v7440 = vpop.permute.xlu0 %7439
      %7441 = vrot.lane.b32.xlu0 %v7378, 111
      %v7442 = vpop.permute.xlu0 %7441
      %7443 = vrot.lane.b32.xlu0 %v7380, 111
      %v7444 = vpop.permute.xlu0 %7443
      %7445 = vrot.lane.b32.xlu0 %v7382, 111
      %v7446 = vpop.permute.xlu0 %7445
      %7447 = vrot.lane.b32.xlu0 %v7384, 111
      %v7448 = vpop.permute.xlu0 %7447
      %7449 = vrot.lane.b32.xlu0 %v7386, 111
      %v7450 = vpop.permute.xlu0 %7449
      %7451 = vrot.lane.b32.xlu0 %v7388, 111
      %v7452 = vpop.permute.xlu0 %7451
      %7453 = vrot.lane.b32.xlu0 %v7390, 111
      %v7454 = vpop.permute.xlu0 %7453
      %7455 = vrot.lane.b32.xlu0 %v7392, 111
      %v7456 = vpop.permute.xlu0 %7455
      %7457 = vrot.lane.b32.xlu0 %v7394, 111
      %v7458 = vpop.permute.xlu0 %7457
      %7459 = vrot.lane.b32.xlu0 %v7396, 111
      %v7460 = vpop.permute.xlu0 %7459
      %7461 = vrot.lane.b32.xlu0 %v7398, 111
      %v7462 = vpop.permute.xlu0 %7461
      %7463 = vrot.lane.b32.xlu0 %v7400, 111
      %v7464 = vpop.permute.xlu0 %7463
      %7465 = vrot.lane.b32.xlu0 %v7402, 111
      %v7466 = vpop.permute.xlu0 %7465
      %7467 = vrot.lane.b32.xlu0 %v7404, 111
      %v7468 = vpop.permute.xlu0 %7467
      %7469 = vrot.lane.b32.xlu0 %v7406, 111
      %v7470 = vpop.permute.xlu0 %7469
      %7471 = vrot.lane.b32.xlu0 %v7408, 111
      %v7472 = vpop.permute.xlu0 %7471
      %v7473 = vsel %vm4174, %v7410, %v7442
      %v7474 = vsel %vm4174, %v7412, %v7444
      %v7475 = vsel %vm4174, %v7414, %v7446
      %v7476 = vsel %vm4174, %v7416, %v7448
      %v7477 = vsel %vm4174, %v7418, %v7450
      %v7478 = vsel %vm4174, %v7420, %v7452
      %v7479 = vsel %vm4174, %v7422, %v7454
      %v7480 = vsel %vm4174, %v7424, %v7456
      %v7481 = vsel %vm4174, %v7426, %v7458
      %v7482 = vsel %vm4174, %v7428, %v7460
      %v7483 = vsel %vm4174, %v7430, %v7462
      %v7484 = vsel %vm4174, %v7432, %v7464
      %v7485 = vsel %vm4174, %v7434, %v7466
      %v7486 = vsel %vm4174, %v7436, %v7468
      %v7487 = vsel %vm4174, %v7438, %v7470
      %v7488 = vsel %vm4174, %v7440, %v7472
      %v7489 = vsel %vm4174, %v7442, %v7410
      %v7490 = vsel %vm4174, %v7444, %v7412
      %v7491 = vsel %vm4174, %v7446, %v7414
      %v7492 = vsel %vm4174, %v7448, %v7416
      %v7493 = vsel %vm4174, %v7450, %v7418
      %v7494 = vsel %vm4174, %v7452, %v7420
      %v7495 = vsel %vm4174, %v7454, %v7422
      %v7496 = vsel %vm4174, %v7456, %v7424
      %v7497 = vsel %vm4174, %v7458, %v7426
      %v7498 = vsel %vm4174, %v7460, %v7428
      %v7499 = vsel %vm4174, %v7462, %v7430
      %v7500 = vsel %vm4174, %v7464, %v7432
      %v7501 = vsel %vm4174, %v7466, %v7434
      %v7502 = vsel %vm4174, %v7468, %v7436
      %v7503 = vsel %vm4174, %v7470, %v7438
      %v7504 = vsel %vm4174, %v7472, %v7440
      %v7505 = vld [vmem:[%s4207] sm:$0x3]
      %v7507 = vlaneseq
      %v7508 = vshrl.u32 %v7507, 7
      %v7509 = vsub.s32 0, %v7508
      %v7510 = vrot.slane %v7505, %v7509
      %v7511 = vlaneseq
      %v7512 = vshrl.u32 %v7511, 7
      %v7513 = vsub.s32 1, %v7512
      %v7514 = vrot.slane %v7505, %v7513
      %v7517 = vmul.f32 %v7473, %v7510
      %v7518 = vmul.f32 %v7489, %v7514
      %v7519 = vmul.f32 %v7474, %v7510
      %v7520 = vmul.f32 %v7490, %v7514
      %v7521 = vmul.f32 %v7475, %v7510
      %v7522 = vmul.f32 %v7491, %v7514
      %v7523 = vmul.f32 %v7476, %v7510
      %v7524 = vmul.f32 %v7492, %v7514
      %v7525 = vmul.f32 %v7477, %v7510
      %v7526 = vmul.f32 %v7493, %v7514
      %v7527 = vmul.f32 %v7478, %v7510
      %v7528 = vmul.f32 %v7494, %v7514
      %v7529 = vmul.f32 %v7479, %v7510
      %v7530 = vmul.f32 %v7495, %v7514
      %v7531 = vmul.f32 %v7480, %v7510
      %v7532 = vmul.f32 %v7496, %v7514
      %v7533 = vmul.f32 %v7481, %v7510
      %v7534 = vmul.f32 %v7497, %v7514
      %v7535 = vmul.f32 %v7482, %v7510
      %v7536 = vmul.f32 %v7498, %v7514
      %v7537 = vmul.f32 %v7483, %v7510
      %v7538 = vmul.f32 %v7499, %v7514
      %v7539 = vmul.f32 %v7484, %v7510
      %v7540 = vmul.f32 %v7500, %v7514
      %v7541 = vmul.f32 %v7485, %v7510
      %v7542 = vmul.f32 %v7501, %v7514
      %v7543 = vmul.f32 %v7486, %v7510
      %v7544 = vmul.f32 %v7502, %v7514
      %v7545 = vmul.f32 %v7487, %v7510
      %v7546 = vmul.f32 %v7503, %v7514
      %v7547 = vmul.f32 %v7488, %v7510
      %v7548 = vmul.f32 %v7504, %v7514
      %v7549 = vld [vmem:[#allocation3] sm:$0xff]
      %v7550 = vld [vmem:[#allocation3 + $0x8] sm:$0xff]
      %v7551 = vld [vmem:[#allocation3 + $0x10] sm:$0xff]
      %v7552 = vld [vmem:[#allocation3 + $0x18] sm:$0xff]
      %v7553 = vld [vmem:[#allocation3 + $0x20] sm:$0xff]
      %v7554 = vld [vmem:[#allocation3 + $0x28] sm:$0xff]
      %v7555 = vld [vmem:[#allocation3 + $0x30] sm:$0xff]
      %v7556 = vld [vmem:[#allocation3 + $0x38] sm:$0xff]
      %v7557 = vld [vmem:[#allocation3 + $0x40] sm:$0xff]
      %v7558 = vld [vmem:[#allocation3 + $0x48] sm:$0xff]
      %v7559 = vld [vmem:[#allocation3 + $0x50] sm:$0xff]
      %v7560 = vld [vmem:[#allocation3 + $0x58] sm:$0xff]
      %v7561 = vld [vmem:[#allocation3 + $0x60] sm:$0xff]
      %v7562 = vld [vmem:[#allocation3 + $0x68] sm:$0xff]
      %v7563 = vld [vmem:[#allocation3 + $0x70] sm:$0xff]
      %v7564 = vld [vmem:[#allocation3 + $0x78] sm:$0xff]
      %s7565 = scalar_lea.vmem %s3, 256
      %v7566 = vld [vmem:[%s7565] sm:$0xf]
      %v7567 = vld [vmem:[%s7565 + $0x4] sm:$0xf]
      %v7568 = vld [vmem:[%s7565 + $0x8] sm:$0xf]
      %v7569 = vld [vmem:[%s7565 + $0xc] sm:$0xf]
      %v7570 = vld [vmem:[%s7565 + $0x10] sm:$0xf]
      %v7571 = vld [vmem:[%s7565 + $0x14] sm:$0xf]
      %v7572 = vld [vmem:[%s7565 + $0x18] sm:$0xf]
      %v7573 = vld [vmem:[%s7565 + $0x1c] sm:$0xf]
      %v7574 = vpack.c.bf16 %v7519, %v7517
      %v7575 = vpack.c.bf16 %v7520, %v7518
      %v7576 = vpack.c.bf16 %v7523, %v7521
      %v7577 = vpack.c.bf16 %v7524, %v7522
      %v7578 = vpack.c.bf16 %v7527, %v7525
      %v7579 = vpack.c.bf16 %v7528, %v7526
      %v7580 = vpack.c.bf16 %v7531, %v7529
      %v7581 = vpack.c.bf16 %v7532, %v7530
      %v7582 = vpack.c.bf16 %v7535, %v7533
      %v7583 = vpack.c.bf16 %v7536, %v7534
      %v7584 = vpack.c.bf16 %v7539, %v7537
      %v7585 = vpack.c.bf16 %v7540, %v7538
      %v7586 = vpack.c.bf16 %v7543, %v7541
      %v7587 = vpack.c.bf16 %v7544, %v7542
      %v7588 = vpack.c.bf16 %v7547, %v7545
      %v7589 = vpack.c.bf16 %v7548, %v7546
      %v7598 = vunpack.c.l.b16 %v7566
      %v7599 = vunpack.c.l.b16 %v7567
      %v7600 = vunpack.c.l.b16 %v7568
      %v7601 = vunpack.c.l.b16 %v7569
      %v7602 = vunpack.c.l.b16 %v7570
      %v7603 = vunpack.c.l.b16 %v7571
      %v7604 = vunpack.c.l.b16 %v7572
      %v7605 = vunpack.c.l.b16 %v7573
      %v7606 = vpack.c.b16 %v7599, %v7598
      %v7607 = vpack.c.b16 %v7601, %v7600
      %v7608 = vpack.c.b16 %v7603, %v7602
      %v7609 = vpack.c.b16 %v7605, %v7604
      %7614 = vmatprep.subr.bf16.mxu0 %v7589
      %7615 = vmatpush1.bf16.msra.mxu0 %v7588
      %7616 = vmatprep.subr.bf16.mxu0 %v7587
      %7617 = vmatpush1.bf16.msra.mxu0 %v7586
      %7618 = vmatprep.subr.bf16.mxu0 %v7585
      %7619 = vmatpush1.bf16.msra.mxu0 %v7584
      %7620 = vmatprep.subr.bf16.mxu0 %v7583
      %7621 = vmatpush1.bf16.msra.mxu0 %v7582
      %7622 = vmatprep.subr.bf16.mxu0 %v7581
      %7623 = vmatpush1.bf16.msra.mxu0 %v7580
      %7624 = vmatprep.subr.bf16.mxu0 %v7579
      %7625 = vmatpush1.bf16.msra.mxu0 %v7578
      %7626 = vmatprep.subr.bf16.mxu0 %v7577
      %7627 = vmatpush1.bf16.msra.mxu0 %v7576
      %7628 = vmatprep.subr.bf16.mxu0 %v7575
      %7629 = vmatpush1.bf16.msra.mxu0 %v7574
      %7630 = vmatprep.subr.bf16.mxu0 0
      %7631 = vmatpush2.bf16.msra.mxu0 0
      %7632 = vmatprep.subr.bf16.mxu0 0
      %7633 = vmatpush2.bf16.msra.mxu0 0
      %7634 = vmatprep.subr.bf16.mxu0 0
      %7635 = vmatpush2.bf16.msra.mxu0 0
      %7636 = vmatprep.subr.bf16.mxu0 0
      %7637 = vmatpush2.bf16.msra.mxu0 0
      %7638 = vmatprep.subr.bf16.mxu0 0
      %7639 = vmatpush2.bf16.msra.mxu0 0
      %7640 = vmatprep.subr.bf16.mxu0 0
      %7641 = vmatpush2.bf16.msra.mxu0 0
      %7642 = vmatprep.subr.bf16.mxu0 0
      %7643 = vmatpush2.bf16.msra.mxu0 0
      %7644 = vmatprep.subr.bf16.mxu0 0
      %7645 = vmatpush2.bf16.msra.mxu0 0
      %7646 = vmatprep.mubr.bf16.mxu0 0
      %7647 = vmatmul.mubr.bf16.gmra.mxu0 %v7606
      %v7648 = vpop.f32.mrf.mxu0
      %v7649 = vadd.f32 0.0, %v7648
      %v7650 = vpop.f32.mrf.mxu0
      %v7651 = vadd.f32 0.0, %v7650
      %v7652 = vpop.f32.mrf.mxu0
      %v7653 = vadd.f32 0.0, %v7652
      %v7654 = vpop.f32.mrf.mxu0
      %v7655 = vadd.f32 0.0, %v7654
      %7656 = vmatprep.mubr.bf16.mxu0 0
      %7657 = vmatmul.mubr.bf16.gmra.mxu0 %v7607
      %v7658 = vpop.f32.mrf.mxu0
      %v7659 = vadd.f32 0.0, %v7658
      %v7660 = vpop.f32.mrf.mxu0
      %v7661 = vadd.f32 0.0, %v7660
      %v7662 = vpop.f32.mrf.mxu0
      %v7663 = vadd.f32 0.0, %v7662
      %v7664 = vpop.f32.mrf.mxu0
      %v7665 = vadd.f32 0.0, %v7664
      %7666 = vmatprep.mubr.bf16.mxu0 0
      %7667 = vmatmul.mubr.bf16.gmra.mxu0 %v7608
      %v7668 = vpop.f32.mrf.mxu0
      %v7669 = vadd.f32 0.0, %v7668
      %v7670 = vpop.f32.mrf.mxu0
      %v7671 = vadd.f32 0.0, %v7670
      %v7672 = vpop.f32.mrf.mxu0
      %v7673 = vadd.f32 0.0, %v7672
      %v7674 = vpop.f32.mrf.mxu0
      %v7675 = vadd.f32 0.0, %v7674
      %7676 = vmatprep.mubr.bf16.mxu0 0
      %7677 = vmatmul.mubr.bf16.gmra.mxu0 %v7609
      %v7678 = vpop.f32.mrf.mxu0
      %v7679 = vadd.f32 0.0, %v7678
      %v7680 = vpop.f32.mrf.mxu0
      %v7681 = vadd.f32 0.0, %v7680
      %v7682 = vpop.f32.mrf.mxu0
      %v7683 = vadd.f32 0.0, %v7682
      %v7684 = vpop.f32.mrf.mxu0
      %v7685 = vadd.f32 0.0, %v7684
      %7686 = vdwg.mxu0
      %v7687 = vadd.f32 %v7549, %v7649
      %v7688 = vadd.f32 %v7550, %v7651
      %v7689 = vadd.f32 %v7551, %v7653
      %v7690 = vadd.f32 %v7552, %v7655
      %v7691 = vadd.f32 %v7553, %v7659
      %v7692 = vadd.f32 %v7554, %v7661
      %v7693 = vadd.f32 %v7555, %v7663
      %v7694 = vadd.f32 %v7556, %v7665
      %v7695 = vadd.f32 %v7557, %v7669
      %v7696 = vadd.f32 %v7558, %v7671
      %v7697 = vadd.f32 %v7559, %v7673
      %v7698 = vadd.f32 %v7560, %v7675
      %v7699 = vadd.f32 %v7561, %v7679
      %v7700 = vadd.f32 %v7562, %v7681
      %v7701 = vadd.f32 %v7563, %v7683
      %v7702 = vadd.f32 %v7564, %v7685
      %7703 = vst [vmem:[#allocation3] sm:$0xff] %v7687
      %7704 = vst [vmem:[#allocation3 + $0x8] sm:$0xff] %v7688
      %7705 = vst [vmem:[#allocation3 + $0x10] sm:$0xff] %v7689
      %7706 = vst [vmem:[#allocation3 + $0x18] sm:$0xff] %v7690
      %7707 = vst [vmem:[#allocation3 + $0x20] sm:$0xff] %v7691
      %7708 = vst [vmem:[#allocation3 + $0x28] sm:$0xff] %v7692
      %7709 = vst [vmem:[#allocation3 + $0x30] sm:$0xff] %v7693
      %7710 = vst [vmem:[#allocation3 + $0x38] sm:$0xff] %v7694
      %7711 = vst [vmem:[#allocation3 + $0x40] sm:$0xff] %v7695
      %7712 = vst [vmem:[#allocation3 + $0x48] sm:$0xff] %v7696
      %7713 = vst [vmem:[#allocation3 + $0x50] sm:$0xff] %v7697
      %7714 = vst [vmem:[#allocation3 + $0x58] sm:$0xff] %v7698
      %7715 = vst [vmem:[#allocation3 + $0x60] sm:$0xff] %v7699
      %7716 = vst [vmem:[#allocation3 + $0x68] sm:$0xff] %v7700
      %7717 = vst [vmem:[#allocation3 + $0x70] sm:$0xff] %v7701
      %7718 = vst [vmem:[#allocation3 + $0x78] sm:$0xff] %v7702
      %v7719 = vld [vmem:[#allocation3] sm:$0xff]
      %v7720 = vld [vmem:[#allocation3 + $0x8] sm:$0xff]
      %v7721 = vld [vmem:[#allocation3 + $0x10] sm:$0xff]
      %v7722 = vld [vmem:[#allocation3 + $0x18] sm:$0xff]
      %v7723 = vld [vmem:[#allocation3 + $0x20] sm:$0xff]
      %v7724 = vld [vmem:[#allocation3 + $0x28] sm:$0xff]
      %v7725 = vld [vmem:[#allocation3 + $0x30] sm:$0xff]
      %v7726 = vld [vmem:[#allocation3 + $0x38] sm:$0xff]
      %v7727 = vld [vmem:[#allocation3 + $0x40] sm:$0xff]
      %v7728 = vld [vmem:[#allocation3 + $0x48] sm:$0xff]
      %v7729 = vld [vmem:[#allocation3 + $0x50] sm:$0xff]
      %v7730 = vld [vmem:[#allocation3 + $0x58] sm:$0xff]
      %v7731 = vld [vmem:[#allocation3 + $0x60] sm:$0xff]
      %v7732 = vld [vmem:[#allocation3 + $0x68] sm:$0xff]
      %v7733 = vld [vmem:[#allocation3 + $0x70] sm:$0xff]
      %v7734 = vld [vmem:[#allocation3 + $0x78] sm:$0xff]
      %v7735 = vld [vmem:[%s4] sm:$0xff]
      %v7736 = vld [vmem:[%s4 + $0x8] sm:$0xff]
      %v7737 = vld [vmem:[%s4 + $0x10] sm:$0xff]
      %v7738 = vld [vmem:[%s4 + $0x18] sm:$0xff]
      %v7739 = vld [vmem:[%s4 + $0x20] sm:$0xff]
      %v7740 = vld [vmem:[%s4 + $0x28] sm:$0xff]
      %v7741 = vld [vmem:[%s4 + $0x30] sm:$0xff]
      %v7742 = vld [vmem:[%s4 + $0x38] sm:$0xff]
      %7744 = vset.pattern.permute.xlu0 0
      %7745 = vperm.xlu0 %7744, %v7735
      %v7746 = vpop.permute.xlu0 %7745
      %7749 = vset.pattern.permute.xlu0 0
      %7750 = vperm.xlu0 %7749, %v7736
      %v7751 = vpop.permute.xlu0 %7750
      %7754 = vset.pattern.permute.xlu0 0
      %7755 = vperm.xlu0 %7754, %v7737
      %v7756 = vpop.permute.xlu0 %7755
      %7759 = vset.pattern.permute.xlu0 0
      %7760 = vperm.xlu0 %7759, %v7738
      %v7761 = vpop.permute.xlu0 %7760
      %7764 = vset.pattern.permute.xlu0 0
      %7765 = vperm.xlu0 %7764, %v7739
      %v7766 = vpop.permute.xlu0 %7765
      %7769 = vset.pattern.permute.xlu0 0
      %7770 = vperm.xlu0 %7769, %v7740
      %v7771 = vpop.permute.xlu0 %7770
      %7774 = vset.pattern.permute.xlu0 0
      %7775 = vperm.xlu0 %7774, %v7741
      %v7776 = vpop.permute.xlu0 %7775
      %7779 = vset.pattern.permute.xlu0 0
      %7780 = vperm.xlu0 %7779, %v7742
      %v7781 = vpop.permute.xlu0 %7780
      %v7783 = vadd.f32 %v7719, %v7746
      %v7784 = vadd.f32 %v7720, %v7746
      %v7785 = vadd.f32 %v7721, %v7751
      %v7786 = vadd.f32 %v7722, %v7751
      %v7787 = vadd.f32 %v7723, %v7756
      %v7788 = vadd.f32 %v7724, %v7756
      %v7789 = vadd.f32 %v7725, %v7761
      %v7790 = vadd.f32 %v7726, %v7761
      %v7791 = vadd.f32 %v7727, %v7766
      %v7792 = vadd.f32 %v7728, %v7766
      %v7793 = vadd.f32 %v7729, %v7771
      %v7794 = vadd.f32 %v7730, %v7771
      %v7795 = vadd.f32 %v7731, %v7776
      %v7796 = vadd.f32 %v7732, %v7776
      %v7797 = vadd.f32 %v7733, %v7781
      %v7798 = vadd.f32 %v7734, %v7781
      %v7799 = vld [vmem:[%s293] sm:$0xff]
      %v7800 = vld [vmem:[%s293 + $0x8] sm:$0xff]
      %v7801 = vld [vmem:[%s293 + $0x10] sm:$0xff]
      %v7802 = vld [vmem:[%s293 + $0x18] sm:$0xff]
      %v7803 = vld [vmem:[%s293 + $0x20] sm:$0xff]
      %v7804 = vld [vmem:[%s293 + $0x28] sm:$0xff]
      %v7805 = vld [vmem:[%s293 + $0x30] sm:$0xff]
      %v7806 = vld [vmem:[%s293 + $0x38] sm:$0xff]
      %v7807 = vadd.f32 %v7799, %v7800
      %7808 = vadd.xlane.f32.xlu0 %v7807
      %v7809 = vpop.xlane.xlu0 %7808
      %v7810 = vadd.f32 %v7801, %v7802
      %7811 = vadd.xlane.f32.xlu0 %v7810
      %v7812 = vpop.xlane.xlu0 %7811
      %v7813 = vadd.f32 %v7803, %v7804
      %7814 = vadd.xlane.f32.xlu0 %v7813
      %v7815 = vpop.xlane.xlu0 %7814
      %v7816 = vadd.f32 %v7805, %v7806
      %7817 = vadd.xlane.f32.xlu0 %v7816
      %v7818 = vpop.xlane.xlu0 %7817
      %v7819 = vmul.f32 %v7809, 0.00390625
      %v7820 = vmul.f32 %v7812, 0.00390625
      %v7821 = vmul.f32 %v7815, 0.00390625
      %v7822 = vmul.f32 %v7818, 0.00390625
      %v7823 = vsub.f32 %v7799, %v7819
      %v7824 = vsub.f32 %v7800, %v7819
      %v7825 = vsub.f32 %v7801, %v7820
      %v7826 = vsub.f32 %v7802, %v7820
      %v7827 = vsub.f32 %v7803, %v7821
      %v7828 = vsub.f32 %v7804, %v7821
      %v7829 = vsub.f32 %v7805, %v7822
      %v7830 = vsub.f32 %v7806, %v7822
      %v7831 = vmul.f32 %v7823, %v7823
      %v7832 = vmul.f32 %v7824, %v7824
      %v7833 = vmul.f32 %v7825, %v7825
      %v7834 = vmul.f32 %v7826, %v7826
      %v7835 = vmul.f32 %v7827, %v7827
      %v7836 = vmul.f32 %v7828, %v7828
      %v7837 = vmul.f32 %v7829, %v7829
      %v7838 = vmul.f32 %v7830, %v7830
      %v7839 = vadd.f32 %v7831, %v7832
      %7840 = vadd.xlane.f32.xlu0 %v7839
      %v7841 = vpop.xlane.xlu0 %7840
      %v7842 = vadd.f32 %v7833, %v7834
      %7843 = vadd.xlane.f32.xlu0 %v7842
      %v7844 = vpop.xlane.xlu0 %7843
      %v7845 = vadd.f32 %v7835, %v7836
      %7846 = vadd.xlane.f32.xlu0 %v7845
      %v7847 = vpop.xlane.xlu0 %7846
      %v7848 = vadd.f32 %v7837, %v7838
      %7849 = vadd.xlane.f32.xlu0 %v7848
      %v7850 = vpop.xlane.xlu0 %7849
      %v7851 = vmul.f32 %v7841, 0.00390625
      %v7852 = vmul.f32 %v7844, 0.00390625
      %v7853 = vmul.f32 %v7847, 0.00390625
      %v7854 = vmul.f32 %v7850, 0.00390625
      %v7855 = vadd.f32 %v7851, 1e-05
      %v7856 = vadd.f32 %v7852, 1e-05
      %v7857 = vadd.f32 %v7853, 1e-05
      %v7858 = vadd.f32 %v7854, 1e-05
      %v7859 = vrsqrt.pop %v7855
      %v7860 = vrsqrt.pop %v7856
      %v7861 = vrsqrt.pop %v7857
      %v7862 = vrsqrt.pop %v7858
      %v7863 = vmul.f32 %v7823, %v7859
      %v7864 = vmul.f32 %v7824, %v7859
      %v7865 = vmul.f32 %v7825, %v7860
      %v7866 = vmul.f32 %v7826, %v7860
      %v7867 = vmul.f32 %v7827, %v7861
      %v7868 = vmul.f32 %v7828, %v7861
      %v7869 = vmul.f32 %v7829, %v7862
      %v7870 = vmul.f32 %v7830, %v7862
      %v7871 = vadd.f32 %v7783, 1.0
      %v7872 = vadd.f32 %v7784, 1.0
      %v7873 = vadd.f32 %v7785, 1.0
      %v7874 = vadd.f32 %v7786, 1.0
      %v7875 = vadd.f32 %v7787, 1.0
      %v7876 = vadd.f32 %v7788, 1.0
      %v7877 = vadd.f32 %v7789, 1.0
      %v7878 = vadd.f32 %v7790, 1.0
      %v7879 = vmul.f32 %v7863, %v7871
      %v7880 = vmul.f32 %v7864, %v7872
      %v7881 = vmul.f32 %v7865, %v7873
      %v7882 = vmul.f32 %v7866, %v7874
      %v7883 = vmul.f32 %v7867, %v7875
      %v7884 = vmul.f32 %v7868, %v7876
      %v7885 = vmul.f32 %v7869, %v7877
      %v7886 = vmul.f32 %v7870, %v7878
      %v7887 = vadd.f32 %v7879, %v7791
      %v7888 = vadd.f32 %v7880, %v7792
      %v7889 = vadd.f32 %v7881, %v7793
      %v7890 = vadd.f32 %v7882, %v7794
      %v7891 = vadd.f32 %v7883, %v7795
      %v7892 = vadd.f32 %v7884, %v7796
      %v7893 = vadd.f32 %v7885, %v7797
      %v7894 = vadd.f32 %v7886, %v7798
      %7895 = vst [vmem:[%s298] sm:$0xff] %v7887
      %7896 = vst [vmem:[%s298 + $0x8] sm:$0xff] %v7888
      %7897 = vst [vmem:[%s298 + $0x10] sm:$0xff] %v7889
      %7898 = vst [vmem:[%s298 + $0x18] sm:$0xff] %v7890
      %7899 = vst [vmem:[%s298 + $0x20] sm:$0xff] %v7891
      %7900 = vst [vmem:[%s298 + $0x28] sm:$0xff] %v7892
      %7901 = vst [vmem:[%s298 + $0x30] sm:$0xff] %v7893
      %7902 = vst [vmem:[%s298 + $0x38] sm:$0xff] %v7894
      %p7903 = scmp.lt.s32.totalorder %s18, 1
      %s7904 = scalar_select %p7903, %s18, 1
      %s7905 = smul.addr %s7904, 8
      %s7906 = smul.addr %s7905, 8
      %s7907 = scalar_lea.vmem %s7, %s7906
      // Predicated region
      $region49: #{spade_forward.1} parent=47 // pred_check
        %p7908 = pneg %p193
      $region50: #{spade_forward.1} parent=47 // pred_check_branch
        %7910 = sbr.rel (%p7908) target = $region52
      $region51: #{spade_forward.1} parent=47 // pred_region
        _
      $region52: #{spade_forward.1} parent=47 // pred_fallthru
        _
    $region48: #{spade_forward.1} parent=5 // pred_fallthru
      _
    %p7911 = scmp.le.s32.totalorder 2, %s13
    // Predicated region
    $region53: #{spade_forward.1} parent=5 // pred_check
      %p7912 = pneg %p7911
    $region54: #{spade_forward.1} parent=5 // pred_check_branch
      %7914 = sbr.rel (%p7912) target = $region56
    $region55: #{spade_forward.1} parent=5 // pred_region
      %s7915 = ssub.s32 %s13, 2
      // Predicated region
      $region57: #{spade_forward.1} parent=55 // pred_check
        %p7916 = pneg %p199
      $region58: #{spade_forward.1} parent=55 // pred_check_branch
        %7918 = sbr.rel (%p7916) target = $region60
      $region59: #{spade_forward.1} parent=55 // pred_region
        %p7919 = scmp.lt.s32.totalorder %s19, 1
        %s7920 = scalar_select %p7919, %s19, 1
        %s7921 = smul.addr %s7920, 8
        %s7922 = smul.addr %s7921, 8
        %s7923 = scalar_lea.vmem %s7, %s7922
      $region60: #{spade_forward.1} parent=55 // pred_fallthru
        _
    $region56: #{spade_forward.1} parent=5 // pred_fallthru
      _
  $region6: #{spade_forward.1} parent=0 // loop_footer
    %s17 = sadd.s32 1, %s13
  $region7: #{spade_forward.1} parent=0 // loop_footer_branch
    %12 = sbr.rel target = $region3
  $region8: #{spade_forward.1} parent=0 // loop_exit
    _

</llo_original>
